<compile_context>
chip_gen: v7x
topology: tpu7x:2x2x1
jax: 0.10.0
libtpu: 0.0.40
codegen_flags: <defaults>
</compile_context>

<pallas_src>
import jax
import jax.numpy as jnp
from jax.experimental import pallas as pl
from jax.experimental.pallas import tpu as pltpu

ALPHA = 0.2              # margin, as in PoemImageEmbedModel(alpha=0.2)
EMBED_DIM = 512          # embed_dim in ImageEmbed / PoemEmbed
BRANCH_DIM = 2048        # each ResNet50-style branch feature size
IMG_FEAT_DIM = BRANCH_DIM * 3   # object + scene + sentiment
BERT_DIM = 768           # BERT pooled-output size
VOCAB = 1000


def _round_up(x, m):
    return ((x + m - 1) // m) * m


# ----------------------------------------------------------------------------
# Pallas kernel: fused image/poem linear embeddings + normalize + rank loss
# ----------------------------------------------------------------------------
def _make_rank_loss_kernel(b_tile, true_b):
    m2 = 2 * b_tile  # rows [0:b_tile] = pair-1 items, [b_tile:2*b_tile] = pair-2

    def kernel(obj_ref, scn_ref, snt_ref, poem_ref,
               wi_ref, bi_ref, wp_ref, bp_ref, out_ref):

        def flat(ref, d):
            # (2, b_tile, d) -> (2*b_tile, d): one dot covers both pair members
            return ref[...].reshape(m2, d)

        # ImageEmbed.linear on the stacked (img1, img2) tile: three partial
        # dots against wi slices replace the (B, 6144) concat.
        acc = jnp.dot(flat(obj_ref, BRANCH_DIM),
                      wi_ref[pl.ds(0, BRANCH_DIM), :],
                      preferred_element_type=jnp.float32)
        acc = acc + jnp.dot(flat(scn_ref, BRANCH_DIM),
                            wi_ref[pl.ds(BRANCH_DIM, BRANCH_DIM), :],
                            preferred_element_type=jnp.float32)
        acc = acc + jnp.dot(flat(snt_ref, BRANCH_DIM),
                            wi_ref[pl.ds(2 * BRANCH_DIM, BRANCH_DIM), :],
                            preferred_element_type=jnp.float32)
        img_emb = acc + bi_ref[...]                      # (2*b_tile, 512) f32

        # PoemEmbed.linear on the stacked (poem1, poem2) tile.
        poem_emb = jnp.dot(flat(poem_ref, BERT_DIM), wp_ref[...],
                           preferred_element_type=jnp.float32) + bp_ref[...]

        def normalize(t):                                # f32 epilogue
            return t * jax.lax.rsqrt(jnp.sum(t * t, axis=1, keepdims=True))

        img_n = normalize(img_emb)
        poem_n = normalize(poem_emb)

        i1 = img_n[:b_tile]
        i2 = img_n[b_tile:]
        p1 = poem_n[:b_tile]
        p2 = poem_n[b_tile:]

        s_i1p1 = jnp.sum(i1 * p1, axis=1, keepdims=True)  # (b_tile, 1)
        s_i1p2 = jnp.sum(i1 * p2, axis=1, keepdims=True)
        s_p2i2 = jnp.sum(p2 * i2, axis=1, keepdims=True)
        s_p2i1 = jnp.sum(p2 * i1, axis=1, keepdims=True)

        loss1 = jnp.maximum(ALPHA - s_i1p1 + s_i1p2, 0.0)
        loss2 = jnp.maximum(ALPHA - s_p2i2 + s_p2i1, 0.0)

        # Mask padded rows out of the sum; the wrapper divides by the true B.
        row = pl.program_id(0) * b_tile + jax.lax.broadcasted_iota(
            jnp.int32, (b_tile, 1), 0)
        per_row = jnp.where(row < true_b, loss1 + loss2, 0.0)
        tile_sum = jnp.sum(per_row)

        # Per-tile partial sum in its own output block -> "parallel"-safe.
        out_ref[...] = jnp.broadcast_to(tile_sum, (1, 8, 128))

    return kernel


def rank_loss_pallas(obj, scn, snt, poem, params, true_b, b_tile):
    """obj/scn/snt: (2, b_pad, 2048) bf16; poem: (2, b_pad, 768) bf16."""
    b_pad = obj.shape[1]
    num_tiles = b_pad // b_tile
    kernel = _make_rank_loss_kernel(b_tile, true_b)

    flops = 2 * (2 * b_pad) * (IMG_FEAT_DIM * EMBED_DIM + BERT_DIM * EMBED_DIM)
    transcendentals = 4 * b_pad                            # rsqrt per embed row
    bytes_accessed = (
        (IMG_FEAT_DIM + BERT_DIM) * EMBED_DIM * 2          # bf16 weights
        + 2 * EMBED_DIM * 4                                # f32 biases
        + 2 * b_pad * (IMG_FEAT_DIM + BERT_DIM) * 2        # bf16 features
        + num_tiles * 8 * 128 * 4)                         # partial-sum output

    def feat_spec(d):
        return pl.BlockSpec((2, b_tile, d), lambda i: (0, i, 0))

    partials = pl.pallas_call(
        kernel,
        out_shape=jax.ShapeDtypeStruct((num_tiles, 8, 128), jnp.float32),
        grid_spec=pltpu.PrefetchScalarGridSpec(
            num_scalar_prefetch=0,
            grid=(num_tiles,),
            in_specs=[
                feat_spec(BRANCH_DIM),                     # object features
                feat_spec(BRANCH_DIM),                     # scene features
                feat_spec(BRANCH_DIM),                     # sentiment features
                feat_spec(BERT_DIM),                       # poem pooled features
                pl.BlockSpec((IMG_FEAT_DIM, EMBED_DIM), lambda i: (0, 0)),  # wi resident
                pl.BlockSpec((1, EMBED_DIM), lambda i: (0, 0)),             # bi
                pl.BlockSpec((BERT_DIM, EMBED_DIM), lambda i: (0, 0)),      # wp resident
                pl.BlockSpec((1, EMBED_DIM), lambda i: (0, 0)),             # bp
            ],
            out_specs=pl.BlockSpec((1, 8, 128), lambda i: (i, 0, 0)),
        ),
        compiler_params=pltpu.CompilerParams(
            dimension_semantics=("parallel",),             # v7x megacore sharding
            vmem_limit_bytes=48 * 1024 * 1024),            # safe on v7x's 64 MiB
        cost_estimate=pl.CostEstimate(
            flops=flops, transcendentals=transcendentals,
            bytes_accessed=bytes_accessed),
    )(obj, scn, snt, poem,
      params["w_img"], params["b_img"], params["w_poem"], params["b_poem"])

    # torch.mean over the true batch (padded rows already masked to 0).
    return jnp.sum(partials[:, 0, 0]) / true_b


# ----------------------------------------------------------------------------
# Glue: deterministic stand-in backbones (plain JAX)
# ----------------------------------------------------------------------------
def extract_img_features(imgs, params):
    # TODO(synk): stand-in for Res50_object / PlacesCNN / Res50_sentiment backbones.
    x = imgs.reshape(imgs.shape[0], imgs.shape[1], -1)     # (2, B, 3*H*W)
    obj = x @ params["w_obj"]                              # (2, B, 2048)
    scn = x @ params["w_scene"]                            # (2, B, 2048)
    snt = x @ params["w_sent"]                             # (2, B, 2048)
    return obj, scn, snt


def extract_poem_features(ids, masks, params):
    # TODO(synk): stand-in for BertModel pooled output (768-dim).
    emb = params["embed_table"][ids]                       # (2, B, S, 768)
    m = masks.astype(jnp.float32)[..., None]               # (2, B, S, 1)
    return jnp.sum(emb * m, axis=2) / jnp.sum(m, axis=2)   # (2, B, 768)


def init_params(key, flat_img):
    ks = jax.random.split(key, 8)
    scale = 0.02
    return {
        "w_obj": scale * jax.random.normal(ks[0], (flat_img, BRANCH_DIM), jnp.float32),
        "w_scene": scale * jax.random.normal(ks[1], (flat_img, BRANCH_DIM), jnp.float32),
        "w_sent": scale * jax.random.normal(ks[2], (flat_img, BRANCH_DIM), jnp.float32),
        "embed_table": scale * jax.random.normal(ks[3], (VOCAB, BERT_DIM), jnp.float32),
        # Embed-projection weights stored in bf16: half-size HBM->VMEM DMA,
        # native MXU input dtype on v5e/v6e/v7x.
        "w_img": (scale * jax.random.normal(
            ks[4], (IMG_FEAT_DIM, EMBED_DIM), jnp.float32)).astype(jnp.bfloat16),
        "b_img": scale * jax.random.normal(ks[5], (1, EMBED_DIM), jnp.float32),
        "w_poem": (scale * jax.random.normal(
            ks[6], (BERT_DIM, EMBED_DIM), jnp.float32)).astype(jnp.bfloat16),
        "b_poem": scale * jax.random.normal(ks[7], (1, EMBED_DIM), jnp.float32),
    }


@jax.jit
def poem_image_embed_forward(img1, ids1, mask1, img2, ids2, mask2, params):
    B = img1.shape[0]
    # Stack the two pair members -> one backbone matmul + one MXU pass per weight.
    imgs = jnp.stack([img1, img2], axis=0)                 # (2, B, C, H, W)
    ids = jnp.stack([ids1, ids2], axis=0)                  # (2, B, S)
    masks = jnp.stack([mask1, mask2], axis=0)              # (2, B, S)

    obj, scn, snt = extract_img_features(imgs, params)
    poem = extract_poem_features(ids, masks, params)

    b_tile = min(128, _round_up(B, 8))                     # sublane / MXU friendly tile
    b_pad = _round_up(B, b_tile)
    pad = b_pad - B

    def prep(t):  # pad batch to the tile multiple, cast matmul operands to bf16
        return jnp.pad(t, ((0, 0), (0, pad), (0, 0))).astype(jnp.bfloat16)

    return rank_loss_pallas(prep(obj), prep(scn), prep(snt), prep(poem),
                            params, B, b_tile)


if __name__ == "__main__":
    key = jax.random.PRNGKey(0)
    k_params, k_i1, k_i2, k_id1, k_id2 = jax.random.split(key, 5)

    B, C, H, W, S = 2, 3, 16, 16, 8
    params = init_params(k_params, C * H * W)

    img1 = jax.random.normal(k_i1, (B, C, H, W), jnp.float32)   # NCHW like PyTorch
    img2 = jax.random.normal(k_i2, (B, C, H, W), jnp.float32)
    ids1 = jax.random.randint(k_id1, (B, S), 0, VOCAB, jnp.int32)
    ids2 = jax.random.randint(k_id2, (B, S), 0, VOCAB, jnp.int32)
    lens = jnp.array([S, 5])
    mask1 = (jnp.arange(S)[None, :] < lens[:, None]).astype(jnp.float32)
    mask2 = (jnp.arange(S)[None, :] < lens[::-1][:, None]).astype(jnp.float32)

    loss = poem_image_embed_forward(img1, ids1, mask1, img2, ids2, mask2, params)
    jax.block_until_ready(loss)
    assert loss.shape == () and bool(jnp.isfinite(loss))
    print("KERNEL_OK")
</pallas_src>

<mosaic_0001>
module attributes {stable_mosaic.version = 11 : i64} {
  func.func @kernel(%arg0: i32, %arg1: memref<2x8x2048xbf16, #tpu.memory_space<vmem>>, %arg2: memref<2x8x2048xbf16, #tpu.memory_space<vmem>>, %arg3: memref<2x8x2048xbf16, #tpu.memory_space<vmem>>, %arg4: memref<2x8x768xbf16, #tpu.memory_space<vmem>>, %arg5: memref<6144x512xbf16, #tpu.memory_space<vmem>>, %arg6: memref<1x512xf32, #tpu.memory_space<vmem>>, %arg7: memref<768x512xbf16, #tpu.memory_space<vmem>>, %arg8: memref<1x512xf32, #tpu.memory_space<vmem>>, %arg9: memref<1x8x128xf32, #tpu.memory_space<vmem>>) attributes {dimension_semantics = [#tpu.dimension_semantics<parallel>], iteration_bounds = array<i64: 1>, scalar_prefetch = 0 : i64, scratch_operands = 0 : i64, tpu.core_type = #tpu.core_type<tc>, window_params = [{transform_indices = @transform_0, window_bounds = array<i64: 2, 8, 2048>}, {transform_indices = @transform_1, window_bounds = array<i64: 2, 8, 2048>}, {transform_indices = @transform_2, window_bounds = array<i64: 2, 8, 2048>}, {transform_indices = @transform_3, window_bounds = array<i64: 2, 8, 768>}, {pipeline_mode = #tpu.pipeline_mode<synchronous>, transform_indices = @transform_4, window_bounds = array<i64: 6144, 512>}, {pipeline_mode = #tpu.pipeline_mode<synchronous>, transform_indices = @transform_5, window_bounds = array<i64: 1, 512>}, {pipeline_mode = #tpu.pipeline_mode<synchronous>, transform_indices = @transform_6, window_bounds = array<i64: 768, 512>}, {pipeline_mode = #tpu.pipeline_mode<synchronous>, transform_indices = @transform_7, window_bounds = array<i64: 1, 512>}, {transform_indices = @transform_8, window_bounds = array<i64: 1, 8, 128>}]} {
    %c0 = arith.constant 0 : index
    %c0_0 = arith.constant 0 : index
    %c0_1 = arith.constant 0 : index
    %0 = vector.load %arg1[%c0, %c0_0, %c0_1] : memref<2x8x2048xbf16, #tpu.memory_space<vmem>>, vector<2x8x2048xbf16>
    %1 = vector.shape_cast %0 : vector<2x8x2048xbf16> to vector<16x2048xbf16>
    %c0_2 = arith.constant 0 : index
    %c0_3 = arith.constant 0 : index
    %2 = vector.load %arg5[%c0_2, %c0_3] : memref<6144x512xbf16, #tpu.memory_space<vmem>>, vector<2048x512xbf16>
    %cst = arith.constant dense<0.000000e+00> : vector<16x512xf32>
    %3 = tpu.matmul %1, %2, %cst {dimension_numbers = #tpu.dot_dimension_numbers<[1], [0], [0], [1], [0, 0, 1, 1], [], []>} : vector<16x2048xbf16>, vector<2048x512xbf16>, vector<16x512xf32> -> vector<16x512xf32>
    %c0_4 = arith.constant 0 : index
    %c0_5 = arith.constant 0 : index
    %c0_6 = arith.constant 0 : index
    %4 = vector.load %arg2[%c0_4, %c0_5, %c0_6] : memref<2x8x2048xbf16, #tpu.memory_space<vmem>>, vector<2x8x2048xbf16>
    %5 = vector.shape_cast %4 : vector<2x8x2048xbf16> to vector<16x2048xbf16>
    %c2048 = arith.constant 2048 : index
    %c0_7 = arith.constant 0 : index
    %6 = vector.load %arg5[%c2048, %c0_7] : memref<6144x512xbf16, #tpu.memory_space<vmem>>, vector<2048x512xbf16>
    %cst_8 = arith.constant dense<0.000000e+00> : vector<16x512xf32>
    %7 = tpu.matmul %5, %6, %cst_8 {dimension_numbers = #tpu.dot_dimension_numbers<[1], [0], [0], [1], [0, 0, 1, 1], [], []>} : vector<16x2048xbf16>, vector<2048x512xbf16>, vector<16x512xf32> -> vector<16x512xf32>
    %8 = arith.addf %3, %7 : vector<16x512xf32>
    %c0_9 = arith.constant 0 : index
    %c0_10 = arith.constant 0 : index
    %c0_11 = arith.constant 0 : index
    %9 = vector.load %arg3[%c0_9, %c0_10, %c0_11] : memref<2x8x2048xbf16, #tpu.memory_space<vmem>>, vector<2x8x2048xbf16>
    %10 = vector.shape_cast %9 : vector<2x8x2048xbf16> to vector<16x2048xbf16>
    %c4096 = arith.constant 4096 : index
    %c0_12 = arith.constant 0 : index
    %11 = vector.load %arg5[%c4096, %c0_12] : memref<6144x512xbf16, #tpu.memory_space<vmem>>, vector<2048x512xbf16>
    %cst_13 = arith.constant dense<0.000000e+00> : vector<16x512xf32>
    %12 = tpu.matmul %10, %11, %cst_13 {dimension_numbers = #tpu.dot_dimension_numbers<[1], [0], [0], [1], [0, 0, 1, 1], [], []>} : vector<16x2048xbf16>, vector<2048x512xbf16>, vector<16x512xf32> -> vector<16x512xf32>
    %13 = arith.addf %8, %12 : vector<16x512xf32>
    %c0_14 = arith.constant 0 : index
    %c0_15 = arith.constant 0 : index
    %14 = vector.load %arg6[%c0_14, %c0_15] : memref<1x512xf32, #tpu.memory_space<vmem>>, vector<1x512xf32>
    %15 = vector.broadcast %14 : vector<1x512xf32> to vector<16x512xf32>
    %16 = arith.addf %13, %15 : vector<16x512xf32>
    %c0_16 = arith.constant 0 : index
    %c0_17 = arith.constant 0 : index
    %c0_18 = arith.constant 0 : index
    %17 = vector.load %arg4[%c0_16, %c0_17, %c0_18] : memref<2x8x768xbf16, #tpu.memory_space<vmem>>, vector<2x8x768xbf16>
    %18 = vector.shape_cast %17 : vector<2x8x768xbf16> to vector<16x768xbf16>
    %c0_19 = arith.constant 0 : index
    %c0_20 = arith.constant 0 : index
    %19 = vector.load %arg7[%c0_19, %c0_20] : memref<768x512xbf16, #tpu.memory_space<vmem>>, vector<768x512xbf16>
    %cst_21 = arith.constant dense<0.000000e+00> : vector<16x512xf32>
    %20 = tpu.matmul %18, %19, %cst_21 {dimension_numbers = #tpu.dot_dimension_numbers<[1], [0], [0], [1], [0, 0, 1, 1], [], []>} : vector<16x768xbf16>, vector<768x512xbf16>, vector<16x512xf32> -> vector<16x512xf32>
    %c0_22 = arith.constant 0 : index
    %c0_23 = arith.constant 0 : index
    %21 = vector.load %arg8[%c0_22, %c0_23] : memref<1x512xf32, #tpu.memory_space<vmem>>, vector<1x512xf32>
    %22 = vector.broadcast %21 : vector<1x512xf32> to vector<16x512xf32>
    %23 = arith.addf %20, %22 : vector<16x512xf32>
    %24 = arith.mulf %16, %16 : vector<16x512xf32>
    %cst_24 = arith.constant dense<0.000000e+00> : vector<16xf32>
    %25 = vector.multi_reduction <add>, %24, %cst_24 [1] : vector<16x512xf32> to vector<16xf32>
    %26 = vector.shape_cast %25 : vector<16xf32> to vector<16x1xf32>
    %27 = math.rsqrt %26 : vector<16x1xf32>
    %28 = vector.broadcast %27 : vector<16x1xf32> to vector<16x512xf32>
    %29 = arith.mulf %16, %28 : vector<16x512xf32>
    %30 = arith.mulf %23, %23 : vector<16x512xf32>
    %cst_25 = arith.constant dense<0.000000e+00> : vector<16xf32>
    %31 = vector.multi_reduction <add>, %30, %cst_25 [1] : vector<16x512xf32> to vector<16xf32>
    %32 = vector.shape_cast %31 : vector<16xf32> to vector<16x1xf32>
    %33 = math.rsqrt %32 : vector<16x1xf32>
    %34 = vector.broadcast %33 : vector<16x1xf32> to vector<16x512xf32>
    %35 = arith.mulf %23, %34 : vector<16x512xf32>
    %36 = vector.extract_strided_slice %29 {offsets = [0, 0], sizes = [8, 512], strides = [1, 1]} : vector<16x512xf32> to vector<8x512xf32>
    %37 = vector.extract_strided_slice %29 {offsets = [8, 0], sizes = [8, 512], strides = [1, 1]} : vector<16x512xf32> to vector<8x512xf32>
    %38 = vector.extract_strided_slice %35 {offsets = [0, 0], sizes = [8, 512], strides = [1, 1]} : vector<16x512xf32> to vector<8x512xf32>
    %39 = vector.extract_strided_slice %35 {offsets = [8, 0], sizes = [8, 512], strides = [1, 1]} : vector<16x512xf32> to vector<8x512xf32>
    %40 = arith.mulf %36, %38 : vector<8x512xf32>
    %cst_26 = arith.constant dense<0.000000e+00> : vector<8xf32>
    %41 = vector.multi_reduction <add>, %40, %cst_26 [1] : vector<8x512xf32> to vector<8xf32>
    %42 = vector.shape_cast %41 : vector<8xf32> to vector<8x1xf32>
    %43 = arith.mulf %36, %39 : vector<8x512xf32>
    %cst_27 = arith.constant dense<0.000000e+00> : vector<8xf32>
    %44 = vector.multi_reduction <add>, %43, %cst_27 [1] : vector<8x512xf32> to vector<8xf32>
    %45 = vector.shape_cast %44 : vector<8xf32> to vector<8x1xf32>
    %46 = arith.mulf %39, %37 : vector<8x512xf32>
    %cst_28 = arith.constant dense<0.000000e+00> : vector<8xf32>
    %47 = vector.multi_reduction <add>, %46, %cst_28 [1] : vector<8x512xf32> to vector<8xf32>
    %48 = vector.shape_cast %47 : vector<8xf32> to vector<8x1xf32>
    %49 = arith.mulf %39, %36 : vector<8x512xf32>
    %cst_29 = arith.constant dense<0.000000e+00> : vector<8xf32>
    %50 = vector.multi_reduction <add>, %49, %cst_29 [1] : vector<8x512xf32> to vector<8xf32>
    %51 = vector.shape_cast %50 : vector<8xf32> to vector<8x1xf32>
    %cst_30 = arith.constant 2.000000e-01 : f32
    %52 = vector.broadcast %cst_30 : f32 to vector<8x1xf32>
    %53 = arith.subf %52, %42 : vector<8x1xf32>
    %54 = arith.addf %53, %45 : vector<8x1xf32>
    %cst_31 = arith.constant 0.000000e+00 : f32
    %55 = vector.broadcast %cst_31 : f32 to vector<8x1xf32>
    %56 = arith.maximumf %54, %55 : vector<8x1xf32>
    %cst_32 = arith.constant 2.000000e-01 : f32
    %57 = vector.broadcast %cst_32 : f32 to vector<8x1xf32>
    %58 = arith.subf %57, %48 : vector<8x1xf32>
    %59 = arith.addf %58, %51 : vector<8x1xf32>
    %cst_33 = arith.constant 0.000000e+00 : f32
    %60 = vector.broadcast %cst_33 : f32 to vector<8x1xf32>
    %61 = arith.maximumf %59, %60 : vector<8x1xf32>
    %c8_i32 = arith.constant 8 : i32
    %62 = arith.muli %arg0, %c8_i32 : i32
    %63 = tpu.iota {dimensions = array<i32: 0>} : vector<8x1xi32>
    %64 = vector.broadcast %62 : i32 to vector<8x1xi32>
    %65 = arith.addi %64, %63 : vector<8x1xi32>
    %c2_i32 = arith.constant 2 : i32
    %66 = vector.broadcast %c2_i32 : i32 to vector<8x1xi32>
    %67 = arith.cmpi slt, %65, %66 : vector<8x1xi32>
    %68 = arith.addf %56, %61 : vector<8x1xf32>
    %cst_34 = arith.constant 0.000000e+00 : f32
    %69 = vector.broadcast %cst_34 : f32 to vector<8x1xf32>
    %70 = arith.select %67, %68, %69 : vector<8x1xi1>, vector<8x1xf32>
    %71 = vector.shape_cast %70 : vector<8x1xf32> to vector<1x8x1xf32>
    %cst_35 = arith.constant dense<0.000000e+00> : vector<1xf32>
    %72 = vector.multi_reduction <add>, %71, %cst_35 [1, 2] : vector<1x8x1xf32> to vector<1xf32>
    %73 = vector.shape_cast %72 : vector<1xf32> to vector<1x1x1xf32>
    %74 = vector.extract %73[0, 0, 0] : f32 from vector<1x1x1xf32>
    %75 = vector.broadcast %74 : f32 to vector<1x8x128xf32>
    %c0_36 = arith.constant 0 : index
    %c0_37 = arith.constant 0 : index
    %c0_38 = arith.constant 0 : index
    %76 = vector.load %arg9[%c0_36, %c0_37, %c0_38] : memref<1x8x128xf32, #tpu.memory_space<vmem>>, vector<1x8x128xf32>
    tpu.vector_store %arg9[%c0_36, %c0_37, %c0_38], %75 {strides = array<i32>} : memref<1x8x128xf32, #tpu.memory_space<vmem>>, vector<1x8x128xf32>,
    return
  }
  func.func @transform_0(%arg0: i32) -> (i32, i32, i32) {
    %c0_i32 = arith.constant 0 : i32
    %c0_i32_0 = arith.constant 0 : i32
    %c0_i32_1 = arith.constant 0 : i32
    return %c0_i32, %arg0, %c0_i32_0 : i32, i32, i32
  }
  func.func @transform_1(%arg0: i32) -> (i32, i32, i32) {
    %c0_i32 = arith.constant 0 : i32
    %c0_i32_0 = arith.constant 0 : i32
    %c0_i32_1 = arith.constant 0 : i32
    return %c0_i32, %arg0, %c0_i32_0 : i32, i32, i32
  }
  func.func @transform_2(%arg0: i32) -> (i32, i32, i32) {
    %c0_i32 = arith.constant 0 : i32
    %c0_i32_0 = arith.constant 0 : i32
    %c0_i32_1 = arith.constant 0 : i32
    return %c0_i32, %arg0, %c0_i32_0 : i32, i32, i32
  }
  func.func @transform_3(%arg0: i32) -> (i32, i32, i32) {
    %c0_i32 = arith.constant 0 : i32
    %c0_i32_0 = arith.constant 0 : i32
    %c0_i32_1 = arith.constant 0 : i32
    return %c0_i32, %arg0, %c0_i32_0 : i32, i32, i32
  }
  func.func @transform_4(%arg0: i32) -> (i32, i32) {
    %c0_i32 = arith.constant 0 : i32
    %c0_i32_0 = arith.constant 0 : i32
    %c0_i32_1 = arith.constant 0 : i32
    return %c0_i32, %c0_i32_0 : i32, i32
  }
  func.func @transform_5(%arg0: i32) -> (i32, i32) {
    %c0_i32 = arith.constant 0 : i32
    %c0_i32_0 = arith.constant 0 : i32
    %c0_i32_1 = arith.constant 0 : i32
    return %c0_i32, %c0_i32_0 : i32, i32
  }
  func.func @transform_6(%arg0: i32) -> (i32, i32) {
    %c0_i32 = arith.constant 0 : i32
    %c0_i32_0 = arith.constant 0 : i32
    %c0_i32_1 = arith.constant 0 : i32
    return %c0_i32, %c0_i32_0 : i32, i32
  }
  func.func @transform_7(%arg0: i32) -> (i32, i32) {
    %c0_i32 = arith.constant 0 : i32
    %c0_i32_0 = arith.constant 0 : i32
    %c0_i32_1 = arith.constant 0 : i32
    return %c0_i32, %c0_i32_0 : i32, i32
  }
  func.func @transform_8(%arg0: i32) -> (i32, i32, i32) {
    %c0_i32 = arith.constant 0 : i32
    %c0_i32_0 = arith.constant 0 : i32
    %c0_i32_1 = arith.constant 0 : i32
    return %arg0, %c0_i32, %c0_i32_0 : i32, i32, i32
  }
}

</mosaic_0001>

<llo_original>
// kernel: poem_image_embed_forward.1
$region0: #{poem_image_embed_forward.1}
  #allocation0 [shape = 'u32[]', space=smem, size = 0x4, offset = 0x4, fixed_abs, tag = 'smem constant byte address 0x4 - core index']
  #allocation1 [shape = 'u32[144,128]{1,0:T(1,128)}', space=vmem, size = 0x12000, scoped, tag = 'internal scratch']
  %s0 = inlined_call_operand.vmem [shape: bf16[2,8,2048], index: 0, kind: input, shape index: {}]
  %s1 = inlined_call_operand.vmem [shape: bf16[2,8,2048], index: 1, kind: input, shape index: {}]
  %s2 = inlined_call_operand.vmem [shape: bf16[2,8,2048], index: 2, kind: input, shape index: {}]
  %s3 = inlined_call_operand.vmem [shape: bf16[2,8,768], index: 3, kind: input, shape index: {}]
  %s4 = inlined_call_operand.vmem [shape: bf16[6144,512], index: 4, kind: input, shape index: {}]
  %s5 = inlined_call_operand.vmem [shape: f32[1,512], index: 5, kind: input, shape index: {}]
  %s6 = inlined_call_operand.vmem [shape: bf16[768,512], index: 6, kind: input, shape index: {}]
  %s7 = inlined_call_operand.vmem [shape: f32[1,512], index: 7, kind: input, shape index: {}]
  %s8 = inlined_call_operand.vmem [shape: f32[1,8,128], index: 8, kind: output, shape index: {}]
  %s9 = sld [smem:[#allocation0]]
  $region42: #{poem_image_embed_forward.1} parent=0
    _
  %s11 = ssub.s32 1, %s9
  %s12 = scalar_select 0, %s11, %s9
  // Predicated region
  $region2: #{poem_image_embed_forward.1} parent=0 // pred_check
    _
  $region3: #{poem_image_embed_forward.1} parent=0 // pred_check_branch
    %14 = sbr.rel (0) target = $region5
  $region4: #{poem_image_embed_forward.1} parent=0 // pred_region
    _
  $region5: #{poem_image_embed_forward.1} parent=0 // pred_fallthru
    _
  // Predicated region
  $region6: #{poem_image_embed_forward.1} parent=0 // pred_check
    _
  $region7: #{poem_image_embed_forward.1} parent=0 // pred_check_branch
    %16 = sbr.rel (0) target = $region9
  $region8: #{poem_image_embed_forward.1} parent=0 // pred_region
    _
  $region9: #{poem_image_embed_forward.1} parent=0 // pred_fallthru
    _
  // Predicated region
  $region10: #{poem_image_embed_forward.1} parent=0 // pred_check
    _
  $region11: #{poem_image_embed_forward.1} parent=0 // pred_check_branch
    %18 = sbr.rel (0) target = $region13
  $region12: #{poem_image_embed_forward.1} parent=0 // pred_region
    _
  $region13: #{poem_image_embed_forward.1} parent=0 // pred_fallthru
    _
  // Predicated region
  $region14: #{poem_image_embed_forward.1} parent=0 // pred_check
    _
  $region15: #{poem_image_embed_forward.1} parent=0 // pred_check_branch
    %20 = sbr.rel (0) target = $region17
  $region16: #{poem_image_embed_forward.1} parent=0 // pred_region
    _
  $region17: #{poem_image_embed_forward.1} parent=0 // pred_fallthru
    _
  // Predicated region
  $region18: #{poem_image_embed_forward.1} parent=0 // pred_check
    _
  $region19: #{poem_image_embed_forward.1} parent=0 // pred_check_branch
    %22 = sbr.rel (0) target = $region21
  $region20: #{poem_image_embed_forward.1} parent=0 // pred_region
    _
  $region21: #{poem_image_embed_forward.1} parent=0 // pred_fallthru
    _
  // Predicated region
  $region22: #{poem_image_embed_forward.1} parent=0 // pred_check
    _
  $region23: #{poem_image_embed_forward.1} parent=0 // pred_check_branch
    %24 = sbr.rel (0) target = $region25
  $region24: #{poem_image_embed_forward.1} parent=0 // pred_region
    _
  $region25: #{poem_image_embed_forward.1} parent=0 // pred_fallthru
    _
  // Predicated region
  $region26: #{poem_image_embed_forward.1} parent=0 // pred_check
    _
  $region27: #{poem_image_embed_forward.1} parent=0 // pred_check_branch
    %26 = sbr.rel (0) target = $region29
  $region28: #{poem_image_embed_forward.1} parent=0 // pred_region
    _
  $region29: #{poem_image_embed_forward.1} parent=0 // pred_fallthru
    _
  // Predicated region
  $region30: #{poem_image_embed_forward.1} parent=0 // pred_check
    _
  $region31: #{poem_image_embed_forward.1} parent=0 // pred_check_branch
    %28 = sbr.rel (0) target = $region33
  $region32: #{poem_image_embed_forward.1} parent=0 // pred_region
    _
  $region33: #{poem_image_embed_forward.1} parent=0 // pred_fallthru
    _
  %v29 = vld [vmem:[%s0] sm:$0xff]
  %v30 = vld [vmem:[%s0 + $0x8] sm:$0xff]
  %v31 = vld [vmem:[%s0 + $0x10] sm:$0xff]
  %v32 = vld [vmem:[%s0 + $0x18] sm:$0xff]
  %v33 = vld [vmem:[%s0 + $0x20] sm:$0xff]
  %v34 = vld [vmem:[%s0 + $0x28] sm:$0xff]
  %v35 = vld [vmem:[%s0 + $0x30] sm:$0xff]
  %v36 = vld [vmem:[%s0 + $0x38] sm:$0xff]
  %v37 = vld [vmem:[%s0 + $0x40] sm:$0xff]
  %v38 = vld [vmem:[%s0 + $0x48] sm:$0xff]
  %v39 = vld [vmem:[%s0 + $0x50] sm:$0xff]
  %v40 = vld [vmem:[%s0 + $0x58] sm:$0xff]
  %v41 = vld [vmem:[%s0 + $0x60] sm:$0xff]
  %v42 = vld [vmem:[%s0 + $0x68] sm:$0xff]
  %v43 = vld [vmem:[%s0 + $0x70] sm:$0xff]
  %v44 = vld [vmem:[%s0 + $0x78] sm:$0xff]
  %v45 = vld [vmem:[%s4] sm:$0xff]
  %v46 = vld [vmem:[%s4 + $0x8] sm:$0xff]
  %v47 = vld [vmem:[%s4 + $0x10] sm:$0xff]
  %v48 = vld [vmem:[%s4 + $0x18] sm:$0xff]
  %v49 = vld [vmem:[%s4 + $0x20] sm:$0xff]
  %v50 = vld [vmem:[%s4 + $0x28] sm:$0xff]
  %v51 = vld [vmem:[%s4 + $0x30] sm:$0xff]
  %v52 = vld [vmem:[%s4 + $0x38] sm:$0xff]
  %v53 = vld [vmem:[%s4 + $0x40] sm:$0xff]
  %v54 = vld [vmem:[%s4 + $0x48] sm:$0xff]
  %v55 = vld [vmem:[%s4 + $0x50] sm:$0xff]
  %v56 = vld [vmem:[%s4 + $0x58] sm:$0xff]
  %v57 = vld [vmem:[%s4 + $0x60] sm:$0xff]
  %v58 = vld [vmem:[%s4 + $0x68] sm:$0xff]
  %v59 = vld [vmem:[%s4 + $0x70] sm:$0xff]
  %v60 = vld [vmem:[%s4 + $0x78] sm:$0xff]
  %v61 = vld [vmem:[%s4 + $0x80] sm:$0xff]
  %v62 = vld [vmem:[%s4 + $0x88] sm:$0xff]
  %v63 = vld [vmem:[%s4 + $0x90] sm:$0xff]
  %v64 = vld [vmem:[%s4 + $0x98] sm:$0xff]
  %v65 = vld [vmem:[%s4 + $0xa0] sm:$0xff]
  %v66 = vld [vmem:[%s4 + $0xa8] sm:$0xff]
  %v67 = vld [vmem:[%s4 + $0xb0] sm:$0xff]
  %v68 = vld [vmem:[%s4 + $0xb8] sm:$0xff]
  %v69 = vld [vmem:[%s4 + $0xc0] sm:$0xff]
  %v70 = vld [vmem:[%s4 + $0xc8] sm:$0xff]
  %v71 = vld [vmem:[%s4 + $0xd0] sm:$0xff]
  %v72 = vld [vmem:[%s4 + $0xd8] sm:$0xff]
  %v73 = vld [vmem:[%s4 + $0xe0] sm:$0xff]
  %v74 = vld [vmem:[%s4 + $0xe8] sm:$0xff]
  %v75 = vld [vmem:[%s4 + $0xf0] sm:$0xff]
  %v76 = vld [vmem:[%s4 + $0xf8] sm:$0xff]
  %v77 = vld [vmem:[%s4 + $0x100] sm:$0xff]
  %v78 = vld [vmem:[%s4 + $0x108] sm:$0xff]
  %v79 = vld [vmem:[%s4 + $0x110] sm:$0xff]
  %v80 = vld [vmem:[%s4 + $0x118] sm:$0xff]
  %v81 = vld [vmem:[%s4 + $0x120] sm:$0xff]
  %v82 = vld [vmem:[%s4 + $0x128] sm:$0xff]
  %v83 = vld [vmem:[%s4 + $0x130] sm:$0xff]
  %v84 = vld [vmem:[%s4 + $0x138] sm:$0xff]
  %v85 = vld [vmem:[%s4 + $0x140] sm:$0xff]
  %v86 = vld [vmem:[%s4 + $0x148] sm:$0xff]
  %v87 = vld [vmem:[%s4 + $0x150] sm:$0xff]
  %v88 = vld [vmem:[%s4 + $0x158] sm:$0xff]
  %v89 = vld [vmem:[%s4 + $0x160] sm:$0xff]
  %v90 = vld [vmem:[%s4 + $0x168] sm:$0xff]
  %v91 = vld [vmem:[%s4 + $0x170] sm:$0xff]
  %v92 = vld [vmem:[%s4 + $0x178] sm:$0xff]
  %v93 = vld [vmem:[%s4 + $0x180] sm:$0xff]
  %v94 = vld [vmem:[%s4 + $0x188] sm:$0xff]
  %v95 = vld [vmem:[%s4 + $0x190] sm:$0xff]
  %v96 = vld [vmem:[%s4 + $0x198] sm:$0xff]
  %v97 = vld [vmem:[%s4 + $0x1a0] sm:$0xff]
  %v98 = vld [vmem:[%s4 + $0x1a8] sm:$0xff]
  %v99 = vld [vmem:[%s4 + $0x1b0] sm:$0xff]
  %v100 = vld [vmem:[%s4 + $0x1b8] sm:$0xff]
  %v101 = vld [vmem:[%s4 + $0x1c0] sm:$0xff]
  %v102 = vld [vmem:[%s4 + $0x1c8] sm:$0xff]
  %v103 = vld [vmem:[%s4 + $0x1d0] sm:$0xff]
  %v104 = vld [vmem:[%s4 + $0x1d8] sm:$0xff]
  %v105 = vld [vmem:[%s4 + $0x1e0] sm:$0xff]
  %v106 = vld [vmem:[%s4 + $0x1e8] sm:$0xff]
  %v107 = vld [vmem:[%s4 + $0x1f0] sm:$0xff]
  %v108 = vld [vmem:[%s4 + $0x1f8] sm:$0xff]
  %v109 = vld [vmem:[%s4 + $0x200] sm:$0xff]
  %v110 = vld [vmem:[%s4 + $0x208] sm:$0xff]
  %v111 = vld [vmem:[%s4 + $0x210] sm:$0xff]
  %v112 = vld [vmem:[%s4 + $0x218] sm:$0xff]
  %v113 = vld [vmem:[%s4 + $0x220] sm:$0xff]
  %v114 = vld [vmem:[%s4 + $0x228] sm:$0xff]
  %v115 = vld [vmem:[%s4 + $0x230] sm:$0xff]
  %v116 = vld [vmem:[%s4 + $0x238] sm:$0xff]
  %v117 = vld [vmem:[%s4 + $0x240] sm:$0xff]
  %v118 = vld [vmem:[%s4 + $0x248] sm:$0xff]
  %v119 = vld [vmem:[%s4 + $0x250] sm:$0xff]
  %v120 = vld [vmem:[%s4 + $0x258] sm:$0xff]
  %v121 = vld [vmem:[%s4 + $0x260] sm:$0xff]
  %v122 = vld [vmem:[%s4 + $0x268] sm:$0xff]
  %v123 = vld [vmem:[%s4 + $0x270] sm:$0xff]
  %v124 = vld [vmem:[%s4 + $0x278] sm:$0xff]
  %v125 = vld [vmem:[%s4 + $0x280] sm:$0xff]
  %v126 = vld [vmem:[%s4 + $0x288] sm:$0xff]
  %v127 = vld [vmem:[%s4 + $0x290] sm:$0xff]
  %v128 = vld [vmem:[%s4 + $0x298] sm:$0xff]
  %v129 = vld [vmem:[%s4 + $0x2a0] sm:$0xff]
  %v130 = vld [vmem:[%s4 + $0x2a8] sm:$0xff]
  %v131 = vld [vmem:[%s4 + $0x2b0] sm:$0xff]
  %v132 = vld [vmem:[%s4 + $0x2b8] sm:$0xff]
  %v133 = vld [vmem:[%s4 + $0x2c0] sm:$0xff]
  %v134 = vld [vmem:[%s4 + $0x2c8] sm:$0xff]
  %v135 = vld [vmem:[%s4 + $0x2d0] sm:$0xff]
  %v136 = vld [vmem:[%s4 + $0x2d8] sm:$0xff]
  %v137 = vld [vmem:[%s4 + $0x2e0] sm:$0xff]
  %v138 = vld [vmem:[%s4 + $0x2e8] sm:$0xff]
  %v139 = vld [vmem:[%s4 + $0x2f0] sm:$0xff]
  %v140 = vld [vmem:[%s4 + $0x2f8] sm:$0xff]
  %v141 = vld [vmem:[%s4 + $0x300] sm:$0xff]
  %v142 = vld [vmem:[%s4 + $0x308] sm:$0xff]
  %v143 = vld [vmem:[%s4 + $0x310] sm:$0xff]
  %v144 = vld [vmem:[%s4 + $0x318] sm:$0xff]
  %v145 = vld [vmem:[%s4 + $0x320] sm:$0xff]
  %v146 = vld [vmem:[%s4 + $0x328] sm:$0xff]
  %v147 = vld [vmem:[%s4 + $0x330] sm:$0xff]
  %v148 = vld [vmem:[%s4 + $0x338] sm:$0xff]
  %v149 = vld [vmem:[%s4 + $0x340] sm:$0xff]
  %v150 = vld [vmem:[%s4 + $0x348] sm:$0xff]
  %v151 = vld [vmem:[%s4 + $0x350] sm:$0xff]
  %v152 = vld [vmem:[%s4 + $0x358] sm:$0xff]
  %v153 = vld [vmem:[%s4 + $0x360] sm:$0xff]
  %v154 = vld [vmem:[%s4 + $0x368] sm:$0xff]
  %v155 = vld [vmem:[%s4 + $0x370] sm:$0xff]
  %v156 = vld [vmem:[%s4 + $0x378] sm:$0xff]
  %v157 = vld [vmem:[%s4 + $0x380] sm:$0xff]
  %v158 = vld [vmem:[%s4 + $0x388] sm:$0xff]
  %v159 = vld [vmem:[%s4 + $0x390] sm:$0xff]
  %v160 = vld [vmem:[%s4 + $0x398] sm:$0xff]
  %v161 = vld [vmem:[%s4 + $0x3a0] sm:$0xff]
  %v162 = vld [vmem:[%s4 + $0x3a8] sm:$0xff]
  %v163 = vld [vmem:[%s4 + $0x3b0] sm:$0xff]
  %v164 = vld [vmem:[%s4 + $0x3b8] sm:$0xff]
  %v165 = vld [vmem:[%s4 + $0x3c0] sm:$0xff]
  %v166 = vld [vmem:[%s4 + $0x3c8] sm:$0xff]
  %v167 = vld [vmem:[%s4 + $0x3d0] sm:$0xff]
  %v168 = vld [vmem:[%s4 + $0x3d8] sm:$0xff]
  %v169 = vld [vmem:[%s4 + $0x3e0] sm:$0xff]
  %v170 = vld [vmem:[%s4 + $0x3e8] sm:$0xff]
  %v171 = vld [vmem:[%s4 + $0x3f0] sm:$0xff]
  %v172 = vld [vmem:[%s4 + $0x3f8] sm:$0xff]
  %v173 = vld [vmem:[%s4 + $0x400] sm:$0xff]
  %v174 = vld [vmem:[%s4 + $0x408] sm:$0xff]
  %v175 = vld [vmem:[%s4 + $0x410] sm:$0xff]
  %v176 = vld [vmem:[%s4 + $0x418] sm:$0xff]
  %v177 = vld [vmem:[%s4 + $0x420] sm:$0xff]
  %v178 = vld [vmem:[%s4 + $0x428] sm:$0xff]
  %v179 = vld [vmem:[%s4 + $0x430] sm:$0xff]
  %v180 = vld [vmem:[%s4 + $0x438] sm:$0xff]
  %v181 = vld [vmem:[%s4 + $0x440] sm:$0xff]
  %v182 = vld [vmem:[%s4 + $0x448] sm:$0xff]
  %v183 = vld [vmem:[%s4 + $0x450] sm:$0xff]
  %v184 = vld [vmem:[%s4 + $0x458] sm:$0xff]
  %v185 = vld [vmem:[%s4 + $0x460] sm:$0xff]
  %v186 = vld [vmem:[%s4 + $0x468] sm:$0xff]
  %v187 = vld [vmem:[%s4 + $0x470] sm:$0xff]
  %v188 = vld [vmem:[%s4 + $0x478] sm:$0xff]
  %v189 = vld [vmem:[%s4 + $0x480] sm:$0xff]
  %v190 = vld [vmem:[%s4 + $0x488] sm:$0xff]
  %v191 = vld [vmem:[%s4 + $0x490] sm:$0xff]
  %v192 = vld [vmem:[%s4 + $0x498] sm:$0xff]
  %v193 = vld [vmem:[%s4 + $0x4a0] sm:$0xff]
  %v194 = vld [vmem:[%s4 + $0x4a8] sm:$0xff]
  %v195 = vld [vmem:[%s4 + $0x4b0] sm:$0xff]
  %v196 = vld [vmem:[%s4 + $0x4b8] sm:$0xff]
  %v197 = vld [vmem:[%s4 + $0x4c0] sm:$0xff]
  %v198 = vld [vmem:[%s4 + $0x4c8] sm:$0xff]
  %v199 = vld [vmem:[%s4 + $0x4d0] sm:$0xff]
  %v200 = vld [vmem:[%s4 + $0x4d8] sm:$0xff]
  %v201 = vld [vmem:[%s4 + $0x4e0] sm:$0xff]
  %v202 = vld [vmem:[%s4 + $0x4e8] sm:$0xff]
  %v203 = vld [vmem:[%s4 + $0x4f0] sm:$0xff]
  %v204 = vld [vmem:[%s4 + $0x4f8] sm:$0xff]
  %v205 = vld [vmem:[%s4 + $0x500] sm:$0xff]
  %v206 = vld [vmem:[%s4 + $0x508] sm:$0xff]
  %v207 = vld [vmem:[%s4 + $0x510] sm:$0xff]
  %v208 = vld [vmem:[%s4 + $0x518] sm:$0xff]
  %v209 = vld [vmem:[%s4 + $0x520] sm:$0xff]
  %v210 = vld [vmem:[%s4 + $0x528] sm:$0xff]
  %v211 = vld [vmem:[%s4 + $0x530] sm:$0xff]
  %v212 = vld [vmem:[%s4 + $0x538] sm:$0xff]
  %v213 = vld [vmem:[%s4 + $0x540] sm:$0xff]
  %v214 = vld [vmem:[%s4 + $0x548] sm:$0xff]
  %v215 = vld [vmem:[%s4 + $0x550] sm:$0xff]
  %v216 = vld [vmem:[%s4 + $0x558] sm:$0xff]
  %v217 = vld [vmem:[%s4 + $0x560] sm:$0xff]
  %v218 = vld [vmem:[%s4 + $0x568] sm:$0xff]
  %v219 = vld [vmem:[%s4 + $0x570] sm:$0xff]
  %v220 = vld [vmem:[%s4 + $0x578] sm:$0xff]
  %v221 = vld [vmem:[%s4 + $0x580] sm:$0xff]
  %v222 = vld [vmem:[%s4 + $0x588] sm:$0xff]
  %v223 = vld [vmem:[%s4 + $0x590] sm:$0xff]
  %v224 = vld [vmem:[%s4 + $0x598] sm:$0xff]
  %v225 = vld [vmem:[%s4 + $0x5a0] sm:$0xff]
  %v226 = vld [vmem:[%s4 + $0x5a8] sm:$0xff]
  %v227 = vld [vmem:[%s4 + $0x5b0] sm:$0xff]
  %v228 = vld [vmem:[%s4 + $0x5b8] sm:$0xff]
  %v229 = vld [vmem:[%s4 + $0x5c0] sm:$0xff]
  %v230 = vld [vmem:[%s4 + $0x5c8] sm:$0xff]
  %v231 = vld [vmem:[%s4 + $0x5d0] sm:$0xff]
  %v232 = vld [vmem:[%s4 + $0x5d8] sm:$0xff]
  %v233 = vld [vmem:[%s4 + $0x5e0] sm:$0xff]
  %v234 = vld [vmem:[%s4 + $0x5e8] sm:$0xff]
  %v235 = vld [vmem:[%s4 + $0x5f0] sm:$0xff]
  %v236 = vld [vmem:[%s4 + $0x5f8] sm:$0xff]
  %v237 = vld [vmem:[%s4 + $0x600] sm:$0xff]
  %v238 = vld [vmem:[%s4 + $0x608] sm:$0xff]
  %v239 = vld [vmem:[%s4 + $0x610] sm:$0xff]
  %v240 = vld [vmem:[%s4 + $0x618] sm:$0xff]
  %v241 = vld [vmem:[%s4 + $0x620] sm:$0xff]
  %v242 = vld [vmem:[%s4 + $0x628] sm:$0xff]
  %v243 = vld [vmem:[%s4 + $0x630] sm:$0xff]
  %v244 = vld [vmem:[%s4 + $0x638] sm:$0xff]
  %v245 = vld [vmem:[%s4 + $0x640] sm:$0xff]
  %v246 = vld [vmem:[%s4 + $0x648] sm:$0xff]
  %v247 = vld [vmem:[%s4 + $0x650] sm:$0xff]
  %v248 = vld [vmem:[%s4 + $0x658] sm:$0xff]
  %v249 = vld [vmem:[%s4 + $0x660] sm:$0xff]
  %v250 = vld [vmem:[%s4 + $0x668] sm:$0xff]
  %v251 = vld [vmem:[%s4 + $0x670] sm:$0xff]
  %v252 = vld [vmem:[%s4 + $0x678] sm:$0xff]
  %v253 = vld [vmem:[%s4 + $0x680] sm:$0xff]
  %v254 = vld [vmem:[%s4 + $0x688] sm:$0xff]
  %v255 = vld [vmem:[%s4 + $0x690] sm:$0xff]
  %v256 = vld [vmem:[%s4 + $0x698] sm:$0xff]
  %v257 = vld [vmem:[%s4 + $0x6a0] sm:$0xff]
  %v258 = vld [vmem:[%s4 + $0x6a8] sm:$0xff]
  %v259 = vld [vmem:[%s4 + $0x6b0] sm:$0xff]
  %v260 = vld [vmem:[%s4 + $0x6b8] sm:$0xff]
  %v261 = vld [vmem:[%s4 + $0x6c0] sm:$0xff]
  %v262 = vld [vmem:[%s4 + $0x6c8] sm:$0xff]
  %v263 = vld [vmem:[%s4 + $0x6d0] sm:$0xff]
  %v264 = vld [vmem:[%s4 + $0x6d8] sm:$0xff]
  %v265 = vld [vmem:[%s4 + $0x6e0] sm:$0xff]
  %v266 = vld [vmem:[%s4 + $0x6e8] sm:$0xff]
  %v267 = vld [vmem:[%s4 + $0x6f0] sm:$0xff]
  %v268 = vld [vmem:[%s4 + $0x6f8] sm:$0xff]
  %v269 = vld [vmem:[%s4 + $0x700] sm:$0xff]
  %v270 = vld [vmem:[%s4 + $0x708] sm:$0xff]
  %v271 = vld [vmem:[%s4 + $0x710] sm:$0xff]
  %v272 = vld [vmem:[%s4 + $0x718] sm:$0xff]
  %v273 = vld [vmem:[%s4 + $0x720] sm:$0xff]
  %v274 = vld [vmem:[%s4 + $0x728] sm:$0xff]
  %v275 = vld [vmem:[%s4 + $0x730] sm:$0xff]
  %v276 = vld [vmem:[%s4 + $0x738] sm:$0xff]
  %v277 = vld [vmem:[%s4 + $0x740] sm:$0xff]
  %v278 = vld [vmem:[%s4 + $0x748] sm:$0xff]
  %v279 = vld [vmem:[%s4 + $0x750] sm:$0xff]
  %v280 = vld [vmem:[%s4 + $0x758] sm:$0xff]
  %v281 = vld [vmem:[%s4 + $0x760] sm:$0xff]
  %v282 = vld [vmem:[%s4 + $0x768] sm:$0xff]
  %v283 = vld [vmem:[%s4 + $0x770] sm:$0xff]
  %v284 = vld [vmem:[%s4 + $0x778] sm:$0xff]
  %v285 = vld [vmem:[%s4 + $0x780] sm:$0xff]
  %v286 = vld [vmem:[%s4 + $0x788] sm:$0xff]
  %v287 = vld [vmem:[%s4 + $0x790] sm:$0xff]
  %v288 = vld [vmem:[%s4 + $0x798] sm:$0xff]
  %v289 = vld [vmem:[%s4 + $0x7a0] sm:$0xff]
  %v290 = vld [vmem:[%s4 + $0x7a8] sm:$0xff]
  %v291 = vld [vmem:[%s4 + $0x7b0] sm:$0xff]
  %v292 = vld [vmem:[%s4 + $0x7b8] sm:$0xff]
  %v293 = vld [vmem:[%s4 + $0x7c0] sm:$0xff]
  %v294 = vld [vmem:[%s4 + $0x7c8] sm:$0xff]
  %v295 = vld [vmem:[%s4 + $0x7d0] sm:$0xff]
  %v296 = vld [vmem:[%s4 + $0x7d8] sm:$0xff]
  %v297 = vld [vmem:[%s4 + $0x7e0] sm:$0xff]
  %v298 = vld [vmem:[%s4 + $0x7e8] sm:$0xff]
  %v299 = vld [vmem:[%s4 + $0x7f0] sm:$0xff]
  %v300 = vld [vmem:[%s4 + $0x7f8] sm:$0xff]
  %v301 = vld [vmem:[%s4 + $0x800] sm:$0xff]
  %v302 = vld [vmem:[%s4 + $0x808] sm:$0xff]
  %v303 = vld [vmem:[%s4 + $0x810] sm:$0xff]
  %v304 = vld [vmem:[%s4 + $0x818] sm:$0xff]
  %v305 = vld [vmem:[%s4 + $0x820] sm:$0xff]
  %v306 = vld [vmem:[%s4 + $0x828] sm:$0xff]
  %v307 = vld [vmem:[%s4 + $0x830] sm:$0xff]
  %v308 = vld [vmem:[%s4 + $0x838] sm:$0xff]
  %v309 = vld [vmem:[%s4 + $0x840] sm:$0xff]
  %v310 = vld [vmem:[%s4 + $0x848] sm:$0xff]
  %v311 = vld [vmem:[%s4 + $0x850] sm:$0xff]
  %v312 = vld [vmem:[%s4 + $0x858] sm:$0xff]
  %v313 = vld [vmem:[%s4 + $0x860] sm:$0xff]
  %v314 = vld [vmem:[%s4 + $0x868] sm:$0xff]
  %v315 = vld [vmem:[%s4 + $0x870] sm:$0xff]
  %v316 = vld [vmem:[%s4 + $0x878] sm:$0xff]
  %v317 = vld [vmem:[%s4 + $0x880] sm:$0xff]
  %v318 = vld [vmem:[%s4 + $0x888] sm:$0xff]
  %v319 = vld [vmem:[%s4 + $0x890] sm:$0xff]
  %v320 = vld [vmem:[%s4 + $0x898] sm:$0xff]
  %v321 = vld [vmem:[%s4 + $0x8a0] sm:$0xff]
  %v322 = vld [vmem:[%s4 + $0x8a8] sm:$0xff]
  %v323 = vld [vmem:[%s4 + $0x8b0] sm:$0xff]
  %v324 = vld [vmem:[%s4 + $0x8b8] sm:$0xff]
  %v325 = vld [vmem:[%s4 + $0x8c0] sm:$0xff]
  %v326 = vld [vmem:[%s4 + $0x8c8] sm:$0xff]
  %v327 = vld [vmem:[%s4 + $0x8d0] sm:$0xff]
  %v328 = vld [vmem:[%s4 + $0x8d8] sm:$0xff]
  %v329 = vld [vmem:[%s4 + $0x8e0] sm:$0xff]
  %v330 = vld [vmem:[%s4 + $0x8e8] sm:$0xff]
  %v331 = vld [vmem:[%s4 + $0x8f0] sm:$0xff]
  %v332 = vld [vmem:[%s4 + $0x8f8] sm:$0xff]
  %v333 = vld [vmem:[%s4 + $0x900] sm:$0xff]
  %v334 = vld [vmem:[%s4 + $0x908] sm:$0xff]
  %v335 = vld [vmem:[%s4 + $0x910] sm:$0xff]
  %v336 = vld [vmem:[%s4 + $0x918] sm:$0xff]
  %v337 = vld [vmem:[%s4 + $0x920] sm:$0xff]
  %v338 = vld [vmem:[%s4 + $0x928] sm:$0xff]
  %v339 = vld [vmem:[%s4 + $0x930] sm:$0xff]
  %v340 = vld [vmem:[%s4 + $0x938] sm:$0xff]
  %v341 = vld [vmem:[%s4 + $0x940] sm:$0xff]
  %v342 = vld [vmem:[%s4 + $0x948] sm:$0xff]
  %v343 = vld [vmem:[%s4 + $0x950] sm:$0xff]
  %v344 = vld [vmem:[%s4 + $0x958] sm:$0xff]
  %v345 = vld [vmem:[%s4 + $0x960] sm:$0xff]
  %v346 = vld [vmem:[%s4 + $0x968] sm:$0xff]
  %v347 = vld [vmem:[%s4 + $0x970] sm:$0xff]
  %v348 = vld [vmem:[%s4 + $0x978] sm:$0xff]
  %v349 = vld [vmem:[%s4 + $0x980] sm:$0xff]
  %v350 = vld [vmem:[%s4 + $0x988] sm:$0xff]
  %v351 = vld [vmem:[%s4 + $0x990] sm:$0xff]
  %v352 = vld [vmem:[%s4 + $0x998] sm:$0xff]
  %v353 = vld [vmem:[%s4 + $0x9a0] sm:$0xff]
  %v354 = vld [vmem:[%s4 + $0x9a8] sm:$0xff]
  %v355 = vld [vmem:[%s4 + $0x9b0] sm:$0xff]
  %v356 = vld [vmem:[%s4 + $0x9b8] sm:$0xff]
  %v357 = vld [vmem:[%s4 + $0x9c0] sm:$0xff]
  %v358 = vld [vmem:[%s4 + $0x9c8] sm:$0xff]
  %v359 = vld [vmem:[%s4 + $0x9d0] sm:$0xff]
  %v360 = vld [vmem:[%s4 + $0x9d8] sm:$0xff]
  %v361 = vld [vmem:[%s4 + $0x9e0] sm:$0xff]
  %v362 = vld [vmem:[%s4 + $0x9e8] sm:$0xff]
  %v363 = vld [vmem:[%s4 + $0x9f0] sm:$0xff]
  %v364 = vld [vmem:[%s4 + $0x9f8] sm:$0xff]
  %v365 = vld [vmem:[%s4 + $0xa00] sm:$0xff]
  %v366 = vld [vmem:[%s4 + $0xa08] sm:$0xff]
  %v367 = vld [vmem:[%s4 + $0xa10] sm:$0xff]
  %v368 = vld [vmem:[%s4 + $0xa18] sm:$0xff]
  %v369 = vld [vmem:[%s4 + $0xa20] sm:$0xff]
  %v370 = vld [vmem:[%s4 + $0xa28] sm:$0xff]
  %v371 = vld [vmem:[%s4 + $0xa30] sm:$0xff]
  %v372 = vld [vmem:[%s4 + $0xa38] sm:$0xff]
  %v373 = vld [vmem:[%s4 + $0xa40] sm:$0xff]
  %v374 = vld [vmem:[%s4 + $0xa48] sm:$0xff]
  %v375 = vld [vmem:[%s4 + $0xa50] sm:$0xff]
  %v376 = vld [vmem:[%s4 + $0xa58] sm:$0xff]
  %v377 = vld [vmem:[%s4 + $0xa60] sm:$0xff]
  %v378 = vld [vmem:[%s4 + $0xa68] sm:$0xff]
  %v379 = vld [vmem:[%s4 + $0xa70] sm:$0xff]
  %v380 = vld [vmem:[%s4 + $0xa78] sm:$0xff]
  %v381 = vld [vmem:[%s4 + $0xa80] sm:$0xff]
  %v382 = vld [vmem:[%s4 + $0xa88] sm:$0xff]
  %v383 = vld [vmem:[%s4 + $0xa90] sm:$0xff]
  %v384 = vld [vmem:[%s4 + $0xa98] sm:$0xff]
  %v385 = vld [vmem:[%s4 + $0xaa0] sm:$0xff]
  %v386 = vld [vmem:[%s4 + $0xaa8] sm:$0xff]
  %v387 = vld [vmem:[%s4 + $0xab0] sm:$0xff]
  %v388 = vld [vmem:[%s4 + $0xab8] sm:$0xff]
  %v389 = vld [vmem:[%s4 + $0xac0] sm:$0xff]
  %v390 = vld [vmem:[%s4 + $0xac8] sm:$0xff]
  %v391 = vld [vmem:[%s4 + $0xad0] sm:$0xff]
  %v392 = vld [vmem:[%s4 + $0xad8] sm:$0xff]
  %v393 = vld [vmem:[%s4 + $0xae0] sm:$0xff]
  %v394 = vld [vmem:[%s4 + $0xae8] sm:$0xff]
  %v395 = vld [vmem:[%s4 + $0xaf0] sm:$0xff]
  %v396 = vld [vmem:[%s4 + $0xaf8] sm:$0xff]
  %v397 = vld [vmem:[%s4 + $0xb00] sm:$0xff]
  %v398 = vld [vmem:[%s4 + $0xb08] sm:$0xff]
  %v399 = vld [vmem:[%s4 + $0xb10] sm:$0xff]
  %v400 = vld [vmem:[%s4 + $0xb18] sm:$0xff]
  %v401 = vld [vmem:[%s4 + $0xb20] sm:$0xff]
  %v402 = vld [vmem:[%s4 + $0xb28] sm:$0xff]
  %v403 = vld [vmem:[%s4 + $0xb30] sm:$0xff]
  %v404 = vld [vmem:[%s4 + $0xb38] sm:$0xff]
  %v405 = vld [vmem:[%s4 + $0xb40] sm:$0xff]
  %v406 = vld [vmem:[%s4 + $0xb48] sm:$0xff]
  %v407 = vld [vmem:[%s4 + $0xb50] sm:$0xff]
  %v408 = vld [vmem:[%s4 + $0xb58] sm:$0xff]
  %v409 = vld [vmem:[%s4 + $0xb60] sm:$0xff]
  %v410 = vld [vmem:[%s4 + $0xb68] sm:$0xff]
  %v411 = vld [vmem:[%s4 + $0xb70] sm:$0xff]
  %v412 = vld [vmem:[%s4 + $0xb78] sm:$0xff]
  %v413 = vld [vmem:[%s4 + $0xb80] sm:$0xff]
  %v414 = vld [vmem:[%s4 + $0xb88] sm:$0xff]
  %v415 = vld [vmem:[%s4 + $0xb90] sm:$0xff]
  %v416 = vld [vmem:[%s4 + $0xb98] sm:$0xff]
  %v417 = vld [vmem:[%s4 + $0xba0] sm:$0xff]
  %v418 = vld [vmem:[%s4 + $0xba8] sm:$0xff]
  %v419 = vld [vmem:[%s4 + $0xbb0] sm:$0xff]
  %v420 = vld [vmem:[%s4 + $0xbb8] sm:$0xff]
  %v421 = vld [vmem:[%s4 + $0xbc0] sm:$0xff]
  %v422 = vld [vmem:[%s4 + $0xbc8] sm:$0xff]
  %v423 = vld [vmem:[%s4 + $0xbd0] sm:$0xff]
  %v424 = vld [vmem:[%s4 + $0xbd8] sm:$0xff]
  %v425 = vld [vmem:[%s4 + $0xbe0] sm:$0xff]
  %v426 = vld [vmem:[%s4 + $0xbe8] sm:$0xff]
  %v427 = vld [vmem:[%s4 + $0xbf0] sm:$0xff]
  %v428 = vld [vmem:[%s4 + $0xbf8] sm:$0xff]
  %v429 = vld [vmem:[%s4 + $0xc00] sm:$0xff]
  %v430 = vld [vmem:[%s4 + $0xc08] sm:$0xff]
  %v431 = vld [vmem:[%s4 + $0xc10] sm:$0xff]
  %v432 = vld [vmem:[%s4 + $0xc18] sm:$0xff]
  %v433 = vld [vmem:[%s4 + $0xc20] sm:$0xff]
  %v434 = vld [vmem:[%s4 + $0xc28] sm:$0xff]
  %v435 = vld [vmem:[%s4 + $0xc30] sm:$0xff]
  %v436 = vld [vmem:[%s4 + $0xc38] sm:$0xff]
  %v437 = vld [vmem:[%s4 + $0xc40] sm:$0xff]
  %v438 = vld [vmem:[%s4 + $0xc48] sm:$0xff]
  %v439 = vld [vmem:[%s4 + $0xc50] sm:$0xff]
  %v440 = vld [vmem:[%s4 + $0xc58] sm:$0xff]
  %v441 = vld [vmem:[%s4 + $0xc60] sm:$0xff]
  %v442 = vld [vmem:[%s4 + $0xc68] sm:$0xff]
  %v443 = vld [vmem:[%s4 + $0xc70] sm:$0xff]
  %v444 = vld [vmem:[%s4 + $0xc78] sm:$0xff]
  %v445 = vld [vmem:[%s4 + $0xc80] sm:$0xff]
  %v446 = vld [vmem:[%s4 + $0xc88] sm:$0xff]
  %v447 = vld [vmem:[%s4 + $0xc90] sm:$0xff]
  %v448 = vld [vmem:[%s4 + $0xc98] sm:$0xff]
  %v449 = vld [vmem:[%s4 + $0xca0] sm:$0xff]
  %v450 = vld [vmem:[%s4 + $0xca8] sm:$0xff]
  %v451 = vld [vmem:[%s4 + $0xcb0] sm:$0xff]
  %v452 = vld [vmem:[%s4 + $0xcb8] sm:$0xff]
  %v453 = vld [vmem:[%s4 + $0xcc0] sm:$0xff]
  %v454 = vld [vmem:[%s4 + $0xcc8] sm:$0xff]
  %v455 = vld [vmem:[%s4 + $0xcd0] sm:$0xff]
  %v456 = vld [vmem:[%s4 + $0xcd8] sm:$0xff]
  %v457 = vld [vmem:[%s4 + $0xce0] sm:$0xff]
  %v458 = vld [vmem:[%s4 + $0xce8] sm:$0xff]
  %v459 = vld [vmem:[%s4 + $0xcf0] sm:$0xff]
  %v460 = vld [vmem:[%s4 + $0xcf8] sm:$0xff]
  %v461 = vld [vmem:[%s4 + $0xd00] sm:$0xff]
  %v462 = vld [vmem:[%s4 + $0xd08] sm:$0xff]
  %v463 = vld [vmem:[%s4 + $0xd10] sm:$0xff]
  %v464 = vld [vmem:[%s4 + $0xd18] sm:$0xff]
  %v465 = vld [vmem:[%s4 + $0xd20] sm:$0xff]
  %v466 = vld [vmem:[%s4 + $0xd28] sm:$0xff]
  %v467 = vld [vmem:[%s4 + $0xd30] sm:$0xff]
  %v468 = vld [vmem:[%s4 + $0xd38] sm:$0xff]
  %v469 = vld [vmem:[%s4 + $0xd40] sm:$0xff]
  %v470 = vld [vmem:[%s4 + $0xd48] sm:$0xff]
  %v471 = vld [vmem:[%s4 + $0xd50] sm:$0xff]
  %v472 = vld [vmem:[%s4 + $0xd58] sm:$0xff]
  %v473 = vld [vmem:[%s4 + $0xd60] sm:$0xff]
  %v474 = vld [vmem:[%s4 + $0xd68] sm:$0xff]
  %v475 = vld [vmem:[%s4 + $0xd70] sm:$0xff]
  %v476 = vld [vmem:[%s4 + $0xd78] sm:$0xff]
  %v477 = vld [vmem:[%s4 + $0xd80] sm:$0xff]
  %v478 = vld [vmem:[%s4 + $0xd88] sm:$0xff]
  %v479 = vld [vmem:[%s4 + $0xd90] sm:$0xff]
  %v480 = vld [vmem:[%s4 + $0xd98] sm:$0xff]
  %v481 = vld [vmem:[%s4 + $0xda0] sm:$0xff]
  %v482 = vld [vmem:[%s4 + $0xda8] sm:$0xff]
  %v483 = vld [vmem:[%s4 + $0xdb0] sm:$0xff]
  %v484 = vld [vmem:[%s4 + $0xdb8] sm:$0xff]
  %v485 = vld [vmem:[%s4 + $0xdc0] sm:$0xff]
  %v486 = vld [vmem:[%s4 + $0xdc8] sm:$0xff]
  %v487 = vld [vmem:[%s4 + $0xdd0] sm:$0xff]
  %v488 = vld [vmem:[%s4 + $0xdd8] sm:$0xff]
  %v489 = vld [vmem:[%s4 + $0xde0] sm:$0xff]
  %v490 = vld [vmem:[%s4 + $0xde8] sm:$0xff]
  %v491 = vld [vmem:[%s4 + $0xdf0] sm:$0xff]
  %v492 = vld [vmem:[%s4 + $0xdf8] sm:$0xff]
  %v493 = vld [vmem:[%s4 + $0xe00] sm:$0xff]
  %v494 = vld [vmem:[%s4 + $0xe08] sm:$0xff]
  %v495 = vld [vmem:[%s4 + $0xe10] sm:$0xff]
  %v496 = vld [vmem:[%s4 + $0xe18] sm:$0xff]
  %v497 = vld [vmem:[%s4 + $0xe20] sm:$0xff]
  %v498 = vld [vmem:[%s4 + $0xe28] sm:$0xff]
  %v499 = vld [vmem:[%s4 + $0xe30] sm:$0xff]
  %v500 = vld [vmem:[%s4 + $0xe38] sm:$0xff]
  %v501 = vld [vmem:[%s4 + $0xe40] sm:$0xff]
  %v502 = vld [vmem:[%s4 + $0xe48] sm:$0xff]
  %v503 = vld [vmem:[%s4 + $0xe50] sm:$0xff]
  %v504 = vld [vmem:[%s4 + $0xe58] sm:$0xff]
  %v505 = vld [vmem:[%s4 + $0xe60] sm:$0xff]
  %v506 = vld [vmem:[%s4 + $0xe68] sm:$0xff]
  %v507 = vld [vmem:[%s4 + $0xe70] sm:$0xff]
  %v508 = vld [vmem:[%s4 + $0xe78] sm:$0xff]
  %v509 = vld [vmem:[%s4 + $0xe80] sm:$0xff]
  %v510 = vld [vmem:[%s4 + $0xe88] sm:$0xff]
  %v511 = vld [vmem:[%s4 + $0xe90] sm:$0xff]
  %v512 = vld [vmem:[%s4 + $0xe98] sm:$0xff]
  %v513 = vld [vmem:[%s4 + $0xea0] sm:$0xff]
  %v514 = vld [vmem:[%s4 + $0xea8] sm:$0xff]
  %v515 = vld [vmem:[%s4 + $0xeb0] sm:$0xff]
  %v516 = vld [vmem:[%s4 + $0xeb8] sm:$0xff]
  %v517 = vld [vmem:[%s4 + $0xec0] sm:$0xff]
  %v518 = vld [vmem:[%s4 + $0xec8] sm:$0xff]
  %v519 = vld [vmem:[%s4 + $0xed0] sm:$0xff]
  %v520 = vld [vmem:[%s4 + $0xed8] sm:$0xff]
  %v521 = vld [vmem:[%s4 + $0xee0] sm:$0xff]
  %v522 = vld [vmem:[%s4 + $0xee8] sm:$0xff]
  %v523 = vld [vmem:[%s4 + $0xef0] sm:$0xff]
  %v524 = vld [vmem:[%s4 + $0xef8] sm:$0xff]
  %v525 = vld [vmem:[%s4 + $0xf00] sm:$0xff]
  %v526 = vld [vmem:[%s4 + $0xf08] sm:$0xff]
  %v527 = vld [vmem:[%s4 + $0xf10] sm:$0xff]
  %v528 = vld [vmem:[%s4 + $0xf18] sm:$0xff]
  %v529 = vld [vmem:[%s4 + $0xf20] sm:$0xff]
  %v530 = vld [vmem:[%s4 + $0xf28] sm:$0xff]
  %v531 = vld [vmem:[%s4 + $0xf30] sm:$0xff]
  %v532 = vld [vmem:[%s4 + $0xf38] sm:$0xff]
  %v533 = vld [vmem:[%s4 + $0xf40] sm:$0xff]
  %v534 = vld [vmem:[%s4 + $0xf48] sm:$0xff]
  %v535 = vld [vmem:[%s4 + $0xf50] sm:$0xff]
  %v536 = vld [vmem:[%s4 + $0xf58] sm:$0xff]
  %v537 = vld [vmem:[%s4 + $0xf60] sm:$0xff]
  %v538 = vld [vmem:[%s4 + $0xf68] sm:$0xff]
  %v539 = vld [vmem:[%s4 + $0xf70] sm:$0xff]
  %v540 = vld [vmem:[%s4 + $0xf78] sm:$0xff]
  %v541 = vld [vmem:[%s4 + $0xf80] sm:$0xff]
  %v542 = vld [vmem:[%s4 + $0xf88] sm:$0xff]
  %v543 = vld [vmem:[%s4 + $0xf90] sm:$0xff]
  %v544 = vld [vmem:[%s4 + $0xf98] sm:$0xff]
  %v545 = vld [vmem:[%s4 + $0xfa0] sm:$0xff]
  %v546 = vld [vmem:[%s4 + $0xfa8] sm:$0xff]
  %v547 = vld [vmem:[%s4 + $0xfb0] sm:$0xff]
  %v548 = vld [vmem:[%s4 + $0xfb8] sm:$0xff]
  %v549 = vld [vmem:[%s4 + $0xfc0] sm:$0xff]
  %v550 = vld [vmem:[%s4 + $0xfc8] sm:$0xff]
  %v551 = vld [vmem:[%s4 + $0xfd0] sm:$0xff]
  %v552 = vld [vmem:[%s4 + $0xfd8] sm:$0xff]
  %v553 = vld [vmem:[%s4 + $0xfe0] sm:$0xff]
  %v554 = vld [vmem:[%s4 + $0xfe8] sm:$0xff]
  %v555 = vld [vmem:[%s4 + $0xff0] sm:$0xff]
  %v556 = vld [vmem:[%s4 + $0xff8] sm:$0xff]
  %v557 = vld [vmem:[%s1] sm:$0xff]
  %v558 = vld [vmem:[%s1 + $0x8] sm:$0xff]
  %v559 = vld [vmem:[%s1 + $0x10] sm:$0xff]
  %v560 = vld [vmem:[%s1 + $0x18] sm:$0xff]
  %v561 = vld [vmem:[%s1 + $0x20] sm:$0xff]
  %v562 = vld [vmem:[%s1 + $0x28] sm:$0xff]
  %v563 = vld [vmem:[%s1 + $0x30] sm:$0xff]
  %v564 = vld [vmem:[%s1 + $0x38] sm:$0xff]
  %v565 = vld [vmem:[%s1 + $0x40] sm:$0xff]
  %v566 = vld [vmem:[%s1 + $0x48] sm:$0xff]
  %v567 = vld [vmem:[%s1 + $0x50] sm:$0xff]
  %v568 = vld [vmem:[%s1 + $0x58] sm:$0xff]
  %v569 = vld [vmem:[%s1 + $0x60] sm:$0xff]
  %v570 = vld [vmem:[%s1 + $0x68] sm:$0xff]
  %v571 = vld [vmem:[%s1 + $0x70] sm:$0xff]
  %v572 = vld [vmem:[%s1 + $0x78] sm:$0xff]
  %v573 = vld [vmem:[%s4 + $0x1000] sm:$0xff]
  %v574 = vld [vmem:[%s4 + $0x1008] sm:$0xff]
  %v575 = vld [vmem:[%s4 + $0x1010] sm:$0xff]
  %v576 = vld [vmem:[%s4 + $0x1018] sm:$0xff]
  %v577 = vld [vmem:[%s4 + $0x1020] sm:$0xff]
  %v578 = vld [vmem:[%s4 + $0x1028] sm:$0xff]
  %v579 = vld [vmem:[%s4 + $0x1030] sm:$0xff]
  %v580 = vld [vmem:[%s4 + $0x1038] sm:$0xff]
  %v581 = vld [vmem:[%s4 + $0x1040] sm:$0xff]
  %v582 = vld [vmem:[%s4 + $0x1048] sm:$0xff]
  %v583 = vld [vmem:[%s4 + $0x1050] sm:$0xff]
  %v584 = vld [vmem:[%s4 + $0x1058] sm:$0xff]
  %v585 = vld [vmem:[%s4 + $0x1060] sm:$0xff]
  %v586 = vld [vmem:[%s4 + $0x1068] sm:$0xff]
  %v587 = vld [vmem:[%s4 + $0x1070] sm:$0xff]
  %v588 = vld [vmem:[%s4 + $0x1078] sm:$0xff]
  %v589 = vld [vmem:[%s4 + $0x1080] sm:$0xff]
  %v590 = vld [vmem:[%s4 + $0x1088] sm:$0xff]
  %v591 = vld [vmem:[%s4 + $0x1090] sm:$0xff]
  %v592 = vld [vmem:[%s4 + $0x1098] sm:$0xff]
  %v593 = vld [vmem:[%s4 + $0x10a0] sm:$0xff]
  %v594 = vld [vmem:[%s4 + $0x10a8] sm:$0xff]
  %v595 = vld [vmem:[%s4 + $0x10b0] sm:$0xff]
  %v596 = vld [vmem:[%s4 + $0x10b8] sm:$0xff]
  %v597 = vld [vmem:[%s4 + $0x10c0] sm:$0xff]
  %v598 = vld [vmem:[%s4 + $0x10c8] sm:$0xff]
  %v599 = vld [vmem:[%s4 + $0x10d0] sm:$0xff]
  %v600 = vld [vmem:[%s4 + $0x10d8] sm:$0xff]
  %v601 = vld [vmem:[%s4 + $0x10e0] sm:$0xff]
  %v602 = vld [vmem:[%s4 + $0x10e8] sm:$0xff]
  %v603 = vld [vmem:[%s4 + $0x10f0] sm:$0xff]
  %v604 = vld [vmem:[%s4 + $0x10f8] sm:$0xff]
  %v605 = vld [vmem:[%s4 + $0x1100] sm:$0xff]
  %v606 = vld [vmem:[%s4 + $0x1108] sm:$0xff]
  %v607 = vld [vmem:[%s4 + $0x1110] sm:$0xff]
  %v608 = vld [vmem:[%s4 + $0x1118] sm:$0xff]
  %v609 = vld [vmem:[%s4 + $0x1120] sm:$0xff]
  %v610 = vld [vmem:[%s4 + $0x1128] sm:$0xff]
  %v611 = vld [vmem:[%s4 + $0x1130] sm:$0xff]
  %v612 = vld [vmem:[%s4 + $0x1138] sm:$0xff]
  %v613 = vld [vmem:[%s4 + $0x1140] sm:$0xff]
  %v614 = vld [vmem:[%s4 + $0x1148] sm:$0xff]
  %v615 = vld [vmem:[%s4 + $0x1150] sm:$0xff]
  %v616 = vld [vmem:[%s4 + $0x1158] sm:$0xff]
  %v617 = vld [vmem:[%s4 + $0x1160] sm:$0xff]
  %v618 = vld [vmem:[%s4 + $0x1168] sm:$0xff]
  %v619 = vld [vmem:[%s4 + $0x1170] sm:$0xff]
  %v620 = vld [vmem:[%s4 + $0x1178] sm:$0xff]
  %v621 = vld [vmem:[%s4 + $0x1180] sm:$0xff]
  %v622 = vld [vmem:[%s4 + $0x1188] sm:$0xff]
  %v623 = vld [vmem:[%s4 + $0x1190] sm:$0xff]
  %v624 = vld [vmem:[%s4 + $0x1198] sm:$0xff]
  %v625 = vld [vmem:[%s4 + $0x11a0] sm:$0xff]
  %v626 = vld [vmem:[%s4 + $0x11a8] sm:$0xff]
  %v627 = vld [vmem:[%s4 + $0x11b0] sm:$0xff]
  %v628 = vld [vmem:[%s4 + $0x11b8] sm:$0xff]
  %v629 = vld [vmem:[%s4 + $0x11c0] sm:$0xff]
  %v630 = vld [vmem:[%s4 + $0x11c8] sm:$0xff]
  %v631 = vld [vmem:[%s4 + $0x11d0] sm:$0xff]
  %v632 = vld [vmem:[%s4 + $0x11d8] sm:$0xff]
  %v633 = vld [vmem:[%s4 + $0x11e0] sm:$0xff]
  %v634 = vld [vmem:[%s4 + $0x11e8] sm:$0xff]
  %v635 = vld [vmem:[%s4 + $0x11f0] sm:$0xff]
  %v636 = vld [vmem:[%s4 + $0x11f8] sm:$0xff]
  %v637 = vld [vmem:[%s4 + $0x1200] sm:$0xff]
  %v638 = vld [vmem:[%s4 + $0x1208] sm:$0xff]
  %v639 = vld [vmem:[%s4 + $0x1210] sm:$0xff]
  %v640 = vld [vmem:[%s4 + $0x1218] sm:$0xff]
  %v641 = vld [vmem:[%s4 + $0x1220] sm:$0xff]
  %v642 = vld [vmem:[%s4 + $0x1228] sm:$0xff]
  %v643 = vld [vmem:[%s4 + $0x1230] sm:$0xff]
  %v644 = vld [vmem:[%s4 + $0x1238] sm:$0xff]
  %v645 = vld [vmem:[%s4 + $0x1240] sm:$0xff]
  %v646 = vld [vmem:[%s4 + $0x1248] sm:$0xff]
  %v647 = vld [vmem:[%s4 + $0x1250] sm:$0xff]
  %v648 = vld [vmem:[%s4 + $0x1258] sm:$0xff]
  %v649 = vld [vmem:[%s4 + $0x1260] sm:$0xff]
  %v650 = vld [vmem:[%s4 + $0x1268] sm:$0xff]
  %v651 = vld [vmem:[%s4 + $0x1270] sm:$0xff]
  %v652 = vld [vmem:[%s4 + $0x1278] sm:$0xff]
  %v653 = vld [vmem:[%s4 + $0x1280] sm:$0xff]
  %v654 = vld [vmem:[%s4 + $0x1288] sm:$0xff]
  %v655 = vld [vmem:[%s4 + $0x1290] sm:$0xff]
  %v656 = vld [vmem:[%s4 + $0x1298] sm:$0xff]
  %v657 = vld [vmem:[%s4 + $0x12a0] sm:$0xff]
  %v658 = vld [vmem:[%s4 + $0x12a8] sm:$0xff]
  %v659 = vld [vmem:[%s4 + $0x12b0] sm:$0xff]
  %v660 = vld [vmem:[%s4 + $0x12b8] sm:$0xff]
  %v661 = vld [vmem:[%s4 + $0x12c0] sm:$0xff]
  %v662 = vld [vmem:[%s4 + $0x12c8] sm:$0xff]
  %v663 = vld [vmem:[%s4 + $0x12d0] sm:$0xff]
  %v664 = vld [vmem:[%s4 + $0x12d8] sm:$0xff]
  %v665 = vld [vmem:[%s4 + $0x12e0] sm:$0xff]
  %v666 = vld [vmem:[%s4 + $0x12e8] sm:$0xff]
  %v667 = vld [vmem:[%s4 + $0x12f0] sm:$0xff]
  %v668 = vld [vmem:[%s4 + $0x12f8] sm:$0xff]
  %v669 = vld [vmem:[%s4 + $0x1300] sm:$0xff]
  %v670 = vld [vmem:[%s4 + $0x1308] sm:$0xff]
  %v671 = vld [vmem:[%s4 + $0x1310] sm:$0xff]
  %v672 = vld [vmem:[%s4 + $0x1318] sm:$0xff]
  %v673 = vld [vmem:[%s4 + $0x1320] sm:$0xff]
  %v674 = vld [vmem:[%s4 + $0x1328] sm:$0xff]
  %v675 = vld [vmem:[%s4 + $0x1330] sm:$0xff]
  %v676 = vld [vmem:[%s4 + $0x1338] sm:$0xff]
  %v677 = vld [vmem:[%s4 + $0x1340] sm:$0xff]
  %v678 = vld [vmem:[%s4 + $0x1348] sm:$0xff]
  %v679 = vld [vmem:[%s4 + $0x1350] sm:$0xff]
  %v680 = vld [vmem:[%s4 + $0x1358] sm:$0xff]
  %v681 = vld [vmem:[%s4 + $0x1360] sm:$0xff]
  %v682 = vld [vmem:[%s4 + $0x1368] sm:$0xff]
  %v683 = vld [vmem:[%s4 + $0x1370] sm:$0xff]
  %v684 = vld [vmem:[%s4 + $0x1378] sm:$0xff]
  %v685 = vld [vmem:[%s4 + $0x1380] sm:$0xff]
  %v686 = vld [vmem:[%s4 + $0x1388] sm:$0xff]
  %v687 = vld [vmem:[%s4 + $0x1390] sm:$0xff]
  %v688 = vld [vmem:[%s4 + $0x1398] sm:$0xff]
  %v689 = vld [vmem:[%s4 + $0x13a0] sm:$0xff]
  %v690 = vld [vmem:[%s4 + $0x13a8] sm:$0xff]
  %v691 = vld [vmem:[%s4 + $0x13b0] sm:$0xff]
  %v692 = vld [vmem:[%s4 + $0x13b8] sm:$0xff]
  %v693 = vld [vmem:[%s4 + $0x13c0] sm:$0xff]
  %v694 = vld [vmem:[%s4 + $0x13c8] sm:$0xff]
  %v695 = vld [vmem:[%s4 + $0x13d0] sm:$0xff]
  %v696 = vld [vmem:[%s4 + $0x13d8] sm:$0xff]
  %v697 = vld [vmem:[%s4 + $0x13e0] sm:$0xff]
  %v698 = vld [vmem:[%s4 + $0x13e8] sm:$0xff]
  %v699 = vld [vmem:[%s4 + $0x13f0] sm:$0xff]
  %v700 = vld [vmem:[%s4 + $0x13f8] sm:$0xff]
  %v701 = vld [vmem:[%s4 + $0x1400] sm:$0xff]
  %v702 = vld [vmem:[%s4 + $0x1408] sm:$0xff]
  %v703 = vld [vmem:[%s4 + $0x1410] sm:$0xff]
  %v704 = vld [vmem:[%s4 + $0x1418] sm:$0xff]
  %v705 = vld [vmem:[%s4 + $0x1420] sm:$0xff]
  %v706 = vld [vmem:[%s4 + $0x1428] sm:$0xff]
  %v707 = vld [vmem:[%s4 + $0x1430] sm:$0xff]
  %v708 = vld [vmem:[%s4 + $0x1438] sm:$0xff]
  %v709 = vld [vmem:[%s4 + $0x1440] sm:$0xff]
  %v710 = vld [vmem:[%s4 + $0x1448] sm:$0xff]
  %v711 = vld [vmem:[%s4 + $0x1450] sm:$0xff]
  %v712 = vld [vmem:[%s4 + $0x1458] sm:$0xff]
  %v713 = vld [vmem:[%s4 + $0x1460] sm:$0xff]
  %v714 = vld [vmem:[%s4 + $0x1468] sm:$0xff]
  %v715 = vld [vmem:[%s4 + $0x1470] sm:$0xff]
  %v716 = vld [vmem:[%s4 + $0x1478] sm:$0xff]
  %v717 = vld [vmem:[%s4 + $0x1480] sm:$0xff]
  %v718 = vld [vmem:[%s4 + $0x1488] sm:$0xff]
  %v719 = vld [vmem:[%s4 + $0x1490] sm:$0xff]
  %v720 = vld [vmem:[%s4 + $0x1498] sm:$0xff]
  %v721 = vld [vmem:[%s4 + $0x14a0] sm:$0xff]
  %v722 = vld [vmem:[%s4 + $0x14a8] sm:$0xff]
  %v723 = vld [vmem:[%s4 + $0x14b0] sm:$0xff]
  %v724 = vld [vmem:[%s4 + $0x14b8] sm:$0xff]
  %v725 = vld [vmem:[%s4 + $0x14c0] sm:$0xff]
  %v726 = vld [vmem:[%s4 + $0x14c8] sm:$0xff]
  %v727 = vld [vmem:[%s4 + $0x14d0] sm:$0xff]
  %v728 = vld [vmem:[%s4 + $0x14d8] sm:$0xff]
  %v729 = vld [vmem:[%s4 + $0x14e0] sm:$0xff]
  %v730 = vld [vmem:[%s4 + $0x14e8] sm:$0xff]
  %v731 = vld [vmem:[%s4 + $0x14f0] sm:$0xff]
  %v732 = vld [vmem:[%s4 + $0x14f8] sm:$0xff]
  %v733 = vld [vmem:[%s4 + $0x1500] sm:$0xff]
  %v734 = vld [vmem:[%s4 + $0x1508] sm:$0xff]
  %v735 = vld [vmem:[%s4 + $0x1510] sm:$0xff]
  %v736 = vld [vmem:[%s4 + $0x1518] sm:$0xff]
  %v737 = vld [vmem:[%s4 + $0x1520] sm:$0xff]
  %v738 = vld [vmem:[%s4 + $0x1528] sm:$0xff]
  %v739 = vld [vmem:[%s4 + $0x1530] sm:$0xff]
  %v740 = vld [vmem:[%s4 + $0x1538] sm:$0xff]
  %v741 = vld [vmem:[%s4 + $0x1540] sm:$0xff]
  %v742 = vld [vmem:[%s4 + $0x1548] sm:$0xff]
  %v743 = vld [vmem:[%s4 + $0x1550] sm:$0xff]
  %v744 = vld [vmem:[%s4 + $0x1558] sm:$0xff]
  %v745 = vld [vmem:[%s4 + $0x1560] sm:$0xff]
  %v746 = vld [vmem:[%s4 + $0x1568] sm:$0xff]
  %v747 = vld [vmem:[%s4 + $0x1570] sm:$0xff]
  %v748 = vld [vmem:[%s4 + $0x1578] sm:$0xff]
  %v749 = vld [vmem:[%s4 + $0x1580] sm:$0xff]
  %v750 = vld [vmem:[%s4 + $0x1588] sm:$0xff]
  %v751 = vld [vmem:[%s4 + $0x1590] sm:$0xff]
  %v752 = vld [vmem:[%s4 + $0x1598] sm:$0xff]
  %v753 = vld [vmem:[%s4 + $0x15a0] sm:$0xff]
  %v754 = vld [vmem:[%s4 + $0x15a8] sm:$0xff]
  %v755 = vld [vmem:[%s4 + $0x15b0] sm:$0xff]
  %v756 = vld [vmem:[%s4 + $0x15b8] sm:$0xff]
  %v757 = vld [vmem:[%s4 + $0x15c0] sm:$0xff]
  %v758 = vld [vmem:[%s4 + $0x15c8] sm:$0xff]
  %v759 = vld [vmem:[%s4 + $0x15d0] sm:$0xff]
  %v760 = vld [vmem:[%s4 + $0x15d8] sm:$0xff]
  %v761 = vld [vmem:[%s4 + $0x15e0] sm:$0xff]
  %v762 = vld [vmem:[%s4 + $0x15e8] sm:$0xff]
  %v763 = vld [vmem:[%s4 + $0x15f0] sm:$0xff]
  %v764 = vld [vmem:[%s4 + $0x15f8] sm:$0xff]
  %v765 = vld [vmem:[%s4 + $0x1600] sm:$0xff]
  %v766 = vld [vmem:[%s4 + $0x1608] sm:$0xff]
  %v767 = vld [vmem:[%s4 + $0x1610] sm:$0xff]
  %v768 = vld [vmem:[%s4 + $0x1618] sm:$0xff]
  %v769 = vld [vmem:[%s4 + $0x1620] sm:$0xff]
  %v770 = vld [vmem:[%s4 + $0x1628] sm:$0xff]
  %v771 = vld [vmem:[%s4 + $0x1630] sm:$0xff]
  %v772 = vld [vmem:[%s4 + $0x1638] sm:$0xff]
  %v773 = vld [vmem:[%s4 + $0x1640] sm:$0xff]
  %v774 = vld [vmem:[%s4 + $0x1648] sm:$0xff]
  %v775 = vld [vmem:[%s4 + $0x1650] sm:$0xff]
  %v776 = vld [vmem:[%s4 + $0x1658] sm:$0xff]
  %v777 = vld [vmem:[%s4 + $0x1660] sm:$0xff]
  %v778 = vld [vmem:[%s4 + $0x1668] sm:$0xff]
  %v779 = vld [vmem:[%s4 + $0x1670] sm:$0xff]
  %v780 = vld [vmem:[%s4 + $0x1678] sm:$0xff]
  %v781 = vld [vmem:[%s4 + $0x1680] sm:$0xff]
  %v782 = vld [vmem:[%s4 + $0x1688] sm:$0xff]
  %v783 = vld [vmem:[%s4 + $0x1690] sm:$0xff]
  %v784 = vld [vmem:[%s4 + $0x1698] sm:$0xff]
  %v785 = vld [vmem:[%s4 + $0x16a0] sm:$0xff]
  %v786 = vld [vmem:[%s4 + $0x16a8] sm:$0xff]
  %v787 = vld [vmem:[%s4 + $0x16b0] sm:$0xff]
  %v788 = vld [vmem:[%s4 + $0x16b8] sm:$0xff]
  %v789 = vld [vmem:[%s4 + $0x16c0] sm:$0xff]
  %v790 = vld [vmem:[%s4 + $0x16c8] sm:$0xff]
  %v791 = vld [vmem:[%s4 + $0x16d0] sm:$0xff]
  %v792 = vld [vmem:[%s4 + $0x16d8] sm:$0xff]
  %v793 = vld [vmem:[%s4 + $0x16e0] sm:$0xff]
  %v794 = vld [vmem:[%s4 + $0x16e8] sm:$0xff]
  %v795 = vld [vmem:[%s4 + $0x16f0] sm:$0xff]
  %v796 = vld [vmem:[%s4 + $0x16f8] sm:$0xff]
  %v797 = vld [vmem:[%s4 + $0x1700] sm:$0xff]
  %v798 = vld [vmem:[%s4 + $0x1708] sm:$0xff]
  %v799 = vld [vmem:[%s4 + $0x1710] sm:$0xff]
  %v800 = vld [vmem:[%s4 + $0x1718] sm:$0xff]
  %v801 = vld [vmem:[%s4 + $0x1720] sm:$0xff]
  %v802 = vld [vmem:[%s4 + $0x1728] sm:$0xff]
  %v803 = vld [vmem:[%s4 + $0x1730] sm:$0xff]
  %v804 = vld [vmem:[%s4 + $0x1738] sm:$0xff]
  %v805 = vld [vmem:[%s4 + $0x1740] sm:$0xff]
  %v806 = vld [vmem:[%s4 + $0x1748] sm:$0xff]
  %v807 = vld [vmem:[%s4 + $0x1750] sm:$0xff]
  %v808 = vld [vmem:[%s4 + $0x1758] sm:$0xff]
  %v809 = vld [vmem:[%s4 + $0x1760] sm:$0xff]
  %v810 = vld [vmem:[%s4 + $0x1768] sm:$0xff]
  %v811 = vld [vmem:[%s4 + $0x1770] sm:$0xff]
  %v812 = vld [vmem:[%s4 + $0x1778] sm:$0xff]
  %v813 = vld [vmem:[%s4 + $0x1780] sm:$0xff]
  %v814 = vld [vmem:[%s4 + $0x1788] sm:$0xff]
  %v815 = vld [vmem:[%s4 + $0x1790] sm:$0xff]
  %v816 = vld [vmem:[%s4 + $0x1798] sm:$0xff]
  %v817 = vld [vmem:[%s4 + $0x17a0] sm:$0xff]
  %v818 = vld [vmem:[%s4 + $0x17a8] sm:$0xff]
  %v819 = vld [vmem:[%s4 + $0x17b0] sm:$0xff]
  %v820 = vld [vmem:[%s4 + $0x17b8] sm:$0xff]
  %v821 = vld [vmem:[%s4 + $0x17c0] sm:$0xff]
  %v822 = vld [vmem:[%s4 + $0x17c8] sm:$0xff]
  %v823 = vld [vmem:[%s4 + $0x17d0] sm:$0xff]
  %v824 = vld [vmem:[%s4 + $0x17d8] sm:$0xff]
  %v825 = vld [vmem:[%s4 + $0x17e0] sm:$0xff]
  %v826 = vld [vmem:[%s4 + $0x17e8] sm:$0xff]
  %v827 = vld [vmem:[%s4 + $0x17f0] sm:$0xff]
  %v828 = vld [vmem:[%s4 + $0x17f8] sm:$0xff]
  %v829 = vld [vmem:[%s4 + $0x1800] sm:$0xff]
  %v830 = vld [vmem:[%s4 + $0x1808] sm:$0xff]
  %v831 = vld [vmem:[%s4 + $0x1810] sm:$0xff]
  %v832 = vld [vmem:[%s4 + $0x1818] sm:$0xff]
  %v833 = vld [vmem:[%s4 + $0x1820] sm:$0xff]
  %v834 = vld [vmem:[%s4 + $0x1828] sm:$0xff]
  %v835 = vld [vmem:[%s4 + $0x1830] sm:$0xff]
  %v836 = vld [vmem:[%s4 + $0x1838] sm:$0xff]
  %v837 = vld [vmem:[%s4 + $0x1840] sm:$0xff]
  %v838 = vld [vmem:[%s4 + $0x1848] sm:$0xff]
  %v839 = vld [vmem:[%s4 + $0x1850] sm:$0xff]
  %v840 = vld [vmem:[%s4 + $0x1858] sm:$0xff]
  %v841 = vld [vmem:[%s4 + $0x1860] sm:$0xff]
  %v842 = vld [vmem:[%s4 + $0x1868] sm:$0xff]
  %v843 = vld [vmem:[%s4 + $0x1870] sm:$0xff]
  %v844 = vld [vmem:[%s4 + $0x1878] sm:$0xff]
  %v845 = vld [vmem:[%s4 + $0x1880] sm:$0xff]
  %v846 = vld [vmem:[%s4 + $0x1888] sm:$0xff]
  %v847 = vld [vmem:[%s4 + $0x1890] sm:$0xff]
  %v848 = vld [vmem:[%s4 + $0x1898] sm:$0xff]
  %v849 = vld [vmem:[%s4 + $0x18a0] sm:$0xff]
  %v850 = vld [vmem:[%s4 + $0x18a8] sm:$0xff]
  %v851 = vld [vmem:[%s4 + $0x18b0] sm:$0xff]
  %v852 = vld [vmem:[%s4 + $0x18b8] sm:$0xff]
  %v853 = vld [vmem:[%s4 + $0x18c0] sm:$0xff]
  %v854 = vld [vmem:[%s4 + $0x18c8] sm:$0xff]
  %v855 = vld [vmem:[%s4 + $0x18d0] sm:$0xff]
  %v856 = vld [vmem:[%s4 + $0x18d8] sm:$0xff]
  %v857 = vld [vmem:[%s4 + $0x18e0] sm:$0xff]
  %v858 = vld [vmem:[%s4 + $0x18e8] sm:$0xff]
  %v859 = vld [vmem:[%s4 + $0x18f0] sm:$0xff]
  %v860 = vld [vmem:[%s4 + $0x18f8] sm:$0xff]
  %v861 = vld [vmem:[%s4 + $0x1900] sm:$0xff]
  %v862 = vld [vmem:[%s4 + $0x1908] sm:$0xff]
  %v863 = vld [vmem:[%s4 + $0x1910] sm:$0xff]
  %v864 = vld [vmem:[%s4 + $0x1918] sm:$0xff]
  %v865 = vld [vmem:[%s4 + $0x1920] sm:$0xff]
  %v866 = vld [vmem:[%s4 + $0x1928] sm:$0xff]
  %v867 = vld [vmem:[%s4 + $0x1930] sm:$0xff]
  %v868 = vld [vmem:[%s4 + $0x1938] sm:$0xff]
  %v869 = vld [vmem:[%s4 + $0x1940] sm:$0xff]
  %v870 = vld [vmem:[%s4 + $0x1948] sm:$0xff]
  %v871 = vld [vmem:[%s4 + $0x1950] sm:$0xff]
  %v872 = vld [vmem:[%s4 + $0x1958] sm:$0xff]
  %v873 = vld [vmem:[%s4 + $0x1960] sm:$0xff]
  %v874 = vld [vmem:[%s4 + $0x1968] sm:$0xff]
  %v875 = vld [vmem:[%s4 + $0x1970] sm:$0xff]
  %v876 = vld [vmem:[%s4 + $0x1978] sm:$0xff]
  %v877 = vld [vmem:[%s4 + $0x1980] sm:$0xff]
  %v878 = vld [vmem:[%s4 + $0x1988] sm:$0xff]
  %v879 = vld [vmem:[%s4 + $0x1990] sm:$0xff]
  %v880 = vld [vmem:[%s4 + $0x1998] sm:$0xff]
  %v881 = vld [vmem:[%s4 + $0x19a0] sm:$0xff]
  %v882 = vld [vmem:[%s4 + $0x19a8] sm:$0xff]
  %v883 = vld [vmem:[%s4 + $0x19b0] sm:$0xff]
  %v884 = vld [vmem:[%s4 + $0x19b8] sm:$0xff]
  %v885 = vld [vmem:[%s4 + $0x19c0] sm:$0xff]
  %v886 = vld [vmem:[%s4 + $0x19c8] sm:$0xff]
  %v887 = vld [vmem:[%s4 + $0x19d0] sm:$0xff]
  %v888 = vld [vmem:[%s4 + $0x19d8] sm:$0xff]
  %v889 = vld [vmem:[%s4 + $0x19e0] sm:$0xff]
  %v890 = vld [vmem:[%s4 + $0x19e8] sm:$0xff]
  %v891 = vld [vmem:[%s4 + $0x19f0] sm:$0xff]
  %v892 = vld [vmem:[%s4 + $0x19f8] sm:$0xff]
  %v893 = vld [vmem:[%s4 + $0x1a00] sm:$0xff]
  %v894 = vld [vmem:[%s4 + $0x1a08] sm:$0xff]
  %v895 = vld [vmem:[%s4 + $0x1a10] sm:$0xff]
  %v896 = vld [vmem:[%s4 + $0x1a18] sm:$0xff]
  %v897 = vld [vmem:[%s4 + $0x1a20] sm:$0xff]
  %v898 = vld [vmem:[%s4 + $0x1a28] sm:$0xff]
  %v899 = vld [vmem:[%s4 + $0x1a30] sm:$0xff]
  %v900 = vld [vmem:[%s4 + $0x1a38] sm:$0xff]
  %v901 = vld [vmem:[%s4 + $0x1a40] sm:$0xff]
  %v902 = vld [vmem:[%s4 + $0x1a48] sm:$0xff]
  %v903 = vld [vmem:[%s4 + $0x1a50] sm:$0xff]
  %v904 = vld [vmem:[%s4 + $0x1a58] sm:$0xff]
  %v905 = vld [vmem:[%s4 + $0x1a60] sm:$0xff]
  %v906 = vld [vmem:[%s4 + $0x1a68] sm:$0xff]
  %v907 = vld [vmem:[%s4 + $0x1a70] sm:$0xff]
  %v908 = vld [vmem:[%s4 + $0x1a78] sm:$0xff]
  %v909 = vld [vmem:[%s4 + $0x1a80] sm:$0xff]
  %v910 = vld [vmem:[%s4 + $0x1a88] sm:$0xff]
  %v911 = vld [vmem:[%s4 + $0x1a90] sm:$0xff]
  %v912 = vld [vmem:[%s4 + $0x1a98] sm:$0xff]
  %v913 = vld [vmem:[%s4 + $0x1aa0] sm:$0xff]
  %v914 = vld [vmem:[%s4 + $0x1aa8] sm:$0xff]
  %v915 = vld [vmem:[%s4 + $0x1ab0] sm:$0xff]
  %v916 = vld [vmem:[%s4 + $0x1ab8] sm:$0xff]
  %v917 = vld [vmem:[%s4 + $0x1ac0] sm:$0xff]
  %v918 = vld [vmem:[%s4 + $0x1ac8] sm:$0xff]
  %v919 = vld [vmem:[%s4 + $0x1ad0] sm:$0xff]
  %v920 = vld [vmem:[%s4 + $0x1ad8] sm:$0xff]
  %v921 = vld [vmem:[%s4 + $0x1ae0] sm:$0xff]
  %v922 = vld [vmem:[%s4 + $0x1ae8] sm:$0xff]
  %v923 = vld [vmem:[%s4 + $0x1af0] sm:$0xff]
  %v924 = vld [vmem:[%s4 + $0x1af8] sm:$0xff]
  %v925 = vld [vmem:[%s4 + $0x1b00] sm:$0xff]
  %v926 = vld [vmem:[%s4 + $0x1b08] sm:$0xff]
  %v927 = vld [vmem:[%s4 + $0x1b10] sm:$0xff]
  %v928 = vld [vmem:[%s4 + $0x1b18] sm:$0xff]
  %v929 = vld [vmem:[%s4 + $0x1b20] sm:$0xff]
  %v930 = vld [vmem:[%s4 + $0x1b28] sm:$0xff]
  %v931 = vld [vmem:[%s4 + $0x1b30] sm:$0xff]
  %v932 = vld [vmem:[%s4 + $0x1b38] sm:$0xff]
  %v933 = vld [vmem:[%s4 + $0x1b40] sm:$0xff]
  %v934 = vld [vmem:[%s4 + $0x1b48] sm:$0xff]
  %v935 = vld [vmem:[%s4 + $0x1b50] sm:$0xff]
  %v936 = vld [vmem:[%s4 + $0x1b58] sm:$0xff]
  %v937 = vld [vmem:[%s4 + $0x1b60] sm:$0xff]
  %v938 = vld [vmem:[%s4 + $0x1b68] sm:$0xff]
  %v939 = vld [vmem:[%s4 + $0x1b70] sm:$0xff]
  %v940 = vld [vmem:[%s4 + $0x1b78] sm:$0xff]
  %v941 = vld [vmem:[%s4 + $0x1b80] sm:$0xff]
  %v942 = vld [vmem:[%s4 + $0x1b88] sm:$0xff]
  %v943 = vld [vmem:[%s4 + $0x1b90] sm:$0xff]
  %v944 = vld [vmem:[%s4 + $0x1b98] sm:$0xff]
  %v945 = vld [vmem:[%s4 + $0x1ba0] sm:$0xff]
  %v946 = vld [vmem:[%s4 + $0x1ba8] sm:$0xff]
  %v947 = vld [vmem:[%s4 + $0x1bb0] sm:$0xff]
  %v948 = vld [vmem:[%s4 + $0x1bb8] sm:$0xff]
  %v949 = vld [vmem:[%s4 + $0x1bc0] sm:$0xff]
  %v950 = vld [vmem:[%s4 + $0x1bc8] sm:$0xff]
  %v951 = vld [vmem:[%s4 + $0x1bd0] sm:$0xff]
  %v952 = vld [vmem:[%s4 + $0x1bd8] sm:$0xff]
  %v953 = vld [vmem:[%s4 + $0x1be0] sm:$0xff]
  %v954 = vld [vmem:[%s4 + $0x1be8] sm:$0xff]
  %v955 = vld [vmem:[%s4 + $0x1bf0] sm:$0xff]
  %v956 = vld [vmem:[%s4 + $0x1bf8] sm:$0xff]
  %v957 = vld [vmem:[%s4 + $0x1c00] sm:$0xff]
  %v958 = vld [vmem:[%s4 + $0x1c08] sm:$0xff]
  %v959 = vld [vmem:[%s4 + $0x1c10] sm:$0xff]
  %v960 = vld [vmem:[%s4 + $0x1c18] sm:$0xff]
  %v961 = vld [vmem:[%s4 + $0x1c20] sm:$0xff]
  %v962 = vld [vmem:[%s4 + $0x1c28] sm:$0xff]
  %v963 = vld [vmem:[%s4 + $0x1c30] sm:$0xff]
  %v964 = vld [vmem:[%s4 + $0x1c38] sm:$0xff]
  %v965 = vld [vmem:[%s4 + $0x1c40] sm:$0xff]
  %v966 = vld [vmem:[%s4 + $0x1c48] sm:$0xff]
  %v967 = vld [vmem:[%s4 + $0x1c50] sm:$0xff]
  %v968 = vld [vmem:[%s4 + $0x1c58] sm:$0xff]
  %v969 = vld [vmem:[%s4 + $0x1c60] sm:$0xff]
  %v970 = vld [vmem:[%s4 + $0x1c68] sm:$0xff]
  %v971 = vld [vmem:[%s4 + $0x1c70] sm:$0xff]
  %v972 = vld [vmem:[%s4 + $0x1c78] sm:$0xff]
  %v973 = vld [vmem:[%s4 + $0x1c80] sm:$0xff]
  %v974 = vld [vmem:[%s4 + $0x1c88] sm:$0xff]
  %v975 = vld [vmem:[%s4 + $0x1c90] sm:$0xff]
  %v976 = vld [vmem:[%s4 + $0x1c98] sm:$0xff]
  %v977 = vld [vmem:[%s4 + $0x1ca0] sm:$0xff]
  %v978 = vld [vmem:[%s4 + $0x1ca8] sm:$0xff]
  %v979 = vld [vmem:[%s4 + $0x1cb0] sm:$0xff]
  %v980 = vld [vmem:[%s4 + $0x1cb8] sm:$0xff]
  %v981 = vld [vmem:[%s4 + $0x1cc0] sm:$0xff]
  %v982 = vld [vmem:[%s4 + $0x1cc8] sm:$0xff]
  %v983 = vld [vmem:[%s4 + $0x1cd0] sm:$0xff]
  %v984 = vld [vmem:[%s4 + $0x1cd8] sm:$0xff]
  %v985 = vld [vmem:[%s4 + $0x1ce0] sm:$0xff]
  %v986 = vld [vmem:[%s4 + $0x1ce8] sm:$0xff]
  %v987 = vld [vmem:[%s4 + $0x1cf0] sm:$0xff]
  %v988 = vld [vmem:[%s4 + $0x1cf8] sm:$0xff]
  %v989 = vld [vmem:[%s4 + $0x1d00] sm:$0xff]
  %v990 = vld [vmem:[%s4 + $0x1d08] sm:$0xff]
  %v991 = vld [vmem:[%s4 + $0x1d10] sm:$0xff]
  %v992 = vld [vmem:[%s4 + $0x1d18] sm:$0xff]
  %v993 = vld [vmem:[%s4 + $0x1d20] sm:$0xff]
  %v994 = vld [vmem:[%s4 + $0x1d28] sm:$0xff]
  %v995 = vld [vmem:[%s4 + $0x1d30] sm:$0xff]
  %v996 = vld [vmem:[%s4 + $0x1d38] sm:$0xff]
  %v997 = vld [vmem:[%s4 + $0x1d40] sm:$0xff]
  %v998 = vld [vmem:[%s4 + $0x1d48] sm:$0xff]
  %v999 = vld [vmem:[%s4 + $0x1d50] sm:$0xff]
  %v1000 = vld [vmem:[%s4 + $0x1d58] sm:$0xff]
  %v1001 = vld [vmem:[%s4 + $0x1d60] sm:$0xff]
  %v1002 = vld [vmem:[%s4 + $0x1d68] sm:$0xff]
  %v1003 = vld [vmem:[%s4 + $0x1d70] sm:$0xff]
  %v1004 = vld [vmem:[%s4 + $0x1d78] sm:$0xff]
  %v1005 = vld [vmem:[%s4 + $0x1d80] sm:$0xff]
  %v1006 = vld [vmem:[%s4 + $0x1d88] sm:$0xff]
  %v1007 = vld [vmem:[%s4 + $0x1d90] sm:$0xff]
  %v1008 = vld [vmem:[%s4 + $0x1d98] sm:$0xff]
  %v1009 = vld [vmem:[%s4 + $0x1da0] sm:$0xff]
  %v1010 = vld [vmem:[%s4 + $0x1da8] sm:$0xff]
  %v1011 = vld [vmem:[%s4 + $0x1db0] sm:$0xff]
  %v1012 = vld [vmem:[%s4 + $0x1db8] sm:$0xff]
  %v1013 = vld [vmem:[%s4 + $0x1dc0] sm:$0xff]
  %v1014 = vld [vmem:[%s4 + $0x1dc8] sm:$0xff]
  %v1015 = vld [vmem:[%s4 + $0x1dd0] sm:$0xff]
  %v1016 = vld [vmem:[%s4 + $0x1dd8] sm:$0xff]
  %v1017 = vld [vmem:[%s4 + $0x1de0] sm:$0xff]
  %v1018 = vld [vmem:[%s4 + $0x1de8] sm:$0xff]
  %v1019 = vld [vmem:[%s4 + $0x1df0] sm:$0xff]
  %v1020 = vld [vmem:[%s4 + $0x1df8] sm:$0xff]
  %v1021 = vld [vmem:[%s4 + $0x1e00] sm:$0xff]
  %v1022 = vld [vmem:[%s4 + $0x1e08] sm:$0xff]
  %v1023 = vld [vmem:[%s4 + $0x1e10] sm:$0xff]
  %v1024 = vld [vmem:[%s4 + $0x1e18] sm:$0xff]
  %v1025 = vld [vmem:[%s4 + $0x1e20] sm:$0xff]
  %v1026 = vld [vmem:[%s4 + $0x1e28] sm:$0xff]
  %v1027 = vld [vmem:[%s4 + $0x1e30] sm:$0xff]
  %v1028 = vld [vmem:[%s4 + $0x1e38] sm:$0xff]
  %v1029 = vld [vmem:[%s4 + $0x1e40] sm:$0xff]
  %v1030 = vld [vmem:[%s4 + $0x1e48] sm:$0xff]
  %v1031 = vld [vmem:[%s4 + $0x1e50] sm:$0xff]
  %v1032 = vld [vmem:[%s4 + $0x1e58] sm:$0xff]
  %v1033 = vld [vmem:[%s4 + $0x1e60] sm:$0xff]
  %v1034 = vld [vmem:[%s4 + $0x1e68] sm:$0xff]
  %v1035 = vld [vmem:[%s4 + $0x1e70] sm:$0xff]
  %v1036 = vld [vmem:[%s4 + $0x1e78] sm:$0xff]
  %v1037 = vld [vmem:[%s4 + $0x1e80] sm:$0xff]
  %v1038 = vld [vmem:[%s4 + $0x1e88] sm:$0xff]
  %v1039 = vld [vmem:[%s4 + $0x1e90] sm:$0xff]
  %v1040 = vld [vmem:[%s4 + $0x1e98] sm:$0xff]
  %v1041 = vld [vmem:[%s4 + $0x1ea0] sm:$0xff]
  %v1042 = vld [vmem:[%s4 + $0x1ea8] sm:$0xff]
  %v1043 = vld [vmem:[%s4 + $0x1eb0] sm:$0xff]
  %v1044 = vld [vmem:[%s4 + $0x1eb8] sm:$0xff]
  %v1045 = vld [vmem:[%s4 + $0x1ec0] sm:$0xff]
  %v1046 = vld [vmem:[%s4 + $0x1ec8] sm:$0xff]
  %v1047 = vld [vmem:[%s4 + $0x1ed0] sm:$0xff]
  %v1048 = vld [vmem:[%s4 + $0x1ed8] sm:$0xff]
  %v1049 = vld [vmem:[%s4 + $0x1ee0] sm:$0xff]
  %v1050 = vld [vmem:[%s4 + $0x1ee8] sm:$0xff]
  %v1051 = vld [vmem:[%s4 + $0x1ef0] sm:$0xff]
  %v1052 = vld [vmem:[%s4 + $0x1ef8] sm:$0xff]
  %v1053 = vld [vmem:[%s4 + $0x1f00] sm:$0xff]
  %v1054 = vld [vmem:[%s4 + $0x1f08] sm:$0xff]
  %v1055 = vld [vmem:[%s4 + $0x1f10] sm:$0xff]
  %v1056 = vld [vmem:[%s4 + $0x1f18] sm:$0xff]
  %v1057 = vld [vmem:[%s4 + $0x1f20] sm:$0xff]
  %v1058 = vld [vmem:[%s4 + $0x1f28] sm:$0xff]
  %v1059 = vld [vmem:[%s4 + $0x1f30] sm:$0xff]
  %v1060 = vld [vmem:[%s4 + $0x1f38] sm:$0xff]
  %v1061 = vld [vmem:[%s4 + $0x1f40] sm:$0xff]
  %v1062 = vld [vmem:[%s4 + $0x1f48] sm:$0xff]
  %v1063 = vld [vmem:[%s4 + $0x1f50] sm:$0xff]
  %v1064 = vld [vmem:[%s4 + $0x1f58] sm:$0xff]
  %v1065 = vld [vmem:[%s4 + $0x1f60] sm:$0xff]
  %v1066 = vld [vmem:[%s4 + $0x1f68] sm:$0xff]
  %v1067 = vld [vmem:[%s4 + $0x1f70] sm:$0xff]
  %v1068 = vld [vmem:[%s4 + $0x1f78] sm:$0xff]
  %v1069 = vld [vmem:[%s4 + $0x1f80] sm:$0xff]
  %v1070 = vld [vmem:[%s4 + $0x1f88] sm:$0xff]
  %v1071 = vld [vmem:[%s4 + $0x1f90] sm:$0xff]
  %v1072 = vld [vmem:[%s4 + $0x1f98] sm:$0xff]
  %v1073 = vld [vmem:[%s4 + $0x1fa0] sm:$0xff]
  %v1074 = vld [vmem:[%s4 + $0x1fa8] sm:$0xff]
  %v1075 = vld [vmem:[%s4 + $0x1fb0] sm:$0xff]
  %v1076 = vld [vmem:[%s4 + $0x1fb8] sm:$0xff]
  %v1077 = vld [vmem:[%s4 + $0x1fc0] sm:$0xff]
  %v1078 = vld [vmem:[%s4 + $0x1fc8] sm:$0xff]
  %v1079 = vld [vmem:[%s4 + $0x1fd0] sm:$0xff]
  %v1080 = vld [vmem:[%s4 + $0x1fd8] sm:$0xff]
  %v1081 = vld [vmem:[%s4 + $0x1fe0] sm:$0xff]
  %v1082 = vld [vmem:[%s4 + $0x1fe8] sm:$0xff]
  %v1083 = vld [vmem:[%s4 + $0x1ff0] sm:$0xff]
  %v1084 = vld [vmem:[%s4 + $0x1ff8] sm:$0xff]
  %v1101 = vunpack.c.l.b16 %v557
  %v1102 = vunpack.c.h.b16 %v557
  %v1103 = vunpack.c.l.b16 %v558
  %v1104 = vunpack.c.h.b16 %v558
  %v1105 = vunpack.c.l.b16 %v559
  %v1106 = vunpack.c.h.b16 %v559
  %v1107 = vunpack.c.l.b16 %v560
  %v1108 = vunpack.c.h.b16 %v560
  %v1109 = vunpack.c.l.b16 %v561
  %v1110 = vunpack.c.h.b16 %v561
  %v1111 = vunpack.c.l.b16 %v562
  %v1112 = vunpack.c.h.b16 %v562
  %v1113 = vunpack.c.l.b16 %v563
  %v1114 = vunpack.c.h.b16 %v563
  %v1115 = vunpack.c.l.b16 %v564
  %v1116 = vunpack.c.h.b16 %v564
  %v1117 = vunpack.c.l.b16 %v565
  %v1118 = vunpack.c.h.b16 %v565
  %v1119 = vunpack.c.l.b16 %v566
  %v1120 = vunpack.c.h.b16 %v566
  %v1121 = vunpack.c.l.b16 %v567
  %v1122 = vunpack.c.h.b16 %v567
  %v1123 = vunpack.c.l.b16 %v568
  %v1124 = vunpack.c.h.b16 %v568
  %v1125 = vunpack.c.l.b16 %v569
  %v1126 = vunpack.c.h.b16 %v569
  %v1127 = vunpack.c.l.b16 %v570
  %v1128 = vunpack.c.h.b16 %v570
  %v1129 = vunpack.c.l.b16 %v571
  %v1130 = vunpack.c.h.b16 %v571
  %v1131 = vunpack.c.l.b16 %v572
  %v1132 = vunpack.c.h.b16 %v572
  %v1133 = vpack.c.b16 %v1117, %v1101
  %v1134 = vpack.c.b16 %v1118, %v1102
  %v1135 = vpack.c.b16 %v1119, %v1103
  %v1136 = vpack.c.b16 %v1120, %v1104
  %v1137 = vpack.c.b16 %v1121, %v1105
  %v1138 = vpack.c.b16 %v1122, %v1106
  %v1139 = vpack.c.b16 %v1123, %v1107
  %v1140 = vpack.c.b16 %v1124, %v1108
  %v1141 = vpack.c.b16 %v1125, %v1109
  %v1142 = vpack.c.b16 %v1126, %v1110
  %v1143 = vpack.c.b16 %v1127, %v1111
  %v1144 = vpack.c.b16 %v1128, %v1112
  %v1145 = vpack.c.b16 %v1129, %v1113
  %v1146 = vpack.c.b16 %v1130, %v1114
  %v1147 = vpack.c.b16 %v1131, %v1115
  %v1148 = vpack.c.b16 %v1132, %v1116
  %v1677 = vunpack.c.l.b16 %v573
  %v1678 = vunpack.c.h.b16 %v573
  %v1679 = vunpack.c.l.b16 %v574
  %v1680 = vunpack.c.h.b16 %v574
  %v1681 = vunpack.c.l.b16 %v575
  %v1682 = vunpack.c.h.b16 %v575
  %v1683 = vunpack.c.l.b16 %v576
  %v1684 = vunpack.c.h.b16 %v576
  %v1685 = vunpack.c.l.b16 %v577
  %v1686 = vunpack.c.h.b16 %v577
  %v1687 = vunpack.c.l.b16 %v578
  %v1688 = vunpack.c.h.b16 %v578
  %v1689 = vunpack.c.l.b16 %v579
  %v1690 = vunpack.c.h.b16 %v579
  %v1691 = vunpack.c.l.b16 %v580
  %v1692 = vunpack.c.h.b16 %v580
  %v1693 = vunpack.c.l.b16 %v581
  %v1694 = vunpack.c.h.b16 %v581
  %v1695 = vunpack.c.l.b16 %v582
  %v1696 = vunpack.c.h.b16 %v582
  %v1697 = vunpack.c.l.b16 %v583
  %v1698 = vunpack.c.h.b16 %v583
  %v1699 = vunpack.c.l.b16 %v584
  %v1700 = vunpack.c.h.b16 %v584
  %v1701 = vunpack.c.l.b16 %v585
  %v1702 = vunpack.c.h.b16 %v585
  %v1703 = vunpack.c.l.b16 %v586
  %v1704 = vunpack.c.h.b16 %v586
  %v1705 = vunpack.c.l.b16 %v587
  %v1706 = vunpack.c.h.b16 %v587
  %v1707 = vunpack.c.l.b16 %v588
  %v1708 = vunpack.c.h.b16 %v588
  %v1709 = vunpack.c.l.b16 %v589
  %v1710 = vunpack.c.h.b16 %v589
  %v1711 = vunpack.c.l.b16 %v590
  %v1712 = vunpack.c.h.b16 %v590
  %v1713 = vunpack.c.l.b16 %v591
  %v1714 = vunpack.c.h.b16 %v591
  %v1715 = vunpack.c.l.b16 %v592
  %v1716 = vunpack.c.h.b16 %v592
  %v1717 = vunpack.c.l.b16 %v593
  %v1718 = vunpack.c.h.b16 %v593
  %v1719 = vunpack.c.l.b16 %v594
  %v1720 = vunpack.c.h.b16 %v594
  %v1721 = vunpack.c.l.b16 %v595
  %v1722 = vunpack.c.h.b16 %v595
  %v1723 = vunpack.c.l.b16 %v596
  %v1724 = vunpack.c.h.b16 %v596
  %v1725 = vunpack.c.l.b16 %v597
  %v1726 = vunpack.c.h.b16 %v597
  %v1727 = vunpack.c.l.b16 %v598
  %v1728 = vunpack.c.h.b16 %v598
  %v1729 = vunpack.c.l.b16 %v599
  %v1730 = vunpack.c.h.b16 %v599
  %v1731 = vunpack.c.l.b16 %v600
  %v1732 = vunpack.c.h.b16 %v600
  %v1733 = vunpack.c.l.b16 %v601
  %v1734 = vunpack.c.h.b16 %v601
  %v1735 = vunpack.c.l.b16 %v602
  %v1736 = vunpack.c.h.b16 %v602
  %v1737 = vunpack.c.l.b16 %v603
  %v1738 = vunpack.c.h.b16 %v603
  %v1739 = vunpack.c.l.b16 %v604
  %v1740 = vunpack.c.h.b16 %v604
  %v1741 = vunpack.c.l.b16 %v605
  %v1742 = vunpack.c.h.b16 %v605
  %v1743 = vunpack.c.l.b16 %v606
  %v1744 = vunpack.c.h.b16 %v606
  %v1745 = vunpack.c.l.b16 %v607
  %v1746 = vunpack.c.h.b16 %v607
  %v1747 = vunpack.c.l.b16 %v608
  %v1748 = vunpack.c.h.b16 %v608
  %v1749 = vunpack.c.l.b16 %v609
  %v1750 = vunpack.c.h.b16 %v609
  %v1751 = vunpack.c.l.b16 %v610
  %v1752 = vunpack.c.h.b16 %v610
  %v1753 = vunpack.c.l.b16 %v611
  %v1754 = vunpack.c.h.b16 %v611
  %v1755 = vunpack.c.l.b16 %v612
  %v1756 = vunpack.c.h.b16 %v612
  %v1757 = vunpack.c.l.b16 %v613
  %v1758 = vunpack.c.h.b16 %v613
  %v1759 = vunpack.c.l.b16 %v614
  %v1760 = vunpack.c.h.b16 %v614
  %v1761 = vunpack.c.l.b16 %v615
  %v1762 = vunpack.c.h.b16 %v615
  %v1763 = vunpack.c.l.b16 %v616
  %v1764 = vunpack.c.h.b16 %v616
  %v1765 = vunpack.c.l.b16 %v617
  %v1766 = vunpack.c.h.b16 %v617
  %v1767 = vunpack.c.l.b16 %v618
  %v1768 = vunpack.c.h.b16 %v618
  %v1769 = vunpack.c.l.b16 %v619
  %v1770 = vunpack.c.h.b16 %v619
  %v1771 = vunpack.c.l.b16 %v620
  %v1772 = vunpack.c.h.b16 %v620
  %v1773 = vunpack.c.l.b16 %v621
  %v1774 = vunpack.c.h.b16 %v621
  %v1775 = vunpack.c.l.b16 %v622
  %v1776 = vunpack.c.h.b16 %v622
  %v1777 = vunpack.c.l.b16 %v623
  %v1778 = vunpack.c.h.b16 %v623
  %v1779 = vunpack.c.l.b16 %v624
  %v1780 = vunpack.c.h.b16 %v624
  %v1781 = vunpack.c.l.b16 %v625
  %v1782 = vunpack.c.h.b16 %v625
  %v1783 = vunpack.c.l.b16 %v626
  %v1784 = vunpack.c.h.b16 %v626
  %v1785 = vunpack.c.l.b16 %v627
  %v1786 = vunpack.c.h.b16 %v627
  %v1787 = vunpack.c.l.b16 %v628
  %v1788 = vunpack.c.h.b16 %v628
  %v1789 = vunpack.c.l.b16 %v629
  %v1790 = vunpack.c.h.b16 %v629
  %v1791 = vunpack.c.l.b16 %v630
  %v1792 = vunpack.c.h.b16 %v630
  %v1793 = vunpack.c.l.b16 %v631
  %v1794 = vunpack.c.h.b16 %v631
  %v1795 = vunpack.c.l.b16 %v632
  %v1796 = vunpack.c.h.b16 %v632
  %v1797 = vunpack.c.l.b16 %v633
  %v1798 = vunpack.c.h.b16 %v633
  %v1799 = vunpack.c.l.b16 %v634
  %v1800 = vunpack.c.h.b16 %v634
  %v1801 = vunpack.c.l.b16 %v635
  %v1802 = vunpack.c.h.b16 %v635
  %v1803 = vunpack.c.l.b16 %v636
  %v1804 = vunpack.c.h.b16 %v636
  %v1805 = vunpack.c.l.b16 %v637
  %v1806 = vunpack.c.h.b16 %v637
  %v1807 = vunpack.c.l.b16 %v638
  %v1808 = vunpack.c.h.b16 %v638
  %v1809 = vunpack.c.l.b16 %v639
  %v1810 = vunpack.c.h.b16 %v639
  %v1811 = vunpack.c.l.b16 %v640
  %v1812 = vunpack.c.h.b16 %v640
  %v1813 = vunpack.c.l.b16 %v641
  %v1814 = vunpack.c.h.b16 %v641
  %v1815 = vunpack.c.l.b16 %v642
  %v1816 = vunpack.c.h.b16 %v642
  %v1817 = vunpack.c.l.b16 %v643
  %v1818 = vunpack.c.h.b16 %v643
  %v1819 = vunpack.c.l.b16 %v644
  %v1820 = vunpack.c.h.b16 %v644
  %v1821 = vunpack.c.l.b16 %v645
  %v1822 = vunpack.c.h.b16 %v645
  %v1823 = vunpack.c.l.b16 %v646
  %v1824 = vunpack.c.h.b16 %v646
  %v1825 = vunpack.c.l.b16 %v647
  %v1826 = vunpack.c.h.b16 %v647
  %v1827 = vunpack.c.l.b16 %v648
  %v1828 = vunpack.c.h.b16 %v648
  %v1829 = vunpack.c.l.b16 %v649
  %v1830 = vunpack.c.h.b16 %v649
  %v1831 = vunpack.c.l.b16 %v650
  %v1832 = vunpack.c.h.b16 %v650
  %v1833 = vunpack.c.l.b16 %v651
  %v1834 = vunpack.c.h.b16 %v651
  %v1835 = vunpack.c.l.b16 %v652
  %v1836 = vunpack.c.h.b16 %v652
  %v1837 = vunpack.c.l.b16 %v653
  %v1838 = vunpack.c.h.b16 %v653
  %v1839 = vunpack.c.l.b16 %v654
  %v1840 = vunpack.c.h.b16 %v654
  %v1841 = vunpack.c.l.b16 %v655
  %v1842 = vunpack.c.h.b16 %v655
  %v1843 = vunpack.c.l.b16 %v656
  %v1844 = vunpack.c.h.b16 %v656
  %v1845 = vunpack.c.l.b16 %v657
  %v1846 = vunpack.c.h.b16 %v657
  %v1847 = vunpack.c.l.b16 %v658
  %v1848 = vunpack.c.h.b16 %v658
  %v1849 = vunpack.c.l.b16 %v659
  %v1850 = vunpack.c.h.b16 %v659
  %v1851 = vunpack.c.l.b16 %v660
  %v1852 = vunpack.c.h.b16 %v660
  %v1853 = vunpack.c.l.b16 %v661
  %v1854 = vunpack.c.h.b16 %v661
  %v1855 = vunpack.c.l.b16 %v662
  %v1856 = vunpack.c.h.b16 %v662
  %v1857 = vunpack.c.l.b16 %v663
  %v1858 = vunpack.c.h.b16 %v663
  %v1859 = vunpack.c.l.b16 %v664
  %v1860 = vunpack.c.h.b16 %v664
  %v1861 = vunpack.c.l.b16 %v665
  %v1862 = vunpack.c.h.b16 %v665
  %v1863 = vunpack.c.l.b16 %v666
  %v1864 = vunpack.c.h.b16 %v666
  %v1865 = vunpack.c.l.b16 %v667
  %v1866 = vunpack.c.h.b16 %v667
  %v1867 = vunpack.c.l.b16 %v668
  %v1868 = vunpack.c.h.b16 %v668
  %v1869 = vunpack.c.l.b16 %v669
  %v1870 = vunpack.c.h.b16 %v669
  %v1871 = vunpack.c.l.b16 %v670
  %v1872 = vunpack.c.h.b16 %v670
  %v1873 = vunpack.c.l.b16 %v671
  %v1874 = vunpack.c.h.b16 %v671
  %v1875 = vunpack.c.l.b16 %v672
  %v1876 = vunpack.c.h.b16 %v672
  %v1877 = vunpack.c.l.b16 %v673
  %v1878 = vunpack.c.h.b16 %v673
  %v1879 = vunpack.c.l.b16 %v674
  %v1880 = vunpack.c.h.b16 %v674
  %v1881 = vunpack.c.l.b16 %v675
  %v1882 = vunpack.c.h.b16 %v675
  %v1883 = vunpack.c.l.b16 %v676
  %v1884 = vunpack.c.h.b16 %v676
  %v1885 = vunpack.c.l.b16 %v677
  %v1886 = vunpack.c.h.b16 %v677
  %v1887 = vunpack.c.l.b16 %v678
  %v1888 = vunpack.c.h.b16 %v678
  %v1889 = vunpack.c.l.b16 %v679
  %v1890 = vunpack.c.h.b16 %v679
  %v1891 = vunpack.c.l.b16 %v680
  %v1892 = vunpack.c.h.b16 %v680
  %v1893 = vunpack.c.l.b16 %v681
  %v1894 = vunpack.c.h.b16 %v681
  %v1895 = vunpack.c.l.b16 %v682
  %v1896 = vunpack.c.h.b16 %v682
  %v1897 = vunpack.c.l.b16 %v683
  %v1898 = vunpack.c.h.b16 %v683
  %v1899 = vunpack.c.l.b16 %v684
  %v1900 = vunpack.c.h.b16 %v684
  %v1901 = vunpack.c.l.b16 %v685
  %v1902 = vunpack.c.h.b16 %v685
  %v1903 = vunpack.c.l.b16 %v686
  %v1904 = vunpack.c.h.b16 %v686
  %v1905 = vunpack.c.l.b16 %v687
  %v1906 = vunpack.c.h.b16 %v687
  %v1907 = vunpack.c.l.b16 %v688
  %v1908 = vunpack.c.h.b16 %v688
  %v1909 = vunpack.c.l.b16 %v689
  %v1910 = vunpack.c.h.b16 %v689
  %v1911 = vunpack.c.l.b16 %v690
  %v1912 = vunpack.c.h.b16 %v690
  %v1913 = vunpack.c.l.b16 %v691
  %v1914 = vunpack.c.h.b16 %v691
  %v1915 = vunpack.c.l.b16 %v692
  %v1916 = vunpack.c.h.b16 %v692
  %v1917 = vunpack.c.l.b16 %v693
  %v1918 = vunpack.c.h.b16 %v693
  %v1919 = vunpack.c.l.b16 %v694
  %v1920 = vunpack.c.h.b16 %v694
  %v1921 = vunpack.c.l.b16 %v695
  %v1922 = vunpack.c.h.b16 %v695
  %v1923 = vunpack.c.l.b16 %v696
  %v1924 = vunpack.c.h.b16 %v696
  %v1925 = vunpack.c.l.b16 %v697
  %v1926 = vunpack.c.h.b16 %v697
  %v1927 = vunpack.c.l.b16 %v698
  %v1928 = vunpack.c.h.b16 %v698
  %v1929 = vunpack.c.l.b16 %v699
  %v1930 = vunpack.c.h.b16 %v699
  %v1931 = vunpack.c.l.b16 %v700
  %v1932 = vunpack.c.h.b16 %v700
  %v1933 = vunpack.c.l.b16 %v701
  %v1934 = vunpack.c.h.b16 %v701
  %v1935 = vunpack.c.l.b16 %v702
  %v1936 = vunpack.c.h.b16 %v702
  %v1937 = vunpack.c.l.b16 %v703
  %v1938 = vunpack.c.h.b16 %v703
  %v1939 = vunpack.c.l.b16 %v704
  %v1940 = vunpack.c.h.b16 %v704
  %v1941 = vunpack.c.l.b16 %v705
  %v1942 = vunpack.c.h.b16 %v705
  %v1943 = vunpack.c.l.b16 %v706
  %v1944 = vunpack.c.h.b16 %v706
  %v1945 = vunpack.c.l.b16 %v707
  %v1946 = vunpack.c.h.b16 %v707
  %v1947 = vunpack.c.l.b16 %v708
  %v1948 = vunpack.c.h.b16 %v708
  %v1949 = vunpack.c.l.b16 %v709
  %v1950 = vunpack.c.h.b16 %v709
  %v1951 = vunpack.c.l.b16 %v710
  %v1952 = vunpack.c.h.b16 %v710
  %v1953 = vunpack.c.l.b16 %v711
  %v1954 = vunpack.c.h.b16 %v711
  %v1955 = vunpack.c.l.b16 %v712
  %v1956 = vunpack.c.h.b16 %v712
  %v1957 = vunpack.c.l.b16 %v713
  %v1958 = vunpack.c.h.b16 %v713
  %v1959 = vunpack.c.l.b16 %v714
  %v1960 = vunpack.c.h.b16 %v714
  %v1961 = vunpack.c.l.b16 %v715
  %v1962 = vunpack.c.h.b16 %v715
  %v1963 = vunpack.c.l.b16 %v716
  %v1964 = vunpack.c.h.b16 %v716
  %v1965 = vunpack.c.l.b16 %v717
  %v1966 = vunpack.c.h.b16 %v717
  %v1967 = vunpack.c.l.b16 %v718
  %v1968 = vunpack.c.h.b16 %v718
  %v1969 = vunpack.c.l.b16 %v719
  %v1970 = vunpack.c.h.b16 %v719
  %v1971 = vunpack.c.l.b16 %v720
  %v1972 = vunpack.c.h.b16 %v720
  %v1973 = vunpack.c.l.b16 %v721
  %v1974 = vunpack.c.h.b16 %v721
  %v1975 = vunpack.c.l.b16 %v722
  %v1976 = vunpack.c.h.b16 %v722
  %v1977 = vunpack.c.l.b16 %v723
  %v1978 = vunpack.c.h.b16 %v723
  %v1979 = vunpack.c.l.b16 %v724
  %v1980 = vunpack.c.h.b16 %v724
  %v1981 = vunpack.c.l.b16 %v725
  %v1982 = vunpack.c.h.b16 %v725
  %v1983 = vunpack.c.l.b16 %v726
  %v1984 = vunpack.c.h.b16 %v726
  %v1985 = vunpack.c.l.b16 %v727
  %v1986 = vunpack.c.h.b16 %v727
  %v1987 = vunpack.c.l.b16 %v728
  %v1988 = vunpack.c.h.b16 %v728
  %v1989 = vunpack.c.l.b16 %v729
  %v1990 = vunpack.c.h.b16 %v729
  %v1991 = vunpack.c.l.b16 %v730
  %v1992 = vunpack.c.h.b16 %v730
  %v1993 = vunpack.c.l.b16 %v731
  %v1994 = vunpack.c.h.b16 %v731
  %v1995 = vunpack.c.l.b16 %v732
  %v1996 = vunpack.c.h.b16 %v732
  %v1997 = vunpack.c.l.b16 %v733
  %v1998 = vunpack.c.h.b16 %v733
  %v1999 = vunpack.c.l.b16 %v734
  %v2000 = vunpack.c.h.b16 %v734
  %v2001 = vunpack.c.l.b16 %v735
  %v2002 = vunpack.c.h.b16 %v735
  %v2003 = vunpack.c.l.b16 %v736
  %v2004 = vunpack.c.h.b16 %v736
  %v2005 = vunpack.c.l.b16 %v737
  %v2006 = vunpack.c.h.b16 %v737
  %v2007 = vunpack.c.l.b16 %v738
  %v2008 = vunpack.c.h.b16 %v738
  %v2009 = vunpack.c.l.b16 %v739
  %v2010 = vunpack.c.h.b16 %v739
  %v2011 = vunpack.c.l.b16 %v740
  %v2012 = vunpack.c.h.b16 %v740
  %v2013 = vunpack.c.l.b16 %v741
  %v2014 = vunpack.c.h.b16 %v741
  %v2015 = vunpack.c.l.b16 %v742
  %v2016 = vunpack.c.h.b16 %v742
  %v2017 = vunpack.c.l.b16 %v743
  %v2018 = vunpack.c.h.b16 %v743
  %v2019 = vunpack.c.l.b16 %v744
  %v2020 = vunpack.c.h.b16 %v744
  %v2021 = vunpack.c.l.b16 %v745
  %v2022 = vunpack.c.h.b16 %v745
  %v2023 = vunpack.c.l.b16 %v746
  %v2024 = vunpack.c.h.b16 %v746
  %v2025 = vunpack.c.l.b16 %v747
  %v2026 = vunpack.c.h.b16 %v747
  %v2027 = vunpack.c.l.b16 %v748
  %v2028 = vunpack.c.h.b16 %v748
  %v2029 = vunpack.c.l.b16 %v749
  %v2030 = vunpack.c.h.b16 %v749
  %v2031 = vunpack.c.l.b16 %v750
  %v2032 = vunpack.c.h.b16 %v750
  %v2033 = vunpack.c.l.b16 %v751
  %v2034 = vunpack.c.h.b16 %v751
  %v2035 = vunpack.c.l.b16 %v752
  %v2036 = vunpack.c.h.b16 %v752
  %v2037 = vunpack.c.l.b16 %v753
  %v2038 = vunpack.c.h.b16 %v753
  %v2039 = vunpack.c.l.b16 %v754
  %v2040 = vunpack.c.h.b16 %v754
  %v2041 = vunpack.c.l.b16 %v755
  %v2042 = vunpack.c.h.b16 %v755
  %v2043 = vunpack.c.l.b16 %v756
  %v2044 = vunpack.c.h.b16 %v756
  %v2045 = vunpack.c.l.b16 %v757
  %v2046 = vunpack.c.h.b16 %v757
  %v2047 = vunpack.c.l.b16 %v758
  %v2048 = vunpack.c.h.b16 %v758
  %v2049 = vunpack.c.l.b16 %v759
  %v2050 = vunpack.c.h.b16 %v759
  %v2051 = vunpack.c.l.b16 %v760
  %v2052 = vunpack.c.h.b16 %v760
  %v2053 = vunpack.c.l.b16 %v761
  %v2054 = vunpack.c.h.b16 %v761
  %v2055 = vunpack.c.l.b16 %v762
  %v2056 = vunpack.c.h.b16 %v762
  %v2057 = vunpack.c.l.b16 %v763
  %v2058 = vunpack.c.h.b16 %v763
  %v2059 = vunpack.c.l.b16 %v764
  %v2060 = vunpack.c.h.b16 %v764
  %v2061 = vunpack.c.l.b16 %v765
  %v2062 = vunpack.c.h.b16 %v765
  %v2063 = vunpack.c.l.b16 %v766
  %v2064 = vunpack.c.h.b16 %v766
  %v2065 = vunpack.c.l.b16 %v767
  %v2066 = vunpack.c.h.b16 %v767
  %v2067 = vunpack.c.l.b16 %v768
  %v2068 = vunpack.c.h.b16 %v768
  %v2069 = vunpack.c.l.b16 %v769
  %v2070 = vunpack.c.h.b16 %v769
  %v2071 = vunpack.c.l.b16 %v770
  %v2072 = vunpack.c.h.b16 %v770
  %v2073 = vunpack.c.l.b16 %v771
  %v2074 = vunpack.c.h.b16 %v771
  %v2075 = vunpack.c.l.b16 %v772
  %v2076 = vunpack.c.h.b16 %v772
  %v2077 = vunpack.c.l.b16 %v773
  %v2078 = vunpack.c.h.b16 %v773
  %v2079 = vunpack.c.l.b16 %v774
  %v2080 = vunpack.c.h.b16 %v774
  %v2081 = vunpack.c.l.b16 %v775
  %v2082 = vunpack.c.h.b16 %v775
  %v2083 = vunpack.c.l.b16 %v776
  %v2084 = vunpack.c.h.b16 %v776
  %v2085 = vunpack.c.l.b16 %v777
  %v2086 = vunpack.c.h.b16 %v777
  %v2087 = vunpack.c.l.b16 %v778
  %v2088 = vunpack.c.h.b16 %v778
  %v2089 = vunpack.c.l.b16 %v779
  %v2090 = vunpack.c.h.b16 %v779
  %v2091 = vunpack.c.l.b16 %v780
  %v2092 = vunpack.c.h.b16 %v780
  %v2093 = vunpack.c.l.b16 %v781
  %v2094 = vunpack.c.h.b16 %v781
  %v2095 = vunpack.c.l.b16 %v782
  %v2096 = vunpack.c.h.b16 %v782
  %v2097 = vunpack.c.l.b16 %v783
  %v2098 = vunpack.c.h.b16 %v783
  %v2099 = vunpack.c.l.b16 %v784
  %v2100 = vunpack.c.h.b16 %v784
  %v2101 = vunpack.c.l.b16 %v785
  %v2102 = vunpack.c.h.b16 %v785
  %v2103 = vunpack.c.l.b16 %v786
  %v2104 = vunpack.c.h.b16 %v786
  %v2105 = vunpack.c.l.b16 %v787
  %v2106 = vunpack.c.h.b16 %v787
  %v2107 = vunpack.c.l.b16 %v788
  %v2108 = vunpack.c.h.b16 %v788
  %v2109 = vunpack.c.l.b16 %v789
  %v2110 = vunpack.c.h.b16 %v789
  %v2111 = vunpack.c.l.b16 %v790
  %v2112 = vunpack.c.h.b16 %v790
  %v2113 = vunpack.c.l.b16 %v791
  %v2114 = vunpack.c.h.b16 %v791
  %v2115 = vunpack.c.l.b16 %v792
  %v2116 = vunpack.c.h.b16 %v792
  %v2117 = vunpack.c.l.b16 %v793
  %v2118 = vunpack.c.h.b16 %v793
  %v2119 = vunpack.c.l.b16 %v794
  %v2120 = vunpack.c.h.b16 %v794
  %v2121 = vunpack.c.l.b16 %v795
  %v2122 = vunpack.c.h.b16 %v795
  %v2123 = vunpack.c.l.b16 %v796
  %v2124 = vunpack.c.h.b16 %v796
  %v2125 = vunpack.c.l.b16 %v797
  %v2126 = vunpack.c.h.b16 %v797
  %v2127 = vunpack.c.l.b16 %v798
  %v2128 = vunpack.c.h.b16 %v798
  %v2129 = vunpack.c.l.b16 %v799
  %v2130 = vunpack.c.h.b16 %v799
  %v2131 = vunpack.c.l.b16 %v800
  %v2132 = vunpack.c.h.b16 %v800
  %v2133 = vunpack.c.l.b16 %v801
  %v2134 = vunpack.c.h.b16 %v801
  %v2135 = vunpack.c.l.b16 %v802
  %v2136 = vunpack.c.h.b16 %v802
  %v2137 = vunpack.c.l.b16 %v803
  %v2138 = vunpack.c.h.b16 %v803
  %v2139 = vunpack.c.l.b16 %v804
  %v2140 = vunpack.c.h.b16 %v804
  %v2141 = vunpack.c.l.b16 %v805
  %v2142 = vunpack.c.h.b16 %v805
  %v2143 = vunpack.c.l.b16 %v806
  %v2144 = vunpack.c.h.b16 %v806
  %v2145 = vunpack.c.l.b16 %v807
  %v2146 = vunpack.c.h.b16 %v807
  %v2147 = vunpack.c.l.b16 %v808
  %v2148 = vunpack.c.h.b16 %v808
  %v2149 = vunpack.c.l.b16 %v809
  %v2150 = vunpack.c.h.b16 %v809
  %v2151 = vunpack.c.l.b16 %v810
  %v2152 = vunpack.c.h.b16 %v810
  %v2153 = vunpack.c.l.b16 %v811
  %v2154 = vunpack.c.h.b16 %v811
  %v2155 = vunpack.c.l.b16 %v812
  %v2156 = vunpack.c.h.b16 %v812
  %v2157 = vunpack.c.l.b16 %v813
  %v2158 = vunpack.c.h.b16 %v813
  %v2159 = vunpack.c.l.b16 %v814
  %v2160 = vunpack.c.h.b16 %v814
  %v2161 = vunpack.c.l.b16 %v815
  %v2162 = vunpack.c.h.b16 %v815
  %v2163 = vunpack.c.l.b16 %v816
  %v2164 = vunpack.c.h.b16 %v816
  %v2165 = vunpack.c.l.b16 %v817
  %v2166 = vunpack.c.h.b16 %v817
  %v2167 = vunpack.c.l.b16 %v818
  %v2168 = vunpack.c.h.b16 %v818
  %v2169 = vunpack.c.l.b16 %v819
  %v2170 = vunpack.c.h.b16 %v819
  %v2171 = vunpack.c.l.b16 %v820
  %v2172 = vunpack.c.h.b16 %v820
  %v2173 = vunpack.c.l.b16 %v821
  %v2174 = vunpack.c.h.b16 %v821
  %v2175 = vunpack.c.l.b16 %v822
  %v2176 = vunpack.c.h.b16 %v822
  %v2177 = vunpack.c.l.b16 %v823
  %v2178 = vunpack.c.h.b16 %v823
  %v2179 = vunpack.c.l.b16 %v824
  %v2180 = vunpack.c.h.b16 %v824
  %v2181 = vunpack.c.l.b16 %v825
  %v2182 = vunpack.c.h.b16 %v825
  %v2183 = vunpack.c.l.b16 %v826
  %v2184 = vunpack.c.h.b16 %v826
  %v2185 = vunpack.c.l.b16 %v827
  %v2186 = vunpack.c.h.b16 %v827
  %v2187 = vunpack.c.l.b16 %v828
  %v2188 = vunpack.c.h.b16 %v828
  %v2189 = vunpack.c.l.b16 %v829
  %v2190 = vunpack.c.h.b16 %v829
  %v2191 = vunpack.c.l.b16 %v830
  %v2192 = vunpack.c.h.b16 %v830
  %v2193 = vunpack.c.l.b16 %v831
  %v2194 = vunpack.c.h.b16 %v831
  %v2195 = vunpack.c.l.b16 %v832
  %v2196 = vunpack.c.h.b16 %v832
  %v2197 = vunpack.c.l.b16 %v833
  %v2198 = vunpack.c.h.b16 %v833
  %v2199 = vunpack.c.l.b16 %v834
  %v2200 = vunpack.c.h.b16 %v834
  %v2201 = vunpack.c.l.b16 %v835
  %v2202 = vunpack.c.h.b16 %v835
  %v2203 = vunpack.c.l.b16 %v836
  %v2204 = vunpack.c.h.b16 %v836
  %v2205 = vunpack.c.l.b16 %v837
  %v2206 = vunpack.c.h.b16 %v837
  %v2207 = vunpack.c.l.b16 %v838
  %v2208 = vunpack.c.h.b16 %v838
  %v2209 = vunpack.c.l.b16 %v839
  %v2210 = vunpack.c.h.b16 %v839
  %v2211 = vunpack.c.l.b16 %v840
  %v2212 = vunpack.c.h.b16 %v840
  %v2213 = vunpack.c.l.b16 %v841
  %v2214 = vunpack.c.h.b16 %v841
  %v2215 = vunpack.c.l.b16 %v842
  %v2216 = vunpack.c.h.b16 %v842
  %v2217 = vunpack.c.l.b16 %v843
  %v2218 = vunpack.c.h.b16 %v843
  %v2219 = vunpack.c.l.b16 %v844
  %v2220 = vunpack.c.h.b16 %v844
  %v2221 = vunpack.c.l.b16 %v845
  %v2222 = vunpack.c.h.b16 %v845
  %v2223 = vunpack.c.l.b16 %v846
  %v2224 = vunpack.c.h.b16 %v846
  %v2225 = vunpack.c.l.b16 %v847
  %v2226 = vunpack.c.h.b16 %v847
  %v2227 = vunpack.c.l.b16 %v848
  %v2228 = vunpack.c.h.b16 %v848
  %v2229 = vunpack.c.l.b16 %v849
  %v2230 = vunpack.c.h.b16 %v849
  %v2231 = vunpack.c.l.b16 %v850
  %v2232 = vunpack.c.h.b16 %v850
  %v2233 = vunpack.c.l.b16 %v851
  %v2234 = vunpack.c.h.b16 %v851
  %v2235 = vunpack.c.l.b16 %v852
  %v2236 = vunpack.c.h.b16 %v852
  %v2237 = vunpack.c.l.b16 %v853
  %v2238 = vunpack.c.h.b16 %v853
  %v2239 = vunpack.c.l.b16 %v854
  %v2240 = vunpack.c.h.b16 %v854
  %v2241 = vunpack.c.l.b16 %v855
  %v2242 = vunpack.c.h.b16 %v855
  %v2243 = vunpack.c.l.b16 %v856
  %v2244 = vunpack.c.h.b16 %v856
  %v2245 = vunpack.c.l.b16 %v857
  %v2246 = vunpack.c.h.b16 %v857
  %v2247 = vunpack.c.l.b16 %v858
  %v2248 = vunpack.c.h.b16 %v858
  %v2249 = vunpack.c.l.b16 %v859
  %v2250 = vunpack.c.h.b16 %v859
  %v2251 = vunpack.c.l.b16 %v860
  %v2252 = vunpack.c.h.b16 %v860
  %v2253 = vunpack.c.l.b16 %v861
  %v2254 = vunpack.c.h.b16 %v861
  %v2255 = vunpack.c.l.b16 %v862
  %v2256 = vunpack.c.h.b16 %v862
  %v2257 = vunpack.c.l.b16 %v863
  %v2258 = vunpack.c.h.b16 %v863
  %v2259 = vunpack.c.l.b16 %v864
  %v2260 = vunpack.c.h.b16 %v864
  %v2261 = vunpack.c.l.b16 %v865
  %v2262 = vunpack.c.h.b16 %v865
  %v2263 = vunpack.c.l.b16 %v866
  %v2264 = vunpack.c.h.b16 %v866
  %v2265 = vunpack.c.l.b16 %v867
  %v2266 = vunpack.c.h.b16 %v867
  %v2267 = vunpack.c.l.b16 %v868
  %v2268 = vunpack.c.h.b16 %v868
  %v2269 = vunpack.c.l.b16 %v869
  %v2270 = vunpack.c.h.b16 %v869
  %v2271 = vunpack.c.l.b16 %v870
  %v2272 = vunpack.c.h.b16 %v870
  %v2273 = vunpack.c.l.b16 %v871
  %v2274 = vunpack.c.h.b16 %v871
  %v2275 = vunpack.c.l.b16 %v872
  %v2276 = vunpack.c.h.b16 %v872
  %v2277 = vunpack.c.l.b16 %v873
  %v2278 = vunpack.c.h.b16 %v873
  %v2279 = vunpack.c.l.b16 %v874
  %v2280 = vunpack.c.h.b16 %v874
  %v2281 = vunpack.c.l.b16 %v875
  %v2282 = vunpack.c.h.b16 %v875
  %v2283 = vunpack.c.l.b16 %v876
  %v2284 = vunpack.c.h.b16 %v876
  %v2285 = vunpack.c.l.b16 %v877
  %v2286 = vunpack.c.h.b16 %v877
  %v2287 = vunpack.c.l.b16 %v878
  %v2288 = vunpack.c.h.b16 %v878
  %v2289 = vunpack.c.l.b16 %v879
  %v2290 = vunpack.c.h.b16 %v879
  %v2291 = vunpack.c.l.b16 %v880
  %v2292 = vunpack.c.h.b16 %v880
  %v2293 = vunpack.c.l.b16 %v881
  %v2294 = vunpack.c.h.b16 %v881
  %v2295 = vunpack.c.l.b16 %v882
  %v2296 = vunpack.c.h.b16 %v882
  %v2297 = vunpack.c.l.b16 %v883
  %v2298 = vunpack.c.h.b16 %v883
  %v2299 = vunpack.c.l.b16 %v884
  %v2300 = vunpack.c.h.b16 %v884
  %v2301 = vunpack.c.l.b16 %v885
  %v2302 = vunpack.c.h.b16 %v885
  %v2303 = vunpack.c.l.b16 %v886
  %v2304 = vunpack.c.h.b16 %v886
  %v2305 = vunpack.c.l.b16 %v887
  %v2306 = vunpack.c.h.b16 %v887
  %v2307 = vunpack.c.l.b16 %v888
  %v2308 = vunpack.c.h.b16 %v888
  %v2309 = vunpack.c.l.b16 %v889
  %v2310 = vunpack.c.h.b16 %v889
  %v2311 = vunpack.c.l.b16 %v890
  %v2312 = vunpack.c.h.b16 %v890
  %v2313 = vunpack.c.l.b16 %v891
  %v2314 = vunpack.c.h.b16 %v891
  %v2315 = vunpack.c.l.b16 %v892
  %v2316 = vunpack.c.h.b16 %v892
  %v2317 = vunpack.c.l.b16 %v893
  %v2318 = vunpack.c.h.b16 %v893
  %v2319 = vunpack.c.l.b16 %v894
  %v2320 = vunpack.c.h.b16 %v894
  %v2321 = vunpack.c.l.b16 %v895
  %v2322 = vunpack.c.h.b16 %v895
  %v2323 = vunpack.c.l.b16 %v896
  %v2324 = vunpack.c.h.b16 %v896
  %v2325 = vunpack.c.l.b16 %v897
  %v2326 = vunpack.c.h.b16 %v897
  %v2327 = vunpack.c.l.b16 %v898
  %v2328 = vunpack.c.h.b16 %v898
  %v2329 = vunpack.c.l.b16 %v899
  %v2330 = vunpack.c.h.b16 %v899
  %v2331 = vunpack.c.l.b16 %v900
  %v2332 = vunpack.c.h.b16 %v900
  %v2333 = vunpack.c.l.b16 %v901
  %v2334 = vunpack.c.h.b16 %v901
  %v2335 = vunpack.c.l.b16 %v902
  %v2336 = vunpack.c.h.b16 %v902
  %v2337 = vunpack.c.l.b16 %v903
  %v2338 = vunpack.c.h.b16 %v903
  %v2339 = vunpack.c.l.b16 %v904
  %v2340 = vunpack.c.h.b16 %v904
  %v2341 = vunpack.c.l.b16 %v905
  %v2342 = vunpack.c.h.b16 %v905
  %v2343 = vunpack.c.l.b16 %v906
  %v2344 = vunpack.c.h.b16 %v906
  %v2345 = vunpack.c.l.b16 %v907
  %v2346 = vunpack.c.h.b16 %v907
  %v2347 = vunpack.c.l.b16 %v908
  %v2348 = vunpack.c.h.b16 %v908
  %v2349 = vunpack.c.l.b16 %v909
  %v2350 = vunpack.c.h.b16 %v909
  %v2351 = vunpack.c.l.b16 %v910
  %v2352 = vunpack.c.h.b16 %v910
  %v2353 = vunpack.c.l.b16 %v911
  %v2354 = vunpack.c.h.b16 %v911
  %v2355 = vunpack.c.l.b16 %v912
  %v2356 = vunpack.c.h.b16 %v912
  %v2357 = vunpack.c.l.b16 %v913
  %v2358 = vunpack.c.h.b16 %v913
  %v2359 = vunpack.c.l.b16 %v914
  %v2360 = vunpack.c.h.b16 %v914
  %v2361 = vunpack.c.l.b16 %v915
  %v2362 = vunpack.c.h.b16 %v915
  %v2363 = vunpack.c.l.b16 %v916
  %v2364 = vunpack.c.h.b16 %v916
  %v2365 = vunpack.c.l.b16 %v917
  %v2366 = vunpack.c.h.b16 %v917
  %v2367 = vunpack.c.l.b16 %v918
  %v2368 = vunpack.c.h.b16 %v918
  %v2369 = vunpack.c.l.b16 %v919
  %v2370 = vunpack.c.h.b16 %v919
  %v2371 = vunpack.c.l.b16 %v920
  %v2372 = vunpack.c.h.b16 %v920
  %v2373 = vunpack.c.l.b16 %v921
  %v2374 = vunpack.c.h.b16 %v921
  %v2375 = vunpack.c.l.b16 %v922
  %v2376 = vunpack.c.h.b16 %v922
  %v2377 = vunpack.c.l.b16 %v923
  %v2378 = vunpack.c.h.b16 %v923
  %v2379 = vunpack.c.l.b16 %v924
  %v2380 = vunpack.c.h.b16 %v924
  %v2381 = vunpack.c.l.b16 %v925
  %v2382 = vunpack.c.h.b16 %v925
  %v2383 = vunpack.c.l.b16 %v926
  %v2384 = vunpack.c.h.b16 %v926
  %v2385 = vunpack.c.l.b16 %v927
  %v2386 = vunpack.c.h.b16 %v927
  %v2387 = vunpack.c.l.b16 %v928
  %v2388 = vunpack.c.h.b16 %v928
  %v2389 = vunpack.c.l.b16 %v929
  %v2390 = vunpack.c.h.b16 %v929
  %v2391 = vunpack.c.l.b16 %v930
  %v2392 = vunpack.c.h.b16 %v930
  %v2393 = vunpack.c.l.b16 %v931
  %v2394 = vunpack.c.h.b16 %v931
  %v2395 = vunpack.c.l.b16 %v932
  %v2396 = vunpack.c.h.b16 %v932
  %v2397 = vunpack.c.l.b16 %v933
  %v2398 = vunpack.c.h.b16 %v933
  %v2399 = vunpack.c.l.b16 %v934
  %v2400 = vunpack.c.h.b16 %v934
  %v2401 = vunpack.c.l.b16 %v935
  %v2402 = vunpack.c.h.b16 %v935
  %v2403 = vunpack.c.l.b16 %v936
  %v2404 = vunpack.c.h.b16 %v936
  %v2405 = vunpack.c.l.b16 %v937
  %v2406 = vunpack.c.h.b16 %v937
  %v2407 = vunpack.c.l.b16 %v938
  %v2408 = vunpack.c.h.b16 %v938
  %v2409 = vunpack.c.l.b16 %v939
  %v2410 = vunpack.c.h.b16 %v939
  %v2411 = vunpack.c.l.b16 %v940
  %v2412 = vunpack.c.h.b16 %v940
  %v2413 = vunpack.c.l.b16 %v941
  %v2414 = vunpack.c.h.b16 %v941
  %v2415 = vunpack.c.l.b16 %v942
  %v2416 = vunpack.c.h.b16 %v942
  %v2417 = vunpack.c.l.b16 %v943
  %v2418 = vunpack.c.h.b16 %v943
  %v2419 = vunpack.c.l.b16 %v944
  %v2420 = vunpack.c.h.b16 %v944
  %v2421 = vunpack.c.l.b16 %v945
  %v2422 = vunpack.c.h.b16 %v945
  %v2423 = vunpack.c.l.b16 %v946
  %v2424 = vunpack.c.h.b16 %v946
  %v2425 = vunpack.c.l.b16 %v947
  %v2426 = vunpack.c.h.b16 %v947
  %v2427 = vunpack.c.l.b16 %v948
  %v2428 = vunpack.c.h.b16 %v948
  %v2429 = vunpack.c.l.b16 %v949
  %v2430 = vunpack.c.h.b16 %v949
  %v2431 = vunpack.c.l.b16 %v950
  %v2432 = vunpack.c.h.b16 %v950
  %v2433 = vunpack.c.l.b16 %v951
  %v2434 = vunpack.c.h.b16 %v951
  %v2435 = vunpack.c.l.b16 %v952
  %v2436 = vunpack.c.h.b16 %v952
  %v2437 = vunpack.c.l.b16 %v953
  %v2438 = vunpack.c.h.b16 %v953
  %v2439 = vunpack.c.l.b16 %v954
  %v2440 = vunpack.c.h.b16 %v954
  %v2441 = vunpack.c.l.b16 %v955
  %v2442 = vunpack.c.h.b16 %v955
  %v2443 = vunpack.c.l.b16 %v956
  %v2444 = vunpack.c.h.b16 %v956
  %v2445 = vunpack.c.l.b16 %v957
  %v2446 = vunpack.c.h.b16 %v957
  %v2447 = vunpack.c.l.b16 %v958
  %v2448 = vunpack.c.h.b16 %v958
  %v2449 = vunpack.c.l.b16 %v959
  %v2450 = vunpack.c.h.b16 %v959
  %v2451 = vunpack.c.l.b16 %v960
  %v2452 = vunpack.c.h.b16 %v960
  %v2453 = vunpack.c.l.b16 %v961
  %v2454 = vunpack.c.h.b16 %v961
  %v2455 = vunpack.c.l.b16 %v962
  %v2456 = vunpack.c.h.b16 %v962
  %v2457 = vunpack.c.l.b16 %v963
  %v2458 = vunpack.c.h.b16 %v963
  %v2459 = vunpack.c.l.b16 %v964
  %v2460 = vunpack.c.h.b16 %v964
  %v2461 = vunpack.c.l.b16 %v965
  %v2462 = vunpack.c.h.b16 %v965
  %v2463 = vunpack.c.l.b16 %v966
  %v2464 = vunpack.c.h.b16 %v966
  %v2465 = vunpack.c.l.b16 %v967
  %v2466 = vunpack.c.h.b16 %v967
  %v2467 = vunpack.c.l.b16 %v968
  %v2468 = vunpack.c.h.b16 %v968
  %v2469 = vunpack.c.l.b16 %v969
  %v2470 = vunpack.c.h.b16 %v969
  %v2471 = vunpack.c.l.b16 %v970
  %v2472 = vunpack.c.h.b16 %v970
  %v2473 = vunpack.c.l.b16 %v971
  %v2474 = vunpack.c.h.b16 %v971
  %v2475 = vunpack.c.l.b16 %v972
  %v2476 = vunpack.c.h.b16 %v972
  %v2477 = vunpack.c.l.b16 %v973
  %v2478 = vunpack.c.h.b16 %v973
  %v2479 = vunpack.c.l.b16 %v974
  %v2480 = vunpack.c.h.b16 %v974
  %v2481 = vunpack.c.l.b16 %v975
  %v2482 = vunpack.c.h.b16 %v975
  %v2483 = vunpack.c.l.b16 %v976
  %v2484 = vunpack.c.h.b16 %v976
  %v2485 = vunpack.c.l.b16 %v977
  %v2486 = vunpack.c.h.b16 %v977
  %v2487 = vunpack.c.l.b16 %v978
  %v2488 = vunpack.c.h.b16 %v978
  %v2489 = vunpack.c.l.b16 %v979
  %v2490 = vunpack.c.h.b16 %v979
  %v2491 = vunpack.c.l.b16 %v980
  %v2492 = vunpack.c.h.b16 %v980
  %v2493 = vunpack.c.l.b16 %v981
  %v2494 = vunpack.c.h.b16 %v981
  %v2495 = vunpack.c.l.b16 %v982
  %v2496 = vunpack.c.h.b16 %v982
  %v2497 = vunpack.c.l.b16 %v983
  %v2498 = vunpack.c.h.b16 %v983
  %v2499 = vunpack.c.l.b16 %v984
  %v2500 = vunpack.c.h.b16 %v984
  %v2501 = vunpack.c.l.b16 %v985
  %v2502 = vunpack.c.h.b16 %v985
  %v2503 = vunpack.c.l.b16 %v986
  %v2504 = vunpack.c.h.b16 %v986
  %v2505 = vunpack.c.l.b16 %v987
  %v2506 = vunpack.c.h.b16 %v987
  %v2507 = vunpack.c.l.b16 %v988
  %v2508 = vunpack.c.h.b16 %v988
  %v2509 = vunpack.c.l.b16 %v989
  %v2510 = vunpack.c.h.b16 %v989
  %v2511 = vunpack.c.l.b16 %v990
  %v2512 = vunpack.c.h.b16 %v990
  %v2513 = vunpack.c.l.b16 %v991
  %v2514 = vunpack.c.h.b16 %v991
  %v2515 = vunpack.c.l.b16 %v992
  %v2516 = vunpack.c.h.b16 %v992
  %v2517 = vunpack.c.l.b16 %v993
  %v2518 = vunpack.c.h.b16 %v993
  %v2519 = vunpack.c.l.b16 %v994
  %v2520 = vunpack.c.h.b16 %v994
  %v2521 = vunpack.c.l.b16 %v995
  %v2522 = vunpack.c.h.b16 %v995
  %v2523 = vunpack.c.l.b16 %v996
  %v2524 = vunpack.c.h.b16 %v996
  %v2525 = vunpack.c.l.b16 %v997
  %v2526 = vunpack.c.h.b16 %v997
  %v2527 = vunpack.c.l.b16 %v998
  %v2528 = vunpack.c.h.b16 %v998
  %v2529 = vunpack.c.l.b16 %v999
  %v2530 = vunpack.c.h.b16 %v999
  %v2531 = vunpack.c.l.b16 %v1000
  %v2532 = vunpack.c.h.b16 %v1000
  %v2533 = vunpack.c.l.b16 %v1001
  %v2534 = vunpack.c.h.b16 %v1001
  %v2535 = vunpack.c.l.b16 %v1002
  %v2536 = vunpack.c.h.b16 %v1002
  %v2537 = vunpack.c.l.b16 %v1003
  %v2538 = vunpack.c.h.b16 %v1003
  %v2539 = vunpack.c.l.b16 %v1004
  %v2540 = vunpack.c.h.b16 %v1004
  %v2541 = vunpack.c.l.b16 %v1005
  %v2542 = vunpack.c.h.b16 %v1005
  %v2543 = vunpack.c.l.b16 %v1006
  %v2544 = vunpack.c.h.b16 %v1006
  %v2545 = vunpack.c.l.b16 %v1007
  %v2546 = vunpack.c.h.b16 %v1007
  %v2547 = vunpack.c.l.b16 %v1008
  %v2548 = vunpack.c.h.b16 %v1008
  %v2549 = vunpack.c.l.b16 %v1009
  %v2550 = vunpack.c.h.b16 %v1009
  %v2551 = vunpack.c.l.b16 %v1010
  %v2552 = vunpack.c.h.b16 %v1010
  %v2553 = vunpack.c.l.b16 %v1011
  %v2554 = vunpack.c.h.b16 %v1011
  %v2555 = vunpack.c.l.b16 %v1012
  %v2556 = vunpack.c.h.b16 %v1012
  %v2557 = vunpack.c.l.b16 %v1013
  %v2558 = vunpack.c.h.b16 %v1013
  %v2559 = vunpack.c.l.b16 %v1014
  %v2560 = vunpack.c.h.b16 %v1014
  %v2561 = vunpack.c.l.b16 %v1015
  %v2562 = vunpack.c.h.b16 %v1015
  %v2563 = vunpack.c.l.b16 %v1016
  %v2564 = vunpack.c.h.b16 %v1016
  %v2565 = vunpack.c.l.b16 %v1017
  %v2566 = vunpack.c.h.b16 %v1017
  %v2567 = vunpack.c.l.b16 %v1018
  %v2568 = vunpack.c.h.b16 %v1018
  %v2569 = vunpack.c.l.b16 %v1019
  %v2570 = vunpack.c.h.b16 %v1019
  %v2571 = vunpack.c.l.b16 %v1020
  %v2572 = vunpack.c.h.b16 %v1020
  %v2573 = vunpack.c.l.b16 %v1021
  %v2574 = vunpack.c.h.b16 %v1021
  %v2575 = vunpack.c.l.b16 %v1022
  %v2576 = vunpack.c.h.b16 %v1022
  %v2577 = vunpack.c.l.b16 %v1023
  %v2578 = vunpack.c.h.b16 %v1023
  %v2579 = vunpack.c.l.b16 %v1024
  %v2580 = vunpack.c.h.b16 %v1024
  %v2581 = vunpack.c.l.b16 %v1025
  %v2582 = vunpack.c.h.b16 %v1025
  %v2583 = vunpack.c.l.b16 %v1026
  %v2584 = vunpack.c.h.b16 %v1026
  %v2585 = vunpack.c.l.b16 %v1027
  %v2586 = vunpack.c.h.b16 %v1027
  %v2587 = vunpack.c.l.b16 %v1028
  %v2588 = vunpack.c.h.b16 %v1028
  %v2589 = vunpack.c.l.b16 %v1029
  %v2590 = vunpack.c.h.b16 %v1029
  %v2591 = vunpack.c.l.b16 %v1030
  %v2592 = vunpack.c.h.b16 %v1030
  %v2593 = vunpack.c.l.b16 %v1031
  %v2594 = vunpack.c.h.b16 %v1031
  %v2595 = vunpack.c.l.b16 %v1032
  %v2596 = vunpack.c.h.b16 %v1032
  %v2597 = vunpack.c.l.b16 %v1033
  %v2598 = vunpack.c.h.b16 %v1033
  %v2599 = vunpack.c.l.b16 %v1034
  %v2600 = vunpack.c.h.b16 %v1034
  %v2601 = vunpack.c.l.b16 %v1035
  %v2602 = vunpack.c.h.b16 %v1035
  %v2603 = vunpack.c.l.b16 %v1036
  %v2604 = vunpack.c.h.b16 %v1036
  %v2605 = vunpack.c.l.b16 %v1037
  %v2606 = vunpack.c.h.b16 %v1037
  %v2607 = vunpack.c.l.b16 %v1038
  %v2608 = vunpack.c.h.b16 %v1038
  %v2609 = vunpack.c.l.b16 %v1039
  %v2610 = vunpack.c.h.b16 %v1039
  %v2611 = vunpack.c.l.b16 %v1040
  %v2612 = vunpack.c.h.b16 %v1040
  %v2613 = vunpack.c.l.b16 %v1041
  %v2614 = vunpack.c.h.b16 %v1041
  %v2615 = vunpack.c.l.b16 %v1042
  %v2616 = vunpack.c.h.b16 %v1042
  %v2617 = vunpack.c.l.b16 %v1043
  %v2618 = vunpack.c.h.b16 %v1043
  %v2619 = vunpack.c.l.b16 %v1044
  %v2620 = vunpack.c.h.b16 %v1044
  %v2621 = vunpack.c.l.b16 %v1045
  %v2622 = vunpack.c.h.b16 %v1045
  %v2623 = vunpack.c.l.b16 %v1046
  %v2624 = vunpack.c.h.b16 %v1046
  %v2625 = vunpack.c.l.b16 %v1047
  %v2626 = vunpack.c.h.b16 %v1047
  %v2627 = vunpack.c.l.b16 %v1048
  %v2628 = vunpack.c.h.b16 %v1048
  %v2629 = vunpack.c.l.b16 %v1049
  %v2630 = vunpack.c.h.b16 %v1049
  %v2631 = vunpack.c.l.b16 %v1050
  %v2632 = vunpack.c.h.b16 %v1050
  %v2633 = vunpack.c.l.b16 %v1051
  %v2634 = vunpack.c.h.b16 %v1051
  %v2635 = vunpack.c.l.b16 %v1052
  %v2636 = vunpack.c.h.b16 %v1052
  %v2637 = vunpack.c.l.b16 %v1053
  %v2638 = vunpack.c.h.b16 %v1053
  %v2639 = vunpack.c.l.b16 %v1054
  %v2640 = vunpack.c.h.b16 %v1054
  %v2641 = vunpack.c.l.b16 %v1055
  %v2642 = vunpack.c.h.b16 %v1055
  %v2643 = vunpack.c.l.b16 %v1056
  %v2644 = vunpack.c.h.b16 %v1056
  %v2645 = vunpack.c.l.b16 %v1057
  %v2646 = vunpack.c.h.b16 %v1057
  %v2647 = vunpack.c.l.b16 %v1058
  %v2648 = vunpack.c.h.b16 %v1058
  %v2649 = vunpack.c.l.b16 %v1059
  %v2650 = vunpack.c.h.b16 %v1059
  %v2651 = vunpack.c.l.b16 %v1060
  %v2652 = vunpack.c.h.b16 %v1060
  %v2653 = vunpack.c.l.b16 %v1061
  %v2654 = vunpack.c.h.b16 %v1061
  %v2655 = vunpack.c.l.b16 %v1062
  %v2656 = vunpack.c.h.b16 %v1062
  %v2657 = vunpack.c.l.b16 %v1063
  %v2658 = vunpack.c.h.b16 %v1063
  %v2659 = vunpack.c.l.b16 %v1064
  %v2660 = vunpack.c.h.b16 %v1064
  %v2661 = vunpack.c.l.b16 %v1065
  %v2662 = vunpack.c.h.b16 %v1065
  %v2663 = vunpack.c.l.b16 %v1066
  %v2664 = vunpack.c.h.b16 %v1066
  %v2665 = vunpack.c.l.b16 %v1067
  %v2666 = vunpack.c.h.b16 %v1067
  %v2667 = vunpack.c.l.b16 %v1068
  %v2668 = vunpack.c.h.b16 %v1068
  %v2669 = vunpack.c.l.b16 %v1069
  %v2670 = vunpack.c.h.b16 %v1069
  %v2671 = vunpack.c.l.b16 %v1070
  %v2672 = vunpack.c.h.b16 %v1070
  %v2673 = vunpack.c.l.b16 %v1071
  %v2674 = vunpack.c.h.b16 %v1071
  %v2675 = vunpack.c.l.b16 %v1072
  %v2676 = vunpack.c.h.b16 %v1072
  %v2677 = vunpack.c.l.b16 %v1073
  %v2678 = vunpack.c.h.b16 %v1073
  %v2679 = vunpack.c.l.b16 %v1074
  %v2680 = vunpack.c.h.b16 %v1074
  %v2681 = vunpack.c.l.b16 %v1075
  %v2682 = vunpack.c.h.b16 %v1075
  %v2683 = vunpack.c.l.b16 %v1076
  %v2684 = vunpack.c.h.b16 %v1076
  %v2685 = vunpack.c.l.b16 %v1077
  %v2686 = vunpack.c.h.b16 %v1077
  %v2687 = vunpack.c.l.b16 %v1078
  %v2688 = vunpack.c.h.b16 %v1078
  %v2689 = vunpack.c.l.b16 %v1079
  %v2690 = vunpack.c.h.b16 %v1079
  %v2691 = vunpack.c.l.b16 %v1080
  %v2692 = vunpack.c.h.b16 %v1080
  %v2693 = vunpack.c.l.b16 %v1081
  %v2694 = vunpack.c.h.b16 %v1081
  %v2695 = vunpack.c.l.b16 %v1082
  %v2696 = vunpack.c.h.b16 %v1082
  %v2697 = vunpack.c.l.b16 %v1083
  %v2698 = vunpack.c.h.b16 %v1083
  %v2699 = vunpack.c.l.b16 %v1084
  %v2700 = vunpack.c.h.b16 %v1084
  %v2701 = vpack.c.b16 %v1681, %v1677
  %v2702 = vpack.c.b16 %v1682, %v1678
  %v2703 = vpack.c.b16 %v1683, %v1679
  %v2704 = vpack.c.b16 %v1684, %v1680
  %v2705 = vpack.c.b16 %v1689, %v1685
  %v2706 = vpack.c.b16 %v1690, %v1686
  %v2707 = vpack.c.b16 %v1691, %v1687
  %v2708 = vpack.c.b16 %v1692, %v1688
  %v2709 = vpack.c.b16 %v1697, %v1693
  %v2710 = vpack.c.b16 %v1698, %v1694
  %v2711 = vpack.c.b16 %v1699, %v1695
  %v2712 = vpack.c.b16 %v1700, %v1696
  %v2713 = vpack.c.b16 %v1705, %v1701
  %v2714 = vpack.c.b16 %v1706, %v1702
  %v2715 = vpack.c.b16 %v1707, %v1703
  %v2716 = vpack.c.b16 %v1708, %v1704
  %v2717 = vpack.c.b16 %v1713, %v1709
  %v2718 = vpack.c.b16 %v1714, %v1710
  %v2719 = vpack.c.b16 %v1715, %v1711
  %v2720 = vpack.c.b16 %v1716, %v1712
  %v2721 = vpack.c.b16 %v1721, %v1717
  %v2722 = vpack.c.b16 %v1722, %v1718
  %v2723 = vpack.c.b16 %v1723, %v1719
  %v2724 = vpack.c.b16 %v1724, %v1720
  %v2725 = vpack.c.b16 %v1729, %v1725
  %v2726 = vpack.c.b16 %v1730, %v1726
  %v2727 = vpack.c.b16 %v1731, %v1727
  %v2728 = vpack.c.b16 %v1732, %v1728
  %v2729 = vpack.c.b16 %v1737, %v1733
  %v2730 = vpack.c.b16 %v1738, %v1734
  %v2731 = vpack.c.b16 %v1739, %v1735
  %v2732 = vpack.c.b16 %v1740, %v1736
  %v2733 = vpack.c.b16 %v1745, %v1741
  %v2734 = vpack.c.b16 %v1746, %v1742
  %v2735 = vpack.c.b16 %v1747, %v1743
  %v2736 = vpack.c.b16 %v1748, %v1744
  %v2737 = vpack.c.b16 %v1753, %v1749
  %v2738 = vpack.c.b16 %v1754, %v1750
  %v2739 = vpack.c.b16 %v1755, %v1751
  %v2740 = vpack.c.b16 %v1756, %v1752
  %v2741 = vpack.c.b16 %v1761, %v1757
  %v2742 = vpack.c.b16 %v1762, %v1758
  %v2743 = vpack.c.b16 %v1763, %v1759
  %v2744 = vpack.c.b16 %v1764, %v1760
  %v2745 = vpack.c.b16 %v1769, %v1765
  %v2746 = vpack.c.b16 %v1770, %v1766
  %v2747 = vpack.c.b16 %v1771, %v1767
  %v2748 = vpack.c.b16 %v1772, %v1768
  %v2749 = vpack.c.b16 %v1777, %v1773
  %v2750 = vpack.c.b16 %v1778, %v1774
  %v2751 = vpack.c.b16 %v1779, %v1775
  %v2752 = vpack.c.b16 %v1780, %v1776
  %v2753 = vpack.c.b16 %v1785, %v1781
  %v2754 = vpack.c.b16 %v1786, %v1782
  %v2755 = vpack.c.b16 %v1787, %v1783
  %v2756 = vpack.c.b16 %v1788, %v1784
  %v2757 = vpack.c.b16 %v1793, %v1789
  %v2758 = vpack.c.b16 %v1794, %v1790
  %v2759 = vpack.c.b16 %v1795, %v1791
  %v2760 = vpack.c.b16 %v1796, %v1792
  %v2761 = vpack.c.b16 %v1801, %v1797
  %v2762 = vpack.c.b16 %v1802, %v1798
  %v2763 = vpack.c.b16 %v1803, %v1799
  %v2764 = vpack.c.b16 %v1804, %v1800
  %v2765 = vpack.c.b16 %v1809, %v1805
  %v2766 = vpack.c.b16 %v1810, %v1806
  %v2767 = vpack.c.b16 %v1811, %v1807
  %v2768 = vpack.c.b16 %v1812, %v1808
  %v2769 = vpack.c.b16 %v1817, %v1813
  %v2770 = vpack.c.b16 %v1818, %v1814
  %v2771 = vpack.c.b16 %v1819, %v1815
  %v2772 = vpack.c.b16 %v1820, %v1816
  %v2773 = vpack.c.b16 %v1825, %v1821
  %v2774 = vpack.c.b16 %v1826, %v1822
  %v2775 = vpack.c.b16 %v1827, %v1823
  %v2776 = vpack.c.b16 %v1828, %v1824
  %v2777 = vpack.c.b16 %v1833, %v1829
  %v2778 = vpack.c.b16 %v1834, %v1830
  %v2779 = vpack.c.b16 %v1835, %v1831
  %v2780 = vpack.c.b16 %v1836, %v1832
  %v2781 = vpack.c.b16 %v1841, %v1837
  %v2782 = vpack.c.b16 %v1842, %v1838
  %v2783 = vpack.c.b16 %v1843, %v1839
  %v2784 = vpack.c.b16 %v1844, %v1840
  %v2785 = vpack.c.b16 %v1849, %v1845
  %v2786 = vpack.c.b16 %v1850, %v1846
  %v2787 = vpack.c.b16 %v1851, %v1847
  %v2788 = vpack.c.b16 %v1852, %v1848
  %v2789 = vpack.c.b16 %v1857, %v1853
  %v2790 = vpack.c.b16 %v1858, %v1854
  %v2791 = vpack.c.b16 %v1859, %v1855
  %v2792 = vpack.c.b16 %v1860, %v1856
  %v2793 = vpack.c.b16 %v1865, %v1861
  %v2794 = vpack.c.b16 %v1866, %v1862
  %v2795 = vpack.c.b16 %v1867, %v1863
  %v2796 = vpack.c.b16 %v1868, %v1864
  %v2797 = vpack.c.b16 %v1873, %v1869
  %v2798 = vpack.c.b16 %v1874, %v1870
  %v2799 = vpack.c.b16 %v1875, %v1871
  %v2800 = vpack.c.b16 %v1876, %v1872
  %v2801 = vpack.c.b16 %v1881, %v1877
  %v2802 = vpack.c.b16 %v1882, %v1878
  %v2803 = vpack.c.b16 %v1883, %v1879
  %v2804 = vpack.c.b16 %v1884, %v1880
  %v2805 = vpack.c.b16 %v1889, %v1885
  %v2806 = vpack.c.b16 %v1890, %v1886
  %v2807 = vpack.c.b16 %v1891, %v1887
  %v2808 = vpack.c.b16 %v1892, %v1888
  %v2809 = vpack.c.b16 %v1897, %v1893
  %v2810 = vpack.c.b16 %v1898, %v1894
  %v2811 = vpack.c.b16 %v1899, %v1895
  %v2812 = vpack.c.b16 %v1900, %v1896
  %v2813 = vpack.c.b16 %v1905, %v1901
  %v2814 = vpack.c.b16 %v1906, %v1902
  %v2815 = vpack.c.b16 %v1907, %v1903
  %v2816 = vpack.c.b16 %v1908, %v1904
  %v2817 = vpack.c.b16 %v1913, %v1909
  %v2818 = vpack.c.b16 %v1914, %v1910
  %v2819 = vpack.c.b16 %v1915, %v1911
  %v2820 = vpack.c.b16 %v1916, %v1912
  %v2821 = vpack.c.b16 %v1921, %v1917
  %v2822 = vpack.c.b16 %v1922, %v1918
  %v2823 = vpack.c.b16 %v1923, %v1919
  %v2824 = vpack.c.b16 %v1924, %v1920
  %v2825 = vpack.c.b16 %v1929, %v1925
  %v2826 = vpack.c.b16 %v1930, %v1926
  %v2827 = vpack.c.b16 %v1931, %v1927
  %v2828 = vpack.c.b16 %v1932, %v1928
  %v2829 = vpack.c.b16 %v1937, %v1933
  %v2830 = vpack.c.b16 %v1938, %v1934
  %v2831 = vpack.c.b16 %v1939, %v1935
  %v2832 = vpack.c.b16 %v1940, %v1936
  %v2833 = vpack.c.b16 %v1945, %v1941
  %v2834 = vpack.c.b16 %v1946, %v1942
  %v2835 = vpack.c.b16 %v1947, %v1943
  %v2836 = vpack.c.b16 %v1948, %v1944
  %v2837 = vpack.c.b16 %v1953, %v1949
  %v2838 = vpack.c.b16 %v1954, %v1950
  %v2839 = vpack.c.b16 %v1955, %v1951
  %v2840 = vpack.c.b16 %v1956, %v1952
  %v2841 = vpack.c.b16 %v1961, %v1957
  %v2842 = vpack.c.b16 %v1962, %v1958
  %v2843 = vpack.c.b16 %v1963, %v1959
  %v2844 = vpack.c.b16 %v1964, %v1960
  %v2845 = vpack.c.b16 %v1969, %v1965
  %v2846 = vpack.c.b16 %v1970, %v1966
  %v2847 = vpack.c.b16 %v1971, %v1967
  %v2848 = vpack.c.b16 %v1972, %v1968
  %v2849 = vpack.c.b16 %v1977, %v1973
  %v2850 = vpack.c.b16 %v1978, %v1974
  %v2851 = vpack.c.b16 %v1979, %v1975
  %v2852 = vpack.c.b16 %v1980, %v1976
  %v2853 = vpack.c.b16 %v1985, %v1981
  %v2854 = vpack.c.b16 %v1986, %v1982
  %v2855 = vpack.c.b16 %v1987, %v1983
  %v2856 = vpack.c.b16 %v1988, %v1984
  %v2857 = vpack.c.b16 %v1993, %v1989
  %v2858 = vpack.c.b16 %v1994, %v1990
  %v2859 = vpack.c.b16 %v1995, %v1991
  %v2860 = vpack.c.b16 %v1996, %v1992
  %v2861 = vpack.c.b16 %v2001, %v1997
  %v2862 = vpack.c.b16 %v2002, %v1998
  %v2863 = vpack.c.b16 %v2003, %v1999
  %v2864 = vpack.c.b16 %v2004, %v2000
  %v2865 = vpack.c.b16 %v2009, %v2005
  %v2866 = vpack.c.b16 %v2010, %v2006
  %v2867 = vpack.c.b16 %v2011, %v2007
  %v2868 = vpack.c.b16 %v2012, %v2008
  %v2869 = vpack.c.b16 %v2017, %v2013
  %v2870 = vpack.c.b16 %v2018, %v2014
  %v2871 = vpack.c.b16 %v2019, %v2015
  %v2872 = vpack.c.b16 %v2020, %v2016
  %v2873 = vpack.c.b16 %v2025, %v2021
  %v2874 = vpack.c.b16 %v2026, %v2022
  %v2875 = vpack.c.b16 %v2027, %v2023
  %v2876 = vpack.c.b16 %v2028, %v2024
  %v2877 = vpack.c.b16 %v2033, %v2029
  %v2878 = vpack.c.b16 %v2034, %v2030
  %v2879 = vpack.c.b16 %v2035, %v2031
  %v2880 = vpack.c.b16 %v2036, %v2032
  %v2881 = vpack.c.b16 %v2041, %v2037
  %v2882 = vpack.c.b16 %v2042, %v2038
  %v2883 = vpack.c.b16 %v2043, %v2039
  %v2884 = vpack.c.b16 %v2044, %v2040
  %v2885 = vpack.c.b16 %v2049, %v2045
  %v2886 = vpack.c.b16 %v2050, %v2046
  %v2887 = vpack.c.b16 %v2051, %v2047
  %v2888 = vpack.c.b16 %v2052, %v2048
  %v2889 = vpack.c.b16 %v2057, %v2053
  %v2890 = vpack.c.b16 %v2058, %v2054
  %v2891 = vpack.c.b16 %v2059, %v2055
  %v2892 = vpack.c.b16 %v2060, %v2056
  %v2893 = vpack.c.b16 %v2065, %v2061
  %v2894 = vpack.c.b16 %v2066, %v2062
  %v2895 = vpack.c.b16 %v2067, %v2063
  %v2896 = vpack.c.b16 %v2068, %v2064
  %v2897 = vpack.c.b16 %v2073, %v2069
  %v2898 = vpack.c.b16 %v2074, %v2070
  %v2899 = vpack.c.b16 %v2075, %v2071
  %v2900 = vpack.c.b16 %v2076, %v2072
  %v2901 = vpack.c.b16 %v2081, %v2077
  %v2902 = vpack.c.b16 %v2082, %v2078
  %v2903 = vpack.c.b16 %v2083, %v2079
  %v2904 = vpack.c.b16 %v2084, %v2080
  %v2905 = vpack.c.b16 %v2089, %v2085
  %v2906 = vpack.c.b16 %v2090, %v2086
  %v2907 = vpack.c.b16 %v2091, %v2087
  %v2908 = vpack.c.b16 %v2092, %v2088
  %v2909 = vpack.c.b16 %v2097, %v2093
  %v2910 = vpack.c.b16 %v2098, %v2094
  %v2911 = vpack.c.b16 %v2099, %v2095
  %v2912 = vpack.c.b16 %v2100, %v2096
  %v2913 = vpack.c.b16 %v2105, %v2101
  %v2914 = vpack.c.b16 %v2106, %v2102
  %v2915 = vpack.c.b16 %v2107, %v2103
  %v2916 = vpack.c.b16 %v2108, %v2104
  %v2917 = vpack.c.b16 %v2113, %v2109
  %v2918 = vpack.c.b16 %v2114, %v2110
  %v2919 = vpack.c.b16 %v2115, %v2111
  %v2920 = vpack.c.b16 %v2116, %v2112
  %v2921 = vpack.c.b16 %v2121, %v2117
  %v2922 = vpack.c.b16 %v2122, %v2118
  %v2923 = vpack.c.b16 %v2123, %v2119
  %v2924 = vpack.c.b16 %v2124, %v2120
  %v2925 = vpack.c.b16 %v2129, %v2125
  %v2926 = vpack.c.b16 %v2130, %v2126
  %v2927 = vpack.c.b16 %v2131, %v2127
  %v2928 = vpack.c.b16 %v2132, %v2128
  %v2929 = vpack.c.b16 %v2137, %v2133
  %v2930 = vpack.c.b16 %v2138, %v2134
  %v2931 = vpack.c.b16 %v2139, %v2135
  %v2932 = vpack.c.b16 %v2140, %v2136
  %v2933 = vpack.c.b16 %v2145, %v2141
  %v2934 = vpack.c.b16 %v2146, %v2142
  %v2935 = vpack.c.b16 %v2147, %v2143
  %v2936 = vpack.c.b16 %v2148, %v2144
  %v2937 = vpack.c.b16 %v2153, %v2149
  %v2938 = vpack.c.b16 %v2154, %v2150
  %v2939 = vpack.c.b16 %v2155, %v2151
  %v2940 = vpack.c.b16 %v2156, %v2152
  %v2941 = vpack.c.b16 %v2161, %v2157
  %v2942 = vpack.c.b16 %v2162, %v2158
  %v2943 = vpack.c.b16 %v2163, %v2159
  %v2944 = vpack.c.b16 %v2164, %v2160
  %v2945 = vpack.c.b16 %v2169, %v2165
  %v2946 = vpack.c.b16 %v2170, %v2166
  %v2947 = vpack.c.b16 %v2171, %v2167
  %v2948 = vpack.c.b16 %v2172, %v2168
  %v2949 = vpack.c.b16 %v2177, %v2173
  %v2950 = vpack.c.b16 %v2178, %v2174
  %v2951 = vpack.c.b16 %v2179, %v2175
  %v2952 = vpack.c.b16 %v2180, %v2176
  %v2953 = vpack.c.b16 %v2185, %v2181
  %v2954 = vpack.c.b16 %v2186, %v2182
  %v2955 = vpack.c.b16 %v2187, %v2183
  %v2956 = vpack.c.b16 %v2188, %v2184
  %v2957 = vpack.c.b16 %v2193, %v2189
  %v2958 = vpack.c.b16 %v2194, %v2190
  %v2959 = vpack.c.b16 %v2195, %v2191
  %v2960 = vpack.c.b16 %v2196, %v2192
  %v2961 = vpack.c.b16 %v2201, %v2197
  %v2962 = vpack.c.b16 %v2202, %v2198
  %v2963 = vpack.c.b16 %v2203, %v2199
  %v2964 = vpack.c.b16 %v2204, %v2200
  %v2965 = vpack.c.b16 %v2209, %v2205
  %v2966 = vpack.c.b16 %v2210, %v2206
  %v2967 = vpack.c.b16 %v2211, %v2207
  %v2968 = vpack.c.b16 %v2212, %v2208
  %v2969 = vpack.c.b16 %v2217, %v2213
  %v2970 = vpack.c.b16 %v2218, %v2214
  %v2971 = vpack.c.b16 %v2219, %v2215
  %v2972 = vpack.c.b16 %v2220, %v2216
  %v2973 = vpack.c.b16 %v2225, %v2221
  %v2974 = vpack.c.b16 %v2226, %v2222
  %v2975 = vpack.c.b16 %v2227, %v2223
  %v2976 = vpack.c.b16 %v2228, %v2224
  %v2977 = vpack.c.b16 %v2233, %v2229
  %v2978 = vpack.c.b16 %v2234, %v2230
  %v2979 = vpack.c.b16 %v2235, %v2231
  %v2980 = vpack.c.b16 %v2236, %v2232
  %v2981 = vpack.c.b16 %v2241, %v2237
  %v2982 = vpack.c.b16 %v2242, %v2238
  %v2983 = vpack.c.b16 %v2243, %v2239
  %v2984 = vpack.c.b16 %v2244, %v2240
  %v2985 = vpack.c.b16 %v2249, %v2245
  %v2986 = vpack.c.b16 %v2250, %v2246
  %v2987 = vpack.c.b16 %v2251, %v2247
  %v2988 = vpack.c.b16 %v2252, %v2248
  %v2989 = vpack.c.b16 %v2257, %v2253
  %v2990 = vpack.c.b16 %v2258, %v2254
  %v2991 = vpack.c.b16 %v2259, %v2255
  %v2992 = vpack.c.b16 %v2260, %v2256
  %v2993 = vpack.c.b16 %v2265, %v2261
  %v2994 = vpack.c.b16 %v2266, %v2262
  %v2995 = vpack.c.b16 %v2267, %v2263
  %v2996 = vpack.c.b16 %v2268, %v2264
  %v2997 = vpack.c.b16 %v2273, %v2269
  %v2998 = vpack.c.b16 %v2274, %v2270
  %v2999 = vpack.c.b16 %v2275, %v2271
  %v3000 = vpack.c.b16 %v2276, %v2272
  %v3001 = vpack.c.b16 %v2281, %v2277
  %v3002 = vpack.c.b16 %v2282, %v2278
  %v3003 = vpack.c.b16 %v2283, %v2279
  %v3004 = vpack.c.b16 %v2284, %v2280
  %v3005 = vpack.c.b16 %v2289, %v2285
  %v3006 = vpack.c.b16 %v2290, %v2286
  %v3007 = vpack.c.b16 %v2291, %v2287
  %v3008 = vpack.c.b16 %v2292, %v2288
  %v3009 = vpack.c.b16 %v2297, %v2293
  %v3010 = vpack.c.b16 %v2298, %v2294
  %v3011 = vpack.c.b16 %v2299, %v2295
  %v3012 = vpack.c.b16 %v2300, %v2296
  %v3013 = vpack.c.b16 %v2305, %v2301
  %v3014 = vpack.c.b16 %v2306, %v2302
  %v3015 = vpack.c.b16 %v2307, %v2303
  %v3016 = vpack.c.b16 %v2308, %v2304
  %v3017 = vpack.c.b16 %v2313, %v2309
  %v3018 = vpack.c.b16 %v2314, %v2310
  %v3019 = vpack.c.b16 %v2315, %v2311
  %v3020 = vpack.c.b16 %v2316, %v2312
  %v3021 = vpack.c.b16 %v2321, %v2317
  %v3022 = vpack.c.b16 %v2322, %v2318
  %v3023 = vpack.c.b16 %v2323, %v2319
  %v3024 = vpack.c.b16 %v2324, %v2320
  %v3025 = vpack.c.b16 %v2329, %v2325
  %v3026 = vpack.c.b16 %v2330, %v2326
  %v3027 = vpack.c.b16 %v2331, %v2327
  %v3028 = vpack.c.b16 %v2332, %v2328
  %v3029 = vpack.c.b16 %v2337, %v2333
  %v3030 = vpack.c.b16 %v2338, %v2334
  %v3031 = vpack.c.b16 %v2339, %v2335
  %v3032 = vpack.c.b16 %v2340, %v2336
  %v3033 = vpack.c.b16 %v2345, %v2341
  %v3034 = vpack.c.b16 %v2346, %v2342
  %v3035 = vpack.c.b16 %v2347, %v2343
  %v3036 = vpack.c.b16 %v2348, %v2344
  %v3037 = vpack.c.b16 %v2353, %v2349
  %v3038 = vpack.c.b16 %v2354, %v2350
  %v3039 = vpack.c.b16 %v2355, %v2351
  %v3040 = vpack.c.b16 %v2356, %v2352
  %v3041 = vpack.c.b16 %v2361, %v2357
  %v3042 = vpack.c.b16 %v2362, %v2358
  %v3043 = vpack.c.b16 %v2363, %v2359
  %v3044 = vpack.c.b16 %v2364, %v2360
  %v3045 = vpack.c.b16 %v2369, %v2365
  %v3046 = vpack.c.b16 %v2370, %v2366
  %v3047 = vpack.c.b16 %v2371, %v2367
  %v3048 = vpack.c.b16 %v2372, %v2368
  %v3049 = vpack.c.b16 %v2377, %v2373
  %v3050 = vpack.c.b16 %v2378, %v2374
  %v3051 = vpack.c.b16 %v2379, %v2375
  %v3052 = vpack.c.b16 %v2380, %v2376
  %v3053 = vpack.c.b16 %v2385, %v2381
  %v3054 = vpack.c.b16 %v2386, %v2382
  %v3055 = vpack.c.b16 %v2387, %v2383
  %v3056 = vpack.c.b16 %v2388, %v2384
  %v3057 = vpack.c.b16 %v2393, %v2389
  %v3058 = vpack.c.b16 %v2394, %v2390
  %v3059 = vpack.c.b16 %v2395, %v2391
  %v3060 = vpack.c.b16 %v2396, %v2392
  %v3061 = vpack.c.b16 %v2401, %v2397
  %v3062 = vpack.c.b16 %v2402, %v2398
  %v3063 = vpack.c.b16 %v2403, %v2399
  %v3064 = vpack.c.b16 %v2404, %v2400
  %v3065 = vpack.c.b16 %v2409, %v2405
  %v3066 = vpack.c.b16 %v2410, %v2406
  %v3067 = vpack.c.b16 %v2411, %v2407
  %v3068 = vpack.c.b16 %v2412, %v2408
  %v3069 = vpack.c.b16 %v2417, %v2413
  %v3070 = vpack.c.b16 %v2418, %v2414
  %v3071 = vpack.c.b16 %v2419, %v2415
  %v3072 = vpack.c.b16 %v2420, %v2416
  %v3073 = vpack.c.b16 %v2425, %v2421
  %v3074 = vpack.c.b16 %v2426, %v2422
  %v3075 = vpack.c.b16 %v2427, %v2423
  %v3076 = vpack.c.b16 %v2428, %v2424
  %v3077 = vpack.c.b16 %v2433, %v2429
  %v3078 = vpack.c.b16 %v2434, %v2430
  %v3079 = vpack.c.b16 %v2435, %v2431
  %v3080 = vpack.c.b16 %v2436, %v2432
  %v3081 = vpack.c.b16 %v2441, %v2437
  %v3082 = vpack.c.b16 %v2442, %v2438
  %v3083 = vpack.c.b16 %v2443, %v2439
  %v3084 = vpack.c.b16 %v2444, %v2440
  %v3085 = vpack.c.b16 %v2449, %v2445
  %v3086 = vpack.c.b16 %v2450, %v2446
  %v3087 = vpack.c.b16 %v2451, %v2447
  %v3088 = vpack.c.b16 %v2452, %v2448
  %v3089 = vpack.c.b16 %v2457, %v2453
  %v3090 = vpack.c.b16 %v2458, %v2454
  %v3091 = vpack.c.b16 %v2459, %v2455
  %v3092 = vpack.c.b16 %v2460, %v2456
  %v3093 = vpack.c.b16 %v2465, %v2461
  %v3094 = vpack.c.b16 %v2466, %v2462
  %v3095 = vpack.c.b16 %v2467, %v2463
  %v3096 = vpack.c.b16 %v2468, %v2464
  %v3097 = vpack.c.b16 %v2473, %v2469
  %v3098 = vpack.c.b16 %v2474, %v2470
  %v3099 = vpack.c.b16 %v2475, %v2471
  %v3100 = vpack.c.b16 %v2476, %v2472
  %v3101 = vpack.c.b16 %v2481, %v2477
  %v3102 = vpack.c.b16 %v2482, %v2478
  %v3103 = vpack.c.b16 %v2483, %v2479
  %v3104 = vpack.c.b16 %v2484, %v2480
  %v3105 = vpack.c.b16 %v2489, %v2485
  %v3106 = vpack.c.b16 %v2490, %v2486
  %v3107 = vpack.c.b16 %v2491, %v2487
  %v3108 = vpack.c.b16 %v2492, %v2488
  %v3109 = vpack.c.b16 %v2497, %v2493
  %v3110 = vpack.c.b16 %v2498, %v2494
  %v3111 = vpack.c.b16 %v2499, %v2495
  %v3112 = vpack.c.b16 %v2500, %v2496
  %v3113 = vpack.c.b16 %v2505, %v2501
  %v3114 = vpack.c.b16 %v2506, %v2502
  %v3115 = vpack.c.b16 %v2507, %v2503
  %v3116 = vpack.c.b16 %v2508, %v2504
  %v3117 = vpack.c.b16 %v2513, %v2509
  %v3118 = vpack.c.b16 %v2514, %v2510
  %v3119 = vpack.c.b16 %v2515, %v2511
  %v3120 = vpack.c.b16 %v2516, %v2512
  %v3121 = vpack.c.b16 %v2521, %v2517
  %v3122 = vpack.c.b16 %v2522, %v2518
  %v3123 = vpack.c.b16 %v2523, %v2519
  %v3124 = vpack.c.b16 %v2524, %v2520
  %v3125 = vpack.c.b16 %v2529, %v2525
  %v3126 = vpack.c.b16 %v2530, %v2526
  %v3127 = vpack.c.b16 %v2531, %v2527
  %v3128 = vpack.c.b16 %v2532, %v2528
  %v3129 = vpack.c.b16 %v2537, %v2533
  %v3130 = vpack.c.b16 %v2538, %v2534
  %v3131 = vpack.c.b16 %v2539, %v2535
  %v3132 = vpack.c.b16 %v2540, %v2536
  %v3133 = vpack.c.b16 %v2545, %v2541
  %v3134 = vpack.c.b16 %v2546, %v2542
  %v3135 = vpack.c.b16 %v2547, %v2543
  %v3136 = vpack.c.b16 %v2548, %v2544
  %v3137 = vpack.c.b16 %v2553, %v2549
  %v3138 = vpack.c.b16 %v2554, %v2550
  %v3139 = vpack.c.b16 %v2555, %v2551
  %v3140 = vpack.c.b16 %v2556, %v2552
  %v3141 = vpack.c.b16 %v2561, %v2557
  %v3142 = vpack.c.b16 %v2562, %v2558
  %v3143 = vpack.c.b16 %v2563, %v2559
  %v3144 = vpack.c.b16 %v2564, %v2560
  %v3145 = vpack.c.b16 %v2569, %v2565
  %v3146 = vpack.c.b16 %v2570, %v2566
  %v3147 = vpack.c.b16 %v2571, %v2567
  %v3148 = vpack.c.b16 %v2572, %v2568
  %v3149 = vpack.c.b16 %v2577, %v2573
  %v3150 = vpack.c.b16 %v2578, %v2574
  %v3151 = vpack.c.b16 %v2579, %v2575
  %v3152 = vpack.c.b16 %v2580, %v2576
  %v3153 = vpack.c.b16 %v2585, %v2581
  %v3154 = vpack.c.b16 %v2586, %v2582
  %v3155 = vpack.c.b16 %v2587, %v2583
  %v3156 = vpack.c.b16 %v2588, %v2584
  %v3157 = vpack.c.b16 %v2593, %v2589
  %v3158 = vpack.c.b16 %v2594, %v2590
  %v3159 = vpack.c.b16 %v2595, %v2591
  %v3160 = vpack.c.b16 %v2596, %v2592
  %v3161 = vpack.c.b16 %v2601, %v2597
  %v3162 = vpack.c.b16 %v2602, %v2598
  %v3163 = vpack.c.b16 %v2603, %v2599
  %v3164 = vpack.c.b16 %v2604, %v2600
  %v3165 = vpack.c.b16 %v2609, %v2605
  %v3166 = vpack.c.b16 %v2610, %v2606
  %v3167 = vpack.c.b16 %v2611, %v2607
  %v3168 = vpack.c.b16 %v2612, %v2608
  %v3169 = vpack.c.b16 %v2617, %v2613
  %v3170 = vpack.c.b16 %v2618, %v2614
  %v3171 = vpack.c.b16 %v2619, %v2615
  %v3172 = vpack.c.b16 %v2620, %v2616
  %v3173 = vpack.c.b16 %v2625, %v2621
  %v3174 = vpack.c.b16 %v2626, %v2622
  %v3175 = vpack.c.b16 %v2627, %v2623
  %v3176 = vpack.c.b16 %v2628, %v2624
  %v3177 = vpack.c.b16 %v2633, %v2629
  %v3178 = vpack.c.b16 %v2634, %v2630
  %v3179 = vpack.c.b16 %v2635, %v2631
  %v3180 = vpack.c.b16 %v2636, %v2632
  %v3181 = vpack.c.b16 %v2641, %v2637
  %v3182 = vpack.c.b16 %v2642, %v2638
  %v3183 = vpack.c.b16 %v2643, %v2639
  %v3184 = vpack.c.b16 %v2644, %v2640
  %v3185 = vpack.c.b16 %v2649, %v2645
  %v3186 = vpack.c.b16 %v2650, %v2646
  %v3187 = vpack.c.b16 %v2651, %v2647
  %v3188 = vpack.c.b16 %v2652, %v2648
  %v3189 = vpack.c.b16 %v2657, %v2653
  %v3190 = vpack.c.b16 %v2658, %v2654
  %v3191 = vpack.c.b16 %v2659, %v2655
  %v3192 = vpack.c.b16 %v2660, %v2656
  %v3193 = vpack.c.b16 %v2665, %v2661
  %v3194 = vpack.c.b16 %v2666, %v2662
  %v3195 = vpack.c.b16 %v2667, %v2663
  %v3196 = vpack.c.b16 %v2668, %v2664
  %v3197 = vpack.c.b16 %v2673, %v2669
  %v3198 = vpack.c.b16 %v2674, %v2670
  %v3199 = vpack.c.b16 %v2675, %v2671
  %v3200 = vpack.c.b16 %v2676, %v2672
  %v3201 = vpack.c.b16 %v2681, %v2677
  %v3202 = vpack.c.b16 %v2682, %v2678
  %v3203 = vpack.c.b16 %v2683, %v2679
  %v3204 = vpack.c.b16 %v2684, %v2680
  %v3205 = vpack.c.b16 %v2689, %v2685
  %v3206 = vpack.c.b16 %v2690, %v2686
  %v3207 = vpack.c.b16 %v2691, %v2687
  %v3208 = vpack.c.b16 %v2692, %v2688
  %v3209 = vpack.c.b16 %v2697, %v2693
  %v3210 = vpack.c.b16 %v2698, %v2694
  %v3211 = vpack.c.b16 %v2699, %v2695
  %v3212 = vpack.c.b16 %v2700, %v2696
  %3725 = vmatprep.subr.bf16.mxu0 %v2702
  %3726 = vmatpush1.bf16.msra.mxu0 %v2701
  %3727 = vmatprep.subr.bf16.mxu0 %v2706
  %3728 = vmatpush1.bf16.msra.mxu0 %v2705
  %3729 = vmatprep.subr.bf16.mxu0 %v2710
  %3730 = vmatpush1.bf16.msra.mxu0 %v2709
  %3731 = vmatprep.subr.bf16.mxu0 %v2714
  %3732 = vmatpush1.bf16.msra.mxu0 %v2713
  %3733 = vmatprep.subr.bf16.mxu0 %v2718
  %3734 = vmatpush1.bf16.msra.mxu0 %v2717
  %3735 = vmatprep.subr.bf16.mxu0 %v2722
  %3736 = vmatpush1.bf16.msra.mxu0 %v2721
  %3737 = vmatprep.subr.bf16.mxu0 %v2726
  %3738 = vmatpush1.bf16.msra.mxu0 %v2725
  %3739 = vmatprep.subr.bf16.mxu0 %v2730
  %3740 = vmatpush1.bf16.msra.mxu0 %v2729
  %3741 = vmatprep.subr.bf16.mxu0 %v2734
  %3742 = vmatpush1.bf16.msra.mxu0 %v2733
  %3743 = vmatprep.subr.bf16.mxu0 %v2738
  %3744 = vmatpush1.bf16.msra.mxu0 %v2737
  %3745 = vmatprep.subr.bf16.mxu0 %v2742
  %3746 = vmatpush1.bf16.msra.mxu0 %v2741
  %3747 = vmatprep.subr.bf16.mxu0 %v2746
  %3748 = vmatpush1.bf16.msra.mxu0 %v2745
  %3749 = vmatprep.subr.bf16.mxu0 %v2750
  %3750 = vmatpush1.bf16.msra.mxu0 %v2749
  %3751 = vmatprep.subr.bf16.mxu0 %v2754
  %3752 = vmatpush1.bf16.msra.mxu0 %v2753
  %3753 = vmatprep.subr.bf16.mxu0 %v2758
  %3754 = vmatpush1.bf16.msra.mxu0 %v2757
  %3755 = vmatprep.subr.bf16.mxu0 %v2762
  %3756 = vmatpush1.bf16.msra.mxu0 %v2761
  %3757 = vmatprep.mubr.bf16.mxu0 %v1134
  %3758 = vmatmul.mubr.bf16.gmra.mrb[0].mxu0 %v1133
  %v3759 = vpop.f32.mrb[0].mxu0
  %v3760 = vadd.f32 0.0, %v3759
  %v3761 = vpop.f32.mrb[0].mxu0
  %v3762 = vadd.f32 0.0, %v3761
  %v3763 = vpop.f32.mrb[0].mxu0
  %v3764 = vadd.f32 0.0, %v3763
  %v3765 = vpop.f32.mrb[0].mxu0
  %v3766 = vadd.f32 0.0, %v3765
  %3767 = vdwg.mxu0
  %3768 = vmatprep.subr.bf16.mxu0 %v2766
  %3769 = vmatpush1.bf16.msra.mxu0 %v2765
  %3770 = vmatprep.subr.bf16.mxu0 %v2770
  %3771 = vmatpush1.bf16.msra.mxu0 %v2769
  %3772 = vmatprep.subr.bf16.mxu0 %v2774
  %3773 = vmatpush1.bf16.msra.mxu0 %v2773
  %3774 = vmatprep.subr.bf16.mxu0 %v2778
  %3775 = vmatpush1.bf16.msra.mxu0 %v2777
  %3776 = vmatprep.subr.bf16.mxu0 %v2782
  %3777 = vmatpush1.bf16.msra.mxu0 %v2781
  %3778 = vmatprep.subr.bf16.mxu0 %v2786
  %3779 = vmatpush1.bf16.msra.mxu0 %v2785
  %3780 = vmatprep.subr.bf16.mxu0 %v2790
  %3781 = vmatpush1.bf16.msra.mxu0 %v2789
  %3782 = vmatprep.subr.bf16.mxu0 %v2794
  %3783 = vmatpush1.bf16.msra.mxu0 %v2793
  %3784 = vmatprep.subr.bf16.mxu0 %v2798
  %3785 = vmatpush1.bf16.msra.mxu0 %v2797
  %3786 = vmatprep.subr.bf16.mxu0 %v2802
  %3787 = vmatpush1.bf16.msra.mxu0 %v2801
  %3788 = vmatprep.subr.bf16.mxu0 %v2806
  %3789 = vmatpush1.bf16.msra.mxu0 %v2805
  %3790 = vmatprep.subr.bf16.mxu0 %v2810
  %3791 = vmatpush1.bf16.msra.mxu0 %v2809
  %3792 = vmatprep.subr.bf16.mxu0 %v2814
  %3793 = vmatpush1.bf16.msra.mxu0 %v2813
  %3794 = vmatprep.subr.bf16.mxu0 %v2818
  %3795 = vmatpush1.bf16.msra.mxu0 %v2817
  %3796 = vmatprep.subr.bf16.mxu0 %v2822
  %3797 = vmatpush1.bf16.msra.mxu0 %v2821
  %3798 = vmatprep.subr.bf16.mxu0 %v2826
  %3799 = vmatpush1.bf16.msra.mxu0 %v2825
  %3800 = vmatprep.mubr.bf16.mxu0 %v1136
  %3801 = vmatmul.mubr.bf16.gmra.mrb[0].mxu0 %v1135
  %v3802 = vpop.f32.mrb[0].mxu0
  %v3803 = vadd.f32 %v3760, %v3802
  %v3804 = vpop.f32.mrb[0].mxu0
  %v3805 = vadd.f32 %v3762, %v3804
  %v3806 = vpop.f32.mrb[0].mxu0
  %v3807 = vadd.f32 %v3764, %v3806
  %v3808 = vpop.f32.mrb[0].mxu0
  %v3809 = vadd.f32 %v3766, %v3808
  %3810 = vdwg.mxu0
  %3811 = vmatprep.subr.bf16.mxu0 %v2830
  %3812 = vmatpush1.bf16.msra.mxu0 %v2829
  %3813 = vmatprep.subr.bf16.mxu0 %v2834
  %3814 = vmatpush1.bf16.msra.mxu0 %v2833
  %3815 = vmatprep.subr.bf16.mxu0 %v2838
  %3816 = vmatpush1.bf16.msra.mxu0 %v2837
  %3817 = vmatprep.subr.bf16.mxu0 %v2842
  %3818 = vmatpush1.bf16.msra.mxu0 %v2841
  %3819 = vmatprep.subr.bf16.mxu0 %v2846
  %3820 = vmatpush1.bf16.msra.mxu0 %v2845
  %3821 = vmatprep.subr.bf16.mxu0 %v2850
  %3822 = vmatpush1.bf16.msra.mxu0 %v2849
  %3823 = vmatprep.subr.bf16.mxu0 %v2854
  %3824 = vmatpush1.bf16.msra.mxu0 %v2853
  %3825 = vmatprep.subr.bf16.mxu0 %v2858
  %3826 = vmatpush1.bf16.msra.mxu0 %v2857
  %3827 = vmatprep.subr.bf16.mxu0 %v2862
  %3828 = vmatpush1.bf16.msra.mxu0 %v2861
  %3829 = vmatprep.subr.bf16.mxu0 %v2866
  %3830 = vmatpush1.bf16.msra.mxu0 %v2865
  %3831 = vmatprep.subr.bf16.mxu0 %v2870
  %3832 = vmatpush1.bf16.msra.mxu0 %v2869
  %3833 = vmatprep.subr.bf16.mxu0 %v2874
  %3834 = vmatpush1.bf16.msra.mxu0 %v2873
  %3835 = vmatprep.subr.bf16.mxu0 %v2878
  %3836 = vmatpush1.bf16.msra.mxu0 %v2877
  %3837 = vmatprep.subr.bf16.mxu0 %v2882
  %3838 = vmatpush1.bf16.msra.mxu0 %v2881
  %3839 = vmatprep.subr.bf16.mxu0 %v2886
  %3840 = vmatpush1.bf16.msra.mxu0 %v2885
  %3841 = vmatprep.subr.bf16.mxu0 %v2890
  %3842 = vmatpush1.bf16.msra.mxu0 %v2889
  %3843 = vmatprep.mubr.bf16.mxu0 %v1138
  %3844 = vmatmul.mubr.bf16.gmra.mrb[0].mxu0 %v1137
  %v3845 = vpop.f32.mrb[0].mxu0
  %v3846 = vadd.f32 %v3803, %v3845
  %v3847 = vpop.f32.mrb[0].mxu0
  %v3848 = vadd.f32 %v3805, %v3847
  %v3849 = vpop.f32.mrb[0].mxu0
  %v3850 = vadd.f32 %v3807, %v3849
  %v3851 = vpop.f32.mrb[0].mxu0
  %v3852 = vadd.f32 %v3809, %v3851
  %3853 = vdwg.mxu0
  %3854 = vmatprep.subr.bf16.mxu0 %v2894
  %3855 = vmatpush1.bf16.msra.mxu0 %v2893
  %3856 = vmatprep.subr.bf16.mxu0 %v2898
  %3857 = vmatpush1.bf16.msra.mxu0 %v2897
  %3858 = vmatprep.subr.bf16.mxu0 %v2902
  %3859 = vmatpush1.bf16.msra.mxu0 %v2901
  %3860 = vmatprep.subr.bf16.mxu0 %v2906
  %3861 = vmatpush1.bf16.msra.mxu0 %v2905
  %3862 = vmatprep.subr.bf16.mxu0 %v2910
  %3863 = vmatpush1.bf16.msra.mxu0 %v2909
  %3864 = vmatprep.subr.bf16.mxu0 %v2914
  %3865 = vmatpush1.bf16.msra.mxu0 %v2913
  %3866 = vmatprep.subr.bf16.mxu0 %v2918
  %3867 = vmatpush1.bf16.msra.mxu0 %v2917
  %3868 = vmatprep.subr.bf16.mxu0 %v2922
  %3869 = vmatpush1.bf16.msra.mxu0 %v2921
  %3870 = vmatprep.subr.bf16.mxu0 %v2926
  %3871 = vmatpush1.bf16.msra.mxu0 %v2925
  %3872 = vmatprep.subr.bf16.mxu0 %v2930
  %3873 = vmatpush1.bf16.msra.mxu0 %v2929
  %3874 = vmatprep.subr.bf16.mxu0 %v2934
  %3875 = vmatpush1.bf16.msra.mxu0 %v2933
  %3876 = vmatprep.subr.bf16.mxu0 %v2938
  %3877 = vmatpush1.bf16.msra.mxu0 %v2937
  %3878 = vmatprep.subr.bf16.mxu0 %v2942
  %3879 = vmatpush1.bf16.msra.mxu0 %v2941
  %3880 = vmatprep.subr.bf16.mxu0 %v2946
  %3881 = vmatpush1.bf16.msra.mxu0 %v2945
  %3882 = vmatprep.subr.bf16.mxu0 %v2950
  %3883 = vmatpush1.bf16.msra.mxu0 %v2949
  %3884 = vmatprep.subr.bf16.mxu0 %v2954
  %3885 = vmatpush1.bf16.msra.mxu0 %v2953
  %3886 = vmatprep.mubr.bf16.mxu0 %v1140
  %3887 = vmatmul.mubr.bf16.gmra.mrb[0].mxu0 %v1139
  %v3888 = vpop.f32.mrb[0].mxu0
  %v3889 = vadd.f32 %v3846, %v3888
  %v3890 = vpop.f32.mrb[0].mxu0
  %v3891 = vadd.f32 %v3848, %v3890
  %v3892 = vpop.f32.mrb[0].mxu0
  %v3893 = vadd.f32 %v3850, %v3892
  %v3894 = vpop.f32.mrb[0].mxu0
  %v3895 = vadd.f32 %v3852, %v3894
  %3896 = vdwg.mxu0
  %3897 = vmatprep.subr.bf16.mxu0 %v2958
  %3898 = vmatpush1.bf16.msra.mxu0 %v2957
  %3899 = vmatprep.subr.bf16.mxu0 %v2962
  %3900 = vmatpush1.bf16.msra.mxu0 %v2961
  %3901 = vmatprep.subr.bf16.mxu0 %v2966
  %3902 = vmatpush1.bf16.msra.mxu0 %v2965
  %3903 = vmatprep.subr.bf16.mxu0 %v2970
  %3904 = vmatpush1.bf16.msra.mxu0 %v2969
  %3905 = vmatprep.subr.bf16.mxu0 %v2974
  %3906 = vmatpush1.bf16.msra.mxu0 %v2973
  %3907 = vmatprep.subr.bf16.mxu0 %v2978
  %3908 = vmatpush1.bf16.msra.mxu0 %v2977
  %3909 = vmatprep.subr.bf16.mxu0 %v2982
  %3910 = vmatpush1.bf16.msra.mxu0 %v2981
  %3911 = vmatprep.subr.bf16.mxu0 %v2986
  %3912 = vmatpush1.bf16.msra.mxu0 %v2985
  %3913 = vmatprep.subr.bf16.mxu0 %v2990
  %3914 = vmatpush1.bf16.msra.mxu0 %v2989
  %3915 = vmatprep.subr.bf16.mxu0 %v2994
  %3916 = vmatpush1.bf16.msra.mxu0 %v2993
  %3917 = vmatprep.subr.bf16.mxu0 %v2998
  %3918 = vmatpush1.bf16.msra.mxu0 %v2997
  %3919 = vmatprep.subr.bf16.mxu0 %v3002
  %3920 = vmatpush1.bf16.msra.mxu0 %v3001
  %3921 = vmatprep.subr.bf16.mxu0 %v3006
  %3922 = vmatpush1.bf16.msra.mxu0 %v3005
  %3923 = vmatprep.subr.bf16.mxu0 %v3010
  %3924 = vmatpush1.bf16.msra.mxu0 %v3009
  %3925 = vmatprep.subr.bf16.mxu0 %v3014
  %3926 = vmatpush1.bf16.msra.mxu0 %v3013
  %3927 = vmatprep.subr.bf16.mxu0 %v3018
  %3928 = vmatpush1.bf16.msra.mxu0 %v3017
  %3929 = vmatprep.mubr.bf16.mxu0 %v1142
  %3930 = vmatmul.mubr.bf16.gmra.mrb[0].mxu0 %v1141
  %v3931 = vpop.f32.mrb[0].mxu0
  %v3932 = vadd.f32 %v3889, %v3931
  %v3933 = vpop.f32.mrb[0].mxu0
  %v3934 = vadd.f32 %v3891, %v3933
  %v3935 = vpop.f32.mrb[0].mxu0
  %v3936 = vadd.f32 %v3893, %v3935
  %v3937 = vpop.f32.mrb[0].mxu0
  %v3938 = vadd.f32 %v3895, %v3937
  %3939 = vdwg.mxu0
  %3940 = vmatprep.subr.bf16.mxu0 %v3022
  %3941 = vmatpush1.bf16.msra.mxu0 %v3021
  %3942 = vmatprep.subr.bf16.mxu0 %v3026
  %3943 = vmatpush1.bf16.msra.mxu0 %v3025
  %3944 = vmatprep.subr.bf16.mxu0 %v3030
  %3945 = vmatpush1.bf16.msra.mxu0 %v3029
  %3946 = vmatprep.subr.bf16.mxu0 %v3034
  %3947 = vmatpush1.bf16.msra.mxu0 %v3033
  %3948 = vmatprep.subr.bf16.mxu0 %v3038
  %3949 = vmatpush1.bf16.msra.mxu0 %v3037
  %3950 = vmatprep.subr.bf16.mxu0 %v3042
  %3951 = vmatpush1.bf16.msra.mxu0 %v3041
  %3952 = vmatprep.subr.bf16.mxu0 %v3046
  %3953 = vmatpush1.bf16.msra.mxu0 %v3045
  %3954 = vmatprep.subr.bf16.mxu0 %v3050
  %3955 = vmatpush1.bf16.msra.mxu0 %v3049
  %3956 = vmatprep.subr.bf16.mxu0 %v3054
  %3957 = vmatpush1.bf16.msra.mxu0 %v3053
  %3958 = vmatprep.subr.bf16.mxu0 %v3058
  %3959 = vmatpush1.bf16.msra.mxu0 %v3057
  %3960 = vmatprep.subr.bf16.mxu0 %v3062
  %3961 = vmatpush1.bf16.msra.mxu0 %v3061
  %3962 = vmatprep.subr.bf16.mxu0 %v3066
  %3963 = vmatpush1.bf16.msra.mxu0 %v3065
  %3964 = vmatprep.subr.bf16.mxu0 %v3070
  %3965 = vmatpush1.bf16.msra.mxu0 %v3069
  %3966 = vmatprep.subr.bf16.mxu0 %v3074
  %3967 = vmatpush1.bf16.msra.mxu0 %v3073
  %3968 = vmatprep.subr.bf16.mxu0 %v3078
  %3969 = vmatpush1.bf16.msra.mxu0 %v3077
  %3970 = vmatprep.subr.bf16.mxu0 %v3082
  %3971 = vmatpush1.bf16.msra.mxu0 %v3081
  %3972 = vmatprep.mubr.bf16.mxu0 %v1144
  %3973 = vmatmul.mubr.bf16.gmra.mrb[0].mxu0 %v1143
  %v3974 = vpop.f32.mrb[0].mxu0
  %v3975 = vadd.f32 %v3932, %v3974
  %v3976 = vpop.f32.mrb[0].mxu0
  %v3977 = vadd.f32 %v3934, %v3976
  %v3978 = vpop.f32.mrb[0].mxu0
  %v3979 = vadd.f32 %v3936, %v3978
  %v3980 = vpop.f32.mrb[0].mxu0
  %v3981 = vadd.f32 %v3938, %v3980
  %3982 = vdwg.mxu0
  %3983 = vmatprep.subr.bf16.mxu0 %v3086
  %3984 = vmatpush1.bf16.msra.mxu0 %v3085
  %3985 = vmatprep.subr.bf16.mxu0 %v3090
  %3986 = vmatpush1.bf16.msra.mxu0 %v3089
  %3987 = vmatprep.subr.bf16.mxu0 %v3094
  %3988 = vmatpush1.bf16.msra.mxu0 %v3093
  %3989 = vmatprep.subr.bf16.mxu0 %v3098
  %3990 = vmatpush1.bf16.msra.mxu0 %v3097
  %3991 = vmatprep.subr.bf16.mxu0 %v3102
  %3992 = vmatpush1.bf16.msra.mxu0 %v3101
  %3993 = vmatprep.subr.bf16.mxu0 %v3106
  %3994 = vmatpush1.bf16.msra.mxu0 %v3105
  %3995 = vmatprep.subr.bf16.mxu0 %v3110
  %3996 = vmatpush1.bf16.msra.mxu0 %v3109
  %3997 = vmatprep.subr.bf16.mxu0 %v3114
  %3998 = vmatpush1.bf16.msra.mxu0 %v3113
  %3999 = vmatprep.subr.bf16.mxu0 %v3118
  %4000 = vmatpush1.bf16.msra.mxu0 %v3117
  %4001 = vmatprep.subr.bf16.mxu0 %v3122
  %4002 = vmatpush1.bf16.msra.mxu0 %v3121
  %4003 = vmatprep.subr.bf16.mxu0 %v3126
  %4004 = vmatpush1.bf16.msra.mxu0 %v3125
  %4005 = vmatprep.subr.bf16.mxu0 %v3130
  %4006 = vmatpush1.bf16.msra.mxu0 %v3129
  %4007 = vmatprep.subr.bf16.mxu0 %v3134
  %4008 = vmatpush1.bf16.msra.mxu0 %v3133
  %4009 = vmatprep.subr.bf16.mxu0 %v3138
  %4010 = vmatpush1.bf16.msra.mxu0 %v3137
  %4011 = vmatprep.subr.bf16.mxu0 %v3142
  %4012 = vmatpush1.bf16.msra.mxu0 %v3141
  %4013 = vmatprep.subr.bf16.mxu0 %v3146
  %4014 = vmatpush1.bf16.msra.mxu0 %v3145
  %4015 = vmatprep.mubr.bf16.mxu0 %v1146
  %4016 = vmatmul.mubr.bf16.gmra.mrb[0].mxu0 %v1145
  %v4017 = vpop.f32.mrb[0].mxu0
  %v4018 = vadd.f32 %v3975, %v4017
  %v4019 = vpop.f32.mrb[0].mxu0
  %v4020 = vadd.f32 %v3977, %v4019
  %v4021 = vpop.f32.mrb[0].mxu0
  %v4022 = vadd.f32 %v3979, %v4021
  %v4023 = vpop.f32.mrb[0].mxu0
  %v4024 = vadd.f32 %v3981, %v4023
  %4025 = vdwg.mxu0
  %4026 = vmatprep.subr.bf16.mxu0 %v3150
  %4027 = vmatpush1.bf16.msra.mxu0 %v3149
  %4028 = vmatprep.subr.bf16.mxu0 %v3154
  %4029 = vmatpush1.bf16.msra.mxu0 %v3153
  %4030 = vmatprep.subr.bf16.mxu0 %v3158
  %4031 = vmatpush1.bf16.msra.mxu0 %v3157
  %4032 = vmatprep.subr.bf16.mxu0 %v3162
  %4033 = vmatpush1.bf16.msra.mxu0 %v3161
  %4034 = vmatprep.subr.bf16.mxu0 %v3166
  %4035 = vmatpush1.bf16.msra.mxu0 %v3165
  %4036 = vmatprep.subr.bf16.mxu0 %v3170
  %4037 = vmatpush1.bf16.msra.mxu0 %v3169
  %4038 = vmatprep.subr.bf16.mxu0 %v3174
  %4039 = vmatpush1.bf16.msra.mxu0 %v3173
  %4040 = vmatprep.subr.bf16.mxu0 %v3178
  %4041 = vmatpush1.bf16.msra.mxu0 %v3177
  %4042 = vmatprep.subr.bf16.mxu0 %v3182
  %4043 = vmatpush1.bf16.msra.mxu0 %v3181
  %4044 = vmatprep.subr.bf16.mxu0 %v3186
  %4045 = vmatpush1.bf16.msra.mxu0 %v3185
  %4046 = vmatprep.subr.bf16.mxu0 %v3190
  %4047 = vmatpush1.bf16.msra.mxu0 %v3189
  %4048 = vmatprep.subr.bf16.mxu0 %v3194
  %4049 = vmatpush1.bf16.msra.mxu0 %v3193
  %4050 = vmatprep.subr.bf16.mxu0 %v3198
  %4051 = vmatpush1.bf16.msra.mxu0 %v3197
  %4052 = vmatprep.subr.bf16.mxu0 %v3202
  %4053 = vmatpush1.bf16.msra.mxu0 %v3201
  %4054 = vmatprep.subr.bf16.mxu0 %v3206
  %4055 = vmatpush1.bf16.msra.mxu0 %v3205
  %4056 = vmatprep.subr.bf16.mxu0 %v3210
  %4057 = vmatpush1.bf16.msra.mxu0 %v3209
  %4058 = vmatprep.mubr.bf16.mxu0 %v1148
  %4059 = vmatmul.mubr.bf16.gmra.mrb[0].mxu0 %v1147
  %v4060 = vpop.f32.mrb[0].mxu0
  %v4061 = vadd.f32 %v4018, %v4060
  %v4062 = vpop.f32.mrb[0].mxu0
  %v4063 = vadd.f32 %v4020, %v4062
  %v4064 = vpop.f32.mrb[0].mxu0
  %v4065 = vadd.f32 %v4022, %v4064
  %v4066 = vpop.f32.mrb[0].mxu0
  %v4067 = vadd.f32 %v4024, %v4066
  %4068 = vdwg.mxu0
  %4069 = vmatprep.subr.bf16.mxu0 %v2704
  %4070 = vmatpush1.bf16.msra.mxu0 %v2703
  %4071 = vmatprep.subr.bf16.mxu0 %v2708
  %4072 = vmatpush1.bf16.msra.mxu0 %v2707
  %4073 = vmatprep.subr.bf16.mxu0 %v2712
  %4074 = vmatpush1.bf16.msra.mxu0 %v2711
  %4075 = vmatprep.subr.bf16.mxu0 %v2716
  %4076 = vmatpush1.bf16.msra.mxu0 %v2715
  %4077 = vmatprep.subr.bf16.mxu0 %v2720
  %4078 = vmatpush1.bf16.msra.mxu0 %v2719
  %4079 = vmatprep.subr.bf16.mxu0 %v2724
  %4080 = vmatpush1.bf16.msra.mxu0 %v2723
  %4081 = vmatprep.subr.bf16.mxu0 %v2728
  %4082 = vmatpush1.bf16.msra.mxu0 %v2727
  %4083 = vmatprep.subr.bf16.mxu0 %v2732
  %4084 = vmatpush1.bf16.msra.mxu0 %v2731
  %4085 = vmatprep.subr.bf16.mxu0 %v2736
  %4086 = vmatpush1.bf16.msra.mxu0 %v2735
  %4087 = vmatprep.subr.bf16.mxu0 %v2740
  %4088 = vmatpush1.bf16.msra.mxu0 %v2739
  %4089 = vmatprep.subr.bf16.mxu0 %v2744
  %4090 = vmatpush1.bf16.msra.mxu0 %v2743
  %4091 = vmatprep.subr.bf16.mxu0 %v2748
  %4092 = vmatpush1.bf16.msra.mxu0 %v2747
  %4093 = vmatprep.subr.bf16.mxu0 %v2752
  %4094 = vmatpush1.bf16.msra.mxu0 %v2751
  %4095 = vmatprep.subr.bf16.mxu0 %v2756
  %4096 = vmatpush1.bf16.msra.mxu0 %v2755
  %4097 = vmatprep.subr.bf16.mxu0 %v2760
  %4098 = vmatpush1.bf16.msra.mxu0 %v2759
  %4099 = vmatprep.subr.bf16.mxu0 %v2764
  %4100 = vmatpush1.bf16.msra.mxu0 %v2763
  %4101 = vmatprep.mubr.bf16.mxu0 %v1134
  %4102 = vmatmul.mubr.bf16.gmra.mrb[0].mxu0 %v1133
  %v4103 = vpop.f32.mrb[0].mxu0
  %v4104 = vadd.f32 0.0, %v4103
  %v4105 = vpop.f32.mrb[0].mxu0
  %v4106 = vadd.f32 0.0, %v4105
  %v4107 = vpop.f32.mrb[0].mxu0
  %v4108 = vadd.f32 0.0, %v4107
  %v4109 = vpop.f32.mrb[0].mxu0
  %v4110 = vadd.f32 0.0, %v4109
  %4111 = vdwg.mxu0
  %4112 = vmatprep.subr.bf16.mxu0 %v2768
  %4113 = vmatpush1.bf16.msra.mxu0 %v2767
  %4114 = vmatprep.subr.bf16.mxu0 %v2772
  %4115 = vmatpush1.bf16.msra.mxu0 %v2771
  %4116 = vmatprep.subr.bf16.mxu0 %v2776
  %4117 = vmatpush1.bf16.msra.mxu0 %v2775
  %4118 = vmatprep.subr.bf16.mxu0 %v2780
  %4119 = vmatpush1.bf16.msra.mxu0 %v2779
  %4120 = vmatprep.subr.bf16.mxu0 %v2784
  %4121 = vmatpush1.bf16.msra.mxu0 %v2783
  %4122 = vmatprep.subr.bf16.mxu0 %v2788
  %4123 = vmatpush1.bf16.msra.mxu0 %v2787
  %4124 = vmatprep.subr.bf16.mxu0 %v2792
  %4125 = vmatpush1.bf16.msra.mxu0 %v2791
  %4126 = vmatprep.subr.bf16.mxu0 %v2796
  %4127 = vmatpush1.bf16.msra.mxu0 %v2795
  %4128 = vmatprep.subr.bf16.mxu0 %v2800
  %4129 = vmatpush1.bf16.msra.mxu0 %v2799
  %4130 = vmatprep.subr.bf16.mxu0 %v2804
  %4131 = vmatpush1.bf16.msra.mxu0 %v2803
  %4132 = vmatprep.subr.bf16.mxu0 %v2808
  %4133 = vmatpush1.bf16.msra.mxu0 %v2807
  %4134 = vmatprep.subr.bf16.mxu0 %v2812
  %4135 = vmatpush1.bf16.msra.mxu0 %v2811
  %4136 = vmatprep.subr.bf16.mxu0 %v2816
  %4137 = vmatpush1.bf16.msra.mxu0 %v2815
  %4138 = vmatprep.subr.bf16.mxu0 %v2820
  %4139 = vmatpush1.bf16.msra.mxu0 %v2819
  %4140 = vmatprep.subr.bf16.mxu0 %v2824
  %4141 = vmatpush1.bf16.msra.mxu0 %v2823
  %4142 = vmatprep.subr.bf16.mxu0 %v2828
  %4143 = vmatpush1.bf16.msra.mxu0 %v2827
  %4144 = vmatprep.mubr.bf16.mxu0 %v1136
  %4145 = vmatmul.mubr.bf16.gmra.mrb[0].mxu0 %v1135
  %v4146 = vpop.f32.mrb[0].mxu0
  %v4147 = vadd.f32 %v4104, %v4146
  %v4148 = vpop.f32.mrb[0].mxu0
  %v4149 = vadd.f32 %v4106, %v4148
  %v4150 = vpop.f32.mrb[0].mxu0
  %v4151 = vadd.f32 %v4108, %v4150
  %v4152 = vpop.f32.mrb[0].mxu0
  %v4153 = vadd.f32 %v4110, %v4152
  %4154 = vdwg.mxu0
  %4155 = vmatprep.subr.bf16.mxu0 %v2832
  %4156 = vmatpush1.bf16.msra.mxu0 %v2831
  %4157 = vmatprep.subr.bf16.mxu0 %v2836
  %4158 = vmatpush1.bf16.msra.mxu0 %v2835
  %4159 = vmatprep.subr.bf16.mxu0 %v2840
  %4160 = vmatpush1.bf16.msra.mxu0 %v2839
  %4161 = vmatprep.subr.bf16.mxu0 %v2844
  %4162 = vmatpush1.bf16.msra.mxu0 %v2843
  %4163 = vmatprep.subr.bf16.mxu0 %v2848
  %4164 = vmatpush1.bf16.msra.mxu0 %v2847
  %4165 = vmatprep.subr.bf16.mxu0 %v2852
  %4166 = vmatpush1.bf16.msra.mxu0 %v2851
  %4167 = vmatprep.subr.bf16.mxu0 %v2856
  %4168 = vmatpush1.bf16.msra.mxu0 %v2855
  %4169 = vmatprep.subr.bf16.mxu0 %v2860
  %4170 = vmatpush1.bf16.msra.mxu0 %v2859
  %4171 = vmatprep.subr.bf16.mxu0 %v2864
  %4172 = vmatpush1.bf16.msra.mxu0 %v2863
  %4173 = vmatprep.subr.bf16.mxu0 %v2868
  %4174 = vmatpush1.bf16.msra.mxu0 %v2867
  %4175 = vmatprep.subr.bf16.mxu0 %v2872
  %4176 = vmatpush1.bf16.msra.mxu0 %v2871
  %4177 = vmatprep.subr.bf16.mxu0 %v2876
  %4178 = vmatpush1.bf16.msra.mxu0 %v2875
  %4179 = vmatprep.subr.bf16.mxu0 %v2880
  %4180 = vmatpush1.bf16.msra.mxu0 %v2879
  %4181 = vmatprep.subr.bf16.mxu0 %v2884
  %4182 = vmatpush1.bf16.msra.mxu0 %v2883
  %4183 = vmatprep.subr.bf16.mxu0 %v2888
  %4184 = vmatpush1.bf16.msra.mxu0 %v2887
  %4185 = vmatprep.subr.bf16.mxu0 %v2892
  %4186 = vmatpush1.bf16.msra.mxu0 %v2891
  %4187 = vmatprep.mubr.bf16.mxu0 %v1138
  %4188 = vmatmul.mubr.bf16.gmra.mrb[0].mxu0 %v1137
  %v4189 = vpop.f32.mrb[0].mxu0
  %v4190 = vadd.f32 %v4147, %v4189
  %v4191 = vpop.f32.mrb[0].mxu0
  %v4192 = vadd.f32 %v4149, %v4191
  %v4193 = vpop.f32.mrb[0].mxu0
  %v4194 = vadd.f32 %v4151, %v4193
  %v4195 = vpop.f32.mrb[0].mxu0
  %v4196 = vadd.f32 %v4153, %v4195
  %4197 = vdwg.mxu0
  %4198 = vmatprep.subr.bf16.mxu0 %v2896
  %4199 = vmatpush1.bf16.msra.mxu0 %v2895
  %4200 = vmatprep.subr.bf16.mxu0 %v2900
  %4201 = vmatpush1.bf16.msra.mxu0 %v2899
  %4202 = vmatprep.subr.bf16.mxu0 %v2904
  %4203 = vmatpush1.bf16.msra.mxu0 %v2903
  %4204 = vmatprep.subr.bf16.mxu0 %v2908
  %4205 = vmatpush1.bf16.msra.mxu0 %v2907
  %4206 = vmatprep.subr.bf16.mxu0 %v2912
  %4207 = vmatpush1.bf16.msra.mxu0 %v2911
  %4208 = vmatprep.subr.bf16.mxu0 %v2916
  %4209 = vmatpush1.bf16.msra.mxu0 %v2915
  %4210 = vmatprep.subr.bf16.mxu0 %v2920
  %4211 = vmatpush1.bf16.msra.mxu0 %v2919
  %4212 = vmatprep.subr.bf16.mxu0 %v2924
  %4213 = vmatpush1.bf16.msra.mxu0 %v2923
  %4214 = vmatprep.subr.bf16.mxu0 %v2928
  %4215 = vmatpush1.bf16.msra.mxu0 %v2927
  %4216 = vmatprep.subr.bf16.mxu0 %v2932
  %4217 = vmatpush1.bf16.msra.mxu0 %v2931
  %4218 = vmatprep.subr.bf16.mxu0 %v2936
  %4219 = vmatpush1.bf16.msra.mxu0 %v2935
  %4220 = vmatprep.subr.bf16.mxu0 %v2940
  %4221 = vmatpush1.bf16.msra.mxu0 %v2939
  %4222 = vmatprep.subr.bf16.mxu0 %v2944
  %4223 = vmatpush1.bf16.msra.mxu0 %v2943
  %4224 = vmatprep.subr.bf16.mxu0 %v2948
  %4225 = vmatpush1.bf16.msra.mxu0 %v2947
  %4226 = vmatprep.subr.bf16.mxu0 %v2952
  %4227 = vmatpush1.bf16.msra.mxu0 %v2951
  %4228 = vmatprep.subr.bf16.mxu0 %v2956
  %4229 = vmatpush1.bf16.msra.mxu0 %v2955
  %4230 = vmatprep.mubr.bf16.mxu0 %v1140
  %4231 = vmatmul.mubr.bf16.gmra.mrb[0].mxu0 %v1139
  %v4232 = vpop.f32.mrb[0].mxu0
  %v4233 = vadd.f32 %v4190, %v4232
  %v4234 = vpop.f32.mrb[0].mxu0
  %v4235 = vadd.f32 %v4192, %v4234
  %v4236 = vpop.f32.mrb[0].mxu0
  %v4237 = vadd.f32 %v4194, %v4236
  %v4238 = vpop.f32.mrb[0].mxu0
  %v4239 = vadd.f32 %v4196, %v4238
  %4240 = vdwg.mxu0
  %4241 = vmatprep.subr.bf16.mxu0 %v2960
  %4242 = vmatpush1.bf16.msra.mxu0 %v2959
  %4243 = vmatprep.subr.bf16.mxu0 %v2964
  %4244 = vmatpush1.bf16.msra.mxu0 %v2963
  %4245 = vmatprep.subr.bf16.mxu0 %v2968
  %4246 = vmatpush1.bf16.msra.mxu0 %v2967
  %4247 = vmatprep.subr.bf16.mxu0 %v2972
  %4248 = vmatpush1.bf16.msra.mxu0 %v2971
  %4249 = vmatprep.subr.bf16.mxu0 %v2976
  %4250 = vmatpush1.bf16.msra.mxu0 %v2975
  %4251 = vmatprep.subr.bf16.mxu0 %v2980
  %4252 = vmatpush1.bf16.msra.mxu0 %v2979
  %4253 = vmatprep.subr.bf16.mxu0 %v2984
  %4254 = vmatpush1.bf16.msra.mxu0 %v2983
  %4255 = vmatprep.subr.bf16.mxu0 %v2988
  %4256 = vmatpush1.bf16.msra.mxu0 %v2987
  %4257 = vmatprep.subr.bf16.mxu0 %v2992
  %4258 = vmatpush1.bf16.msra.mxu0 %v2991
  %4259 = vmatprep.subr.bf16.mxu0 %v2996
  %4260 = vmatpush1.bf16.msra.mxu0 %v2995
  %4261 = vmatprep.subr.bf16.mxu0 %v3000
  %4262 = vmatpush1.bf16.msra.mxu0 %v2999
  %4263 = vmatprep.subr.bf16.mxu0 %v3004
  %4264 = vmatpush1.bf16.msra.mxu0 %v3003
  %4265 = vmatprep.subr.bf16.mxu0 %v3008
  %4266 = vmatpush1.bf16.msra.mxu0 %v3007
  %4267 = vmatprep.subr.bf16.mxu0 %v3012
  %4268 = vmatpush1.bf16.msra.mxu0 %v3011
  %4269 = vmatprep.subr.bf16.mxu0 %v3016
  %4270 = vmatpush1.bf16.msra.mxu0 %v3015
  %4271 = vmatprep.subr.bf16.mxu0 %v3020
  %4272 = vmatpush1.bf16.msra.mxu0 %v3019
  %4273 = vmatprep.mubr.bf16.mxu0 %v1142
  %4274 = vmatmul.mubr.bf16.gmra.mrb[0].mxu0 %v1141
  %v4275 = vpop.f32.mrb[0].mxu0
  %v4276 = vadd.f32 %v4233, %v4275
  %v4277 = vpop.f32.mrb[0].mxu0
  %v4278 = vadd.f32 %v4235, %v4277
  %v4279 = vpop.f32.mrb[0].mxu0
  %v4280 = vadd.f32 %v4237, %v4279
  %v4281 = vpop.f32.mrb[0].mxu0
  %v4282 = vadd.f32 %v4239, %v4281
  %4283 = vdwg.mxu0
  %4284 = vmatprep.subr.bf16.mxu0 %v3024
  %4285 = vmatpush1.bf16.msra.mxu0 %v3023
  %4286 = vmatprep.subr.bf16.mxu0 %v3028
  %4287 = vmatpush1.bf16.msra.mxu0 %v3027
  %4288 = vmatprep.subr.bf16.mxu0 %v3032
  %4289 = vmatpush1.bf16.msra.mxu0 %v3031
  %4290 = vmatprep.subr.bf16.mxu0 %v3036
  %4291 = vmatpush1.bf16.msra.mxu0 %v3035
  %4292 = vmatprep.subr.bf16.mxu0 %v3040
  %4293 = vmatpush1.bf16.msra.mxu0 %v3039
  %4294 = vmatprep.subr.bf16.mxu0 %v3044
  %4295 = vmatpush1.bf16.msra.mxu0 %v3043
  %4296 = vmatprep.subr.bf16.mxu0 %v3048
  %4297 = vmatpush1.bf16.msra.mxu0 %v3047
  %4298 = vmatprep.subr.bf16.mxu0 %v3052
  %4299 = vmatpush1.bf16.msra.mxu0 %v3051
  %4300 = vmatprep.subr.bf16.mxu0 %v3056
  %4301 = vmatpush1.bf16.msra.mxu0 %v3055
  %4302 = vmatprep.subr.bf16.mxu0 %v3060
  %4303 = vmatpush1.bf16.msra.mxu0 %v3059
  %4304 = vmatprep.subr.bf16.mxu0 %v3064
  %4305 = vmatpush1.bf16.msra.mxu0 %v3063
  %4306 = vmatprep.subr.bf16.mxu0 %v3068
  %4307 = vmatpush1.bf16.msra.mxu0 %v3067
  %4308 = vmatprep.subr.bf16.mxu0 %v3072
  %4309 = vmatpush1.bf16.msra.mxu0 %v3071
  %4310 = vmatprep.subr.bf16.mxu0 %v3076
  %4311 = vmatpush1.bf16.msra.mxu0 %v3075
  %4312 = vmatprep.subr.bf16.mxu0 %v3080
  %4313 = vmatpush1.bf16.msra.mxu0 %v3079
  %4314 = vmatprep.subr.bf16.mxu0 %v3084
  %4315 = vmatpush1.bf16.msra.mxu0 %v3083
  %4316 = vmatprep.mubr.bf16.mxu0 %v1144
  %4317 = vmatmul.mubr.bf16.gmra.mrb[0].mxu0 %v1143
  %v4318 = vpop.f32.mrb[0].mxu0
  %v4319 = vadd.f32 %v4276, %v4318
  %v4320 = vpop.f32.mrb[0].mxu0
  %v4321 = vadd.f32 %v4278, %v4320
  %v4322 = vpop.f32.mrb[0].mxu0
  %v4323 = vadd.f32 %v4280, %v4322
  %v4324 = vpop.f32.mrb[0].mxu0
  %v4325 = vadd.f32 %v4282, %v4324
  %4326 = vdwg.mxu0
  %4327 = vmatprep.subr.bf16.mxu0 %v3088
  %4328 = vmatpush1.bf16.msra.mxu0 %v3087
  %4329 = vmatprep.subr.bf16.mxu0 %v3092
  %4330 = vmatpush1.bf16.msra.mxu0 %v3091
  %4331 = vmatprep.subr.bf16.mxu0 %v3096
  %4332 = vmatpush1.bf16.msra.mxu0 %v3095
  %4333 = vmatprep.subr.bf16.mxu0 %v3100
  %4334 = vmatpush1.bf16.msra.mxu0 %v3099
  %4335 = vmatprep.subr.bf16.mxu0 %v3104
  %4336 = vmatpush1.bf16.msra.mxu0 %v3103
  %4337 = vmatprep.subr.bf16.mxu0 %v3108
  %4338 = vmatpush1.bf16.msra.mxu0 %v3107
  %4339 = vmatprep.subr.bf16.mxu0 %v3112
  %4340 = vmatpush1.bf16.msra.mxu0 %v3111
  %4341 = vmatprep.subr.bf16.mxu0 %v3116
  %4342 = vmatpush1.bf16.msra.mxu0 %v3115
  %4343 = vmatprep.subr.bf16.mxu0 %v3120
  %4344 = vmatpush1.bf16.msra.mxu0 %v3119
  %4345 = vmatprep.subr.bf16.mxu0 %v3124
  %4346 = vmatpush1.bf16.msra.mxu0 %v3123
  %4347 = vmatprep.subr.bf16.mxu0 %v3128
  %4348 = vmatpush1.bf16.msra.mxu0 %v3127
  %4349 = vmatprep.subr.bf16.mxu0 %v3132
  %4350 = vmatpush1.bf16.msra.mxu0 %v3131
  %4351 = vmatprep.subr.bf16.mxu0 %v3136
  %4352 = vmatpush1.bf16.msra.mxu0 %v3135
  %4353 = vmatprep.subr.bf16.mxu0 %v3140
  %4354 = vmatpush1.bf16.msra.mxu0 %v3139
  %4355 = vmatprep.subr.bf16.mxu0 %v3144
  %4356 = vmatpush1.bf16.msra.mxu0 %v3143
  %4357 = vmatprep.subr.bf16.mxu0 %v3148
  %4358 = vmatpush1.bf16.msra.mxu0 %v3147
  %4359 = vmatprep.mubr.bf16.mxu0 %v1146
  %4360 = vmatmul.mubr.bf16.gmra.mrb[0].mxu0 %v1145
  %v4361 = vpop.f32.mrb[0].mxu0
  %v4362 = vadd.f32 %v4319, %v4361
  %v4363 = vpop.f32.mrb[0].mxu0
  %v4364 = vadd.f32 %v4321, %v4363
  %v4365 = vpop.f32.mrb[0].mxu0
  %v4366 = vadd.f32 %v4323, %v4365
  %v4367 = vpop.f32.mrb[0].mxu0
  %v4368 = vadd.f32 %v4325, %v4367
  %4369 = vdwg.mxu0
  %4370 = vmatprep.subr.bf16.mxu0 %v3152
  %4371 = vmatpush1.bf16.msra.mxu0 %v3151
  %4372 = vmatprep.subr.bf16.mxu0 %v3156
  %4373 = vmatpush1.bf16.msra.mxu0 %v3155
  %4374 = vmatprep.subr.bf16.mxu0 %v3160
  %4375 = vmatpush1.bf16.msra.mxu0 %v3159
  %4376 = vmatprep.subr.bf16.mxu0 %v3164
  %4377 = vmatpush1.bf16.msra.mxu0 %v3163
  %4378 = vmatprep.subr.bf16.mxu0 %v3168
  %4379 = vmatpush1.bf16.msra.mxu0 %v3167
  %4380 = vmatprep.subr.bf16.mxu0 %v3172
  %4381 = vmatpush1.bf16.msra.mxu0 %v3171
  %4382 = vmatprep.subr.bf16.mxu0 %v3176
  %4383 = vmatpush1.bf16.msra.mxu0 %v3175
  %4384 = vmatprep.subr.bf16.mxu0 %v3180
  %4385 = vmatpush1.bf16.msra.mxu0 %v3179
  %4386 = vmatprep.subr.bf16.mxu0 %v3184
  %4387 = vmatpush1.bf16.msra.mxu0 %v3183
  %4388 = vmatprep.subr.bf16.mxu0 %v3188
  %4389 = vmatpush1.bf16.msra.mxu0 %v3187
  %4390 = vmatprep.subr.bf16.mxu0 %v3192
  %4391 = vmatpush1.bf16.msra.mxu0 %v3191
  %4392 = vmatprep.subr.bf16.mxu0 %v3196
  %4393 = vmatpush1.bf16.msra.mxu0 %v3195
  %4394 = vmatprep.subr.bf16.mxu0 %v3200
  %4395 = vmatpush1.bf16.msra.mxu0 %v3199
  %4396 = vmatprep.subr.bf16.mxu0 %v3204
  %4397 = vmatpush1.bf16.msra.mxu0 %v3203
  %4398 = vmatprep.subr.bf16.mxu0 %v3208
  %4399 = vmatpush1.bf16.msra.mxu0 %v3207
  %4400 = vmatprep.subr.bf16.mxu0 %v3212
  %4401 = vmatpush1.bf16.msra.mxu0 %v3211
  %4402 = vmatprep.mubr.bf16.mxu0 %v1148
  %4403 = vmatmul.mubr.bf16.gmra.mrb[0].mxu0 %v1147
  %v4404 = vpop.f32.mrb[0].mxu0
  %v4405 = vadd.f32 %v4362, %v4404
  %v4406 = vpop.f32.mrb[0].mxu0
  %v4407 = vadd.f32 %v4364, %v4406
  %v4408 = vpop.f32.mrb[0].mxu0
  %v4409 = vadd.f32 %v4366, %v4408
  %v4410 = vpop.f32.mrb[0].mxu0
  %v4411 = vadd.f32 %v4368, %v4410
  %4412 = vdwg.mxu0
  %v4429 = vunpack.c.l.b16 %v29
  %v4430 = vunpack.c.h.b16 %v29
  %v4431 = vunpack.c.l.b16 %v30
  %v4432 = vunpack.c.h.b16 %v30
  %v4433 = vunpack.c.l.b16 %v31
  %v4434 = vunpack.c.h.b16 %v31
  %v4435 = vunpack.c.l.b16 %v32
  %v4436 = vunpack.c.h.b16 %v32
  %v4437 = vunpack.c.l.b16 %v33
  %v4438 = vunpack.c.h.b16 %v33
  %v4439 = vunpack.c.l.b16 %v34
  %v4440 = vunpack.c.h.b16 %v34
  %v4441 = vunpack.c.l.b16 %v35
  %v4442 = vunpack.c.h.b16 %v35
  %v4443 = vunpack.c.l.b16 %v36
  %v4444 = vunpack.c.h.b16 %v36
  %v4445 = vunpack.c.l.b16 %v37
  %v4446 = vunpack.c.h.b16 %v37
  %v4447 = vunpack.c.l.b16 %v38
  %v4448 = vunpack.c.h.b16 %v38
  %v4449 = vunpack.c.l.b16 %v39
  %v4450 = vunpack.c.h.b16 %v39
  %v4451 = vunpack.c.l.b16 %v40
  %v4452 = vunpack.c.h.b16 %v40
  %v4453 = vunpack.c.l.b16 %v41
  %v4454 = vunpack.c.h.b16 %v41
  %v4455 = vunpack.c.l.b16 %v42
  %v4456 = vunpack.c.h.b16 %v42
  %v4457 = vunpack.c.l.b16 %v43
  %v4458 = vunpack.c.h.b16 %v43
  %v4459 = vunpack.c.l.b16 %v44
  %v4460 = vunpack.c.h.b16 %v44
  %v4461 = vpack.c.b16 %v4445, %v4429
  %v4462 = vpack.c.b16 %v4446, %v4430
  %v4463 = vpack.c.b16 %v4447, %v4431
  %v4464 = vpack.c.b16 %v4448, %v4432
  %v4465 = vpack.c.b16 %v4449, %v4433
  %v4466 = vpack.c.b16 %v4450, %v4434
  %v4467 = vpack.c.b16 %v4451, %v4435
  %v4468 = vpack.c.b16 %v4452, %v4436
  %v4469 = vpack.c.b16 %v4453, %v4437
  %v4470 = vpack.c.b16 %v4454, %v4438
  %v4471 = vpack.c.b16 %v4455, %v4439
  %v4472 = vpack.c.b16 %v4456, %v4440
  %v4473 = vpack.c.b16 %v4457, %v4441
  %v4474 = vpack.c.b16 %v4458, %v4442
  %v4475 = vpack.c.b16 %v4459, %v4443
  %v4476 = vpack.c.b16 %v4460, %v4444
  %v5005 = vunpack.c.l.b16 %v45
  %v5006 = vunpack.c.h.b16 %v45
  %v5007 = vunpack.c.l.b16 %v46
  %v5008 = vunpack.c.h.b16 %v46
  %v5009 = vunpack.c.l.b16 %v47
  %v5010 = vunpack.c.h.b16 %v47
  %v5011 = vunpack.c.l.b16 %v48
  %v5012 = vunpack.c.h.b16 %v48
  %v5013 = vunpack.c.l.b16 %v49
  %v5014 = vunpack.c.h.b16 %v49
  %v5015 = vunpack.c.l.b16 %v50
  %v5016 = vunpack.c.h.b16 %v50
  %v5017 = vunpack.c.l.b16 %v51
  %v5018 = vunpack.c.h.b16 %v51
  %v5019 = vunpack.c.l.b16 %v52
  %v5020 = vunpack.c.h.b16 %v52
  %v5021 = vunpack.c.l.b16 %v53
  %v5022 = vunpack.c.h.b16 %v53
  %v5023 = vunpack.c.l.b16 %v54
  %v5024 = vunpack.c.h.b16 %v54
  %v5025 = vunpack.c.l.b16 %v55
  %v5026 = vunpack.c.h.b16 %v55
  %v5027 = vunpack.c.l.b16 %v56
  %v5028 = vunpack.c.h.b16 %v56
  %v5029 = vunpack.c.l.b16 %v57
  %v5030 = vunpack.c.h.b16 %v57
  %v5031 = vunpack.c.l.b16 %v58
  %v5032 = vunpack.c.h.b16 %v58
  %v5033 = vunpack.c.l.b16 %v59
  %v5034 = vunpack.c.h.b16 %v59
  %v5035 = vunpack.c.l.b16 %v60
  %v5036 = vunpack.c.h.b16 %v60
  %v5037 = vunpack.c.l.b16 %v61
  %v5038 = vunpack.c.h.b16 %v61
  %v5039 = vunpack.c.l.b16 %v62
  %v5040 = vunpack.c.h.b16 %v62
  %v5041 = vunpack.c.l.b16 %v63
  %v5042 = vunpack.c.h.b16 %v63
  %v5043 = vunpack.c.l.b16 %v64
  %v5044 = vunpack.c.h.b16 %v64
  %v5045 = vunpack.c.l.b16 %v65
  %v5046 = vunpack.c.h.b16 %v65
  %v5047 = vunpack.c.l.b16 %v66
  %v5048 = vunpack.c.h.b16 %v66
  %v5049 = vunpack.c.l.b16 %v67
  %v5050 = vunpack.c.h.b16 %v67
  %v5051 = vunpack.c.l.b16 %v68
  %v5052 = vunpack.c.h.b16 %v68
  %v5053 = vunpack.c.l.b16 %v69
  %v5054 = vunpack.c.h.b16 %v69
  %v5055 = vunpack.c.l.b16 %v70
  %v5056 = vunpack.c.h.b16 %v70
  %v5057 = vunpack.c.l.b16 %v71
  %v5058 = vunpack.c.h.b16 %v71
  %v5059 = vunpack.c.l.b16 %v72
  %v5060 = vunpack.c.h.b16 %v72
  %v5061 = vunpack.c.l.b16 %v73
  %v5062 = vunpack.c.h.b16 %v73
  %v5063 = vunpack.c.l.b16 %v74
  %v5064 = vunpack.c.h.b16 %v74
  %v5065 = vunpack.c.l.b16 %v75
  %v5066 = vunpack.c.h.b16 %v75
  %v5067 = vunpack.c.l.b16 %v76
  %v5068 = vunpack.c.h.b16 %v76
  %v5069 = vunpack.c.l.b16 %v77
  %v5070 = vunpack.c.h.b16 %v77
  %v5071 = vunpack.c.l.b16 %v78
  %v5072 = vunpack.c.h.b16 %v78
  %v5073 = vunpack.c.l.b16 %v79
  %v5074 = vunpack.c.h.b16 %v79
  %v5075 = vunpack.c.l.b16 %v80
  %v5076 = vunpack.c.h.b16 %v80
  %v5077 = vunpack.c.l.b16 %v81
  %v5078 = vunpack.c.h.b16 %v81
  %v5079 = vunpack.c.l.b16 %v82
  %v5080 = vunpack.c.h.b16 %v82
  %v5081 = vunpack.c.l.b16 %v83
  %v5082 = vunpack.c.h.b16 %v83
  %v5083 = vunpack.c.l.b16 %v84
  %v5084 = vunpack.c.h.b16 %v84
  %v5085 = vunpack.c.l.b16 %v85
  %v5086 = vunpack.c.h.b16 %v85
  %v5087 = vunpack.c.l.b16 %v86
  %v5088 = vunpack.c.h.b16 %v86
  %v5089 = vunpack.c.l.b16 %v87
  %v5090 = vunpack.c.h.b16 %v87
  %v5091 = vunpack.c.l.b16 %v88
  %v5092 = vunpack.c.h.b16 %v88
  %v5093 = vunpack.c.l.b16 %v89
  %v5094 = vunpack.c.h.b16 %v89
  %v5095 = vunpack.c.l.b16 %v90
  %v5096 = vunpack.c.h.b16 %v90
  %v5097 = vunpack.c.l.b16 %v91
  %v5098 = vunpack.c.h.b16 %v91
  %v5099 = vunpack.c.l.b16 %v92
  %v5100 = vunpack.c.h.b16 %v92
  %v5101 = vunpack.c.l.b16 %v93
  %v5102 = vunpack.c.h.b16 %v93
  %v5103 = vunpack.c.l.b16 %v94
  %v5104 = vunpack.c.h.b16 %v94
  %v5105 = vunpack.c.l.b16 %v95
  %v5106 = vunpack.c.h.b16 %v95
  %v5107 = vunpack.c.l.b16 %v96
  %v5108 = vunpack.c.h.b16 %v96
  %v5109 = vunpack.c.l.b16 %v97
  %v5110 = vunpack.c.h.b16 %v97
  %v5111 = vunpack.c.l.b16 %v98
  %v5112 = vunpack.c.h.b16 %v98
  %v5113 = vunpack.c.l.b16 %v99
  %v5114 = vunpack.c.h.b16 %v99
  %v5115 = vunpack.c.l.b16 %v100
  %v5116 = vunpack.c.h.b16 %v100
  %v5117 = vunpack.c.l.b16 %v101
  %v5118 = vunpack.c.h.b16 %v101
  %v5119 = vunpack.c.l.b16 %v102
  %v5120 = vunpack.c.h.b16 %v102
  %v5121 = vunpack.c.l.b16 %v103
  %v5122 = vunpack.c.h.b16 %v103
  %v5123 = vunpack.c.l.b16 %v104
  %v5124 = vunpack.c.h.b16 %v104
  %v5125 = vunpack.c.l.b16 %v105
  %v5126 = vunpack.c.h.b16 %v105
  %v5127 = vunpack.c.l.b16 %v106
  %v5128 = vunpack.c.h.b16 %v106
  %v5129 = vunpack.c.l.b16 %v107
  %v5130 = vunpack.c.h.b16 %v107
  %v5131 = vunpack.c.l.b16 %v108
  %v5132 = vunpack.c.h.b16 %v108
  %v5133 = vunpack.c.l.b16 %v109
  %v5134 = vunpack.c.h.b16 %v109
  %v5135 = vunpack.c.l.b16 %v110
  %v5136 = vunpack.c.h.b16 %v110
  %v5137 = vunpack.c.l.b16 %v111
  %v5138 = vunpack.c.h.b16 %v111
  %v5139 = vunpack.c.l.b16 %v112
  %v5140 = vunpack.c.h.b16 %v112
  %v5141 = vunpack.c.l.b16 %v113
  %v5142 = vunpack.c.h.b16 %v113
  %v5143 = vunpack.c.l.b16 %v114
  %v5144 = vunpack.c.h.b16 %v114
  %v5145 = vunpack.c.l.b16 %v115
  %v5146 = vunpack.c.h.b16 %v115
  %v5147 = vunpack.c.l.b16 %v116
  %v5148 = vunpack.c.h.b16 %v116
  %v5149 = vunpack.c.l.b16 %v117
  %v5150 = vunpack.c.h.b16 %v117
  %v5151 = vunpack.c.l.b16 %v118
  %v5152 = vunpack.c.h.b16 %v118
  %v5153 = vunpack.c.l.b16 %v119
  %v5154 = vunpack.c.h.b16 %v119
  %v5155 = vunpack.c.l.b16 %v120
  %v5156 = vunpack.c.h.b16 %v120
  %v5157 = vunpack.c.l.b16 %v121
  %v5158 = vunpack.c.h.b16 %v121
  %v5159 = vunpack.c.l.b16 %v122
  %v5160 = vunpack.c.h.b16 %v122
  %v5161 = vunpack.c.l.b16 %v123
  %v5162 = vunpack.c.h.b16 %v123
  %v5163 = vunpack.c.l.b16 %v124
  %v5164 = vunpack.c.h.b16 %v124
  %v5165 = vunpack.c.l.b16 %v125
  %v5166 = vunpack.c.h.b16 %v125
  %v5167 = vunpack.c.l.b16 %v126
  %v5168 = vunpack.c.h.b16 %v126
  %v5169 = vunpack.c.l.b16 %v127
  %v5170 = vunpack.c.h.b16 %v127
  %v5171 = vunpack.c.l.b16 %v128
  %v5172 = vunpack.c.h.b16 %v128
  %v5173 = vunpack.c.l.b16 %v129
  %v5174 = vunpack.c.h.b16 %v129
  %v5175 = vunpack.c.l.b16 %v130
  %v5176 = vunpack.c.h.b16 %v130
  %v5177 = vunpack.c.l.b16 %v131
  %v5178 = vunpack.c.h.b16 %v131
  %v5179 = vunpack.c.l.b16 %v132
  %v5180 = vunpack.c.h.b16 %v132
  %v5181 = vunpack.c.l.b16 %v133
  %v5182 = vunpack.c.h.b16 %v133
  %v5183 = vunpack.c.l.b16 %v134
  %v5184 = vunpack.c.h.b16 %v134
  %v5185 = vunpack.c.l.b16 %v135
  %v5186 = vunpack.c.h.b16 %v135
  %v5187 = vunpack.c.l.b16 %v136
  %v5188 = vunpack.c.h.b16 %v136
  %v5189 = vunpack.c.l.b16 %v137
  %v5190 = vunpack.c.h.b16 %v137
  %v5191 = vunpack.c.l.b16 %v138
  %v5192 = vunpack.c.h.b16 %v138
  %v5193 = vunpack.c.l.b16 %v139
  %v5194 = vunpack.c.h.b16 %v139
  %v5195 = vunpack.c.l.b16 %v140
  %v5196 = vunpack.c.h.b16 %v140
  %v5197 = vunpack.c.l.b16 %v141
  %v5198 = vunpack.c.h.b16 %v141
  %v5199 = vunpack.c.l.b16 %v142
  %v5200 = vunpack.c.h.b16 %v142
  %v5201 = vunpack.c.l.b16 %v143
  %v5202 = vunpack.c.h.b16 %v143
  %v5203 = vunpack.c.l.b16 %v144
  %v5204 = vunpack.c.h.b16 %v144
  %v5205 = vunpack.c.l.b16 %v145
  %v5206 = vunpack.c.h.b16 %v145
  %v5207 = vunpack.c.l.b16 %v146
  %v5208 = vunpack.c.h.b16 %v146
  %v5209 = vunpack.c.l.b16 %v147
  %v5210 = vunpack.c.h.b16 %v147
  %v5211 = vunpack.c.l.b16 %v148
  %v5212 = vunpack.c.h.b16 %v148
  %v5213 = vunpack.c.l.b16 %v149
  %v5214 = vunpack.c.h.b16 %v149
  %v5215 = vunpack.c.l.b16 %v150
  %v5216 = vunpack.c.h.b16 %v150
  %v5217 = vunpack.c.l.b16 %v151
  %v5218 = vunpack.c.h.b16 %v151
  %v5219 = vunpack.c.l.b16 %v152
  %v5220 = vunpack.c.h.b16 %v152
  %v5221 = vunpack.c.l.b16 %v153
  %v5222 = vunpack.c.h.b16 %v153
  %v5223 = vunpack.c.l.b16 %v154
  %v5224 = vunpack.c.h.b16 %v154
  %v5225 = vunpack.c.l.b16 %v155
  %v5226 = vunpack.c.h.b16 %v155
  %v5227 = vunpack.c.l.b16 %v156
  %v5228 = vunpack.c.h.b16 %v156
  %v5229 = vunpack.c.l.b16 %v157
  %v5230 = vunpack.c.h.b16 %v157
  %v5231 = vunpack.c.l.b16 %v158
  %v5232 = vunpack.c.h.b16 %v158
  %v5233 = vunpack.c.l.b16 %v159
  %v5234 = vunpack.c.h.b16 %v159
  %v5235 = vunpack.c.l.b16 %v160
  %v5236 = vunpack.c.h.b16 %v160
  %v5237 = vunpack.c.l.b16 %v161
  %v5238 = vunpack.c.h.b16 %v161
  %v5239 = vunpack.c.l.b16 %v162
  %v5240 = vunpack.c.h.b16 %v162
  %v5241 = vunpack.c.l.b16 %v163
  %v5242 = vunpack.c.h.b16 %v163
  %v5243 = vunpack.c.l.b16 %v164
  %v5244 = vunpack.c.h.b16 %v164
  %v5245 = vunpack.c.l.b16 %v165
  %v5246 = vunpack.c.h.b16 %v165
  %v5247 = vunpack.c.l.b16 %v166
  %v5248 = vunpack.c.h.b16 %v166
  %v5249 = vunpack.c.l.b16 %v167
  %v5250 = vunpack.c.h.b16 %v167
  %v5251 = vunpack.c.l.b16 %v168
  %v5252 = vunpack.c.h.b16 %v168
  %v5253 = vunpack.c.l.b16 %v169
  %v5254 = vunpack.c.h.b16 %v169
  %v5255 = vunpack.c.l.b16 %v170
  %v5256 = vunpack.c.h.b16 %v170
  %v5257 = vunpack.c.l.b16 %v171
  %v5258 = vunpack.c.h.b16 %v171
  %v5259 = vunpack.c.l.b16 %v172
  %v5260 = vunpack.c.h.b16 %v172
  %v5261 = vunpack.c.l.b16 %v173
  %v5262 = vunpack.c.h.b16 %v173
  %v5263 = vunpack.c.l.b16 %v174
  %v5264 = vunpack.c.h.b16 %v174
  %v5265 = vunpack.c.l.b16 %v175
  %v5266 = vunpack.c.h.b16 %v175
  %v5267 = vunpack.c.l.b16 %v176
  %v5268 = vunpack.c.h.b16 %v176
  %v5269 = vunpack.c.l.b16 %v177
  %v5270 = vunpack.c.h.b16 %v177
  %v5271 = vunpack.c.l.b16 %v178
  %v5272 = vunpack.c.h.b16 %v178
  %v5273 = vunpack.c.l.b16 %v179
  %v5274 = vunpack.c.h.b16 %v179
  %v5275 = vunpack.c.l.b16 %v180
  %v5276 = vunpack.c.h.b16 %v180
  %v5277 = vunpack.c.l.b16 %v181
  %v5278 = vunpack.c.h.b16 %v181
  %v5279 = vunpack.c.l.b16 %v182
  %v5280 = vunpack.c.h.b16 %v182
  %v5281 = vunpack.c.l.b16 %v183
  %v5282 = vunpack.c.h.b16 %v183
  %v5283 = vunpack.c.l.b16 %v184
  %v5284 = vunpack.c.h.b16 %v184
  %v5285 = vunpack.c.l.b16 %v185
  %v5286 = vunpack.c.h.b16 %v185
  %v5287 = vunpack.c.l.b16 %v186
  %v5288 = vunpack.c.h.b16 %v186
  %v5289 = vunpack.c.l.b16 %v187
  %v5290 = vunpack.c.h.b16 %v187
  %v5291 = vunpack.c.l.b16 %v188
  %v5292 = vunpack.c.h.b16 %v188
  %v5293 = vunpack.c.l.b16 %v189
  %v5294 = vunpack.c.h.b16 %v189
  %v5295 = vunpack.c.l.b16 %v190
  %v5296 = vunpack.c.h.b16 %v190
  %v5297 = vunpack.c.l.b16 %v191
  %v5298 = vunpack.c.h.b16 %v191
  %v5299 = vunpack.c.l.b16 %v192
  %v5300 = vunpack.c.h.b16 %v192
  %v5301 = vunpack.c.l.b16 %v193
  %v5302 = vunpack.c.h.b16 %v193
  %v5303 = vunpack.c.l.b16 %v194
  %v5304 = vunpack.c.h.b16 %v194
  %v5305 = vunpack.c.l.b16 %v195
  %v5306 = vunpack.c.h.b16 %v195
  %v5307 = vunpack.c.l.b16 %v196
  %v5308 = vunpack.c.h.b16 %v196
  %v5309 = vunpack.c.l.b16 %v197
  %v5310 = vunpack.c.h.b16 %v197
  %v5311 = vunpack.c.l.b16 %v198
  %v5312 = vunpack.c.h.b16 %v198
  %v5313 = vunpack.c.l.b16 %v199
  %v5314 = vunpack.c.h.b16 %v199
  %v5315 = vunpack.c.l.b16 %v200
  %v5316 = vunpack.c.h.b16 %v200
  %v5317 = vunpack.c.l.b16 %v201
  %v5318 = vunpack.c.h.b16 %v201
  %v5319 = vunpack.c.l.b16 %v202
  %v5320 = vunpack.c.h.b16 %v202
  %v5321 = vunpack.c.l.b16 %v203
  %v5322 = vunpack.c.h.b16 %v203
  %v5323 = vunpack.c.l.b16 %v204
  %v5324 = vunpack.c.h.b16 %v204
  %v5325 = vunpack.c.l.b16 %v205
  %v5326 = vunpack.c.h.b16 %v205
  %v5327 = vunpack.c.l.b16 %v206
  %v5328 = vunpack.c.h.b16 %v206
  %v5329 = vunpack.c.l.b16 %v207
  %v5330 = vunpack.c.h.b16 %v207
  %v5331 = vunpack.c.l.b16 %v208
  %v5332 = vunpack.c.h.b16 %v208
  %v5333 = vunpack.c.l.b16 %v209
  %v5334 = vunpack.c.h.b16 %v209
  %v5335 = vunpack.c.l.b16 %v210
  %v5336 = vunpack.c.h.b16 %v210
  %v5337 = vunpack.c.l.b16 %v211
  %v5338 = vunpack.c.h.b16 %v211
  %v5339 = vunpack.c.l.b16 %v212
  %v5340 = vunpack.c.h.b16 %v212
  %v5341 = vunpack.c.l.b16 %v213
  %v5342 = vunpack.c.h.b16 %v213
  %v5343 = vunpack.c.l.b16 %v214
  %v5344 = vunpack.c.h.b16 %v214
  %v5345 = vunpack.c.l.b16 %v215
  %v5346 = vunpack.c.h.b16 %v215
  %v5347 = vunpack.c.l.b16 %v216
  %v5348 = vunpack.c.h.b16 %v216
  %v5349 = vunpack.c.l.b16 %v217
  %v5350 = vunpack.c.h.b16 %v217
  %v5351 = vunpack.c.l.b16 %v218
  %v5352 = vunpack.c.h.b16 %v218
  %v5353 = vunpack.c.l.b16 %v219
  %v5354 = vunpack.c.h.b16 %v219
  %v5355 = vunpack.c.l.b16 %v220
  %v5356 = vunpack.c.h.b16 %v220
  %v5357 = vunpack.c.l.b16 %v221
  %v5358 = vunpack.c.h.b16 %v221
  %v5359 = vunpack.c.l.b16 %v222
  %v5360 = vunpack.c.h.b16 %v222
  %v5361 = vunpack.c.l.b16 %v223
  %v5362 = vunpack.c.h.b16 %v223
  %v5363 = vunpack.c.l.b16 %v224
  %v5364 = vunpack.c.h.b16 %v224
  %v5365 = vunpack.c.l.b16 %v225
  %v5366 = vunpack.c.h.b16 %v225
  %v5367 = vunpack.c.l.b16 %v226
  %v5368 = vunpack.c.h.b16 %v226
  %v5369 = vunpack.c.l.b16 %v227
  %v5370 = vunpack.c.h.b16 %v227
  %v5371 = vunpack.c.l.b16 %v228
  %v5372 = vunpack.c.h.b16 %v228
  %v5373 = vunpack.c.l.b16 %v229
  %v5374 = vunpack.c.h.b16 %v229
  %v5375 = vunpack.c.l.b16 %v230
  %v5376 = vunpack.c.h.b16 %v230
  %v5377 = vunpack.c.l.b16 %v231
  %v5378 = vunpack.c.h.b16 %v231
  %v5379 = vunpack.c.l.b16 %v232
  %v5380 = vunpack.c.h.b16 %v232
  %v5381 = vunpack.c.l.b16 %v233
  %v5382 = vunpack.c.h.b16 %v233
  %v5383 = vunpack.c.l.b16 %v234
  %v5384 = vunpack.c.h.b16 %v234
  %v5385 = vunpack.c.l.b16 %v235
  %v5386 = vunpack.c.h.b16 %v235
  %v5387 = vunpack.c.l.b16 %v236
  %v5388 = vunpack.c.h.b16 %v236
  %v5389 = vunpack.c.l.b16 %v237
  %v5390 = vunpack.c.h.b16 %v237
  %v5391 = vunpack.c.l.b16 %v238
  %v5392 = vunpack.c.h.b16 %v238
  %v5393 = vunpack.c.l.b16 %v239
  %v5394 = vunpack.c.h.b16 %v239
  %v5395 = vunpack.c.l.b16 %v240
  %v5396 = vunpack.c.h.b16 %v240
  %v5397 = vunpack.c.l.b16 %v241
  %v5398 = vunpack.c.h.b16 %v241
  %v5399 = vunpack.c.l.b16 %v242
  %v5400 = vunpack.c.h.b16 %v242
  %v5401 = vunpack.c.l.b16 %v243
  %v5402 = vunpack.c.h.b16 %v243
  %v5403 = vunpack.c.l.b16 %v244
  %v5404 = vunpack.c.h.b16 %v244
  %v5405 = vunpack.c.l.b16 %v245
  %v5406 = vunpack.c.h.b16 %v245
  %v5407 = vunpack.c.l.b16 %v246
  %v5408 = vunpack.c.h.b16 %v246
  %v5409 = vunpack.c.l.b16 %v247
  %v5410 = vunpack.c.h.b16 %v247
  %v5411 = vunpack.c.l.b16 %v248
  %v5412 = vunpack.c.h.b16 %v248
  %v5413 = vunpack.c.l.b16 %v249
  %v5414 = vunpack.c.h.b16 %v249
  %v5415 = vunpack.c.l.b16 %v250
  %v5416 = vunpack.c.h.b16 %v250
  %v5417 = vunpack.c.l.b16 %v251
  %v5418 = vunpack.c.h.b16 %v251
  %v5419 = vunpack.c.l.b16 %v252
  %v5420 = vunpack.c.h.b16 %v252
  %v5421 = vunpack.c.l.b16 %v253
  %v5422 = vunpack.c.h.b16 %v253
  %v5423 = vunpack.c.l.b16 %v254
  %v5424 = vunpack.c.h.b16 %v254
  %v5425 = vunpack.c.l.b16 %v255
  %v5426 = vunpack.c.h.b16 %v255
  %v5427 = vunpack.c.l.b16 %v256
  %v5428 = vunpack.c.h.b16 %v256
  %v5429 = vunpack.c.l.b16 %v257
  %v5430 = vunpack.c.h.b16 %v257
  %v5431 = vunpack.c.l.b16 %v258
  %v5432 = vunpack.c.h.b16 %v258
  %v5433 = vunpack.c.l.b16 %v259
  %v5434 = vunpack.c.h.b16 %v259
  %v5435 = vunpack.c.l.b16 %v260
  %v5436 = vunpack.c.h.b16 %v260
  %v5437 = vunpack.c.l.b16 %v261
  %v5438 = vunpack.c.h.b16 %v261
  %v5439 = vunpack.c.l.b16 %v262
  %v5440 = vunpack.c.h.b16 %v262
  %v5441 = vunpack.c.l.b16 %v263
  %v5442 = vunpack.c.h.b16 %v263
  %v5443 = vunpack.c.l.b16 %v264
  %v5444 = vunpack.c.h.b16 %v264
  %v5445 = vunpack.c.l.b16 %v265
  %v5446 = vunpack.c.h.b16 %v265
  %v5447 = vunpack.c.l.b16 %v266
  %v5448 = vunpack.c.h.b16 %v266
  %v5449 = vunpack.c.l.b16 %v267
  %v5450 = vunpack.c.h.b16 %v267
  %v5451 = vunpack.c.l.b16 %v268
  %v5452 = vunpack.c.h.b16 %v268
  %v5453 = vunpack.c.l.b16 %v269
  %v5454 = vunpack.c.h.b16 %v269
  %v5455 = vunpack.c.l.b16 %v270
  %v5456 = vunpack.c.h.b16 %v270
  %v5457 = vunpack.c.l.b16 %v271
  %v5458 = vunpack.c.h.b16 %v271
  %v5459 = vunpack.c.l.b16 %v272
  %v5460 = vunpack.c.h.b16 %v272
  %v5461 = vunpack.c.l.b16 %v273
  %v5462 = vunpack.c.h.b16 %v273
  %v5463 = vunpack.c.l.b16 %v274
  %v5464 = vunpack.c.h.b16 %v274
  %v5465 = vunpack.c.l.b16 %v275
  %v5466 = vunpack.c.h.b16 %v275
  %v5467 = vunpack.c.l.b16 %v276
  %v5468 = vunpack.c.h.b16 %v276
  %v5469 = vunpack.c.l.b16 %v277
  %v5470 = vunpack.c.h.b16 %v277
  %v5471 = vunpack.c.l.b16 %v278
  %v5472 = vunpack.c.h.b16 %v278
  %v5473 = vunpack.c.l.b16 %v279
  %v5474 = vunpack.c.h.b16 %v279
  %v5475 = vunpack.c.l.b16 %v280
  %v5476 = vunpack.c.h.b16 %v280
  %v5477 = vunpack.c.l.b16 %v281
  %v5478 = vunpack.c.h.b16 %v281
  %v5479 = vunpack.c.l.b16 %v282
  %v5480 = vunpack.c.h.b16 %v282
  %v5481 = vunpack.c.l.b16 %v283
  %v5482 = vunpack.c.h.b16 %v283
  %v5483 = vunpack.c.l.b16 %v284
  %v5484 = vunpack.c.h.b16 %v284
  %v5485 = vunpack.c.l.b16 %v285
  %v5486 = vunpack.c.h.b16 %v285
  %v5487 = vunpack.c.l.b16 %v286
  %v5488 = vunpack.c.h.b16 %v286
  %v5489 = vunpack.c.l.b16 %v287
  %v5490 = vunpack.c.h.b16 %v287
  %v5491 = vunpack.c.l.b16 %v288
  %v5492 = vunpack.c.h.b16 %v288
  %v5493 = vunpack.c.l.b16 %v289
  %v5494 = vunpack.c.h.b16 %v289
  %v5495 = vunpack.c.l.b16 %v290
  %v5496 = vunpack.c.h.b16 %v290
  %v5497 = vunpack.c.l.b16 %v291
  %v5498 = vunpack.c.h.b16 %v291
  %v5499 = vunpack.c.l.b16 %v292
  %v5500 = vunpack.c.h.b16 %v292
  %v5501 = vunpack.c.l.b16 %v293
  %v5502 = vunpack.c.h.b16 %v293
  %v5503 = vunpack.c.l.b16 %v294
  %v5504 = vunpack.c.h.b16 %v294
  %v5505 = vunpack.c.l.b16 %v295
  %v5506 = vunpack.c.h.b16 %v295
  %v5507 = vunpack.c.l.b16 %v296
  %v5508 = vunpack.c.h.b16 %v296
  %v5509 = vunpack.c.l.b16 %v297
  %v5510 = vunpack.c.h.b16 %v297
  %v5511 = vunpack.c.l.b16 %v298
  %v5512 = vunpack.c.h.b16 %v298
  %v5513 = vunpack.c.l.b16 %v299
  %v5514 = vunpack.c.h.b16 %v299
  %v5515 = vunpack.c.l.b16 %v300
  %v5516 = vunpack.c.h.b16 %v300
  %v5517 = vunpack.c.l.b16 %v301
  %v5518 = vunpack.c.h.b16 %v301
  %v5519 = vunpack.c.l.b16 %v302
  %v5520 = vunpack.c.h.b16 %v302
  %v5521 = vunpack.c.l.b16 %v303
  %v5522 = vunpack.c.h.b16 %v303
  %v5523 = vunpack.c.l.b16 %v304
  %v5524 = vunpack.c.h.b16 %v304
  %v5525 = vunpack.c.l.b16 %v305
  %v5526 = vunpack.c.h.b16 %v305
  %v5527 = vunpack.c.l.b16 %v306
  %v5528 = vunpack.c.h.b16 %v306
  %v5529 = vunpack.c.l.b16 %v307
  %v5530 = vunpack.c.h.b16 %v307
  %v5531 = vunpack.c.l.b16 %v308
  %v5532 = vunpack.c.h.b16 %v308
  %v5533 = vunpack.c.l.b16 %v309
  %v5534 = vunpack.c.h.b16 %v309
  %v5535 = vunpack.c.l.b16 %v310
  %v5536 = vunpack.c.h.b16 %v310
  %v5537 = vunpack.c.l.b16 %v311
  %v5538 = vunpack.c.h.b16 %v311
  %v5539 = vunpack.c.l.b16 %v312
  %v5540 = vunpack.c.h.b16 %v312
  %v5541 = vunpack.c.l.b16 %v313
  %v5542 = vunpack.c.h.b16 %v313
  %v5543 = vunpack.c.l.b16 %v314
  %v5544 = vunpack.c.h.b16 %v314
  %v5545 = vunpack.c.l.b16 %v315
  %v5546 = vunpack.c.h.b16 %v315
  %v5547 = vunpack.c.l.b16 %v316
  %v5548 = vunpack.c.h.b16 %v316
  %v5549 = vunpack.c.l.b16 %v317
  %v5550 = vunpack.c.h.b16 %v317
  %v5551 = vunpack.c.l.b16 %v318
  %v5552 = vunpack.c.h.b16 %v318
  %v5553 = vunpack.c.l.b16 %v319
  %v5554 = vunpack.c.h.b16 %v319
  %v5555 = vunpack.c.l.b16 %v320
  %v5556 = vunpack.c.h.b16 %v320
  %v5557 = vunpack.c.l.b16 %v321
  %v5558 = vunpack.c.h.b16 %v321
  %v5559 = vunpack.c.l.b16 %v322
  %v5560 = vunpack.c.h.b16 %v322
  %v5561 = vunpack.c.l.b16 %v323
  %v5562 = vunpack.c.h.b16 %v323
  %v5563 = vunpack.c.l.b16 %v324
  %v5564 = vunpack.c.h.b16 %v324
  %v5565 = vunpack.c.l.b16 %v325
  %v5566 = vunpack.c.h.b16 %v325
  %v5567 = vunpack.c.l.b16 %v326
  %v5568 = vunpack.c.h.b16 %v326
  %v5569 = vunpack.c.l.b16 %v327
  %v5570 = vunpack.c.h.b16 %v327
  %v5571 = vunpack.c.l.b16 %v328
  %v5572 = vunpack.c.h.b16 %v328
  %v5573 = vunpack.c.l.b16 %v329
  %v5574 = vunpack.c.h.b16 %v329
  %v5575 = vunpack.c.l.b16 %v330
  %v5576 = vunpack.c.h.b16 %v330
  %v5577 = vunpack.c.l.b16 %v331
  %v5578 = vunpack.c.h.b16 %v331
  %v5579 = vunpack.c.l.b16 %v332
  %v5580 = vunpack.c.h.b16 %v332
  %v5581 = vunpack.c.l.b16 %v333
  %v5582 = vunpack.c.h.b16 %v333
  %v5583 = vunpack.c.l.b16 %v334
  %v5584 = vunpack.c.h.b16 %v334
  %v5585 = vunpack.c.l.b16 %v335
  %v5586 = vunpack.c.h.b16 %v335
  %v5587 = vunpack.c.l.b16 %v336
  %v5588 = vunpack.c.h.b16 %v336
  %v5589 = vunpack.c.l.b16 %v337
  %v5590 = vunpack.c.h.b16 %v337
  %v5591 = vunpack.c.l.b16 %v338
  %v5592 = vunpack.c.h.b16 %v338
  %v5593 = vunpack.c.l.b16 %v339
  %v5594 = vunpack.c.h.b16 %v339
  %v5595 = vunpack.c.l.b16 %v340
  %v5596 = vunpack.c.h.b16 %v340
  %v5597 = vunpack.c.l.b16 %v341
  %v5598 = vunpack.c.h.b16 %v341
  %v5599 = vunpack.c.l.b16 %v342
  %v5600 = vunpack.c.h.b16 %v342
  %v5601 = vunpack.c.l.b16 %v343
  %v5602 = vunpack.c.h.b16 %v343
  %v5603 = vunpack.c.l.b16 %v344
  %v5604 = vunpack.c.h.b16 %v344
  %v5605 = vunpack.c.l.b16 %v345
  %v5606 = vunpack.c.h.b16 %v345
  %v5607 = vunpack.c.l.b16 %v346
  %v5608 = vunpack.c.h.b16 %v346
  %v5609 = vunpack.c.l.b16 %v347
  %v5610 = vunpack.c.h.b16 %v347
  %v5611 = vunpack.c.l.b16 %v348
  %v5612 = vunpack.c.h.b16 %v348
  %v5613 = vunpack.c.l.b16 %v349
  %v5614 = vunpack.c.h.b16 %v349
  %v5615 = vunpack.c.l.b16 %v350
  %v5616 = vunpack.c.h.b16 %v350
  %v5617 = vunpack.c.l.b16 %v351
  %v5618 = vunpack.c.h.b16 %v351
  %v5619 = vunpack.c.l.b16 %v352
  %v5620 = vunpack.c.h.b16 %v352
  %v5621 = vunpack.c.l.b16 %v353
  %v5622 = vunpack.c.h.b16 %v353
  %v5623 = vunpack.c.l.b16 %v354
  %v5624 = vunpack.c.h.b16 %v354
  %v5625 = vunpack.c.l.b16 %v355
  %v5626 = vunpack.c.h.b16 %v355
  %v5627 = vunpack.c.l.b16 %v356
  %v5628 = vunpack.c.h.b16 %v356
  %v5629 = vunpack.c.l.b16 %v357
  %v5630 = vunpack.c.h.b16 %v357
  %v5631 = vunpack.c.l.b16 %v358
  %v5632 = vunpack.c.h.b16 %v358
  %v5633 = vunpack.c.l.b16 %v359
  %v5634 = vunpack.c.h.b16 %v359
  %v5635 = vunpack.c.l.b16 %v360
  %v5636 = vunpack.c.h.b16 %v360
  %v5637 = vunpack.c.l.b16 %v361
  %v5638 = vunpack.c.h.b16 %v361
  %v5639 = vunpack.c.l.b16 %v362
  %v5640 = vunpack.c.h.b16 %v362
  %v5641 = vunpack.c.l.b16 %v363
  %v5642 = vunpack.c.h.b16 %v363
  %v5643 = vunpack.c.l.b16 %v364
  %v5644 = vunpack.c.h.b16 %v364
  %v5645 = vunpack.c.l.b16 %v365
  %v5646 = vunpack.c.h.b16 %v365
  %v5647 = vunpack.c.l.b16 %v366
  %v5648 = vunpack.c.h.b16 %v366
  %v5649 = vunpack.c.l.b16 %v367
  %v5650 = vunpack.c.h.b16 %v367
  %v5651 = vunpack.c.l.b16 %v368
  %v5652 = vunpack.c.h.b16 %v368
  %v5653 = vunpack.c.l.b16 %v369
  %v5654 = vunpack.c.h.b16 %v369
  %v5655 = vunpack.c.l.b16 %v370
  %v5656 = vunpack.c.h.b16 %v370
  %v5657 = vunpack.c.l.b16 %v371
  %v5658 = vunpack.c.h.b16 %v371
  %v5659 = vunpack.c.l.b16 %v372
  %v5660 = vunpack.c.h.b16 %v372
  %v5661 = vunpack.c.l.b16 %v373
  %v5662 = vunpack.c.h.b16 %v373
  %v5663 = vunpack.c.l.b16 %v374
  %v5664 = vunpack.c.h.b16 %v374
  %v5665 = vunpack.c.l.b16 %v375
  %v5666 = vunpack.c.h.b16 %v375
  %v5667 = vunpack.c.l.b16 %v376
  %v5668 = vunpack.c.h.b16 %v376
  %v5669 = vunpack.c.l.b16 %v377
  %v5670 = vunpack.c.h.b16 %v377
  %v5671 = vunpack.c.l.b16 %v378
  %v5672 = vunpack.c.h.b16 %v378
  %v5673 = vunpack.c.l.b16 %v379
  %v5674 = vunpack.c.h.b16 %v379
  %v5675 = vunpack.c.l.b16 %v380
  %v5676 = vunpack.c.h.b16 %v380
  %v5677 = vunpack.c.l.b16 %v381
  %v5678 = vunpack.c.h.b16 %v381
  %v5679 = vunpack.c.l.b16 %v382
  %v5680 = vunpack.c.h.b16 %v382
  %v5681 = vunpack.c.l.b16 %v383
  %v5682 = vunpack.c.h.b16 %v383
  %v5683 = vunpack.c.l.b16 %v384
  %v5684 = vunpack.c.h.b16 %v384
  %v5685 = vunpack.c.l.b16 %v385
  %v5686 = vunpack.c.h.b16 %v385
  %v5687 = vunpack.c.l.b16 %v386
  %v5688 = vunpack.c.h.b16 %v386
  %v5689 = vunpack.c.l.b16 %v387
  %v5690 = vunpack.c.h.b16 %v387
  %v5691 = vunpack.c.l.b16 %v388
  %v5692 = vunpack.c.h.b16 %v388
  %v5693 = vunpack.c.l.b16 %v389
  %v5694 = vunpack.c.h.b16 %v389
  %v5695 = vunpack.c.l.b16 %v390
  %v5696 = vunpack.c.h.b16 %v390
  %v5697 = vunpack.c.l.b16 %v391
  %v5698 = vunpack.c.h.b16 %v391
  %v5699 = vunpack.c.l.b16 %v392
  %v5700 = vunpack.c.h.b16 %v392
  %v5701 = vunpack.c.l.b16 %v393
  %v5702 = vunpack.c.h.b16 %v393
  %v5703 = vunpack.c.l.b16 %v394
  %v5704 = vunpack.c.h.b16 %v394
  %v5705 = vunpack.c.l.b16 %v395
  %v5706 = vunpack.c.h.b16 %v395
  %v5707 = vunpack.c.l.b16 %v396
  %v5708 = vunpack.c.h.b16 %v396
  %v5709 = vunpack.c.l.b16 %v397
  %v5710 = vunpack.c.h.b16 %v397
  %v5711 = vunpack.c.l.b16 %v398
  %v5712 = vunpack.c.h.b16 %v398
  %v5713 = vunpack.c.l.b16 %v399
  %v5714 = vunpack.c.h.b16 %v399
  %v5715 = vunpack.c.l.b16 %v400
  %v5716 = vunpack.c.h.b16 %v400
  %v5717 = vunpack.c.l.b16 %v401
  %v5718 = vunpack.c.h.b16 %v401
  %v5719 = vunpack.c.l.b16 %v402
  %v5720 = vunpack.c.h.b16 %v402
  %v5721 = vunpack.c.l.b16 %v403
  %v5722 = vunpack.c.h.b16 %v403
  %v5723 = vunpack.c.l.b16 %v404
  %v5724 = vunpack.c.h.b16 %v404
  %v5725 = vunpack.c.l.b16 %v405
  %v5726 = vunpack.c.h.b16 %v405
  %v5727 = vunpack.c.l.b16 %v406
  %v5728 = vunpack.c.h.b16 %v406
  %v5729 = vunpack.c.l.b16 %v407
  %v5730 = vunpack.c.h.b16 %v407
  %v5731 = vunpack.c.l.b16 %v408
  %v5732 = vunpack.c.h.b16 %v408
  %v5733 = vunpack.c.l.b16 %v409
  %v5734 = vunpack.c.h.b16 %v409
  %v5735 = vunpack.c.l.b16 %v410
  %v5736 = vunpack.c.h.b16 %v410
  %v5737 = vunpack.c.l.b16 %v411
  %v5738 = vunpack.c.h.b16 %v411
  %v5739 = vunpack.c.l.b16 %v412
  %v5740 = vunpack.c.h.b16 %v412
  %v5741 = vunpack.c.l.b16 %v413
  %v5742 = vunpack.c.h.b16 %v413
  %v5743 = vunpack.c.l.b16 %v414
  %v5744 = vunpack.c.h.b16 %v414
  %v5745 = vunpack.c.l.b16 %v415
  %v5746 = vunpack.c.h.b16 %v415
  %v5747 = vunpack.c.l.b16 %v416
  %v5748 = vunpack.c.h.b16 %v416
  %v5749 = vunpack.c.l.b16 %v417
  %v5750 = vunpack.c.h.b16 %v417
  %v5751 = vunpack.c.l.b16 %v418
  %v5752 = vunpack.c.h.b16 %v418
  %v5753 = vunpack.c.l.b16 %v419
  %v5754 = vunpack.c.h.b16 %v419
  %v5755 = vunpack.c.l.b16 %v420
  %v5756 = vunpack.c.h.b16 %v420
  %v5757 = vunpack.c.l.b16 %v421
  %v5758 = vunpack.c.h.b16 %v421
  %v5759 = vunpack.c.l.b16 %v422
  %v5760 = vunpack.c.h.b16 %v422
  %v5761 = vunpack.c.l.b16 %v423
  %v5762 = vunpack.c.h.b16 %v423
  %v5763 = vunpack.c.l.b16 %v424
  %v5764 = vunpack.c.h.b16 %v424
  %v5765 = vunpack.c.l.b16 %v425
  %v5766 = vunpack.c.h.b16 %v425
  %v5767 = vunpack.c.l.b16 %v426
  %v5768 = vunpack.c.h.b16 %v426
  %v5769 = vunpack.c.l.b16 %v427
  %v5770 = vunpack.c.h.b16 %v427
  %v5771 = vunpack.c.l.b16 %v428
  %v5772 = vunpack.c.h.b16 %v428
  %v5773 = vunpack.c.l.b16 %v429
  %v5774 = vunpack.c.h.b16 %v429
  %v5775 = vunpack.c.l.b16 %v430
  %v5776 = vunpack.c.h.b16 %v430
  %v5777 = vunpack.c.l.b16 %v431
  %v5778 = vunpack.c.h.b16 %v431
  %v5779 = vunpack.c.l.b16 %v432
  %v5780 = vunpack.c.h.b16 %v432
  %v5781 = vunpack.c.l.b16 %v433
  %v5782 = vunpack.c.h.b16 %v433
  %v5783 = vunpack.c.l.b16 %v434
  %v5784 = vunpack.c.h.b16 %v434
  %v5785 = vunpack.c.l.b16 %v435
  %v5786 = vunpack.c.h.b16 %v435
  %v5787 = vunpack.c.l.b16 %v436
  %v5788 = vunpack.c.h.b16 %v436
  %v5789 = vunpack.c.l.b16 %v437
  %v5790 = vunpack.c.h.b16 %v437
  %v5791 = vunpack.c.l.b16 %v438
  %v5792 = vunpack.c.h.b16 %v438
  %v5793 = vunpack.c.l.b16 %v439
  %v5794 = vunpack.c.h.b16 %v439
  %v5795 = vunpack.c.l.b16 %v440
  %v5796 = vunpack.c.h.b16 %v440
  %v5797 = vunpack.c.l.b16 %v441
  %v5798 = vunpack.c.h.b16 %v441
  %v5799 = vunpack.c.l.b16 %v442
  %v5800 = vunpack.c.h.b16 %v442
  %v5801 = vunpack.c.l.b16 %v443
  %v5802 = vunpack.c.h.b16 %v443
  %v5803 = vunpack.c.l.b16 %v444
  %v5804 = vunpack.c.h.b16 %v444
  %v5805 = vunpack.c.l.b16 %v445
  %v5806 = vunpack.c.h.b16 %v445
  %v5807 = vunpack.c.l.b16 %v446
  %v5808 = vunpack.c.h.b16 %v446
  %v5809 = vunpack.c.l.b16 %v447
  %v5810 = vunpack.c.h.b16 %v447
  %v5811 = vunpack.c.l.b16 %v448
  %v5812 = vunpack.c.h.b16 %v448
  %v5813 = vunpack.c.l.b16 %v449
  %v5814 = vunpack.c.h.b16 %v449
  %v5815 = vunpack.c.l.b16 %v450
  %v5816 = vunpack.c.h.b16 %v450
  %v5817 = vunpack.c.l.b16 %v451
  %v5818 = vunpack.c.h.b16 %v451
  %v5819 = vunpack.c.l.b16 %v452
  %v5820 = vunpack.c.h.b16 %v452
  %v5821 = vunpack.c.l.b16 %v453
  %v5822 = vunpack.c.h.b16 %v453
  %v5823 = vunpack.c.l.b16 %v454
  %v5824 = vunpack.c.h.b16 %v454
  %v5825 = vunpack.c.l.b16 %v455
  %v5826 = vunpack.c.h.b16 %v455
  %v5827 = vunpack.c.l.b16 %v456
  %v5828 = vunpack.c.h.b16 %v456
  %v5829 = vunpack.c.l.b16 %v457
  %v5830 = vunpack.c.h.b16 %v457
  %v5831 = vunpack.c.l.b16 %v458
  %v5832 = vunpack.c.h.b16 %v458
  %v5833 = vunpack.c.l.b16 %v459
  %v5834 = vunpack.c.h.b16 %v459
  %v5835 = vunpack.c.l.b16 %v460
  %v5836 = vunpack.c.h.b16 %v460
  %v5837 = vunpack.c.l.b16 %v461
  %v5838 = vunpack.c.h.b16 %v461
  %v5839 = vunpack.c.l.b16 %v462
  %v5840 = vunpack.c.h.b16 %v462
  %v5841 = vunpack.c.l.b16 %v463
  %v5842 = vunpack.c.h.b16 %v463
  %v5843 = vunpack.c.l.b16 %v464
  %v5844 = vunpack.c.h.b16 %v464
  %v5845 = vunpack.c.l.b16 %v465
  %v5846 = vunpack.c.h.b16 %v465
  %v5847 = vunpack.c.l.b16 %v466
  %v5848 = vunpack.c.h.b16 %v466
  %v5849 = vunpack.c.l.b16 %v467
  %v5850 = vunpack.c.h.b16 %v467
  %v5851 = vunpack.c.l.b16 %v468
  %v5852 = vunpack.c.h.b16 %v468
  %v5853 = vunpack.c.l.b16 %v469
  %v5854 = vunpack.c.h.b16 %v469
  %v5855 = vunpack.c.l.b16 %v470
  %v5856 = vunpack.c.h.b16 %v470
  %v5857 = vunpack.c.l.b16 %v471
  %v5858 = vunpack.c.h.b16 %v471
  %v5859 = vunpack.c.l.b16 %v472
  %v5860 = vunpack.c.h.b16 %v472
  %v5861 = vunpack.c.l.b16 %v473
  %v5862 = vunpack.c.h.b16 %v473
  %v5863 = vunpack.c.l.b16 %v474
  %v5864 = vunpack.c.h.b16 %v474
  %v5865 = vunpack.c.l.b16 %v475
  %v5866 = vunpack.c.h.b16 %v475
  %v5867 = vunpack.c.l.b16 %v476
  %v5868 = vunpack.c.h.b16 %v476
  %v5869 = vunpack.c.l.b16 %v477
  %v5870 = vunpack.c.h.b16 %v477
  %v5871 = vunpack.c.l.b16 %v478
  %v5872 = vunpack.c.h.b16 %v478
  %v5873 = vunpack.c.l.b16 %v479
  %v5874 = vunpack.c.h.b16 %v479
  %v5875 = vunpack.c.l.b16 %v480
  %v5876 = vunpack.c.h.b16 %v480
  %v5877 = vunpack.c.l.b16 %v481
  %v5878 = vunpack.c.h.b16 %v481
  %v5879 = vunpack.c.l.b16 %v482
  %v5880 = vunpack.c.h.b16 %v482
  %v5881 = vunpack.c.l.b16 %v483
  %v5882 = vunpack.c.h.b16 %v483
  %v5883 = vunpack.c.l.b16 %v484
  %v5884 = vunpack.c.h.b16 %v484
  %v5885 = vunpack.c.l.b16 %v485
  %v5886 = vunpack.c.h.b16 %v485
  %v5887 = vunpack.c.l.b16 %v486
  %v5888 = vunpack.c.h.b16 %v486
  %v5889 = vunpack.c.l.b16 %v487
  %v5890 = vunpack.c.h.b16 %v487
  %v5891 = vunpack.c.l.b16 %v488
  %v5892 = vunpack.c.h.b16 %v488
  %v5893 = vunpack.c.l.b16 %v489
  %v5894 = vunpack.c.h.b16 %v489
  %v5895 = vunpack.c.l.b16 %v490
  %v5896 = vunpack.c.h.b16 %v490
  %v5897 = vunpack.c.l.b16 %v491
  %v5898 = vunpack.c.h.b16 %v491
  %v5899 = vunpack.c.l.b16 %v492
  %v5900 = vunpack.c.h.b16 %v492
  %v5901 = vunpack.c.l.b16 %v493
  %v5902 = vunpack.c.h.b16 %v493
  %v5903 = vunpack.c.l.b16 %v494
  %v5904 = vunpack.c.h.b16 %v494
  %v5905 = vunpack.c.l.b16 %v495
  %v5906 = vunpack.c.h.b16 %v495
  %v5907 = vunpack.c.l.b16 %v496
  %v5908 = vunpack.c.h.b16 %v496
  %v5909 = vunpack.c.l.b16 %v497
  %v5910 = vunpack.c.h.b16 %v497
  %v5911 = vunpack.c.l.b16 %v498
  %v5912 = vunpack.c.h.b16 %v498
  %v5913 = vunpack.c.l.b16 %v499
  %v5914 = vunpack.c.h.b16 %v499
  %v5915 = vunpack.c.l.b16 %v500
  %v5916 = vunpack.c.h.b16 %v500
  %v5917 = vunpack.c.l.b16 %v501
  %v5918 = vunpack.c.h.b16 %v501
  %v5919 = vunpack.c.l.b16 %v502
  %v5920 = vunpack.c.h.b16 %v502
  %v5921 = vunpack.c.l.b16 %v503
  %v5922 = vunpack.c.h.b16 %v503
  %v5923 = vunpack.c.l.b16 %v504
  %v5924 = vunpack.c.h.b16 %v504
  %v5925 = vunpack.c.l.b16 %v505
  %v5926 = vunpack.c.h.b16 %v505
  %v5927 = vunpack.c.l.b16 %v506
  %v5928 = vunpack.c.h.b16 %v506
  %v5929 = vunpack.c.l.b16 %v507
  %v5930 = vunpack.c.h.b16 %v507
  %v5931 = vunpack.c.l.b16 %v508
  %v5932 = vunpack.c.h.b16 %v508
  %v5933 = vunpack.c.l.b16 %v509
  %v5934 = vunpack.c.h.b16 %v509
  %v5935 = vunpack.c.l.b16 %v510
  %v5936 = vunpack.c.h.b16 %v510
  %v5937 = vunpack.c.l.b16 %v511
  %v5938 = vunpack.c.h.b16 %v511
  %v5939 = vunpack.c.l.b16 %v512
  %v5940 = vunpack.c.h.b16 %v512
  %v5941 = vunpack.c.l.b16 %v513
  %v5942 = vunpack.c.h.b16 %v513
  %v5943 = vunpack.c.l.b16 %v514
  %v5944 = vunpack.c.h.b16 %v514
  %v5945 = vunpack.c.l.b16 %v515
  %v5946 = vunpack.c.h.b16 %v515
  %v5947 = vunpack.c.l.b16 %v516
  %v5948 = vunpack.c.h.b16 %v516
  %v5949 = vunpack.c.l.b16 %v517
  %v5950 = vunpack.c.h.b16 %v517
  %v5951 = vunpack.c.l.b16 %v518
  %v5952 = vunpack.c.h.b16 %v518
  %v5953 = vunpack.c.l.b16 %v519
  %v5954 = vunpack.c.h.b16 %v519
  %v5955 = vunpack.c.l.b16 %v520
  %v5956 = vunpack.c.h.b16 %v520
  %v5957 = vunpack.c.l.b16 %v521
  %v5958 = vunpack.c.h.b16 %v521
  %v5959 = vunpack.c.l.b16 %v522
  %v5960 = vunpack.c.h.b16 %v522
  %v5961 = vunpack.c.l.b16 %v523
  %v5962 = vunpack.c.h.b16 %v523
  %v5963 = vunpack.c.l.b16 %v524
  %v5964 = vunpack.c.h.b16 %v524
  %v5965 = vunpack.c.l.b16 %v525
  %v5966 = vunpack.c.h.b16 %v525
  %v5967 = vunpack.c.l.b16 %v526
  %v5968 = vunpack.c.h.b16 %v526
  %v5969 = vunpack.c.l.b16 %v527
  %v5970 = vunpack.c.h.b16 %v527
  %v5971 = vunpack.c.l.b16 %v528
  %v5972 = vunpack.c.h.b16 %v528
  %v5973 = vunpack.c.l.b16 %v529
  %v5974 = vunpack.c.h.b16 %v529
  %v5975 = vunpack.c.l.b16 %v530
  %v5976 = vunpack.c.h.b16 %v530
  %v5977 = vunpack.c.l.b16 %v531
  %v5978 = vunpack.c.h.b16 %v531
  %v5979 = vunpack.c.l.b16 %v532
  %v5980 = vunpack.c.h.b16 %v532
  %v5981 = vunpack.c.l.b16 %v533
  %v5982 = vunpack.c.h.b16 %v533
  %v5983 = vunpack.c.l.b16 %v534
  %v5984 = vunpack.c.h.b16 %v534
  %v5985 = vunpack.c.l.b16 %v535
  %v5986 = vunpack.c.h.b16 %v535
  %v5987 = vunpack.c.l.b16 %v536
  %v5988 = vunpack.c.h.b16 %v536
  %v5989 = vunpack.c.l.b16 %v537
  %v5990 = vunpack.c.h.b16 %v537
  %v5991 = vunpack.c.l.b16 %v538
  %v5992 = vunpack.c.h.b16 %v538
  %v5993 = vunpack.c.l.b16 %v539
  %v5994 = vunpack.c.h.b16 %v539
  %v5995 = vunpack.c.l.b16 %v540
  %v5996 = vunpack.c.h.b16 %v540
  %v5997 = vunpack.c.l.b16 %v541
  %v5998 = vunpack.c.h.b16 %v541
  %v5999 = vunpack.c.l.b16 %v542
  %v6000 = vunpack.c.h.b16 %v542
  %v6001 = vunpack.c.l.b16 %v543
  %v6002 = vunpack.c.h.b16 %v543
  %v6003 = vunpack.c.l.b16 %v544
  %v6004 = vunpack.c.h.b16 %v544
  %v6005 = vunpack.c.l.b16 %v545
  %v6006 = vunpack.c.h.b16 %v545
  %v6007 = vunpack.c.l.b16 %v546
  %v6008 = vunpack.c.h.b16 %v546
  %v6009 = vunpack.c.l.b16 %v547
  %v6010 = vunpack.c.h.b16 %v547
  %v6011 = vunpack.c.l.b16 %v548
  %v6012 = vunpack.c.h.b16 %v548
  %v6013 = vunpack.c.l.b16 %v549
  %v6014 = vunpack.c.h.b16 %v549
  %v6015 = vunpack.c.l.b16 %v550
  %v6016 = vunpack.c.h.b16 %v550
  %v6017 = vunpack.c.l.b16 %v551
  %v6018 = vunpack.c.h.b16 %v551
  %v6019 = vunpack.c.l.b16 %v552
  %v6020 = vunpack.c.h.b16 %v552
  %v6021 = vunpack.c.l.b16 %v553
  %v6022 = vunpack.c.h.b16 %v553
  %v6023 = vunpack.c.l.b16 %v554
  %v6024 = vunpack.c.h.b16 %v554
  %v6025 = vunpack.c.l.b16 %v555
  %v6026 = vunpack.c.h.b16 %v555
  %v6027 = vunpack.c.l.b16 %v556
  %v6028 = vunpack.c.h.b16 %v556
  %v6029 = vpack.c.b16 %v5009, %v5005
  %v6030 = vpack.c.b16 %v5010, %v5006
  %v6031 = vpack.c.b16 %v5011, %v5007
  %v6032 = vpack.c.b16 %v5012, %v5008
  %v6033 = vpack.c.b16 %v5017, %v5013
  %v6034 = vpack.c.b16 %v5018, %v5014
  %v6035 = vpack.c.b16 %v5019, %v5015
  %v6036 = vpack.c.b16 %v5020, %v5016
  %v6037 = vpack.c.b16 %v5025, %v5021
  %v6038 = vpack.c.b16 %v5026, %v5022
  %v6039 = vpack.c.b16 %v5027, %v5023
  %v6040 = vpack.c.b16 %v5028, %v5024
  %v6041 = vpack.c.b16 %v5033, %v5029
  %v6042 = vpack.c.b16 %v5034, %v5030
  %v6043 = vpack.c.b16 %v5035, %v5031
  %v6044 = vpack.c.b16 %v5036, %v5032
  %v6045 = vpack.c.b16 %v5041, %v5037
  %v6046 = vpack.c.b16 %v5042, %v5038
  %v6047 = vpack.c.b16 %v5043, %v5039
  %v6048 = vpack.c.b16 %v5044, %v5040
  %v6049 = vpack.c.b16 %v5049, %v5045
  %v6050 = vpack.c.b16 %v5050, %v5046
  %v6051 = vpack.c.b16 %v5051, %v5047
  %v6052 = vpack.c.b16 %v5052, %v5048
  %v6053 = vpack.c.b16 %v5057, %v5053
  %v6054 = vpack.c.b16 %v5058, %v5054
  %v6055 = vpack.c.b16 %v5059, %v5055
  %v6056 = vpack.c.b16 %v5060, %v5056
  %v6057 = vpack.c.b16 %v5065, %v5061
  %v6058 = vpack.c.b16 %v5066, %v5062
  %v6059 = vpack.c.b16 %v5067, %v5063
  %v6060 = vpack.c.b16 %v5068, %v5064
  %v6061 = vpack.c.b16 %v5073, %v5069
  %v6062 = vpack.c.b16 %v5074, %v5070
  %v6063 = vpack.c.b16 %v5075, %v5071
  %v6064 = vpack.c.b16 %v5076, %v5072
  %v6065 = vpack.c.b16 %v5081, %v5077
  %v6066 = vpack.c.b16 %v5082, %v5078
  %v6067 = vpack.c.b16 %v5083, %v5079
  %v6068 = vpack.c.b16 %v5084, %v5080
  %v6069 = vpack.c.b16 %v5089, %v5085
  %v6070 = vpack.c.b16 %v5090, %v5086
  %v6071 = vpack.c.b16 %v5091, %v5087
  %v6072 = vpack.c.b16 %v5092, %v5088
  %v6073 = vpack.c.b16 %v5097, %v5093
  %v6074 = vpack.c.b16 %v5098, %v5094
  %v6075 = vpack.c.b16 %v5099, %v5095
  %v6076 = vpack.c.b16 %v5100, %v5096
  %v6077 = vpack.c.b16 %v5105, %v5101
  %v6078 = vpack.c.b16 %v5106, %v5102
  %v6079 = vpack.c.b16 %v5107, %v5103
  %v6080 = vpack.c.b16 %v5108, %v5104
  %v6081 = vpack.c.b16 %v5113, %v5109
  %v6082 = vpack.c.b16 %v5114, %v5110
  %v6083 = vpack.c.b16 %v5115, %v5111
  %v6084 = vpack.c.b16 %v5116, %v5112
  %v6085 = vpack.c.b16 %v5121, %v5117
  %v6086 = vpack.c.b16 %v5122, %v5118
  %v6087 = vpack.c.b16 %v5123, %v5119
  %v6088 = vpack.c.b16 %v5124, %v5120
  %v6089 = vpack.c.b16 %v5129, %v5125
  %v6090 = vpack.c.b16 %v5130, %v5126
  %v6091 = vpack.c.b16 %v5131, %v5127
  %v6092 = vpack.c.b16 %v5132, %v5128
  %v6093 = vpack.c.b16 %v5137, %v5133
  %v6094 = vpack.c.b16 %v5138, %v5134
  %v6095 = vpack.c.b16 %v5139, %v5135
  %v6096 = vpack.c.b16 %v5140, %v5136
  %v6097 = vpack.c.b16 %v5145, %v5141
  %v6098 = vpack.c.b16 %v5146, %v5142
  %v6099 = vpack.c.b16 %v5147, %v5143
  %v6100 = vpack.c.b16 %v5148, %v5144
  %v6101 = vpack.c.b16 %v5153, %v5149
  %v6102 = vpack.c.b16 %v5154, %v5150
  %v6103 = vpack.c.b16 %v5155, %v5151
  %v6104 = vpack.c.b16 %v5156, %v5152
  %v6105 = vpack.c.b16 %v5161, %v5157
  %v6106 = vpack.c.b16 %v5162, %v5158
  %v6107 = vpack.c.b16 %v5163, %v5159
  %v6108 = vpack.c.b16 %v5164, %v5160
  %v6109 = vpack.c.b16 %v5169, %v5165
  %v6110 = vpack.c.b16 %v5170, %v5166
  %v6111 = vpack.c.b16 %v5171, %v5167
  %v6112 = vpack.c.b16 %v5172, %v5168
  %v6113 = vpack.c.b16 %v5177, %v5173
  %v6114 = vpack.c.b16 %v5178, %v5174
  %v6115 = vpack.c.b16 %v5179, %v5175
  %v6116 = vpack.c.b16 %v5180, %v5176
  %v6117 = vpack.c.b16 %v5185, %v5181
  %v6118 = vpack.c.b16 %v5186, %v5182
  %v6119 = vpack.c.b16 %v5187, %v5183
  %v6120 = vpack.c.b16 %v5188, %v5184
  %v6121 = vpack.c.b16 %v5193, %v5189
  %v6122 = vpack.c.b16 %v5194, %v5190
  %v6123 = vpack.c.b16 %v5195, %v5191
  %v6124 = vpack.c.b16 %v5196, %v5192
  %v6125 = vpack.c.b16 %v5201, %v5197
  %v6126 = vpack.c.b16 %v5202, %v5198
  %v6127 = vpack.c.b16 %v5203, %v5199
  %v6128 = vpack.c.b16 %v5204, %v5200
  %v6129 = vpack.c.b16 %v5209, %v5205
  %v6130 = vpack.c.b16 %v5210, %v5206
  %v6131 = vpack.c.b16 %v5211, %v5207
  %v6132 = vpack.c.b16 %v5212, %v5208
  %v6133 = vpack.c.b16 %v5217, %v5213
  %v6134 = vpack.c.b16 %v5218, %v5214
  %v6135 = vpack.c.b16 %v5219, %v5215
  %v6136 = vpack.c.b16 %v5220, %v5216
  %v6137 = vpack.c.b16 %v5225, %v5221
  %v6138 = vpack.c.b16 %v5226, %v5222
  %v6139 = vpack.c.b16 %v5227, %v5223
  %v6140 = vpack.c.b16 %v5228, %v5224
  %v6141 = vpack.c.b16 %v5233, %v5229
  %v6142 = vpack.c.b16 %v5234, %v5230
  %v6143 = vpack.c.b16 %v5235, %v5231
  %v6144 = vpack.c.b16 %v5236, %v5232
  %v6145 = vpack.c.b16 %v5241, %v5237
  %v6146 = vpack.c.b16 %v5242, %v5238
  %v6147 = vpack.c.b16 %v5243, %v5239
  %v6148 = vpack.c.b16 %v5244, %v5240
  %v6149 = vpack.c.b16 %v5249, %v5245
  %v6150 = vpack.c.b16 %v5250, %v5246
  %v6151 = vpack.c.b16 %v5251, %v5247
  %v6152 = vpack.c.b16 %v5252, %v5248
  %v6153 = vpack.c.b16 %v5257, %v5253
  %v6154 = vpack.c.b16 %v5258, %v5254
  %v6155 = vpack.c.b16 %v5259, %v5255
  %v6156 = vpack.c.b16 %v5260, %v5256
  %v6157 = vpack.c.b16 %v5265, %v5261
  %v6158 = vpack.c.b16 %v5266, %v5262
  %v6159 = vpack.c.b16 %v5267, %v5263
  %v6160 = vpack.c.b16 %v5268, %v5264
  %v6161 = vpack.c.b16 %v5273, %v5269
  %v6162 = vpack.c.b16 %v5274, %v5270
  %v6163 = vpack.c.b16 %v5275, %v5271
  %v6164 = vpack.c.b16 %v5276, %v5272
  %v6165 = vpack.c.b16 %v5281, %v5277
  %v6166 = vpack.c.b16 %v5282, %v5278
  %v6167 = vpack.c.b16 %v5283, %v5279
  %v6168 = vpack.c.b16 %v5284, %v5280
  %v6169 = vpack.c.b16 %v5289, %v5285
  %v6170 = vpack.c.b16 %v5290, %v5286
  %v6171 = vpack.c.b16 %v5291, %v5287
  %v6172 = vpack.c.b16 %v5292, %v5288
  %v6173 = vpack.c.b16 %v5297, %v5293
  %v6174 = vpack.c.b16 %v5298, %v5294
  %v6175 = vpack.c.b16 %v5299, %v5295
  %v6176 = vpack.c.b16 %v5300, %v5296
  %v6177 = vpack.c.b16 %v5305, %v5301
  %v6178 = vpack.c.b16 %v5306, %v5302
  %v6179 = vpack.c.b16 %v5307, %v5303
  %v6180 = vpack.c.b16 %v5308, %v5304
  %v6181 = vpack.c.b16 %v5313, %v5309
  %v6182 = vpack.c.b16 %v5314, %v5310
  %v6183 = vpack.c.b16 %v5315, %v5311
  %v6184 = vpack.c.b16 %v5316, %v5312
  %v6185 = vpack.c.b16 %v5321, %v5317
  %v6186 = vpack.c.b16 %v5322, %v5318
  %v6187 = vpack.c.b16 %v5323, %v5319
  %v6188 = vpack.c.b16 %v5324, %v5320
  %v6189 = vpack.c.b16 %v5329, %v5325
  %v6190 = vpack.c.b16 %v5330, %v5326
  %v6191 = vpack.c.b16 %v5331, %v5327
  %v6192 = vpack.c.b16 %v5332, %v5328
  %v6193 = vpack.c.b16 %v5337, %v5333
  %v6194 = vpack.c.b16 %v5338, %v5334
  %v6195 = vpack.c.b16 %v5339, %v5335
  %v6196 = vpack.c.b16 %v5340, %v5336
  %v6197 = vpack.c.b16 %v5345, %v5341
  %v6198 = vpack.c.b16 %v5346, %v5342
  %v6199 = vpack.c.b16 %v5347, %v5343
  %v6200 = vpack.c.b16 %v5348, %v5344
  %v6201 = vpack.c.b16 %v5353, %v5349
  %v6202 = vpack.c.b16 %v5354, %v5350
  %v6203 = vpack.c.b16 %v5355, %v5351
  %v6204 = vpack.c.b16 %v5356, %v5352
  %v6205 = vpack.c.b16 %v5361, %v5357
  %v6206 = vpack.c.b16 %v5362, %v5358
  %v6207 = vpack.c.b16 %v5363, %v5359
  %v6208 = vpack.c.b16 %v5364, %v5360
  %v6209 = vpack.c.b16 %v5369, %v5365
  %v6210 = vpack.c.b16 %v5370, %v5366
  %v6211 = vpack.c.b16 %v5371, %v5367
  %v6212 = vpack.c.b16 %v5372, %v5368
  %v6213 = vpack.c.b16 %v5377, %v5373
  %v6214 = vpack.c.b16 %v5378, %v5374
  %v6215 = vpack.c.b16 %v5379, %v5375
  %v6216 = vpack.c.b16 %v5380, %v5376
  %v6217 = vpack.c.b16 %v5385, %v5381
  %v6218 = vpack.c.b16 %v5386, %v5382
  %v6219 = vpack.c.b16 %v5387, %v5383
  %v6220 = vpack.c.b16 %v5388, %v5384
  %v6221 = vpack.c.b16 %v5393, %v5389
  %v6222 = vpack.c.b16 %v5394, %v5390
  %v6223 = vpack.c.b16 %v5395, %v5391
  %v6224 = vpack.c.b16 %v5396, %v5392
  %v6225 = vpack.c.b16 %v5401, %v5397
  %v6226 = vpack.c.b16 %v5402, %v5398
  %v6227 = vpack.c.b16 %v5403, %v5399
  %v6228 = vpack.c.b16 %v5404, %v5400
  %v6229 = vpack.c.b16 %v5409, %v5405
  %v6230 = vpack.c.b16 %v5410, %v5406
  %v6231 = vpack.c.b16 %v5411, %v5407
  %v6232 = vpack.c.b16 %v5412, %v5408
  %v6233 = vpack.c.b16 %v5417, %v5413
  %v6234 = vpack.c.b16 %v5418, %v5414
  %v6235 = vpack.c.b16 %v5419, %v5415
  %v6236 = vpack.c.b16 %v5420, %v5416
  %v6237 = vpack.c.b16 %v5425, %v5421
  %v6238 = vpack.c.b16 %v5426, %v5422
  %v6239 = vpack.c.b16 %v5427, %v5423
  %v6240 = vpack.c.b16 %v5428, %v5424
  %v6241 = vpack.c.b16 %v5433, %v5429
  %v6242 = vpack.c.b16 %v5434, %v5430
  %v6243 = vpack.c.b16 %v5435, %v5431
  %v6244 = vpack.c.b16 %v5436, %v5432
  %v6245 = vpack.c.b16 %v5441, %v5437
  %v6246 = vpack.c.b16 %v5442, %v5438
  %v6247 = vpack.c.b16 %v5443, %v5439
  %v6248 = vpack.c.b16 %v5444, %v5440
  %v6249 = vpack.c.b16 %v5449, %v5445
  %v6250 = vpack.c.b16 %v5450, %v5446
  %v6251 = vpack.c.b16 %v5451, %v5447
  %v6252 = vpack.c.b16 %v5452, %v5448
  %v6253 = vpack.c.b16 %v5457, %v5453
  %v6254 = vpack.c.b16 %v5458, %v5454
  %v6255 = vpack.c.b16 %v5459, %v5455
  %v6256 = vpack.c.b16 %v5460, %v5456
  %v6257 = vpack.c.b16 %v5465, %v5461
  %v6258 = vpack.c.b16 %v5466, %v5462
  %v6259 = vpack.c.b16 %v5467, %v5463
  %v6260 = vpack.c.b16 %v5468, %v5464
  %v6261 = vpack.c.b16 %v5473, %v5469
  %v6262 = vpack.c.b16 %v5474, %v5470
  %v6263 = vpack.c.b16 %v5475, %v5471
  %v6264 = vpack.c.b16 %v5476, %v5472
  %v6265 = vpack.c.b16 %v5481, %v5477
  %v6266 = vpack.c.b16 %v5482, %v5478
  %v6267 = vpack.c.b16 %v5483, %v5479
  %v6268 = vpack.c.b16 %v5484, %v5480
  %v6269 = vpack.c.b16 %v5489, %v5485
  %v6270 = vpack.c.b16 %v5490, %v5486
  %v6271 = vpack.c.b16 %v5491, %v5487
  %v6272 = vpack.c.b16 %v5492, %v5488
  %v6273 = vpack.c.b16 %v5497, %v5493
  %v6274 = vpack.c.b16 %v5498, %v5494
  %v6275 = vpack.c.b16 %v5499, %v5495
  %v6276 = vpack.c.b16 %v5500, %v5496
  %v6277 = vpack.c.b16 %v5505, %v5501
  %v6278 = vpack.c.b16 %v5506, %v5502
  %v6279 = vpack.c.b16 %v5507, %v5503
  %v6280 = vpack.c.b16 %v5508, %v5504
  %v6281 = vpack.c.b16 %v5513, %v5509
  %v6282 = vpack.c.b16 %v5514, %v5510
  %v6283 = vpack.c.b16 %v5515, %v5511
  %v6284 = vpack.c.b16 %v5516, %v5512
  %v6285 = vpack.c.b16 %v5521, %v5517
  %v6286 = vpack.c.b16 %v5522, %v5518
  %v6287 = vpack.c.b16 %v5523, %v5519
  %v6288 = vpack.c.b16 %v5524, %v5520
  %v6289 = vpack.c.b16 %v5529, %v5525
  %v6290 = vpack.c.b16 %v5530, %v5526
  %v6291 = vpack.c.b16 %v5531, %v5527
  %v6292 = vpack.c.b16 %v5532, %v5528
  %v6293 = vpack.c.b16 %v5537, %v5533
  %v6294 = vpack.c.b16 %v5538, %v5534
  %v6295 = vpack.c.b16 %v5539, %v5535
  %v6296 = vpack.c.b16 %v5540, %v5536
  %v6297 = vpack.c.b16 %v5545, %v5541
  %v6298 = vpack.c.b16 %v5546, %v5542
  %v6299 = vpack.c.b16 %v5547, %v5543
  %v6300 = vpack.c.b16 %v5548, %v5544
  %v6301 = vpack.c.b16 %v5553, %v5549
  %v6302 = vpack.c.b16 %v5554, %v5550
  %v6303 = vpack.c.b16 %v5555, %v5551
  %v6304 = vpack.c.b16 %v5556, %v5552
  %v6305 = vpack.c.b16 %v5561, %v5557
  %v6306 = vpack.c.b16 %v5562, %v5558
  %v6307 = vpack.c.b16 %v5563, %v5559
  %v6308 = vpack.c.b16 %v5564, %v5560
  %v6309 = vpack.c.b16 %v5569, %v5565
  %v6310 = vpack.c.b16 %v5570, %v5566
  %v6311 = vpack.c.b16 %v5571, %v5567
  %v6312 = vpack.c.b16 %v5572, %v5568
  %v6313 = vpack.c.b16 %v5577, %v5573
  %v6314 = vpack.c.b16 %v5578, %v5574
  %v6315 = vpack.c.b16 %v5579, %v5575
  %v6316 = vpack.c.b16 %v5580, %v5576
  %v6317 = vpack.c.b16 %v5585, %v5581
  %v6318 = vpack.c.b16 %v5586, %v5582
  %v6319 = vpack.c.b16 %v5587, %v5583
  %v6320 = vpack.c.b16 %v5588, %v5584
  %v6321 = vpack.c.b16 %v5593, %v5589
  %v6322 = vpack.c.b16 %v5594, %v5590
  %v6323 = vpack.c.b16 %v5595, %v5591
  %v6324 = vpack.c.b16 %v5596, %v5592
  %v6325 = vpack.c.b16 %v5601, %v5597
  %v6326 = vpack.c.b16 %v5602, %v5598
  %v6327 = vpack.c.b16 %v5603, %v5599
  %v6328 = vpack.c.b16 %v5604, %v5600
  %v6329 = vpack.c.b16 %v5609, %v5605
  %v6330 = vpack.c.b16 %v5610, %v5606
  %v6331 = vpack.c.b16 %v5611, %v5607
  %v6332 = vpack.c.b16 %v5612, %v5608
  %v6333 = vpack.c.b16 %v5617, %v5613
  %v6334 = vpack.c.b16 %v5618, %v5614
  %v6335 = vpack.c.b16 %v5619, %v5615
  %v6336 = vpack.c.b16 %v5620, %v5616
  %v6337 = vpack.c.b16 %v5625, %v5621
  %v6338 = vpack.c.b16 %v5626, %v5622
  %v6339 = vpack.c.b16 %v5627, %v5623
  %v6340 = vpack.c.b16 %v5628, %v5624
  %v6341 = vpack.c.b16 %v5633, %v5629
  %v6342 = vpack.c.b16 %v5634, %v5630
  %v6343 = vpack.c.b16 %v5635, %v5631
  %v6344 = vpack.c.b16 %v5636, %v5632
  %v6345 = vpack.c.b16 %v5641, %v5637
  %v6346 = vpack.c.b16 %v5642, %v5638
  %v6347 = vpack.c.b16 %v5643, %v5639
  %v6348 = vpack.c.b16 %v5644, %v5640
  %v6349 = vpack.c.b16 %v5649, %v5645
  %v6350 = vpack.c.b16 %v5650, %v5646
  %v6351 = vpack.c.b16 %v5651, %v5647
  %v6352 = vpack.c.b16 %v5652, %v5648
  %v6353 = vpack.c.b16 %v5657, %v5653
  %v6354 = vpack.c.b16 %v5658, %v5654
  %v6355 = vpack.c.b16 %v5659, %v5655
  %v6356 = vpack.c.b16 %v5660, %v5656
  %v6357 = vpack.c.b16 %v5665, %v5661
  %v6358 = vpack.c.b16 %v5666, %v5662
  %v6359 = vpack.c.b16 %v5667, %v5663
  %v6360 = vpack.c.b16 %v5668, %v5664
  %v6361 = vpack.c.b16 %v5673, %v5669
  %v6362 = vpack.c.b16 %v5674, %v5670
  %v6363 = vpack.c.b16 %v5675, %v5671
  %v6364 = vpack.c.b16 %v5676, %v5672
  %v6365 = vpack.c.b16 %v5681, %v5677
  %v6366 = vpack.c.b16 %v5682, %v5678
  %v6367 = vpack.c.b16 %v5683, %v5679
  %v6368 = vpack.c.b16 %v5684, %v5680
  %v6369 = vpack.c.b16 %v5689, %v5685
  %v6370 = vpack.c.b16 %v5690, %v5686
  %v6371 = vpack.c.b16 %v5691, %v5687
  %v6372 = vpack.c.b16 %v5692, %v5688
  %v6373 = vpack.c.b16 %v5697, %v5693
  %v6374 = vpack.c.b16 %v5698, %v5694
  %v6375 = vpack.c.b16 %v5699, %v5695
  %v6376 = vpack.c.b16 %v5700, %v5696
  %v6377 = vpack.c.b16 %v5705, %v5701
  %v6378 = vpack.c.b16 %v5706, %v5702
  %v6379 = vpack.c.b16 %v5707, %v5703
  %v6380 = vpack.c.b16 %v5708, %v5704
  %v6381 = vpack.c.b16 %v5713, %v5709
  %v6382 = vpack.c.b16 %v5714, %v5710
  %v6383 = vpack.c.b16 %v5715, %v5711
  %v6384 = vpack.c.b16 %v5716, %v5712
  %v6385 = vpack.c.b16 %v5721, %v5717
  %v6386 = vpack.c.b16 %v5722, %v5718
  %v6387 = vpack.c.b16 %v5723, %v5719
  %v6388 = vpack.c.b16 %v5724, %v5720
  %v6389 = vpack.c.b16 %v5729, %v5725
  %v6390 = vpack.c.b16 %v5730, %v5726
  %v6391 = vpack.c.b16 %v5731, %v5727
  %v6392 = vpack.c.b16 %v5732, %v5728
  %v6393 = vpack.c.b16 %v5737, %v5733
  %v6394 = vpack.c.b16 %v5738, %v5734
  %v6395 = vpack.c.b16 %v5739, %v5735
  %v6396 = vpack.c.b16 %v5740, %v5736
  %v6397 = vpack.c.b16 %v5745, %v5741
  %v6398 = vpack.c.b16 %v5746, %v5742
  %v6399 = vpack.c.b16 %v5747, %v5743
  %v6400 = vpack.c.b16 %v5748, %v5744
  %v6401 = vpack.c.b16 %v5753, %v5749
  %v6402 = vpack.c.b16 %v5754, %v5750
  %v6403 = vpack.c.b16 %v5755, %v5751
  %v6404 = vpack.c.b16 %v5756, %v5752
  %v6405 = vpack.c.b16 %v5761, %v5757
  %v6406 = vpack.c.b16 %v5762, %v5758
  %v6407 = vpack.c.b16 %v5763, %v5759
  %v6408 = vpack.c.b16 %v5764, %v5760
  %v6409 = vpack.c.b16 %v5769, %v5765
  %v6410 = vpack.c.b16 %v5770, %v5766
  %v6411 = vpack.c.b16 %v5771, %v5767
  %v6412 = vpack.c.b16 %v5772, %v5768
  %v6413 = vpack.c.b16 %v5777, %v5773
  %v6414 = vpack.c.b16 %v5778, %v5774
  %v6415 = vpack.c.b16 %v5779, %v5775
  %v6416 = vpack.c.b16 %v5780, %v5776
  %v6417 = vpack.c.b16 %v5785, %v5781
  %v6418 = vpack.c.b16 %v5786, %v5782
  %v6419 = vpack.c.b16 %v5787, %v5783
  %v6420 = vpack.c.b16 %v5788, %v5784
  %v6421 = vpack.c.b16 %v5793, %v5789
  %v6422 = vpack.c.b16 %v5794, %v5790
  %v6423 = vpack.c.b16 %v5795, %v5791
  %v6424 = vpack.c.b16 %v5796, %v5792
  %v6425 = vpack.c.b16 %v5801, %v5797
  %v6426 = vpack.c.b16 %v5802, %v5798
  %v6427 = vpack.c.b16 %v5803, %v5799
  %v6428 = vpack.c.b16 %v5804, %v5800
  %v6429 = vpack.c.b16 %v5809, %v5805
  %v6430 = vpack.c.b16 %v5810, %v5806
  %v6431 = vpack.c.b16 %v5811, %v5807
  %v6432 = vpack.c.b16 %v5812, %v5808
  %v6433 = vpack.c.b16 %v5817, %v5813
  %v6434 = vpack.c.b16 %v5818, %v5814
  %v6435 = vpack.c.b16 %v5819, %v5815
  %v6436 = vpack.c.b16 %v5820, %v5816
  %v6437 = vpack.c.b16 %v5825, %v5821
  %v6438 = vpack.c.b16 %v5826, %v5822
  %v6439 = vpack.c.b16 %v5827, %v5823
  %v6440 = vpack.c.b16 %v5828, %v5824
  %v6441 = vpack.c.b16 %v5833, %v5829
  %v6442 = vpack.c.b16 %v5834, %v5830
  %v6443 = vpack.c.b16 %v5835, %v5831
  %v6444 = vpack.c.b16 %v5836, %v5832
  %v6445 = vpack.c.b16 %v5841, %v5837
  %v6446 = vpack.c.b16 %v5842, %v5838
  %v6447 = vpack.c.b16 %v5843, %v5839
  %v6448 = vpack.c.b16 %v5844, %v5840
  %v6449 = vpack.c.b16 %v5849, %v5845
  %v6450 = vpack.c.b16 %v5850, %v5846
  %v6451 = vpack.c.b16 %v5851, %v5847
  %v6452 = vpack.c.b16 %v5852, %v5848
  %v6453 = vpack.c.b16 %v5857, %v5853
  %v6454 = vpack.c.b16 %v5858, %v5854
  %v6455 = vpack.c.b16 %v5859, %v5855
  %v6456 = vpack.c.b16 %v5860, %v5856
  %v6457 = vpack.c.b16 %v5865, %v5861
  %v6458 = vpack.c.b16 %v5866, %v5862
  %v6459 = vpack.c.b16 %v5867, %v5863
  %v6460 = vpack.c.b16 %v5868, %v5864
  %v6461 = vpack.c.b16 %v5873, %v5869
  %v6462 = vpack.c.b16 %v5874, %v5870
  %v6463 = vpack.c.b16 %v5875, %v5871
  %v6464 = vpack.c.b16 %v5876, %v5872
  %v6465 = vpack.c.b16 %v5881, %v5877
  %v6466 = vpack.c.b16 %v5882, %v5878
  %v6467 = vpack.c.b16 %v5883, %v5879
  %v6468 = vpack.c.b16 %v5884, %v5880
  %v6469 = vpack.c.b16 %v5889, %v5885
  %v6470 = vpack.c.b16 %v5890, %v5886
  %v6471 = vpack.c.b16 %v5891, %v5887
  %v6472 = vpack.c.b16 %v5892, %v5888
  %v6473 = vpack.c.b16 %v5897, %v5893
  %v6474 = vpack.c.b16 %v5898, %v5894
  %v6475 = vpack.c.b16 %v5899, %v5895
  %v6476 = vpack.c.b16 %v5900, %v5896
  %v6477 = vpack.c.b16 %v5905, %v5901
  %v6478 = vpack.c.b16 %v5906, %v5902
  %v6479 = vpack.c.b16 %v5907, %v5903
  %v6480 = vpack.c.b16 %v5908, %v5904
  %v6481 = vpack.c.b16 %v5913, %v5909
  %v6482 = vpack.c.b16 %v5914, %v5910
  %v6483 = vpack.c.b16 %v5915, %v5911
  %v6484 = vpack.c.b16 %v5916, %v5912
  %v6485 = vpack.c.b16 %v5921, %v5917
  %v6486 = vpack.c.b16 %v5922, %v5918
  %v6487 = vpack.c.b16 %v5923, %v5919
  %v6488 = vpack.c.b16 %v5924, %v5920
  %v6489 = vpack.c.b16 %v5929, %v5925
  %v6490 = vpack.c.b16 %v5930, %v5926
  %v6491 = vpack.c.b16 %v5931, %v5927
  %v6492 = vpack.c.b16 %v5932, %v5928
  %v6493 = vpack.c.b16 %v5937, %v5933
  %v6494 = vpack.c.b16 %v5938, %v5934
  %v6495 = vpack.c.b16 %v5939, %v5935
  %v6496 = vpack.c.b16 %v5940, %v5936
  %v6497 = vpack.c.b16 %v5945, %v5941
  %v6498 = vpack.c.b16 %v5946, %v5942
  %v6499 = vpack.c.b16 %v5947, %v5943
  %v6500 = vpack.c.b16 %v5948, %v5944
  %v6501 = vpack.c.b16 %v5953, %v5949
  %v6502 = vpack.c.b16 %v5954, %v5950
  %v6503 = vpack.c.b16 %v5955, %v5951
  %v6504 = vpack.c.b16 %v5956, %v5952
  %v6505 = vpack.c.b16 %v5961, %v5957
  %v6506 = vpack.c.b16 %v5962, %v5958
  %v6507 = vpack.c.b16 %v5963, %v5959
  %v6508 = vpack.c.b16 %v5964, %v5960
  %v6509 = vpack.c.b16 %v5969, %v5965
  %v6510 = vpack.c.b16 %v5970, %v5966
  %v6511 = vpack.c.b16 %v5971, %v5967
  %v6512 = vpack.c.b16 %v5972, %v5968
  %v6513 = vpack.c.b16 %v5977, %v5973
  %v6514 = vpack.c.b16 %v5978, %v5974
  %v6515 = vpack.c.b16 %v5979, %v5975
  %v6516 = vpack.c.b16 %v5980, %v5976
  %v6517 = vpack.c.b16 %v5985, %v5981
  %v6518 = vpack.c.b16 %v5986, %v5982
  %v6519 = vpack.c.b16 %v5987, %v5983
  %v6520 = vpack.c.b16 %v5988, %v5984
  %v6521 = vpack.c.b16 %v5993, %v5989
  %v6522 = vpack.c.b16 %v5994, %v5990
  %v6523 = vpack.c.b16 %v5995, %v5991
  %v6524 = vpack.c.b16 %v5996, %v5992
  %v6525 = vpack.c.b16 %v6001, %v5997
  %v6526 = vpack.c.b16 %v6002, %v5998
  %v6527 = vpack.c.b16 %v6003, %v5999
  %v6528 = vpack.c.b16 %v6004, %v6000
  %v6529 = vpack.c.b16 %v6009, %v6005
  %v6530 = vpack.c.b16 %v6010, %v6006
  %v6531 = vpack.c.b16 %v6011, %v6007
  %v6532 = vpack.c.b16 %v6012, %v6008
  %v6533 = vpack.c.b16 %v6017, %v6013
  %v6534 = vpack.c.b16 %v6018, %v6014
  %v6535 = vpack.c.b16 %v6019, %v6015
  %v6536 = vpack.c.b16 %v6020, %v6016
  %v6537 = vpack.c.b16 %v6025, %v6021
  %v6538 = vpack.c.b16 %v6026, %v6022
  %v6539 = vpack.c.b16 %v6027, %v6023
  %v6540 = vpack.c.b16 %v6028, %v6024
  %7053 = vmatprep.subr.bf16.mxu0 %v6030
  %7054 = vmatpush1.bf16.msra.mxu0 %v6029
  %7055 = vmatprep.subr.bf16.mxu0 %v6034
  %7056 = vmatpush1.bf16.msra.mxu0 %v6033
  %7057 = vmatprep.subr.bf16.mxu0 %v6038
  %7058 = vmatpush1.bf16.msra.mxu0 %v6037
  %7059 = vmatprep.subr.bf16.mxu0 %v6042
  %7060 = vmatpush1.bf16.msra.mxu0 %v6041
  %7061 = vmatprep.subr.bf16.mxu0 %v6046
  %7062 = vmatpush1.bf16.msra.mxu0 %v6045
  %7063 = vmatprep.subr.bf16.mxu0 %v6050
  %7064 = vmatpush1.bf16.msra.mxu0 %v6049
  %7065 = vmatprep.subr.bf16.mxu0 %v6054
  %7066 = vmatpush1.bf16.msra.mxu0 %v6053
  %7067 = vmatprep.subr.bf16.mxu0 %v6058
  %7068 = vmatpush1.bf16.msra.mxu0 %v6057
  %7069 = vmatprep.subr.bf16.mxu0 %v6062
  %7070 = vmatpush1.bf16.msra.mxu0 %v6061
  %7071 = vmatprep.subr.bf16.mxu0 %v6066
  %7072 = vmatpush1.bf16.msra.mxu0 %v6065
  %7073 = vmatprep.subr.bf16.mxu0 %v6070
  %7074 = vmatpush1.bf16.msra.mxu0 %v6069
  %7075 = vmatprep.subr.bf16.mxu0 %v6074
  %7076 = vmatpush1.bf16.msra.mxu0 %v6073
  %7077 = vmatprep.subr.bf16.mxu0 %v6078
  %7078 = vmatpush1.bf16.msra.mxu0 %v6077
  %7079 = vmatprep.subr.bf16.mxu0 %v6082
  %7080 = vmatpush1.bf16.msra.mxu0 %v6081
  %7081 = vmatprep.subr.bf16.mxu0 %v6086
  %7082 = vmatpush1.bf16.msra.mxu0 %v6085
  %7083 = vmatprep.subr.bf16.mxu0 %v6090
  %7084 = vmatpush1.bf16.msra.mxu0 %v6089
  %7085 = vmatprep.mubr.bf16.mxu0 %v4462
  %7086 = vmatmul.mubr.bf16.gmra.mrb[0].mxu0 %v4461
  %v7087 = vpop.f32.mrb[0].mxu0
  %v7088 = vadd.f32 %v4061, %v7087
  %v7089 = vpop.f32.mrb[0].mxu0
  %v7090 = vadd.f32 %v4063, %v7089
  %v7091 = vpop.f32.mrb[0].mxu0
  %v7092 = vadd.f32 %v4065, %v7091
  %v7093 = vpop.f32.mrb[0].mxu0
  %v7094 = vadd.f32 %v4067, %v7093
  %7095 = vdwg.mxu0
  %7096 = vmatprep.subr.bf16.mxu0 %v6094
  %7097 = vmatpush1.bf16.msra.mxu0 %v6093
  %7098 = vmatprep.subr.bf16.mxu0 %v6098
  %7099 = vmatpush1.bf16.msra.mxu0 %v6097
  %7100 = vmatprep.subr.bf16.mxu0 %v6102
  %7101 = vmatpush1.bf16.msra.mxu0 %v6101
  %7102 = vmatprep.subr.bf16.mxu0 %v6106
  %7103 = vmatpush1.bf16.msra.mxu0 %v6105
  %7104 = vmatprep.subr.bf16.mxu0 %v6110
  %7105 = vmatpush1.bf16.msra.mxu0 %v6109
  %7106 = vmatprep.subr.bf16.mxu0 %v6114
  %7107 = vmatpush1.bf16.msra.mxu0 %v6113
  %7108 = vmatprep.subr.bf16.mxu0 %v6118
  %7109 = vmatpush1.bf16.msra.mxu0 %v6117
  %7110 = vmatprep.subr.bf16.mxu0 %v6122
  %7111 = vmatpush1.bf16.msra.mxu0 %v6121
  %7112 = vmatprep.subr.bf16.mxu0 %v6126
  %7113 = vmatpush1.bf16.msra.mxu0 %v6125
  %7114 = vmatprep.subr.bf16.mxu0 %v6130
  %7115 = vmatpush1.bf16.msra.mxu0 %v6129
  %7116 = vmatprep.subr.bf16.mxu0 %v6134
  %7117 = vmatpush1.bf16.msra.mxu0 %v6133
  %7118 = vmatprep.subr.bf16.mxu0 %v6138
  %7119 = vmatpush1.bf16.msra.mxu0 %v6137
  %7120 = vmatprep.subr.bf16.mxu0 %v6142
  %7121 = vmatpush1.bf16.msra.mxu0 %v6141
  %7122 = vmatprep.subr.bf16.mxu0 %v6146
  %7123 = vmatpush1.bf16.msra.mxu0 %v6145
  %7124 = vmatprep.subr.bf16.mxu0 %v6150
  %7125 = vmatpush1.bf16.msra.mxu0 %v6149
  %7126 = vmatprep.subr.bf16.mxu0 %v6154
  %7127 = vmatpush1.bf16.msra.mxu0 %v6153
  %7128 = vmatprep.mubr.bf16.mxu0 %v4464
  %7129 = vmatmul.mubr.bf16.gmra.mrb[0].mxu0 %v4463
  %v7130 = vpop.f32.mrb[0].mxu0
  %v7131 = vadd.f32 %v7088, %v7130
  %v7132 = vpop.f32.mrb[0].mxu0
  %v7133 = vadd.f32 %v7090, %v7132
  %v7134 = vpop.f32.mrb[0].mxu0
  %v7135 = vadd.f32 %v7092, %v7134
  %v7136 = vpop.f32.mrb[0].mxu0
  %v7137 = vadd.f32 %v7094, %v7136
  %7138 = vdwg.mxu0
  %7139 = vmatprep.subr.bf16.mxu0 %v6158
  %7140 = vmatpush1.bf16.msra.mxu0 %v6157
  %7141 = vmatprep.subr.bf16.mxu0 %v6162
  %7142 = vmatpush1.bf16.msra.mxu0 %v6161
  %7143 = vmatprep.subr.bf16.mxu0 %v6166
  %7144 = vmatpush1.bf16.msra.mxu0 %v6165
  %7145 = vmatprep.subr.bf16.mxu0 %v6170
  %7146 = vmatpush1.bf16.msra.mxu0 %v6169
  %7147 = vmatprep.subr.bf16.mxu0 %v6174
  %7148 = vmatpush1.bf16.msra.mxu0 %v6173
  %7149 = vmatprep.subr.bf16.mxu0 %v6178
  %7150 = vmatpush1.bf16.msra.mxu0 %v6177
  %7151 = vmatprep.subr.bf16.mxu0 %v6182
  %7152 = vmatpush1.bf16.msra.mxu0 %v6181
  %7153 = vmatprep.subr.bf16.mxu0 %v6186
  %7154 = vmatpush1.bf16.msra.mxu0 %v6185
  %7155 = vmatprep.subr.bf16.mxu0 %v6190
  %7156 = vmatpush1.bf16.msra.mxu0 %v6189
  %7157 = vmatprep.subr.bf16.mxu0 %v6194
  %7158 = vmatpush1.bf16.msra.mxu0 %v6193
  %7159 = vmatprep.subr.bf16.mxu0 %v6198
  %7160 = vmatpush1.bf16.msra.mxu0 %v6197
  %7161 = vmatprep.subr.bf16.mxu0 %v6202
  %7162 = vmatpush1.bf16.msra.mxu0 %v6201
  %7163 = vmatprep.subr.bf16.mxu0 %v6206
  %7164 = vmatpush1.bf16.msra.mxu0 %v6205
  %7165 = vmatprep.subr.bf16.mxu0 %v6210
  %7166 = vmatpush1.bf16.msra.mxu0 %v6209
  %7167 = vmatprep.subr.bf16.mxu0 %v6214
  %7168 = vmatpush1.bf16.msra.mxu0 %v6213
  %7169 = vmatprep.subr.bf16.mxu0 %v6218
  %7170 = vmatpush1.bf16.msra.mxu0 %v6217
  %7171 = vmatprep.mubr.bf16.mxu0 %v4466
  %7172 = vmatmul.mubr.bf16.gmra.mrb[0].mxu0 %v4465
  %v7173 = vpop.f32.mrb[0].mxu0
  %v7174 = vadd.f32 %v7131, %v7173
  %v7175 = vpop.f32.mrb[0].mxu0
  %v7176 = vadd.f32 %v7133, %v7175
  %v7177 = vpop.f32.mrb[0].mxu0
  %v7178 = vadd.f32 %v7135, %v7177
  %v7179 = vpop.f32.mrb[0].mxu0
  %v7180 = vadd.f32 %v7137, %v7179
  %7181 = vdwg.mxu0
  %7182 = vmatprep.subr.bf16.mxu0 %v6222
  %7183 = vmatpush1.bf16.msra.mxu0 %v6221
  %7184 = vmatprep.subr.bf16.mxu0 %v6226
  %7185 = vmatpush1.bf16.msra.mxu0 %v6225
  %7186 = vmatprep.subr.bf16.mxu0 %v6230
  %7187 = vmatpush1.bf16.msra.mxu0 %v6229
  %7188 = vmatprep.subr.bf16.mxu0 %v6234
  %7189 = vmatpush1.bf16.msra.mxu0 %v6233
  %7190 = vmatprep.subr.bf16.mxu0 %v6238
  %7191 = vmatpush1.bf16.msra.mxu0 %v6237
  %7192 = vmatprep.subr.bf16.mxu0 %v6242
  %7193 = vmatpush1.bf16.msra.mxu0 %v6241
  %7194 = vmatprep.subr.bf16.mxu0 %v6246
  %7195 = vmatpush1.bf16.msra.mxu0 %v6245
  %7196 = vmatprep.subr.bf16.mxu0 %v6250
  %7197 = vmatpush1.bf16.msra.mxu0 %v6249
  %7198 = vmatprep.subr.bf16.mxu0 %v6254
  %7199 = vmatpush1.bf16.msra.mxu0 %v6253
  %7200 = vmatprep.subr.bf16.mxu0 %v6258
  %7201 = vmatpush1.bf16.msra.mxu0 %v6257
  %7202 = vmatprep.subr.bf16.mxu0 %v6262
  %7203 = vmatpush1.bf16.msra.mxu0 %v6261
  %7204 = vmatprep.subr.bf16.mxu0 %v6266
  %7205 = vmatpush1.bf16.msra.mxu0 %v6265
  %7206 = vmatprep.subr.bf16.mxu0 %v6270
  %7207 = vmatpush1.bf16.msra.mxu0 %v6269
  %7208 = vmatprep.subr.bf16.mxu0 %v6274
  %7209 = vmatpush1.bf16.msra.mxu0 %v6273
  %7210 = vmatprep.subr.bf16.mxu0 %v6278
  %7211 = vmatpush1.bf16.msra.mxu0 %v6277
  %7212 = vmatprep.subr.bf16.mxu0 %v6282
  %7213 = vmatpush1.bf16.msra.mxu0 %v6281
  %7214 = vmatprep.mubr.bf16.mxu0 %v4468
  %7215 = vmatmul.mubr.bf16.gmra.mrb[0].mxu0 %v4467
  %v7216 = vpop.f32.mrb[0].mxu0
  %v7217 = vadd.f32 %v7174, %v7216
  %v7218 = vpop.f32.mrb[0].mxu0
  %v7219 = vadd.f32 %v7176, %v7218
  %v7220 = vpop.f32.mrb[0].mxu0
  %v7221 = vadd.f32 %v7178, %v7220
  %v7222 = vpop.f32.mrb[0].mxu0
  %v7223 = vadd.f32 %v7180, %v7222
  %7224 = vdwg.mxu0
  %7225 = vmatprep.subr.bf16.mxu0 %v6286
  %7226 = vmatpush1.bf16.msra.mxu0 %v6285
  %7227 = vmatprep.subr.bf16.mxu0 %v6290
  %7228 = vmatpush1.bf16.msra.mxu0 %v6289
  %7229 = vmatprep.subr.bf16.mxu0 %v6294
  %7230 = vmatpush1.bf16.msra.mxu0 %v6293
  %7231 = vmatprep.subr.bf16.mxu0 %v6298
  %7232 = vmatpush1.bf16.msra.mxu0 %v6297
  %7233 = vmatprep.subr.bf16.mxu0 %v6302
  %7234 = vmatpush1.bf16.msra.mxu0 %v6301
  %7235 = vmatprep.subr.bf16.mxu0 %v6306
  %7236 = vmatpush1.bf16.msra.mxu0 %v6305
  %7237 = vmatprep.subr.bf16.mxu0 %v6310
  %7238 = vmatpush1.bf16.msra.mxu0 %v6309
  %7239 = vmatprep.subr.bf16.mxu0 %v6314
  %7240 = vmatpush1.bf16.msra.mxu0 %v6313
  %7241 = vmatprep.subr.bf16.mxu0 %v6318
  %7242 = vmatpush1.bf16.msra.mxu0 %v6317
  %7243 = vmatprep.subr.bf16.mxu0 %v6322
  %7244 = vmatpush1.bf16.msra.mxu0 %v6321
  %7245 = vmatprep.subr.bf16.mxu0 %v6326
  %7246 = vmatpush1.bf16.msra.mxu0 %v6325
  %7247 = vmatprep.subr.bf16.mxu0 %v6330
  %7248 = vmatpush1.bf16.msra.mxu0 %v6329
  %7249 = vmatprep.subr.bf16.mxu0 %v6334
  %7250 = vmatpush1.bf16.msra.mxu0 %v6333
  %7251 = vmatprep.subr.bf16.mxu0 %v6338
  %7252 = vmatpush1.bf16.msra.mxu0 %v6337
  %7253 = vmatprep.subr.bf16.mxu0 %v6342
  %7254 = vmatpush1.bf16.msra.mxu0 %v6341
  %7255 = vmatprep.subr.bf16.mxu0 %v6346
  %7256 = vmatpush1.bf16.msra.mxu0 %v6345
  %7257 = vmatprep.mubr.bf16.mxu0 %v4470
  %7258 = vmatmul.mubr.bf16.gmra.mrb[0].mxu0 %v4469
  %v7259 = vpop.f32.mrb[0].mxu0
  %v7260 = vadd.f32 %v7217, %v7259
  %v7261 = vpop.f32.mrb[0].mxu0
  %v7262 = vadd.f32 %v7219, %v7261
  %v7263 = vpop.f32.mrb[0].mxu0
  %v7264 = vadd.f32 %v7221, %v7263
  %v7265 = vpop.f32.mrb[0].mxu0
  %v7266 = vadd.f32 %v7223, %v7265
  %7267 = vdwg.mxu0
  %7268 = vmatprep.subr.bf16.mxu0 %v6350
  %7269 = vmatpush1.bf16.msra.mxu0 %v6349
  %7270 = vmatprep.subr.bf16.mxu0 %v6354
  %7271 = vmatpush1.bf16.msra.mxu0 %v6353
  %7272 = vmatprep.subr.bf16.mxu0 %v6358
  %7273 = vmatpush1.bf16.msra.mxu0 %v6357
  %7274 = vmatprep.subr.bf16.mxu0 %v6362
  %7275 = vmatpush1.bf16.msra.mxu0 %v6361
  %7276 = vmatprep.subr.bf16.mxu0 %v6366
  %7277 = vmatpush1.bf16.msra.mxu0 %v6365
  %7278 = vmatprep.subr.bf16.mxu0 %v6370
  %7279 = vmatpush1.bf16.msra.mxu0 %v6369
  %7280 = vmatprep.subr.bf16.mxu0 %v6374
  %7281 = vmatpush1.bf16.msra.mxu0 %v6373
  %7282 = vmatprep.subr.bf16.mxu0 %v6378
  %7283 = vmatpush1.bf16.msra.mxu0 %v6377
  %7284 = vmatprep.subr.bf16.mxu0 %v6382
  %7285 = vmatpush1.bf16.msra.mxu0 %v6381
  %7286 = vmatprep.subr.bf16.mxu0 %v6386
  %7287 = vmatpush1.bf16.msra.mxu0 %v6385
  %7288 = vmatprep.subr.bf16.mxu0 %v6390
  %7289 = vmatpush1.bf16.msra.mxu0 %v6389
  %7290 = vmatprep.subr.bf16.mxu0 %v6394
  %7291 = vmatpush1.bf16.msra.mxu0 %v6393
  %7292 = vmatprep.subr.bf16.mxu0 %v6398
  %7293 = vmatpush1.bf16.msra.mxu0 %v6397
  %7294 = vmatprep.subr.bf16.mxu0 %v6402
  %7295 = vmatpush1.bf16.msra.mxu0 %v6401
  %7296 = vmatprep.subr.bf16.mxu0 %v6406
  %7297 = vmatpush1.bf16.msra.mxu0 %v6405
  %7298 = vmatprep.subr.bf16.mxu0 %v6410
  %7299 = vmatpush1.bf16.msra.mxu0 %v6409
  %7300 = vmatprep.mubr.bf16.mxu0 %v4472
  %7301 = vmatmul.mubr.bf16.gmra.mrb[0].mxu0 %v4471
  %v7302 = vpop.f32.mrb[0].mxu0
  %v7303 = vadd.f32 %v7260, %v7302
  %v7304 = vpop.f32.mrb[0].mxu0
  %v7305 = vadd.f32 %v7262, %v7304
  %v7306 = vpop.f32.mrb[0].mxu0
  %v7307 = vadd.f32 %v7264, %v7306
  %v7308 = vpop.f32.mrb[0].mxu0
  %v7309 = vadd.f32 %v7266, %v7308
  %7310 = vdwg.mxu0
  %7311 = vmatprep.subr.bf16.mxu0 %v6414
  %7312 = vmatpush1.bf16.msra.mxu0 %v6413
  %7313 = vmatprep.subr.bf16.mxu0 %v6418
  %7314 = vmatpush1.bf16.msra.mxu0 %v6417
  %7315 = vmatprep.subr.bf16.mxu0 %v6422
  %7316 = vmatpush1.bf16.msra.mxu0 %v6421
  %7317 = vmatprep.subr.bf16.mxu0 %v6426
  %7318 = vmatpush1.bf16.msra.mxu0 %v6425
  %7319 = vmatprep.subr.bf16.mxu0 %v6430
  %7320 = vmatpush1.bf16.msra.mxu0 %v6429
  %7321 = vmatprep.subr.bf16.mxu0 %v6434
  %7322 = vmatpush1.bf16.msra.mxu0 %v6433
  %7323 = vmatprep.subr.bf16.mxu0 %v6438
  %7324 = vmatpush1.bf16.msra.mxu0 %v6437
  %7325 = vmatprep.subr.bf16.mxu0 %v6442
  %7326 = vmatpush1.bf16.msra.mxu0 %v6441
  %7327 = vmatprep.subr.bf16.mxu0 %v6446
  %7328 = vmatpush1.bf16.msra.mxu0 %v6445
  %7329 = vmatprep.subr.bf16.mxu0 %v6450
  %7330 = vmatpush1.bf16.msra.mxu0 %v6449
  %7331 = vmatprep.subr.bf16.mxu0 %v6454
  %7332 = vmatpush1.bf16.msra.mxu0 %v6453
  %7333 = vmatprep.subr.bf16.mxu0 %v6458
  %7334 = vmatpush1.bf16.msra.mxu0 %v6457
  %7335 = vmatprep.subr.bf16.mxu0 %v6462
  %7336 = vmatpush1.bf16.msra.mxu0 %v6461
  %7337 = vmatprep.subr.bf16.mxu0 %v6466
  %7338 = vmatpush1.bf16.msra.mxu0 %v6465
  %7339 = vmatprep.subr.bf16.mxu0 %v6470
  %7340 = vmatpush1.bf16.msra.mxu0 %v6469
  %7341 = vmatprep.subr.bf16.mxu0 %v6474
  %7342 = vmatpush1.bf16.msra.mxu0 %v6473
  %7343 = vmatprep.mubr.bf16.mxu0 %v4474
  %7344 = vmatmul.mubr.bf16.gmra.mrb[0].mxu0 %v4473
  %v7345 = vpop.f32.mrb[0].mxu0
  %v7346 = vadd.f32 %v7303, %v7345
  %v7347 = vpop.f32.mrb[0].mxu0
  %v7348 = vadd.f32 %v7305, %v7347
  %v7349 = vpop.f32.mrb[0].mxu0
  %v7350 = vadd.f32 %v7307, %v7349
  %v7351 = vpop.f32.mrb[0].mxu0
  %v7352 = vadd.f32 %v7309, %v7351
  %7353 = vdwg.mxu0
  %7354 = vmatprep.subr.bf16.mxu0 %v6478
  %7355 = vmatpush1.bf16.msra.mxu0 %v6477
  %7356 = vmatprep.subr.bf16.mxu0 %v6482
  %7357 = vmatpush1.bf16.msra.mxu0 %v6481
  %7358 = vmatprep.subr.bf16.mxu0 %v6486
  %7359 = vmatpush1.bf16.msra.mxu0 %v6485
  %7360 = vmatprep.subr.bf16.mxu0 %v6490
  %7361 = vmatpush1.bf16.msra.mxu0 %v6489
  %7362 = vmatprep.subr.bf16.mxu0 %v6494
  %7363 = vmatpush1.bf16.msra.mxu0 %v6493
  %7364 = vmatprep.subr.bf16.mxu0 %v6498
  %7365 = vmatpush1.bf16.msra.mxu0 %v6497
  %7366 = vmatprep.subr.bf16.mxu0 %v6502
  %7367 = vmatpush1.bf16.msra.mxu0 %v6501
  %7368 = vmatprep.subr.bf16.mxu0 %v6506
  %7369 = vmatpush1.bf16.msra.mxu0 %v6505
  %7370 = vmatprep.subr.bf16.mxu0 %v6510
  %7371 = vmatpush1.bf16.msra.mxu0 %v6509
  %7372 = vmatprep.subr.bf16.mxu0 %v6514
  %7373 = vmatpush1.bf16.msra.mxu0 %v6513
  %7374 = vmatprep.subr.bf16.mxu0 %v6518
  %7375 = vmatpush1.bf16.msra.mxu0 %v6517
  %7376 = vmatprep.subr.bf16.mxu0 %v6522
  %7377 = vmatpush1.bf16.msra.mxu0 %v6521
  %7378 = vmatprep.subr.bf16.mxu0 %v6526
  %7379 = vmatpush1.bf16.msra.mxu0 %v6525
  %7380 = vmatprep.subr.bf16.mxu0 %v6530
  %7381 = vmatpush1.bf16.msra.mxu0 %v6529
  %7382 = vmatprep.subr.bf16.mxu0 %v6534
  %7383 = vmatpush1.bf16.msra.mxu0 %v6533
  %7384 = vmatprep.subr.bf16.mxu0 %v6538
  %7385 = vmatpush1.bf16.msra.mxu0 %v6537
  %7386 = vmatprep.mubr.bf16.mxu0 %v4476
  %7387 = vmatmul.mubr.bf16.gmra.mrb[0].mxu0 %v4475
  %v7388 = vpop.f32.mrb[0].mxu0
  %v7389 = vadd.f32 %v7346, %v7388
  %v7390 = vpop.f32.mrb[0].mxu0
  %v7391 = vadd.f32 %v7348, %v7390
  %v7392 = vpop.f32.mrb[0].mxu0
  %v7393 = vadd.f32 %v7350, %v7392
  %v7394 = vpop.f32.mrb[0].mxu0
  %v7395 = vadd.f32 %v7352, %v7394
  %7396 = vdwg.mxu0
  %7397 = vmatprep.subr.bf16.mxu0 %v6032
  %7398 = vmatpush1.bf16.msra.mxu0 %v6031
  %7399 = vmatprep.subr.bf16.mxu0 %v6036
  %7400 = vmatpush1.bf16.msra.mxu0 %v6035
  %7401 = vmatprep.subr.bf16.mxu0 %v6040
  %7402 = vmatpush1.bf16.msra.mxu0 %v6039
  %7403 = vmatprep.subr.bf16.mxu0 %v6044
  %7404 = vmatpush1.bf16.msra.mxu0 %v6043
  %7405 = vmatprep.subr.bf16.mxu0 %v6048
  %7406 = vmatpush1.bf16.msra.mxu0 %v6047
  %7407 = vmatprep.subr.bf16.mxu0 %v6052
  %7408 = vmatpush1.bf16.msra.mxu0 %v6051
  %7409 = vmatprep.subr.bf16.mxu0 %v6056
  %7410 = vmatpush1.bf16.msra.mxu0 %v6055
  %7411 = vmatprep.subr.bf16.mxu0 %v6060
  %7412 = vmatpush1.bf16.msra.mxu0 %v6059
  %7413 = vmatprep.subr.bf16.mxu0 %v6064
  %7414 = vmatpush1.bf16.msra.mxu0 %v6063
  %7415 = vmatprep.subr.bf16.mxu0 %v6068
  %7416 = vmatpush1.bf16.msra.mxu0 %v6067
  %7417 = vmatprep.subr.bf16.mxu0 %v6072
  %7418 = vmatpush1.bf16.msra.mxu0 %v6071
  %7419 = vmatprep.subr.bf16.mxu0 %v6076
  %7420 = vmatpush1.bf16.msra.mxu0 %v6075
  %7421 = vmatprep.subr.bf16.mxu0 %v6080
  %7422 = vmatpush1.bf16.msra.mxu0 %v6079
  %7423 = vmatprep.subr.bf16.mxu0 %v6084
  %7424 = vmatpush1.bf16.msra.mxu0 %v6083
  %7425 = vmatprep.subr.bf16.mxu0 %v6088
  %7426 = vmatpush1.bf16.msra.mxu0 %v6087
  %7427 = vmatprep.subr.bf16.mxu0 %v6092
  %7428 = vmatpush1.bf16.msra.mxu0 %v6091
  %7429 = vmatprep.mubr.bf16.mxu0 %v4462
  %7430 = vmatmul.mubr.bf16.gmra.mrb[0].mxu0 %v4461
  %v7431 = vpop.f32.mrb[0].mxu0
  %v7432 = vadd.f32 %v4405, %v7431
  %v7433 = vpop.f32.mrb[0].mxu0
  %v7434 = vadd.f32 %v4407, %v7433
  %v7435 = vpop.f32.mrb[0].mxu0
  %v7436 = vadd.f32 %v4409, %v7435
  %v7437 = vpop.f32.mrb[0].mxu0
  %v7438 = vadd.f32 %v4411, %v7437
  %7439 = vdwg.mxu0
  %7440 = vmatprep.subr.bf16.mxu0 %v6096
  %7441 = vmatpush1.bf16.msra.mxu0 %v6095
  %7442 = vmatprep.subr.bf16.mxu0 %v6100
  %7443 = vmatpush1.bf16.msra.mxu0 %v6099
  %7444 = vmatprep.subr.bf16.mxu0 %v6104
  %7445 = vmatpush1.bf16.msra.mxu0 %v6103
  %7446 = vmatprep.subr.bf16.mxu0 %v6108
  %7447 = vmatpush1.bf16.msra.mxu0 %v6107
  %7448 = vmatprep.subr.bf16.mxu0 %v6112
  %7449 = vmatpush1.bf16.msra.mxu0 %v6111
  %7450 = vmatprep.subr.bf16.mxu0 %v6116
  %7451 = vmatpush1.bf16.msra.mxu0 %v6115
  %7452 = vmatprep.subr.bf16.mxu0 %v6120
  %7453 = vmatpush1.bf16.msra.mxu0 %v6119
  %7454 = vmatprep.subr.bf16.mxu0 %v6124
  %7455 = vmatpush1.bf16.msra.mxu0 %v6123
  %7456 = vmatprep.subr.bf16.mxu0 %v6128
  %7457 = vmatpush1.bf16.msra.mxu0 %v6127
  %7458 = vmatprep.subr.bf16.mxu0 %v6132
  %7459 = vmatpush1.bf16.msra.mxu0 %v6131
  %7460 = vmatprep.subr.bf16.mxu0 %v6136
  %7461 = vmatpush1.bf16.msra.mxu0 %v6135
  %7462 = vmatprep.subr.bf16.mxu0 %v6140
  %7463 = vmatpush1.bf16.msra.mxu0 %v6139
  %7464 = vmatprep.subr.bf16.mxu0 %v6144
  %7465 = vmatpush1.bf16.msra.mxu0 %v6143
  %7466 = vmatprep.subr.bf16.mxu0 %v6148
  %7467 = vmatpush1.bf16.msra.mxu0 %v6147
  %7468 = vmatprep.subr.bf16.mxu0 %v6152
  %7469 = vmatpush1.bf16.msra.mxu0 %v6151
  %7470 = vmatprep.subr.bf16.mxu0 %v6156
  %7471 = vmatpush1.bf16.msra.mxu0 %v6155
  %7472 = vmatprep.mubr.bf16.mxu0 %v4464
  %7473 = vmatmul.mubr.bf16.gmra.mrb[0].mxu0 %v4463
  %v7474 = vpop.f32.mrb[0].mxu0
  %v7475 = vadd.f32 %v7432, %v7474
  %v7476 = vpop.f32.mrb[0].mxu0
  %v7477 = vadd.f32 %v7434, %v7476
  %v7478 = vpop.f32.mrb[0].mxu0
  %v7479 = vadd.f32 %v7436, %v7478
  %v7480 = vpop.f32.mrb[0].mxu0
  %v7481 = vadd.f32 %v7438, %v7480
  %7482 = vdwg.mxu0
  %7483 = vmatprep.subr.bf16.mxu0 %v6160
  %7484 = vmatpush1.bf16.msra.mxu0 %v6159
  %7485 = vmatprep.subr.bf16.mxu0 %v6164
  %7486 = vmatpush1.bf16.msra.mxu0 %v6163
  %7487 = vmatprep.subr.bf16.mxu0 %v6168
  %7488 = vmatpush1.bf16.msra.mxu0 %v6167
  %7489 = vmatprep.subr.bf16.mxu0 %v6172
  %7490 = vmatpush1.bf16.msra.mxu0 %v6171
  %7491 = vmatprep.subr.bf16.mxu0 %v6176
  %7492 = vmatpush1.bf16.msra.mxu0 %v6175
  %7493 = vmatprep.subr.bf16.mxu0 %v6180
  %7494 = vmatpush1.bf16.msra.mxu0 %v6179
  %7495 = vmatprep.subr.bf16.mxu0 %v6184
  %7496 = vmatpush1.bf16.msra.mxu0 %v6183
  %7497 = vmatprep.subr.bf16.mxu0 %v6188
  %7498 = vmatpush1.bf16.msra.mxu0 %v6187
  %7499 = vmatprep.subr.bf16.mxu0 %v6192
  %7500 = vmatpush1.bf16.msra.mxu0 %v6191
  %7501 = vmatprep.subr.bf16.mxu0 %v6196
  %7502 = vmatpush1.bf16.msra.mxu0 %v6195
  %7503 = vmatprep.subr.bf16.mxu0 %v6200
  %7504 = vmatpush1.bf16.msra.mxu0 %v6199
  %7505 = vmatprep.subr.bf16.mxu0 %v6204
  %7506 = vmatpush1.bf16.msra.mxu0 %v6203
  %7507 = vmatprep.subr.bf16.mxu0 %v6208
  %7508 = vmatpush1.bf16.msra.mxu0 %v6207
  %7509 = vmatprep.subr.bf16.mxu0 %v6212
  %7510 = vmatpush1.bf16.msra.mxu0 %v6211
  %7511 = vmatprep.subr.bf16.mxu0 %v6216
  %7512 = vmatpush1.bf16.msra.mxu0 %v6215
  %7513 = vmatprep.subr.bf16.mxu0 %v6220
  %7514 = vmatpush1.bf16.msra.mxu0 %v6219
  %7515 = vmatprep.mubr.bf16.mxu0 %v4466
  %7516 = vmatmul.mubr.bf16.gmra.mrb[0].mxu0 %v4465
  %v7517 = vpop.f32.mrb[0].mxu0
  %v7518 = vadd.f32 %v7475, %v7517
  %v7519 = vpop.f32.mrb[0].mxu0
  %v7520 = vadd.f32 %v7477, %v7519
  %v7521 = vpop.f32.mrb[0].mxu0
  %v7522 = vadd.f32 %v7479, %v7521
  %v7523 = vpop.f32.mrb[0].mxu0
  %v7524 = vadd.f32 %v7481, %v7523
  %7525 = vdwg.mxu0
  %7526 = vmatprep.subr.bf16.mxu0 %v6224
  %7527 = vmatpush1.bf16.msra.mxu0 %v6223
  %7528 = vmatprep.subr.bf16.mxu0 %v6228
  %7529 = vmatpush1.bf16.msra.mxu0 %v6227
  %7530 = vmatprep.subr.bf16.mxu0 %v6232
  %7531 = vmatpush1.bf16.msra.mxu0 %v6231
  %7532 = vmatprep.subr.bf16.mxu0 %v6236
  %7533 = vmatpush1.bf16.msra.mxu0 %v6235
  %7534 = vmatprep.subr.bf16.mxu0 %v6240
  %7535 = vmatpush1.bf16.msra.mxu0 %v6239
  %7536 = vmatprep.subr.bf16.mxu0 %v6244
  %7537 = vmatpush1.bf16.msra.mxu0 %v6243
  %7538 = vmatprep.subr.bf16.mxu0 %v6248
  %7539 = vmatpush1.bf16.msra.mxu0 %v6247
  %7540 = vmatprep.subr.bf16.mxu0 %v6252
  %7541 = vmatpush1.bf16.msra.mxu0 %v6251
  %7542 = vmatprep.subr.bf16.mxu0 %v6256
  %7543 = vmatpush1.bf16.msra.mxu0 %v6255
  %7544 = vmatprep.subr.bf16.mxu0 %v6260
  %7545 = vmatpush1.bf16.msra.mxu0 %v6259
  %7546 = vmatprep.subr.bf16.mxu0 %v6264
  %7547 = vmatpush1.bf16.msra.mxu0 %v6263
  %7548 = vmatprep.subr.bf16.mxu0 %v6268
  %7549 = vmatpush1.bf16.msra.mxu0 %v6267
  %7550 = vmatprep.subr.bf16.mxu0 %v6272
  %7551 = vmatpush1.bf16.msra.mxu0 %v6271
  %7552 = vmatprep.subr.bf16.mxu0 %v6276
  %7553 = vmatpush1.bf16.msra.mxu0 %v6275
  %7554 = vmatprep.subr.bf16.mxu0 %v6280
  %7555 = vmatpush1.bf16.msra.mxu0 %v6279
  %7556 = vmatprep.subr.bf16.mxu0 %v6284
  %7557 = vmatpush1.bf16.msra.mxu0 %v6283
  %7558 = vmatprep.mubr.bf16.mxu0 %v4468
  %7559 = vmatmul.mubr.bf16.gmra.mrb[0].mxu0 %v4467
  %v7560 = vpop.f32.mrb[0].mxu0
  %v7561 = vadd.f32 %v7518, %v7560
  %v7562 = vpop.f32.mrb[0].mxu0
  %v7563 = vadd.f32 %v7520, %v7562
  %v7564 = vpop.f32.mrb[0].mxu0
  %v7565 = vadd.f32 %v7522, %v7564
  %v7566 = vpop.f32.mrb[0].mxu0
  %v7567 = vadd.f32 %v7524, %v7566
  %7568 = vdwg.mxu0
  %7569 = vmatprep.subr.bf16.mxu0 %v6288
  %7570 = vmatpush1.bf16.msra.mxu0 %v6287
  %7571 = vmatprep.subr.bf16.mxu0 %v6292
  %7572 = vmatpush1.bf16.msra.mxu0 %v6291
  %7573 = vmatprep.subr.bf16.mxu0 %v6296
  %7574 = vmatpush1.bf16.msra.mxu0 %v6295
  %7575 = vmatprep.subr.bf16.mxu0 %v6300
  %7576 = vmatpush1.bf16.msra.mxu0 %v6299
  %7577 = vmatprep.subr.bf16.mxu0 %v6304
  %7578 = vmatpush1.bf16.msra.mxu0 %v6303
  %7579 = vmatprep.subr.bf16.mxu0 %v6308
  %7580 = vmatpush1.bf16.msra.mxu0 %v6307
  %7581 = vmatprep.subr.bf16.mxu0 %v6312
  %7582 = vmatpush1.bf16.msra.mxu0 %v6311
  %7583 = vmatprep.subr.bf16.mxu0 %v6316
  %7584 = vmatpush1.bf16.msra.mxu0 %v6315
  %7585 = vmatprep.subr.bf16.mxu0 %v6320
  %7586 = vmatpush1.bf16.msra.mxu0 %v6319
  %7587 = vmatprep.subr.bf16.mxu0 %v6324
  %7588 = vmatpush1.bf16.msra.mxu0 %v6323
  %7589 = vmatprep.subr.bf16.mxu0 %v6328
  %7590 = vmatpush1.bf16.msra.mxu0 %v6327
  %7591 = vmatprep.subr.bf16.mxu0 %v6332
  %7592 = vmatpush1.bf16.msra.mxu0 %v6331
  %7593 = vmatprep.subr.bf16.mxu0 %v6336
  %7594 = vmatpush1.bf16.msra.mxu0 %v6335
  %7595 = vmatprep.subr.bf16.mxu0 %v6340
  %7596 = vmatpush1.bf16.msra.mxu0 %v6339
  %7597 = vmatprep.subr.bf16.mxu0 %v6344
  %7598 = vmatpush1.bf16.msra.mxu0 %v6343
  %7599 = vmatprep.subr.bf16.mxu0 %v6348
  %7600 = vmatpush1.bf16.msra.mxu0 %v6347
  %7601 = vmatprep.mubr.bf16.mxu0 %v4470
  %7602 = vmatmul.mubr.bf16.gmra.mrb[0].mxu0 %v4469
  %v7603 = vpop.f32.mrb[0].mxu0
  %v7604 = vadd.f32 %v7561, %v7603
  %v7605 = vpop.f32.mrb[0].mxu0
  %v7606 = vadd.f32 %v7563, %v7605
  %v7607 = vpop.f32.mrb[0].mxu0
  %v7608 = vadd.f32 %v7565, %v7607
  %v7609 = vpop.f32.mrb[0].mxu0
  %v7610 = vadd.f32 %v7567, %v7609
  %7611 = vdwg.mxu0
  %7612 = vmatprep.subr.bf16.mxu0 %v6352
  %7613 = vmatpush1.bf16.msra.mxu0 %v6351
  %7614 = vmatprep.subr.bf16.mxu0 %v6356
  %7615 = vmatpush1.bf16.msra.mxu0 %v6355
  %7616 = vmatprep.subr.bf16.mxu0 %v6360
  %7617 = vmatpush1.bf16.msra.mxu0 %v6359
  %7618 = vmatprep.subr.bf16.mxu0 %v6364
  %7619 = vmatpush1.bf16.msra.mxu0 %v6363
  %7620 = vmatprep.subr.bf16.mxu0 %v6368
  %7621 = vmatpush1.bf16.msra.mxu0 %v6367
  %7622 = vmatprep.subr.bf16.mxu0 %v6372
  %7623 = vmatpush1.bf16.msra.mxu0 %v6371
  %7624 = vmatprep.subr.bf16.mxu0 %v6376
  %7625 = vmatpush1.bf16.msra.mxu0 %v6375
  %7626 = vmatprep.subr.bf16.mxu0 %v6380
  %7627 = vmatpush1.bf16.msra.mxu0 %v6379
  %7628 = vmatprep.subr.bf16.mxu0 %v6384
  %7629 = vmatpush1.bf16.msra.mxu0 %v6383
  %7630 = vmatprep.subr.bf16.mxu0 %v6388
  %7631 = vmatpush1.bf16.msra.mxu0 %v6387
  %7632 = vmatprep.subr.bf16.mxu0 %v6392
  %7633 = vmatpush1.bf16.msra.mxu0 %v6391
  %7634 = vmatprep.subr.bf16.mxu0 %v6396
  %7635 = vmatpush1.bf16.msra.mxu0 %v6395
  %7636 = vmatprep.subr.bf16.mxu0 %v6400
  %7637 = vmatpush1.bf16.msra.mxu0 %v6399
  %7638 = vmatprep.subr.bf16.mxu0 %v6404
  %7639 = vmatpush1.bf16.msra.mxu0 %v6403
  %7640 = vmatprep.subr.bf16.mxu0 %v6408
  %7641 = vmatpush1.bf16.msra.mxu0 %v6407
  %7642 = vmatprep.subr.bf16.mxu0 %v6412
  %7643 = vmatpush1.bf16.msra.mxu0 %v6411
  %7644 = vmatprep.mubr.bf16.mxu0 %v4472
  %7645 = vmatmul.mubr.bf16.gmra.mrb[0].mxu0 %v4471
  %v7646 = vpop.f32.mrb[0].mxu0
  %v7647 = vadd.f32 %v7604, %v7646
  %v7648 = vpop.f32.mrb[0].mxu0
  %v7649 = vadd.f32 %v7606, %v7648
  %v7650 = vpop.f32.mrb[0].mxu0
  %v7651 = vadd.f32 %v7608, %v7650
  %v7652 = vpop.f32.mrb[0].mxu0
  %v7653 = vadd.f32 %v7610, %v7652
  %7654 = vdwg.mxu0
  %7655 = vmatprep.subr.bf16.mxu0 %v6416
  %7656 = vmatpush1.bf16.msra.mxu0 %v6415
  %7657 = vmatprep.subr.bf16.mxu0 %v6420
  %7658 = vmatpush1.bf16.msra.mxu0 %v6419
  %7659 = vmatprep.subr.bf16.mxu0 %v6424
  %7660 = vmatpush1.bf16.msra.mxu0 %v6423
  %7661 = vmatprep.subr.bf16.mxu0 %v6428
  %7662 = vmatpush1.bf16.msra.mxu0 %v6427
  %7663 = vmatprep.subr.bf16.mxu0 %v6432
  %7664 = vmatpush1.bf16.msra.mxu0 %v6431
  %7665 = vmatprep.subr.bf16.mxu0 %v6436
  %7666 = vmatpush1.bf16.msra.mxu0 %v6435
  %7667 = vmatprep.subr.bf16.mxu0 %v6440
  %7668 = vmatpush1.bf16.msra.mxu0 %v6439
  %7669 = vmatprep.subr.bf16.mxu0 %v6444
  %7670 = vmatpush1.bf16.msra.mxu0 %v6443
  %7671 = vmatprep.subr.bf16.mxu0 %v6448
  %7672 = vmatpush1.bf16.msra.mxu0 %v6447
  %7673 = vmatprep.subr.bf16.mxu0 %v6452
  %7674 = vmatpush1.bf16.msra.mxu0 %v6451
  %7675 = vmatprep.subr.bf16.mxu0 %v6456
  %7676 = vmatpush1.bf16.msra.mxu0 %v6455
  %7677 = vmatprep.subr.bf16.mxu0 %v6460
  %7678 = vmatpush1.bf16.msra.mxu0 %v6459
  %7679 = vmatprep.subr.bf16.mxu0 %v6464
  %7680 = vmatpush1.bf16.msra.mxu0 %v6463
  %7681 = vmatprep.subr.bf16.mxu0 %v6468
  %7682 = vmatpush1.bf16.msra.mxu0 %v6467
  %7683 = vmatprep.subr.bf16.mxu0 %v6472
  %7684 = vmatpush1.bf16.msra.mxu0 %v6471
  %7685 = vmatprep.subr.bf16.mxu0 %v6476
  %7686 = vmatpush1.bf16.msra.mxu0 %v6475
  %7687 = vmatprep.mubr.bf16.mxu0 %v4474
  %7688 = vmatmul.mubr.bf16.gmra.mrb[0].mxu0 %v4473
  %v7689 = vpop.f32.mrb[0].mxu0
  %v7690 = vadd.f32 %v7647, %v7689
  %v7691 = vpop.f32.mrb[0].mxu0
  %v7692 = vadd.f32 %v7649, %v7691
  %v7693 = vpop.f32.mrb[0].mxu0
  %v7694 = vadd.f32 %v7651, %v7693
  %v7695 = vpop.f32.mrb[0].mxu0
  %v7696 = vadd.f32 %v7653, %v7695
  %7697 = vdwg.mxu0
  %7698 = vmatprep.subr.bf16.mxu0 %v6480
  %7699 = vmatpush1.bf16.msra.mxu0 %v6479
  %7700 = vmatprep.subr.bf16.mxu0 %v6484
  %7701 = vmatpush1.bf16.msra.mxu0 %v6483
  %7702 = vmatprep.subr.bf16.mxu0 %v6488
  %7703 = vmatpush1.bf16.msra.mxu0 %v6487
  %7704 = vmatprep.subr.bf16.mxu0 %v6492
  %7705 = vmatpush1.bf16.msra.mxu0 %v6491
  %7706 = vmatprep.subr.bf16.mxu0 %v6496
  %7707 = vmatpush1.bf16.msra.mxu0 %v6495
  %7708 = vmatprep.subr.bf16.mxu0 %v6500
  %7709 = vmatpush1.bf16.msra.mxu0 %v6499
  %7710 = vmatprep.subr.bf16.mxu0 %v6504
  %7711 = vmatpush1.bf16.msra.mxu0 %v6503
  %7712 = vmatprep.subr.bf16.mxu0 %v6508
  %7713 = vmatpush1.bf16.msra.mxu0 %v6507
  %7714 = vmatprep.subr.bf16.mxu0 %v6512
  %7715 = vmatpush1.bf16.msra.mxu0 %v6511
  %7716 = vmatprep.subr.bf16.mxu0 %v6516
  %7717 = vmatpush1.bf16.msra.mxu0 %v6515
  %7718 = vmatprep.subr.bf16.mxu0 %v6520
  %7719 = vmatpush1.bf16.msra.mxu0 %v6519
  %7720 = vmatprep.subr.bf16.mxu0 %v6524
  %7721 = vmatpush1.bf16.msra.mxu0 %v6523
  %7722 = vmatprep.subr.bf16.mxu0 %v6528
  %7723 = vmatpush1.bf16.msra.mxu0 %v6527
  %7724 = vmatprep.subr.bf16.mxu0 %v6532
  %7725 = vmatpush1.bf16.msra.mxu0 %v6531
  %7726 = vmatprep.subr.bf16.mxu0 %v6536
  %7727 = vmatpush1.bf16.msra.mxu0 %v6535
  %7728 = vmatprep.subr.bf16.mxu0 %v6540
  %7729 = vmatpush1.bf16.msra.mxu0 %v6539
  %7730 = vmatprep.mubr.bf16.mxu0 %v4476
  %7731 = vmatmul.mubr.bf16.gmra.mrb[0].mxu0 %v4475
  %v7732 = vpop.f32.mrb[0].mxu0
  %v7733 = vadd.f32 %v7690, %v7732
  %v7734 = vpop.f32.mrb[0].mxu0
  %v7735 = vadd.f32 %v7692, %v7734
  %v7736 = vpop.f32.mrb[0].mxu0
  %v7737 = vadd.f32 %v7694, %v7736
  %v7738 = vpop.f32.mrb[0].mxu0
  %v7739 = vadd.f32 %v7696, %v7738
  %7740 = vdwg.mxu0
  %v7741 = vld [vmem:[%s2] sm:$0xff]
  %v7742 = vld [vmem:[%s2 + $0x8] sm:$0xff]
  %v7743 = vld [vmem:[%s2 + $0x10] sm:$0xff]
  %v7744 = vld [vmem:[%s2 + $0x18] sm:$0xff]
  %v7745 = vld [vmem:[%s2 + $0x20] sm:$0xff]
  %v7746 = vld [vmem:[%s2 + $0x28] sm:$0xff]
  %v7747 = vld [vmem:[%s2 + $0x30] sm:$0xff]
  %v7748 = vld [vmem:[%s2 + $0x38] sm:$0xff]
  %v7749 = vld [vmem:[%s2 + $0x40] sm:$0xff]
  %v7750 = vld [vmem:[%s2 + $0x48] sm:$0xff]
  %v7751 = vld [vmem:[%s2 + $0x50] sm:$0xff]
  %v7752 = vld [vmem:[%s2 + $0x58] sm:$0xff]
  %v7753 = vld [vmem:[%s2 + $0x60] sm:$0xff]
  %v7754 = vld [vmem:[%s2 + $0x68] sm:$0xff]
  %v7755 = vld [vmem:[%s2 + $0x70] sm:$0xff]
  %v7756 = vld [vmem:[%s2 + $0x78] sm:$0xff]
  %v7757 = vld [vmem:[%s4 + $0x2000] sm:$0xff]
  %v7758 = vld [vmem:[%s4 + $0x2008] sm:$0xff]
  %v7759 = vld [vmem:[%s4 + $0x2010] sm:$0xff]
  %v7760 = vld [vmem:[%s4 + $0x2018] sm:$0xff]
  %v7761 = vld [vmem:[%s4 + $0x2020] sm:$0xff]
  %v7762 = vld [vmem:[%s4 + $0x2028] sm:$0xff]
  %v7763 = vld [vmem:[%s4 + $0x2030] sm:$0xff]
  %v7764 = vld [vmem:[%s4 + $0x2038] sm:$0xff]
  %v7765 = vld [vmem:[%s4 + $0x2040] sm:$0xff]
  %v7766 = vld [vmem:[%s4 + $0x2048] sm:$0xff]
  %v7767 = vld [vmem:[%s4 + $0x2050] sm:$0xff]
  %v7768 = vld [vmem:[%s4 + $0x2058] sm:$0xff]
  %v7769 = vld [vmem:[%s4 + $0x2060] sm:$0xff]
  %v7770 = vld [vmem:[%s4 + $0x2068] sm:$0xff]
  %v7771 = vld [vmem:[%s4 + $0x2070] sm:$0xff]
  %v7772 = vld [vmem:[%s4 + $0x2078] sm:$0xff]
  %v7773 = vld [vmem:[%s4 + $0x2080] sm:$0xff]
  %v7774 = vld [vmem:[%s4 + $0x2088] sm:$0xff]
  %v7775 = vld [vmem:[%s4 + $0x2090] sm:$0xff]
  %v7776 = vld [vmem:[%s4 + $0x2098] sm:$0xff]
  %v7777 = vld [vmem:[%s4 + $0x20a0] sm:$0xff]
  %v7778 = vld [vmem:[%s4 + $0x20a8] sm:$0xff]
  %v7779 = vld [vmem:[%s4 + $0x20b0] sm:$0xff]
  %v7780 = vld [vmem:[%s4 + $0x20b8] sm:$0xff]
  %v7781 = vld [vmem:[%s4 + $0x20c0] sm:$0xff]
  %v7782 = vld [vmem:[%s4 + $0x20c8] sm:$0xff]
  %v7783 = vld [vmem:[%s4 + $0x20d0] sm:$0xff]
  %v7784 = vld [vmem:[%s4 + $0x20d8] sm:$0xff]
  %v7785 = vld [vmem:[%s4 + $0x20e0] sm:$0xff]
  %v7786 = vld [vmem:[%s4 + $0x20e8] sm:$0xff]
  %v7787 = vld [vmem:[%s4 + $0x20f0] sm:$0xff]
  %v7788 = vld [vmem:[%s4 + $0x20f8] sm:$0xff]
  %v7789 = vld [vmem:[%s4 + $0x2100] sm:$0xff]
  %v7790 = vld [vmem:[%s4 + $0x2108] sm:$0xff]
  %v7791 = vld [vmem:[%s4 + $0x2110] sm:$0xff]
  %v7792 = vld [vmem:[%s4 + $0x2118] sm:$0xff]
  %v7793 = vld [vmem:[%s4 + $0x2120] sm:$0xff]
  %v7794 = vld [vmem:[%s4 + $0x2128] sm:$0xff]
  %v7795 = vld [vmem:[%s4 + $0x2130] sm:$0xff]
  %v7796 = vld [vmem:[%s4 + $0x2138] sm:$0xff]
  %v7797 = vld [vmem:[%s4 + $0x2140] sm:$0xff]
  %v7798 = vld [vmem:[%s4 + $0x2148] sm:$0xff]
  %v7799 = vld [vmem:[%s4 + $0x2150] sm:$0xff]
  %v7800 = vld [vmem:[%s4 + $0x2158] sm:$0xff]
  %v7801 = vld [vmem:[%s4 + $0x2160] sm:$0xff]
  %v7802 = vld [vmem:[%s4 + $0x2168] sm:$0xff]
  %v7803 = vld [vmem:[%s4 + $0x2170] sm:$0xff]
  %v7804 = vld [vmem:[%s4 + $0x2178] sm:$0xff]
  %v7805 = vld [vmem:[%s4 + $0x2180] sm:$0xff]
  %v7806 = vld [vmem:[%s4 + $0x2188] sm:$0xff]
  %v7807 = vld [vmem:[%s4 + $0x2190] sm:$0xff]
  %v7808 = vld [vmem:[%s4 + $0x2198] sm:$0xff]
  %v7809 = vld [vmem:[%s4 + $0x21a0] sm:$0xff]
  %v7810 = vld [vmem:[%s4 + $0x21a8] sm:$0xff]
  %v7811 = vld [vmem:[%s4 + $0x21b0] sm:$0xff]
  %v7812 = vld [vmem:[%s4 + $0x21b8] sm:$0xff]
  %v7813 = vld [vmem:[%s4 + $0x21c0] sm:$0xff]
  %v7814 = vld [vmem:[%s4 + $0x21c8] sm:$0xff]
  %v7815 = vld [vmem:[%s4 + $0x21d0] sm:$0xff]
  %v7816 = vld [vmem:[%s4 + $0x21d8] sm:$0xff]
  %v7817 = vld [vmem:[%s4 + $0x21e0] sm:$0xff]
  %v7818 = vld [vmem:[%s4 + $0x21e8] sm:$0xff]
  %v7819 = vld [vmem:[%s4 + $0x21f0] sm:$0xff]
  %v7820 = vld [vmem:[%s4 + $0x21f8] sm:$0xff]
  %v7821 = vld [vmem:[%s4 + $0x2200] sm:$0xff]
  %v7822 = vld [vmem:[%s4 + $0x2208] sm:$0xff]
  %v7823 = vld [vmem:[%s4 + $0x2210] sm:$0xff]
  %v7824 = vld [vmem:[%s4 + $0x2218] sm:$0xff]
  %v7825 = vld [vmem:[%s4 + $0x2220] sm:$0xff]
  %v7826 = vld [vmem:[%s4 + $0x2228] sm:$0xff]
  %v7827 = vld [vmem:[%s4 + $0x2230] sm:$0xff]
  %v7828 = vld [vmem:[%s4 + $0x2238] sm:$0xff]
  %v7829 = vld [vmem:[%s4 + $0x2240] sm:$0xff]
  %v7830 = vld [vmem:[%s4 + $0x2248] sm:$0xff]
  %v7831 = vld [vmem:[%s4 + $0x2250] sm:$0xff]
  %v7832 = vld [vmem:[%s4 + $0x2258] sm:$0xff]
  %v7833 = vld [vmem:[%s4 + $0x2260] sm:$0xff]
  %v7834 = vld [vmem:[%s4 + $0x2268] sm:$0xff]
  %v7835 = vld [vmem:[%s4 + $0x2270] sm:$0xff]
  %v7836 = vld [vmem:[%s4 + $0x2278] sm:$0xff]
  %v7837 = vld [vmem:[%s4 + $0x2280] sm:$0xff]
  %v7838 = vld [vmem:[%s4 + $0x2288] sm:$0xff]
  %v7839 = vld [vmem:[%s4 + $0x2290] sm:$0xff]
  %v7840 = vld [vmem:[%s4 + $0x2298] sm:$0xff]
  %v7841 = vld [vmem:[%s4 + $0x22a0] sm:$0xff]
  %v7842 = vld [vmem:[%s4 + $0x22a8] sm:$0xff]
  %v7843 = vld [vmem:[%s4 + $0x22b0] sm:$0xff]
  %v7844 = vld [vmem:[%s4 + $0x22b8] sm:$0xff]
  %v7845 = vld [vmem:[%s4 + $0x22c0] sm:$0xff]
  %v7846 = vld [vmem:[%s4 + $0x22c8] sm:$0xff]
  %v7847 = vld [vmem:[%s4 + $0x22d0] sm:$0xff]
  %v7848 = vld [vmem:[%s4 + $0x22d8] sm:$0xff]
  %v7849 = vld [vmem:[%s4 + $0x22e0] sm:$0xff]
  %v7850 = vld [vmem:[%s4 + $0x22e8] sm:$0xff]
  %v7851 = vld [vmem:[%s4 + $0x22f0] sm:$0xff]
  %v7852 = vld [vmem:[%s4 + $0x22f8] sm:$0xff]
  %v7853 = vld [vmem:[%s4 + $0x2300] sm:$0xff]
  %v7854 = vld [vmem:[%s4 + $0x2308] sm:$0xff]
  %v7855 = vld [vmem:[%s4 + $0x2310] sm:$0xff]
  %v7856 = vld [vmem:[%s4 + $0x2318] sm:$0xff]
  %v7857 = vld [vmem:[%s4 + $0x2320] sm:$0xff]
  %v7858 = vld [vmem:[%s4 + $0x2328] sm:$0xff]
  %v7859 = vld [vmem:[%s4 + $0x2330] sm:$0xff]
  %v7860 = vld [vmem:[%s4 + $0x2338] sm:$0xff]
  %v7861 = vld [vmem:[%s4 + $0x2340] sm:$0xff]
  %v7862 = vld [vmem:[%s4 + $0x2348] sm:$0xff]
  %v7863 = vld [vmem:[%s4 + $0x2350] sm:$0xff]
  %v7864 = vld [vmem:[%s4 + $0x2358] sm:$0xff]
  %v7865 = vld [vmem:[%s4 + $0x2360] sm:$0xff]
  %v7866 = vld [vmem:[%s4 + $0x2368] sm:$0xff]
  %v7867 = vld [vmem:[%s4 + $0x2370] sm:$0xff]
  %v7868 = vld [vmem:[%s4 + $0x2378] sm:$0xff]
  %v7869 = vld [vmem:[%s4 + $0x2380] sm:$0xff]
  %v7870 = vld [vmem:[%s4 + $0x2388] sm:$0xff]
  %v7871 = vld [vmem:[%s4 + $0x2390] sm:$0xff]
  %v7872 = vld [vmem:[%s4 + $0x2398] sm:$0xff]
  %v7873 = vld [vmem:[%s4 + $0x23a0] sm:$0xff]
  %v7874 = vld [vmem:[%s4 + $0x23a8] sm:$0xff]
  %v7875 = vld [vmem:[%s4 + $0x23b0] sm:$0xff]
  %v7876 = vld [vmem:[%s4 + $0x23b8] sm:$0xff]
  %v7877 = vld [vmem:[%s4 + $0x23c0] sm:$0xff]
  %v7878 = vld [vmem:[%s4 + $0x23c8] sm:$0xff]
  %v7879 = vld [vmem:[%s4 + $0x23d0] sm:$0xff]
  %v7880 = vld [vmem:[%s4 + $0x23d8] sm:$0xff]
  %v7881 = vld [vmem:[%s4 + $0x23e0] sm:$0xff]
  %v7882 = vld [vmem:[%s4 + $0x23e8] sm:$0xff]
  %v7883 = vld [vmem:[%s4 + $0x23f0] sm:$0xff]
  %v7884 = vld [vmem:[%s4 + $0x23f8] sm:$0xff]
  %v7885 = vld [vmem:[%s4 + $0x2400] sm:$0xff]
  %v7886 = vld [vmem:[%s4 + $0x2408] sm:$0xff]
  %v7887 = vld [vmem:[%s4 + $0x2410] sm:$0xff]
  %v7888 = vld [vmem:[%s4 + $0x2418] sm:$0xff]
  %v7889 = vld [vmem:[%s4 + $0x2420] sm:$0xff]
  %v7890 = vld [vmem:[%s4 + $0x2428] sm:$0xff]
  %v7891 = vld [vmem:[%s4 + $0x2430] sm:$0xff]
  %v7892 = vld [vmem:[%s4 + $0x2438] sm:$0xff]
  %v7893 = vld [vmem:[%s4 + $0x2440] sm:$0xff]
  %v7894 = vld [vmem:[%s4 + $0x2448] sm:$0xff]
  %v7895 = vld [vmem:[%s4 + $0x2450] sm:$0xff]
  %v7896 = vld [vmem:[%s4 + $0x2458] sm:$0xff]
  %v7897 = vld [vmem:[%s4 + $0x2460] sm:$0xff]
  %v7898 = vld [vmem:[%s4 + $0x2468] sm:$0xff]
  %v7899 = vld [vmem:[%s4 + $0x2470] sm:$0xff]
  %v7900 = vld [vmem:[%s4 + $0x2478] sm:$0xff]
  %v7901 = vld [vmem:[%s4 + $0x2480] sm:$0xff]
  %v7902 = vld [vmem:[%s4 + $0x2488] sm:$0xff]
  %v7903 = vld [vmem:[%s4 + $0x2490] sm:$0xff]
  %v7904 = vld [vmem:[%s4 + $0x2498] sm:$0xff]
  %v7905 = vld [vmem:[%s4 + $0x24a0] sm:$0xff]
  %v7906 = vld [vmem:[%s4 + $0x24a8] sm:$0xff]
  %v7907 = vld [vmem:[%s4 + $0x24b0] sm:$0xff]
  %v7908 = vld [vmem:[%s4 + $0x24b8] sm:$0xff]
  %v7909 = vld [vmem:[%s4 + $0x24c0] sm:$0xff]
  %v7910 = vld [vmem:[%s4 + $0x24c8] sm:$0xff]
  %v7911 = vld [vmem:[%s4 + $0x24d0] sm:$0xff]
  %v7912 = vld [vmem:[%s4 + $0x24d8] sm:$0xff]
  %v7913 = vld [vmem:[%s4 + $0x24e0] sm:$0xff]
  %v7914 = vld [vmem:[%s4 + $0x24e8] sm:$0xff]
  %v7915 = vld [vmem:[%s4 + $0x24f0] sm:$0xff]
  %v7916 = vld [vmem:[%s4 + $0x24f8] sm:$0xff]
  %v7917 = vld [vmem:[%s4 + $0x2500] sm:$0xff]
  %v7918 = vld [vmem:[%s4 + $0x2508] sm:$0xff]
  %v7919 = vld [vmem:[%s4 + $0x2510] sm:$0xff]
  %v7920 = vld [vmem:[%s4 + $0x2518] sm:$0xff]
  %v7921 = vld [vmem:[%s4 + $0x2520] sm:$0xff]
  %v7922 = vld [vmem:[%s4 + $0x2528] sm:$0xff]
  %v7923 = vld [vmem:[%s4 + $0x2530] sm:$0xff]
  %v7924 = vld [vmem:[%s4 + $0x2538] sm:$0xff]
  %v7925 = vld [vmem:[%s4 + $0x2540] sm:$0xff]
  %v7926 = vld [vmem:[%s4 + $0x2548] sm:$0xff]
  %v7927 = vld [vmem:[%s4 + $0x2550] sm:$0xff]
  %v7928 = vld [vmem:[%s4 + $0x2558] sm:$0xff]
  %v7929 = vld [vmem:[%s4 + $0x2560] sm:$0xff]
  %v7930 = vld [vmem:[%s4 + $0x2568] sm:$0xff]
  %v7931 = vld [vmem:[%s4 + $0x2570] sm:$0xff]
  %v7932 = vld [vmem:[%s4 + $0x2578] sm:$0xff]
  %v7933 = vld [vmem:[%s4 + $0x2580] sm:$0xff]
  %v7934 = vld [vmem:[%s4 + $0x2588] sm:$0xff]
  %v7935 = vld [vmem:[%s4 + $0x2590] sm:$0xff]
  %v7936 = vld [vmem:[%s4 + $0x2598] sm:$0xff]
  %v7937 = vld [vmem:[%s4 + $0x25a0] sm:$0xff]
  %v7938 = vld [vmem:[%s4 + $0x25a8] sm:$0xff]
  %v7939 = vld [vmem:[%s4 + $0x25b0] sm:$0xff]
  %v7940 = vld [vmem:[%s4 + $0x25b8] sm:$0xff]
  %v7941 = vld [vmem:[%s4 + $0x25c0] sm:$0xff]
  %v7942 = vld [vmem:[%s4 + $0x25c8] sm:$0xff]
  %v7943 = vld [vmem:[%s4 + $0x25d0] sm:$0xff]
  %v7944 = vld [vmem:[%s4 + $0x25d8] sm:$0xff]
  %v7945 = vld [vmem:[%s4 + $0x25e0] sm:$0xff]
  %v7946 = vld [vmem:[%s4 + $0x25e8] sm:$0xff]
  %v7947 = vld [vmem:[%s4 + $0x25f0] sm:$0xff]
  %v7948 = vld [vmem:[%s4 + $0x25f8] sm:$0xff]
  %v7949 = vld [vmem:[%s4 + $0x2600] sm:$0xff]
  %v7950 = vld [vmem:[%s4 + $0x2608] sm:$0xff]
  %v7951 = vld [vmem:[%s4 + $0x2610] sm:$0xff]
  %v7952 = vld [vmem:[%s4 + $0x2618] sm:$0xff]
  %v7953 = vld [vmem:[%s4 + $0x2620] sm:$0xff]
  %v7954 = vld [vmem:[%s4 + $0x2628] sm:$0xff]
  %v7955 = vld [vmem:[%s4 + $0x2630] sm:$0xff]
  %v7956 = vld [vmem:[%s4 + $0x2638] sm:$0xff]
  %v7957 = vld [vmem:[%s4 + $0x2640] sm:$0xff]
  %v7958 = vld [vmem:[%s4 + $0x2648] sm:$0xff]
  %v7959 = vld [vmem:[%s4 + $0x2650] sm:$0xff]
  %v7960 = vld [vmem:[%s4 + $0x2658] sm:$0xff]
  %v7961 = vld [vmem:[%s4 + $0x2660] sm:$0xff]
  %v7962 = vld [vmem:[%s4 + $0x2668] sm:$0xff]
  %v7963 = vld [vmem:[%s4 + $0x2670] sm:$0xff]
  %v7964 = vld [vmem:[%s4 + $0x2678] sm:$0xff]
  %v7965 = vld [vmem:[%s4 + $0x2680] sm:$0xff]
  %v7966 = vld [vmem:[%s4 + $0x2688] sm:$0xff]
  %v7967 = vld [vmem:[%s4 + $0x2690] sm:$0xff]
  %v7968 = vld [vmem:[%s4 + $0x2698] sm:$0xff]
  %v7969 = vld [vmem:[%s4 + $0x26a0] sm:$0xff]
  %v7970 = vld [vmem:[%s4 + $0x26a8] sm:$0xff]
  %v7971 = vld [vmem:[%s4 + $0x26b0] sm:$0xff]
  %v7972 = vld [vmem:[%s4 + $0x26b8] sm:$0xff]
  %v7973 = vld [vmem:[%s4 + $0x26c0] sm:$0xff]
  %v7974 = vld [vmem:[%s4 + $0x26c8] sm:$0xff]
  %v7975 = vld [vmem:[%s4 + $0x26d0] sm:$0xff]
  %v7976 = vld [vmem:[%s4 + $0x26d8] sm:$0xff]
  %v7977 = vld [vmem:[%s4 + $0x26e0] sm:$0xff]
  %v7978 = vld [vmem:[%s4 + $0x26e8] sm:$0xff]
  %v7979 = vld [vmem:[%s4 + $0x26f0] sm:$0xff]
  %v7980 = vld [vmem:[%s4 + $0x26f8] sm:$0xff]
  %v7981 = vld [vmem:[%s4 + $0x2700] sm:$0xff]
  %v7982 = vld [vmem:[%s4 + $0x2708] sm:$0xff]
  %v7983 = vld [vmem:[%s4 + $0x2710] sm:$0xff]
  %v7984 = vld [vmem:[%s4 + $0x2718] sm:$0xff]
  %v7985 = vld [vmem:[%s4 + $0x2720] sm:$0xff]
  %v7986 = vld [vmem:[%s4 + $0x2728] sm:$0xff]
  %v7987 = vld [vmem:[%s4 + $0x2730] sm:$0xff]
  %v7988 = vld [vmem:[%s4 + $0x2738] sm:$0xff]
  %v7989 = vld [vmem:[%s4 + $0x2740] sm:$0xff]
  %v7990 = vld [vmem:[%s4 + $0x2748] sm:$0xff]
  %v7991 = vld [vmem:[%s4 + $0x2750] sm:$0xff]
  %v7992 = vld [vmem:[%s4 + $0x2758] sm:$0xff]
  %v7993 = vld [vmem:[%s4 + $0x2760] sm:$0xff]
  %v7994 = vld [vmem:[%s4 + $0x2768] sm:$0xff]
  %v7995 = vld [vmem:[%s4 + $0x2770] sm:$0xff]
  %v7996 = vld [vmem:[%s4 + $0x2778] sm:$0xff]
  %v7997 = vld [vmem:[%s4 + $0x2780] sm:$0xff]
  %v7998 = vld [vmem:[%s4 + $0x2788] sm:$0xff]
  %v7999 = vld [vmem:[%s4 + $0x2790] sm:$0xff]
  %v8000 = vld [vmem:[%s4 + $0x2798] sm:$0xff]
  %v8001 = vld [vmem:[%s4 + $0x27a0] sm:$0xff]
  %v8002 = vld [vmem:[%s4 + $0x27a8] sm:$0xff]
  %v8003 = vld [vmem:[%s4 + $0x27b0] sm:$0xff]
  %v8004 = vld [vmem:[%s4 + $0x27b8] sm:$0xff]
  %v8005 = vld [vmem:[%s4 + $0x27c0] sm:$0xff]
  %v8006 = vld [vmem:[%s4 + $0x27c8] sm:$0xff]
  %v8007 = vld [vmem:[%s4 + $0x27d0] sm:$0xff]
  %v8008 = vld [vmem:[%s4 + $0x27d8] sm:$0xff]
  %v8009 = vld [vmem:[%s4 + $0x27e0] sm:$0xff]
  %v8010 = vld [vmem:[%s4 + $0x27e8] sm:$0xff]
  %v8011 = vld [vmem:[%s4 + $0x27f0] sm:$0xff]
  %v8012 = vld [vmem:[%s4 + $0x27f8] sm:$0xff]
  %v8013 = vld [vmem:[%s4 + $0x2800] sm:$0xff]
  %v8014 = vld [vmem:[%s4 + $0x2808] sm:$0xff]
  %v8015 = vld [vmem:[%s4 + $0x2810] sm:$0xff]
  %v8016 = vld [vmem:[%s4 + $0x2818] sm:$0xff]
  %v8017 = vld [vmem:[%s4 + $0x2820] sm:$0xff]
  %v8018 = vld [vmem:[%s4 + $0x2828] sm:$0xff]
  %v8019 = vld [vmem:[%s4 + $0x2830] sm:$0xff]
  %v8020 = vld [vmem:[%s4 + $0x2838] sm:$0xff]
  %v8021 = vld [vmem:[%s4 + $0x2840] sm:$0xff]
  %v8022 = vld [vmem:[%s4 + $0x2848] sm:$0xff]
  %v8023 = vld [vmem:[%s4 + $0x2850] sm:$0xff]
  %v8024 = vld [vmem:[%s4 + $0x2858] sm:$0xff]
  %v8025 = vld [vmem:[%s4 + $0x2860] sm:$0xff]
  %v8026 = vld [vmem:[%s4 + $0x2868] sm:$0xff]
  %v8027 = vld [vmem:[%s4 + $0x2870] sm:$0xff]
  %v8028 = vld [vmem:[%s4 + $0x2878] sm:$0xff]
  %v8029 = vld [vmem:[%s4 + $0x2880] sm:$0xff]
  %v8030 = vld [vmem:[%s4 + $0x2888] sm:$0xff]
  %v8031 = vld [vmem:[%s4 + $0x2890] sm:$0xff]
  %v8032 = vld [vmem:[%s4 + $0x2898] sm:$0xff]
  %v8033 = vld [vmem:[%s4 + $0x28a0] sm:$0xff]
  %v8034 = vld [vmem:[%s4 + $0x28a8] sm:$0xff]
  %v8035 = vld [vmem:[%s4 + $0x28b0] sm:$0xff]
  %v8036 = vld [vmem:[%s4 + $0x28b8] sm:$0xff]
  %v8037 = vld [vmem:[%s4 + $0x28c0] sm:$0xff]
  %v8038 = vld [vmem:[%s4 + $0x28c8] sm:$0xff]
  %v8039 = vld [vmem:[%s4 + $0x28d0] sm:$0xff]
  %v8040 = vld [vmem:[%s4 + $0x28d8] sm:$0xff]
  %v8041 = vld [vmem:[%s4 + $0x28e0] sm:$0xff]
  %v8042 = vld [vmem:[%s4 + $0x28e8] sm:$0xff]
  %v8043 = vld [vmem:[%s4 + $0x28f0] sm:$0xff]
  %v8044 = vld [vmem:[%s4 + $0x28f8] sm:$0xff]
  %v8045 = vld [vmem:[%s4 + $0x2900] sm:$0xff]
  %v8046 = vld [vmem:[%s4 + $0x2908] sm:$0xff]
  %v8047 = vld [vmem:[%s4 + $0x2910] sm:$0xff]
  %v8048 = vld [vmem:[%s4 + $0x2918] sm:$0xff]
  %v8049 = vld [vmem:[%s4 + $0x2920] sm:$0xff]
  %v8050 = vld [vmem:[%s4 + $0x2928] sm:$0xff]
  %v8051 = vld [vmem:[%s4 + $0x2930] sm:$0xff]
  %v8052 = vld [vmem:[%s4 + $0x2938] sm:$0xff]
  %v8053 = vld [vmem:[%s4 + $0x2940] sm:$0xff]
  %v8054 = vld [vmem:[%s4 + $0x2948] sm:$0xff]
  %v8055 = vld [vmem:[%s4 + $0x2950] sm:$0xff]
  %v8056 = vld [vmem:[%s4 + $0x2958] sm:$0xff]
  %v8057 = vld [vmem:[%s4 + $0x2960] sm:$0xff]
  %v8058 = vld [vmem:[%s4 + $0x2968] sm:$0xff]
  %v8059 = vld [vmem:[%s4 + $0x2970] sm:$0xff]
  %v8060 = vld [vmem:[%s4 + $0x2978] sm:$0xff]
  %v8061 = vld [vmem:[%s4 + $0x2980] sm:$0xff]
  %v8062 = vld [vmem:[%s4 + $0x2988] sm:$0xff]
  %v8063 = vld [vmem:[%s4 + $0x2990] sm:$0xff]
  %v8064 = vld [vmem:[%s4 + $0x2998] sm:$0xff]
  %v8065 = vld [vmem:[%s4 + $0x29a0] sm:$0xff]
  %v8066 = vld [vmem:[%s4 + $0x29a8] sm:$0xff]
  %v8067 = vld [vmem:[%s4 + $0x29b0] sm:$0xff]
  %v8068 = vld [vmem:[%s4 + $0x29b8] sm:$0xff]
  %v8069 = vld [vmem:[%s4 + $0x29c0] sm:$0xff]
  %v8070 = vld [vmem:[%s4 + $0x29c8] sm:$0xff]
  %v8071 = vld [vmem:[%s4 + $0x29d0] sm:$0xff]
  %v8072 = vld [vmem:[%s4 + $0x29d8] sm:$0xff]
  %v8073 = vld [vmem:[%s4 + $0x29e0] sm:$0xff]
  %v8074 = vld [vmem:[%s4 + $0x29e8] sm:$0xff]
  %v8075 = vld [vmem:[%s4 + $0x29f0] sm:$0xff]
  %v8076 = vld [vmem:[%s4 + $0x29f8] sm:$0xff]
  %v8077 = vld [vmem:[%s4 + $0x2a00] sm:$0xff]
  %v8078 = vld [vmem:[%s4 + $0x2a08] sm:$0xff]
  %v8079 = vld [vmem:[%s4 + $0x2a10] sm:$0xff]
  %v8080 = vld [vmem:[%s4 + $0x2a18] sm:$0xff]
  %v8081 = vld [vmem:[%s4 + $0x2a20] sm:$0xff]
  %v8082 = vld [vmem:[%s4 + $0x2a28] sm:$0xff]
  %v8083 = vld [vmem:[%s4 + $0x2a30] sm:$0xff]
  %v8084 = vld [vmem:[%s4 + $0x2a38] sm:$0xff]
  %v8085 = vld [vmem:[%s4 + $0x2a40] sm:$0xff]
  %v8086 = vld [vmem:[%s4 + $0x2a48] sm:$0xff]
  %v8087 = vld [vmem:[%s4 + $0x2a50] sm:$0xff]
  %v8088 = vld [vmem:[%s4 + $0x2a58] sm:$0xff]
  %v8089 = vld [vmem:[%s4 + $0x2a60] sm:$0xff]
  %v8090 = vld [vmem:[%s4 + $0x2a68] sm:$0xff]
  %v8091 = vld [vmem:[%s4 + $0x2a70] sm:$0xff]
  %v8092 = vld [vmem:[%s4 + $0x2a78] sm:$0xff]
  %v8093 = vld [vmem:[%s4 + $0x2a80] sm:$0xff]
  %v8094 = vld [vmem:[%s4 + $0x2a88] sm:$0xff]
  %v8095 = vld [vmem:[%s4 + $0x2a90] sm:$0xff]
  %v8096 = vld [vmem:[%s4 + $0x2a98] sm:$0xff]
  %v8097 = vld [vmem:[%s4 + $0x2aa0] sm:$0xff]
  %v8098 = vld [vmem:[%s4 + $0x2aa8] sm:$0xff]
  %v8099 = vld [vmem:[%s4 + $0x2ab0] sm:$0xff]
  %v8100 = vld [vmem:[%s4 + $0x2ab8] sm:$0xff]
  %v8101 = vld [vmem:[%s4 + $0x2ac0] sm:$0xff]
  %v8102 = vld [vmem:[%s4 + $0x2ac8] sm:$0xff]
  %v8103 = vld [vmem:[%s4 + $0x2ad0] sm:$0xff]
  %v8104 = vld [vmem:[%s4 + $0x2ad8] sm:$0xff]
  %v8105 = vld [vmem:[%s4 + $0x2ae0] sm:$0xff]
  %v8106 = vld [vmem:[%s4 + $0x2ae8] sm:$0xff]
  %v8107 = vld [vmem:[%s4 + $0x2af0] sm:$0xff]
  %v8108 = vld [vmem:[%s4 + $0x2af8] sm:$0xff]
  %v8109 = vld [vmem:[%s4 + $0x2b00] sm:$0xff]
  %v8110 = vld [vmem:[%s4 + $0x2b08] sm:$0xff]
  %v8111 = vld [vmem:[%s4 + $0x2b10] sm:$0xff]
  %v8112 = vld [vmem:[%s4 + $0x2b18] sm:$0xff]
  %v8113 = vld [vmem:[%s4 + $0x2b20] sm:$0xff]
  %v8114 = vld [vmem:[%s4 + $0x2b28] sm:$0xff]
  %v8115 = vld [vmem:[%s4 + $0x2b30] sm:$0xff]
  %v8116 = vld [vmem:[%s4 + $0x2b38] sm:$0xff]
  %v8117 = vld [vmem:[%s4 + $0x2b40] sm:$0xff]
  %v8118 = vld [vmem:[%s4 + $0x2b48] sm:$0xff]
  %v8119 = vld [vmem:[%s4 + $0x2b50] sm:$0xff]
  %v8120 = vld [vmem:[%s4 + $0x2b58] sm:$0xff]
  %v8121 = vld [vmem:[%s4 + $0x2b60] sm:$0xff]
  %v8122 = vld [vmem:[%s4 + $0x2b68] sm:$0xff]
  %v8123 = vld [vmem:[%s4 + $0x2b70] sm:$0xff]
  %v8124 = vld [vmem:[%s4 + $0x2b78] sm:$0xff]
  %v8125 = vld [vmem:[%s4 + $0x2b80] sm:$0xff]
  %v8126 = vld [vmem:[%s4 + $0x2b88] sm:$0xff]
  %v8127 = vld [vmem:[%s4 + $0x2b90] sm:$0xff]
  %v8128 = vld [vmem:[%s4 + $0x2b98] sm:$0xff]
  %v8129 = vld [vmem:[%s4 + $0x2ba0] sm:$0xff]
  %v8130 = vld [vmem:[%s4 + $0x2ba8] sm:$0xff]
  %v8131 = vld [vmem:[%s4 + $0x2bb0] sm:$0xff]
  %v8132 = vld [vmem:[%s4 + $0x2bb8] sm:$0xff]
  %v8133 = vld [vmem:[%s4 + $0x2bc0] sm:$0xff]
  %v8134 = vld [vmem:[%s4 + $0x2bc8] sm:$0xff]
  %v8135 = vld [vmem:[%s4 + $0x2bd0] sm:$0xff]
  %v8136 = vld [vmem:[%s4 + $0x2bd8] sm:$0xff]
  %v8137 = vld [vmem:[%s4 + $0x2be0] sm:$0xff]
  %v8138 = vld [vmem:[%s4 + $0x2be8] sm:$0xff]
  %v8139 = vld [vmem:[%s4 + $0x2bf0] sm:$0xff]
  %v8140 = vld [vmem:[%s4 + $0x2bf8] sm:$0xff]
  %v8141 = vld [vmem:[%s4 + $0x2c00] sm:$0xff]
  %v8142 = vld [vmem:[%s4 + $0x2c08] sm:$0xff]
  %v8143 = vld [vmem:[%s4 + $0x2c10] sm:$0xff]
  %v8144 = vld [vmem:[%s4 + $0x2c18] sm:$0xff]
  %v8145 = vld [vmem:[%s4 + $0x2c20] sm:$0xff]
  %v8146 = vld [vmem:[%s4 + $0x2c28] sm:$0xff]
  %v8147 = vld [vmem:[%s4 + $0x2c30] sm:$0xff]
  %v8148 = vld [vmem:[%s4 + $0x2c38] sm:$0xff]
  %v8149 = vld [vmem:[%s4 + $0x2c40] sm:$0xff]
  %v8150 = vld [vmem:[%s4 + $0x2c48] sm:$0xff]
  %v8151 = vld [vmem:[%s4 + $0x2c50] sm:$0xff]
  %v8152 = vld [vmem:[%s4 + $0x2c58] sm:$0xff]
  %v8153 = vld [vmem:[%s4 + $0x2c60] sm:$0xff]
  %v8154 = vld [vmem:[%s4 + $0x2c68] sm:$0xff]
  %v8155 = vld [vmem:[%s4 + $0x2c70] sm:$0xff]
  %v8156 = vld [vmem:[%s4 + $0x2c78] sm:$0xff]
  %v8157 = vld [vmem:[%s4 + $0x2c80] sm:$0xff]
  %v8158 = vld [vmem:[%s4 + $0x2c88] sm:$0xff]
  %v8159 = vld [vmem:[%s4 + $0x2c90] sm:$0xff]
  %v8160 = vld [vmem:[%s4 + $0x2c98] sm:$0xff]
  %v8161 = vld [vmem:[%s4 + $0x2ca0] sm:$0xff]
  %v8162 = vld [vmem:[%s4 + $0x2ca8] sm:$0xff]
  %v8163 = vld [vmem:[%s4 + $0x2cb0] sm:$0xff]
  %v8164 = vld [vmem:[%s4 + $0x2cb8] sm:$0xff]
  %v8165 = vld [vmem:[%s4 + $0x2cc0] sm:$0xff]
  %v8166 = vld [vmem:[%s4 + $0x2cc8] sm:$0xff]
  %v8167 = vld [vmem:[%s4 + $0x2cd0] sm:$0xff]
  %v8168 = vld [vmem:[%s4 + $0x2cd8] sm:$0xff]
  %v8169 = vld [vmem:[%s4 + $0x2ce0] sm:$0xff]
  %v8170 = vld [vmem:[%s4 + $0x2ce8] sm:$0xff]
  %v8171 = vld [vmem:[%s4 + $0x2cf0] sm:$0xff]
  %v8172 = vld [vmem:[%s4 + $0x2cf8] sm:$0xff]
  %v8173 = vld [vmem:[%s4 + $0x2d00] sm:$0xff]
  %v8174 = vld [vmem:[%s4 + $0x2d08] sm:$0xff]
  %v8175 = vld [vmem:[%s4 + $0x2d10] sm:$0xff]
  %v8176 = vld [vmem:[%s4 + $0x2d18] sm:$0xff]
  %v8177 = vld [vmem:[%s4 + $0x2d20] sm:$0xff]
  %v8178 = vld [vmem:[%s4 + $0x2d28] sm:$0xff]
  %v8179 = vld [vmem:[%s4 + $0x2d30] sm:$0xff]
  %v8180 = vld [vmem:[%s4 + $0x2d38] sm:$0xff]
  %v8181 = vld [vmem:[%s4 + $0x2d40] sm:$0xff]
  %v8182 = vld [vmem:[%s4 + $0x2d48] sm:$0xff]
  %v8183 = vld [vmem:[%s4 + $0x2d50] sm:$0xff]
  %v8184 = vld [vmem:[%s4 + $0x2d58] sm:$0xff]
  %v8185 = vld [vmem:[%s4 + $0x2d60] sm:$0xff]
  %v8186 = vld [vmem:[%s4 + $0x2d68] sm:$0xff]
  %v8187 = vld [vmem:[%s4 + $0x2d70] sm:$0xff]
  %v8188 = vld [vmem:[%s4 + $0x2d78] sm:$0xff]
  %v8189 = vld [vmem:[%s4 + $0x2d80] sm:$0xff]
  %v8190 = vld [vmem:[%s4 + $0x2d88] sm:$0xff]
  %v8191 = vld [vmem:[%s4 + $0x2d90] sm:$0xff]
  %v8192 = vld [vmem:[%s4 + $0x2d98] sm:$0xff]
  %v8193 = vld [vmem:[%s4 + $0x2da0] sm:$0xff]
  %v8194 = vld [vmem:[%s4 + $0x2da8] sm:$0xff]
  %v8195 = vld [vmem:[%s4 + $0x2db0] sm:$0xff]
  %v8196 = vld [vmem:[%s4 + $0x2db8] sm:$0xff]
  %v8197 = vld [vmem:[%s4 + $0x2dc0] sm:$0xff]
  %v8198 = vld [vmem:[%s4 + $0x2dc8] sm:$0xff]
  %v8199 = vld [vmem:[%s4 + $0x2dd0] sm:$0xff]
  %v8200 = vld [vmem:[%s4 + $0x2dd8] sm:$0xff]
  %v8201 = vld [vmem:[%s4 + $0x2de0] sm:$0xff]
  %v8202 = vld [vmem:[%s4 + $0x2de8] sm:$0xff]
  %v8203 = vld [vmem:[%s4 + $0x2df0] sm:$0xff]
  %v8204 = vld [vmem:[%s4 + $0x2df8] sm:$0xff]
  %v8205 = vld [vmem:[%s4 + $0x2e00] sm:$0xff]
  %v8206 = vld [vmem:[%s4 + $0x2e08] sm:$0xff]
  %v8207 = vld [vmem:[%s4 + $0x2e10] sm:$0xff]
  %v8208 = vld [vmem:[%s4 + $0x2e18] sm:$0xff]
  %v8209 = vld [vmem:[%s4 + $0x2e20] sm:$0xff]
  %v8210 = vld [vmem:[%s4 + $0x2e28] sm:$0xff]
  %v8211 = vld [vmem:[%s4 + $0x2e30] sm:$0xff]
  %v8212 = vld [vmem:[%s4 + $0x2e38] sm:$0xff]
  %v8213 = vld [vmem:[%s4 + $0x2e40] sm:$0xff]
  %v8214 = vld [vmem:[%s4 + $0x2e48] sm:$0xff]
  %v8215 = vld [vmem:[%s4 + $0x2e50] sm:$0xff]
  %v8216 = vld [vmem:[%s4 + $0x2e58] sm:$0xff]
  %v8217 = vld [vmem:[%s4 + $0x2e60] sm:$0xff]
  %v8218 = vld [vmem:[%s4 + $0x2e68] sm:$0xff]
  %v8219 = vld [vmem:[%s4 + $0x2e70] sm:$0xff]
  %v8220 = vld [vmem:[%s4 + $0x2e78] sm:$0xff]
  %v8221 = vld [vmem:[%s4 + $0x2e80] sm:$0xff]
  %v8222 = vld [vmem:[%s4 + $0x2e88] sm:$0xff]
  %v8223 = vld [vmem:[%s4 + $0x2e90] sm:$0xff]
  %v8224 = vld [vmem:[%s4 + $0x2e98] sm:$0xff]
  %v8225 = vld [vmem:[%s4 + $0x2ea0] sm:$0xff]
  %v8226 = vld [vmem:[%s4 + $0x2ea8] sm:$0xff]
  %v8227 = vld [vmem:[%s4 + $0x2eb0] sm:$0xff]
  %v8228 = vld [vmem:[%s4 + $0x2eb8] sm:$0xff]
  %v8229 = vld [vmem:[%s4 + $0x2ec0] sm:$0xff]
  %v8230 = vld [vmem:[%s4 + $0x2ec8] sm:$0xff]
  %v8231 = vld [vmem:[%s4 + $0x2ed0] sm:$0xff]
  %v8232 = vld [vmem:[%s4 + $0x2ed8] sm:$0xff]
  %v8233 = vld [vmem:[%s4 + $0x2ee0] sm:$0xff]
  %v8234 = vld [vmem:[%s4 + $0x2ee8] sm:$0xff]
  %v8235 = vld [vmem:[%s4 + $0x2ef0] sm:$0xff]
  %v8236 = vld [vmem:[%s4 + $0x2ef8] sm:$0xff]
  %v8237 = vld [vmem:[%s4 + $0x2f00] sm:$0xff]
  %v8238 = vld [vmem:[%s4 + $0x2f08] sm:$0xff]
  %v8239 = vld [vmem:[%s4 + $0x2f10] sm:$0xff]
  %v8240 = vld [vmem:[%s4 + $0x2f18] sm:$0xff]
  %v8241 = vld [vmem:[%s4 + $0x2f20] sm:$0xff]
  %v8242 = vld [vmem:[%s4 + $0x2f28] sm:$0xff]
  %v8243 = vld [vmem:[%s4 + $0x2f30] sm:$0xff]
  %v8244 = vld [vmem:[%s4 + $0x2f38] sm:$0xff]
  %v8245 = vld [vmem:[%s4 + $0x2f40] sm:$0xff]
  %v8246 = vld [vmem:[%s4 + $0x2f48] sm:$0xff]
  %v8247 = vld [vmem:[%s4 + $0x2f50] sm:$0xff]
  %v8248 = vld [vmem:[%s4 + $0x2f58] sm:$0xff]
  %v8249 = vld [vmem:[%s4 + $0x2f60] sm:$0xff]
  %v8250 = vld [vmem:[%s4 + $0x2f68] sm:$0xff]
  %v8251 = vld [vmem:[%s4 + $0x2f70] sm:$0xff]
  %v8252 = vld [vmem:[%s4 + $0x2f78] sm:$0xff]
  %v8253 = vld [vmem:[%s4 + $0x2f80] sm:$0xff]
  %v8254 = vld [vmem:[%s4 + $0x2f88] sm:$0xff]
  %v8255 = vld [vmem:[%s4 + $0x2f90] sm:$0xff]
  %v8256 = vld [vmem:[%s4 + $0x2f98] sm:$0xff]
  %v8257 = vld [vmem:[%s4 + $0x2fa0] sm:$0xff]
  %v8258 = vld [vmem:[%s4 + $0x2fa8] sm:$0xff]
  %v8259 = vld [vmem:[%s4 + $0x2fb0] sm:$0xff]
  %v8260 = vld [vmem:[%s4 + $0x2fb8] sm:$0xff]
  %v8261 = vld [vmem:[%s4 + $0x2fc0] sm:$0xff]
  %v8262 = vld [vmem:[%s4 + $0x2fc8] sm:$0xff]
  %v8263 = vld [vmem:[%s4 + $0x2fd0] sm:$0xff]
  %v8264 = vld [vmem:[%s4 + $0x2fd8] sm:$0xff]
  %v8265 = vld [vmem:[%s4 + $0x2fe0] sm:$0xff]
  %v8266 = vld [vmem:[%s4 + $0x2fe8] sm:$0xff]
  %v8267 = vld [vmem:[%s4 + $0x2ff0] sm:$0xff]
  %v8268 = vld [vmem:[%s4 + $0x2ff8] sm:$0xff]
  %v8285 = vunpack.c.l.b16 %v7741
  %v8286 = vunpack.c.h.b16 %v7741
  %v8287 = vunpack.c.l.b16 %v7742
  %v8288 = vunpack.c.h.b16 %v7742
  %v8289 = vunpack.c.l.b16 %v7743
  %v8290 = vunpack.c.h.b16 %v7743
  %v8291 = vunpack.c.l.b16 %v7744
  %v8292 = vunpack.c.h.b16 %v7744
  %v8293 = vunpack.c.l.b16 %v7745
  %v8294 = vunpack.c.h.b16 %v7745
  %v8295 = vunpack.c.l.b16 %v7746
  %v8296 = vunpack.c.h.b16 %v7746
  %v8297 = vunpack.c.l.b16 %v7747
  %v8298 = vunpack.c.h.b16 %v7747
  %v8299 = vunpack.c.l.b16 %v7748
  %v8300 = vunpack.c.h.b16 %v7748
  %v8301 = vunpack.c.l.b16 %v7749
  %v8302 = vunpack.c.h.b16 %v7749
  %v8303 = vunpack.c.l.b16 %v7750
  %v8304 = vunpack.c.h.b16 %v7750
  %v8305 = vunpack.c.l.b16 %v7751
  %v8306 = vunpack.c.h.b16 %v7751
  %v8307 = vunpack.c.l.b16 %v7752
  %v8308 = vunpack.c.h.b16 %v7752
  %v8309 = vunpack.c.l.b16 %v7753
  %v8310 = vunpack.c.h.b16 %v7753
  %v8311 = vunpack.c.l.b16 %v7754
  %v8312 = vunpack.c.h.b16 %v7754
  %v8313 = vunpack.c.l.b16 %v7755
  %v8314 = vunpack.c.h.b16 %v7755
  %v8315 = vunpack.c.l.b16 %v7756
  %v8316 = vunpack.c.h.b16 %v7756
  %v8317 = vpack.c.b16 %v8301, %v8285
  %v8318 = vpack.c.b16 %v8302, %v8286
  %v8319 = vpack.c.b16 %v8303, %v8287
  %v8320 = vpack.c.b16 %v8304, %v8288
  %v8321 = vpack.c.b16 %v8305, %v8289
  %v8322 = vpack.c.b16 %v8306, %v8290
  %v8323 = vpack.c.b16 %v8307, %v8291
  %v8324 = vpack.c.b16 %v8308, %v8292
  %v8325 = vpack.c.b16 %v8309, %v8293
  %v8326 = vpack.c.b16 %v8310, %v8294
  %v8327 = vpack.c.b16 %v8311, %v8295
  %v8328 = vpack.c.b16 %v8312, %v8296
  %v8329 = vpack.c.b16 %v8313, %v8297
  %v8330 = vpack.c.b16 %v8314, %v8298
  %v8331 = vpack.c.b16 %v8315, %v8299
  %v8332 = vpack.c.b16 %v8316, %v8300
  %v8861 = vunpack.c.l.b16 %v7757
  %v8862 = vunpack.c.h.b16 %v7757
  %v8863 = vunpack.c.l.b16 %v7758
  %v8864 = vunpack.c.h.b16 %v7758
  %v8865 = vunpack.c.l.b16 %v7759
  %v8866 = vunpack.c.h.b16 %v7759
  %v8867 = vunpack.c.l.b16 %v7760
  %v8868 = vunpack.c.h.b16 %v7760
  %v8869 = vunpack.c.l.b16 %v7761
  %v8870 = vunpack.c.h.b16 %v7761
  %v8871 = vunpack.c.l.b16 %v7762
  %v8872 = vunpack.c.h.b16 %v7762
  %v8873 = vunpack.c.l.b16 %v7763
  %v8874 = vunpack.c.h.b16 %v7763
  %v8875 = vunpack.c.l.b16 %v7764
  %v8876 = vunpack.c.h.b16 %v7764
  %v8877 = vunpack.c.l.b16 %v7765
  %v8878 = vunpack.c.h.b16 %v7765
  %v8879 = vunpack.c.l.b16 %v7766
  %v8880 = vunpack.c.h.b16 %v7766
  %v8881 = vunpack.c.l.b16 %v7767
  %v8882 = vunpack.c.h.b16 %v7767
  %v8883 = vunpack.c.l.b16 %v7768
  %v8884 = vunpack.c.h.b16 %v7768
  %v8885 = vunpack.c.l.b16 %v7769
  %v8886 = vunpack.c.h.b16 %v7769
  %v8887 = vunpack.c.l.b16 %v7770
  %v8888 = vunpack.c.h.b16 %v7770
  %v8889 = vunpack.c.l.b16 %v7771
  %v8890 = vunpack.c.h.b16 %v7771
  %v8891 = vunpack.c.l.b16 %v7772
  %v8892 = vunpack.c.h.b16 %v7772
  %v8893 = vunpack.c.l.b16 %v7773
  %v8894 = vunpack.c.h.b16 %v7773
  %v8895 = vunpack.c.l.b16 %v7774
  %v8896 = vunpack.c.h.b16 %v7774
  %v8897 = vunpack.c.l.b16 %v7775
  %v8898 = vunpack.c.h.b16 %v7775
  %v8899 = vunpack.c.l.b16 %v7776
  %v8900 = vunpack.c.h.b16 %v7776
  %v8901 = vunpack.c.l.b16 %v7777
  %v8902 = vunpack.c.h.b16 %v7777
  %v8903 = vunpack.c.l.b16 %v7778
  %v8904 = vunpack.c.h.b16 %v7778
  %v8905 = vunpack.c.l.b16 %v7779
  %v8906 = vunpack.c.h.b16 %v7779
  %v8907 = vunpack.c.l.b16 %v7780
  %v8908 = vunpack.c.h.b16 %v7780
  %v8909 = vunpack.c.l.b16 %v7781
  %v8910 = vunpack.c.h.b16 %v7781
  %v8911 = vunpack.c.l.b16 %v7782
  %v8912 = vunpack.c.h.b16 %v7782
  %v8913 = vunpack.c.l.b16 %v7783
  %v8914 = vunpack.c.h.b16 %v7783
  %v8915 = vunpack.c.l.b16 %v7784
  %v8916 = vunpack.c.h.b16 %v7784
  %v8917 = vunpack.c.l.b16 %v7785
  %v8918 = vunpack.c.h.b16 %v7785
  %v8919 = vunpack.c.l.b16 %v7786
  %v8920 = vunpack.c.h.b16 %v7786
  %v8921 = vunpack.c.l.b16 %v7787
  %v8922 = vunpack.c.h.b16 %v7787
  %v8923 = vunpack.c.l.b16 %v7788
  %v8924 = vunpack.c.h.b16 %v7788
  %v8925 = vunpack.c.l.b16 %v7789
  %v8926 = vunpack.c.h.b16 %v7789
  %v8927 = vunpack.c.l.b16 %v7790
  %v8928 = vunpack.c.h.b16 %v7790
  %v8929 = vunpack.c.l.b16 %v7791
  %v8930 = vunpack.c.h.b16 %v7791
  %v8931 = vunpack.c.l.b16 %v7792
  %v8932 = vunpack.c.h.b16 %v7792
  %v8933 = vunpack.c.l.b16 %v7793
  %v8934 = vunpack.c.h.b16 %v7793
  %v8935 = vunpack.c.l.b16 %v7794
  %v8936 = vunpack.c.h.b16 %v7794
  %v8937 = vunpack.c.l.b16 %v7795
  %v8938 = vunpack.c.h.b16 %v7795
  %v8939 = vunpack.c.l.b16 %v7796
  %v8940 = vunpack.c.h.b16 %v7796
  %v8941 = vunpack.c.l.b16 %v7797
  %v8942 = vunpack.c.h.b16 %v7797
  %v8943 = vunpack.c.l.b16 %v7798
  %v8944 = vunpack.c.h.b16 %v7798
  %v8945 = vunpack.c.l.b16 %v7799
  %v8946 = vunpack.c.h.b16 %v7799
  %v8947 = vunpack.c.l.b16 %v7800
  %v8948 = vunpack.c.h.b16 %v7800
  %v8949 = vunpack.c.l.b16 %v7801
  %v8950 = vunpack.c.h.b16 %v7801
  %v8951 = vunpack.c.l.b16 %v7802
  %v8952 = vunpack.c.h.b16 %v7802
  %v8953 = vunpack.c.l.b16 %v7803
  %v8954 = vunpack.c.h.b16 %v7803
  %v8955 = vunpack.c.l.b16 %v7804
  %v8956 = vunpack.c.h.b16 %v7804
  %v8957 = vunpack.c.l.b16 %v7805
  %v8958 = vunpack.c.h.b16 %v7805
  %v8959 = vunpack.c.l.b16 %v7806
  %v8960 = vunpack.c.h.b16 %v7806
  %v8961 = vunpack.c.l.b16 %v7807
  %v8962 = vunpack.c.h.b16 %v7807
  %v8963 = vunpack.c.l.b16 %v7808
  %v8964 = vunpack.c.h.b16 %v7808
  %v8965 = vunpack.c.l.b16 %v7809
  %v8966 = vunpack.c.h.b16 %v7809
  %v8967 = vunpack.c.l.b16 %v7810
  %v8968 = vunpack.c.h.b16 %v7810
  %v8969 = vunpack.c.l.b16 %v7811
  %v8970 = vunpack.c.h.b16 %v7811
  %v8971 = vunpack.c.l.b16 %v7812
  %v8972 = vunpack.c.h.b16 %v7812
  %v8973 = vunpack.c.l.b16 %v7813
  %v8974 = vunpack.c.h.b16 %v7813
  %v8975 = vunpack.c.l.b16 %v7814
  %v8976 = vunpack.c.h.b16 %v7814
  %v8977 = vunpack.c.l.b16 %v7815
  %v8978 = vunpack.c.h.b16 %v7815
  %v8979 = vunpack.c.l.b16 %v7816
  %v8980 = vunpack.c.h.b16 %v7816
  %v8981 = vunpack.c.l.b16 %v7817
  %v8982 = vunpack.c.h.b16 %v7817
  %v8983 = vunpack.c.l.b16 %v7818
  %v8984 = vunpack.c.h.b16 %v7818
  %v8985 = vunpack.c.l.b16 %v7819
  %v8986 = vunpack.c.h.b16 %v7819
  %v8987 = vunpack.c.l.b16 %v7820
  %v8988 = vunpack.c.h.b16 %v7820
  %v8989 = vunpack.c.l.b16 %v7821
  %v8990 = vunpack.c.h.b16 %v7821
  %v8991 = vunpack.c.l.b16 %v7822
  %v8992 = vunpack.c.h.b16 %v7822
  %v8993 = vunpack.c.l.b16 %v7823
  %v8994 = vunpack.c.h.b16 %v7823
  %v8995 = vunpack.c.l.b16 %v7824
  %v8996 = vunpack.c.h.b16 %v7824
  %v8997 = vunpack.c.l.b16 %v7825
  %v8998 = vunpack.c.h.b16 %v7825
  %v8999 = vunpack.c.l.b16 %v7826
  %v9000 = vunpack.c.h.b16 %v7826
  %v9001 = vunpack.c.l.b16 %v7827
  %v9002 = vunpack.c.h.b16 %v7827
  %v9003 = vunpack.c.l.b16 %v7828
  %v9004 = vunpack.c.h.b16 %v7828
  %v9005 = vunpack.c.l.b16 %v7829
  %v9006 = vunpack.c.h.b16 %v7829
  %v9007 = vunpack.c.l.b16 %v7830
  %v9008 = vunpack.c.h.b16 %v7830
  %v9009 = vunpack.c.l.b16 %v7831
  %v9010 = vunpack.c.h.b16 %v7831
  %v9011 = vunpack.c.l.b16 %v7832
  %v9012 = vunpack.c.h.b16 %v7832
  %v9013 = vunpack.c.l.b16 %v7833
  %v9014 = vunpack.c.h.b16 %v7833
  %v9015 = vunpack.c.l.b16 %v7834
  %v9016 = vunpack.c.h.b16 %v7834
  %v9017 = vunpack.c.l.b16 %v7835
  %v9018 = vunpack.c.h.b16 %v7835
  %v9019 = vunpack.c.l.b16 %v7836
  %v9020 = vunpack.c.h.b16 %v7836
  %v9021 = vunpack.c.l.b16 %v7837
  %v9022 = vunpack.c.h.b16 %v7837
  %v9023 = vunpack.c.l.b16 %v7838
  %v9024 = vunpack.c.h.b16 %v7838
  %v9025 = vunpack.c.l.b16 %v7839
  %v9026 = vunpack.c.h.b16 %v7839
  %v9027 = vunpack.c.l.b16 %v7840
  %v9028 = vunpack.c.h.b16 %v7840
  %v9029 = vunpack.c.l.b16 %v7841
  %v9030 = vunpack.c.h.b16 %v7841
  %v9031 = vunpack.c.l.b16 %v7842
  %v9032 = vunpack.c.h.b16 %v7842
  %v9033 = vunpack.c.l.b16 %v7843
  %v9034 = vunpack.c.h.b16 %v7843
  %v9035 = vunpack.c.l.b16 %v7844
  %v9036 = vunpack.c.h.b16 %v7844
  %v9037 = vunpack.c.l.b16 %v7845
  %v9038 = vunpack.c.h.b16 %v7845
  %v9039 = vunpack.c.l.b16 %v7846
  %v9040 = vunpack.c.h.b16 %v7846
  %v9041 = vunpack.c.l.b16 %v7847
  %v9042 = vunpack.c.h.b16 %v7847
  %v9043 = vunpack.c.l.b16 %v7848
  %v9044 = vunpack.c.h.b16 %v7848
  %v9045 = vunpack.c.l.b16 %v7849
  %v9046 = vunpack.c.h.b16 %v7849
  %v9047 = vunpack.c.l.b16 %v7850
  %v9048 = vunpack.c.h.b16 %v7850
  %v9049 = vunpack.c.l.b16 %v7851
  %v9050 = vunpack.c.h.b16 %v7851
  %v9051 = vunpack.c.l.b16 %v7852
  %v9052 = vunpack.c.h.b16 %v7852
  %v9053 = vunpack.c.l.b16 %v7853
  %v9054 = vunpack.c.h.b16 %v7853
  %v9055 = vunpack.c.l.b16 %v7854
  %v9056 = vunpack.c.h.b16 %v7854
  %v9057 = vunpack.c.l.b16 %v7855
  %v9058 = vunpack.c.h.b16 %v7855
  %v9059 = vunpack.c.l.b16 %v7856
  %v9060 = vunpack.c.h.b16 %v7856
  %v9061 = vunpack.c.l.b16 %v7857
  %v9062 = vunpack.c.h.b16 %v7857
  %v9063 = vunpack.c.l.b16 %v7858
  %v9064 = vunpack.c.h.b16 %v7858
  %v9065 = vunpack.c.l.b16 %v7859
  %v9066 = vunpack.c.h.b16 %v7859
  %v9067 = vunpack.c.l.b16 %v7860
  %v9068 = vunpack.c.h.b16 %v7860
  %v9069 = vunpack.c.l.b16 %v7861
  %v9070 = vunpack.c.h.b16 %v7861
  %v9071 = vunpack.c.l.b16 %v7862
  %v9072 = vunpack.c.h.b16 %v7862
  %v9073 = vunpack.c.l.b16 %v7863
  %v9074 = vunpack.c.h.b16 %v7863
  %v9075 = vunpack.c.l.b16 %v7864
  %v9076 = vunpack.c.h.b16 %v7864
  %v9077 = vunpack.c.l.b16 %v7865
  %v9078 = vunpack.c.h.b16 %v7865
  %v9079 = vunpack.c.l.b16 %v7866
  %v9080 = vunpack.c.h.b16 %v7866
  %v9081 = vunpack.c.l.b16 %v7867
  %v9082 = vunpack.c.h.b16 %v7867
  %v9083 = vunpack.c.l.b16 %v7868
  %v9084 = vunpack.c.h.b16 %v7868
  %v9085 = vunpack.c.l.b16 %v7869
  %v9086 = vunpack.c.h.b16 %v7869
  %v9087 = vunpack.c.l.b16 %v7870
  %v9088 = vunpack.c.h.b16 %v7870
  %v9089 = vunpack.c.l.b16 %v7871
  %v9090 = vunpack.c.h.b16 %v7871
  %v9091 = vunpack.c.l.b16 %v7872
  %v9092 = vunpack.c.h.b16 %v7872
  %v9093 = vunpack.c.l.b16 %v7873
  %v9094 = vunpack.c.h.b16 %v7873
  %v9095 = vunpack.c.l.b16 %v7874
  %v9096 = vunpack.c.h.b16 %v7874
  %v9097 = vunpack.c.l.b16 %v7875
  %v9098 = vunpack.c.h.b16 %v7875
  %v9099 = vunpack.c.l.b16 %v7876
  %v9100 = vunpack.c.h.b16 %v7876
  %v9101 = vunpack.c.l.b16 %v7877
  %v9102 = vunpack.c.h.b16 %v7877
  %v9103 = vunpack.c.l.b16 %v7878
  %v9104 = vunpack.c.h.b16 %v7878
  %v9105 = vunpack.c.l.b16 %v7879
  %v9106 = vunpack.c.h.b16 %v7879
  %v9107 = vunpack.c.l.b16 %v7880
  %v9108 = vunpack.c.h.b16 %v7880
  %v9109 = vunpack.c.l.b16 %v7881
  %v9110 = vunpack.c.h.b16 %v7881
  %v9111 = vunpack.c.l.b16 %v7882
  %v9112 = vunpack.c.h.b16 %v7882
  %v9113 = vunpack.c.l.b16 %v7883
  %v9114 = vunpack.c.h.b16 %v7883
  %v9115 = vunpack.c.l.b16 %v7884
  %v9116 = vunpack.c.h.b16 %v7884
  %v9117 = vunpack.c.l.b16 %v7885
  %v9118 = vunpack.c.h.b16 %v7885
  %v9119 = vunpack.c.l.b16 %v7886
  %v9120 = vunpack.c.h.b16 %v7886
  %v9121 = vunpack.c.l.b16 %v7887
  %v9122 = vunpack.c.h.b16 %v7887
  %v9123 = vunpack.c.l.b16 %v7888
  %v9124 = vunpack.c.h.b16 %v7888
  %v9125 = vunpack.c.l.b16 %v7889
  %v9126 = vunpack.c.h.b16 %v7889
  %v9127 = vunpack.c.l.b16 %v7890
  %v9128 = vunpack.c.h.b16 %v7890
  %v9129 = vunpack.c.l.b16 %v7891
  %v9130 = vunpack.c.h.b16 %v7891
  %v9131 = vunpack.c.l.b16 %v7892
  %v9132 = vunpack.c.h.b16 %v7892
  %v9133 = vunpack.c.l.b16 %v7893
  %v9134 = vunpack.c.h.b16 %v7893
  %v9135 = vunpack.c.l.b16 %v7894
  %v9136 = vunpack.c.h.b16 %v7894
  %v9137 = vunpack.c.l.b16 %v7895
  %v9138 = vunpack.c.h.b16 %v7895
  %v9139 = vunpack.c.l.b16 %v7896
  %v9140 = vunpack.c.h.b16 %v7896
  %v9141 = vunpack.c.l.b16 %v7897
  %v9142 = vunpack.c.h.b16 %v7897
  %v9143 = vunpack.c.l.b16 %v7898
  %v9144 = vunpack.c.h.b16 %v7898
  %v9145 = vunpack.c.l.b16 %v7899
  %v9146 = vunpack.c.h.b16 %v7899
  %v9147 = vunpack.c.l.b16 %v7900
  %v9148 = vunpack.c.h.b16 %v7900
  %v9149 = vunpack.c.l.b16 %v7901
  %v9150 = vunpack.c.h.b16 %v7901
  %v9151 = vunpack.c.l.b16 %v7902
  %v9152 = vunpack.c.h.b16 %v7902
  %v9153 = vunpack.c.l.b16 %v7903
  %v9154 = vunpack.c.h.b16 %v7903
  %v9155 = vunpack.c.l.b16 %v7904
  %v9156 = vunpack.c.h.b16 %v7904
  %v9157 = vunpack.c.l.b16 %v7905
  %v9158 = vunpack.c.h.b16 %v7905
  %v9159 = vunpack.c.l.b16 %v7906
  %v9160 = vunpack.c.h.b16 %v7906
  %v9161 = vunpack.c.l.b16 %v7907
  %v9162 = vunpack.c.h.b16 %v7907
  %v9163 = vunpack.c.l.b16 %v7908
  %v9164 = vunpack.c.h.b16 %v7908
  %v9165 = vunpack.c.l.b16 %v7909
  %v9166 = vunpack.c.h.b16 %v7909
  %v9167 = vunpack.c.l.b16 %v7910
  %v9168 = vunpack.c.h.b16 %v7910
  %v9169 = vunpack.c.l.b16 %v7911
  %v9170 = vunpack.c.h.b16 %v7911
  %v9171 = vunpack.c.l.b16 %v7912
  %v9172 = vunpack.c.h.b16 %v7912
  %v9173 = vunpack.c.l.b16 %v7913
  %v9174 = vunpack.c.h.b16 %v7913
  %v9175 = vunpack.c.l.b16 %v7914
  %v9176 = vunpack.c.h.b16 %v7914
  %v9177 = vunpack.c.l.b16 %v7915
  %v9178 = vunpack.c.h.b16 %v7915
  %v9179 = vunpack.c.l.b16 %v7916
  %v9180 = vunpack.c.h.b16 %v7916
  %v9181 = vunpack.c.l.b16 %v7917
  %v9182 = vunpack.c.h.b16 %v7917
  %v9183 = vunpack.c.l.b16 %v7918
  %v9184 = vunpack.c.h.b16 %v7918
  %v9185 = vunpack.c.l.b16 %v7919
  %v9186 = vunpack.c.h.b16 %v7919
  %v9187 = vunpack.c.l.b16 %v7920
  %v9188 = vunpack.c.h.b16 %v7920
  %v9189 = vunpack.c.l.b16 %v7921
  %v9190 = vunpack.c.h.b16 %v7921
  %v9191 = vunpack.c.l.b16 %v7922
  %v9192 = vunpack.c.h.b16 %v7922
  %v9193 = vunpack.c.l.b16 %v7923
  %v9194 = vunpack.c.h.b16 %v7923
  %v9195 = vunpack.c.l.b16 %v7924
  %v9196 = vunpack.c.h.b16 %v7924
  %v9197 = vunpack.c.l.b16 %v7925
  %v9198 = vunpack.c.h.b16 %v7925
  %v9199 = vunpack.c.l.b16 %v7926
  %v9200 = vunpack.c.h.b16 %v7926
  %v9201 = vunpack.c.l.b16 %v7927
  %v9202 = vunpack.c.h.b16 %v7927
  %v9203 = vunpack.c.l.b16 %v7928
  %v9204 = vunpack.c.h.b16 %v7928
  %v9205 = vunpack.c.l.b16 %v7929
  %v9206 = vunpack.c.h.b16 %v7929
  %v9207 = vunpack.c.l.b16 %v7930
  %v9208 = vunpack.c.h.b16 %v7930
  %v9209 = vunpack.c.l.b16 %v7931
  %v9210 = vunpack.c.h.b16 %v7931
  %v9211 = vunpack.c.l.b16 %v7932
  %v9212 = vunpack.c.h.b16 %v7932
  %v9213 = vunpack.c.l.b16 %v7933
  %v9214 = vunpack.c.h.b16 %v7933
  %v9215 = vunpack.c.l.b16 %v7934
  %v9216 = vunpack.c.h.b16 %v7934
  %v9217 = vunpack.c.l.b16 %v7935
  %v9218 = vunpack.c.h.b16 %v7935
  %v9219 = vunpack.c.l.b16 %v7936
  %v9220 = vunpack.c.h.b16 %v7936
  %v9221 = vunpack.c.l.b16 %v7937
  %v9222 = vunpack.c.h.b16 %v7937
  %v9223 = vunpack.c.l.b16 %v7938
  %v9224 = vunpack.c.h.b16 %v7938
  %v9225 = vunpack.c.l.b16 %v7939
  %v9226 = vunpack.c.h.b16 %v7939
  %v9227 = vunpack.c.l.b16 %v7940
  %v9228 = vunpack.c.h.b16 %v7940
  %v9229 = vunpack.c.l.b16 %v7941
  %v9230 = vunpack.c.h.b16 %v7941
  %v9231 = vunpack.c.l.b16 %v7942
  %v9232 = vunpack.c.h.b16 %v7942
  %v9233 = vunpack.c.l.b16 %v7943
  %v9234 = vunpack.c.h.b16 %v7943
  %v9235 = vunpack.c.l.b16 %v7944
  %v9236 = vunpack.c.h.b16 %v7944
  %v9237 = vunpack.c.l.b16 %v7945
  %v9238 = vunpack.c.h.b16 %v7945
  %v9239 = vunpack.c.l.b16 %v7946
  %v9240 = vunpack.c.h.b16 %v7946
  %v9241 = vunpack.c.l.b16 %v7947
  %v9242 = vunpack.c.h.b16 %v7947
  %v9243 = vunpack.c.l.b16 %v7948
  %v9244 = vunpack.c.h.b16 %v7948
  %v9245 = vunpack.c.l.b16 %v7949
  %v9246 = vunpack.c.h.b16 %v7949
  %v9247 = vunpack.c.l.b16 %v7950
  %v9248 = vunpack.c.h.b16 %v7950
  %v9249 = vunpack.c.l.b16 %v7951
  %v9250 = vunpack.c.h.b16 %v7951
  %v9251 = vunpack.c.l.b16 %v7952
  %v9252 = vunpack.c.h.b16 %v7952
  %v9253 = vunpack.c.l.b16 %v7953
  %v9254 = vunpack.c.h.b16 %v7953
  %v9255 = vunpack.c.l.b16 %v7954
  %v9256 = vunpack.c.h.b16 %v7954
  %v9257 = vunpack.c.l.b16 %v7955
  %v9258 = vunpack.c.h.b16 %v7955
  %v9259 = vunpack.c.l.b16 %v7956
  %v9260 = vunpack.c.h.b16 %v7956
  %v9261 = vunpack.c.l.b16 %v7957
  %v9262 = vunpack.c.h.b16 %v7957
  %v9263 = vunpack.c.l.b16 %v7958
  %v9264 = vunpack.c.h.b16 %v7958
  %v9265 = vunpack.c.l.b16 %v7959
  %v9266 = vunpack.c.h.b16 %v7959
  %v9267 = vunpack.c.l.b16 %v7960
  %v9268 = vunpack.c.h.b16 %v7960
  %v9269 = vunpack.c.l.b16 %v7961
  %v9270 = vunpack.c.h.b16 %v7961
  %v9271 = vunpack.c.l.b16 %v7962
  %v9272 = vunpack.c.h.b16 %v7962
  %v9273 = vunpack.c.l.b16 %v7963
  %v9274 = vunpack.c.h.b16 %v7963
  %v9275 = vunpack.c.l.b16 %v7964
  %v9276 = vunpack.c.h.b16 %v7964
  %v9277 = vunpack.c.l.b16 %v7965
  %v9278 = vunpack.c.h.b16 %v7965
  %v9279 = vunpack.c.l.b16 %v7966
  %v9280 = vunpack.c.h.b16 %v7966
  %v9281 = vunpack.c.l.b16 %v7967
  %v9282 = vunpack.c.h.b16 %v7967
  %v9283 = vunpack.c.l.b16 %v7968
  %v9284 = vunpack.c.h.b16 %v7968
  %v9285 = vunpack.c.l.b16 %v7969
  %v9286 = vunpack.c.h.b16 %v7969
  %v9287 = vunpack.c.l.b16 %v7970
  %v9288 = vunpack.c.h.b16 %v7970
  %v9289 = vunpack.c.l.b16 %v7971
  %v9290 = vunpack.c.h.b16 %v7971
  %v9291 = vunpack.c.l.b16 %v7972
  %v9292 = vunpack.c.h.b16 %v7972
  %v9293 = vunpack.c.l.b16 %v7973
  %v9294 = vunpack.c.h.b16 %v7973
  %v9295 = vunpack.c.l.b16 %v7974
  %v9296 = vunpack.c.h.b16 %v7974
  %v9297 = vunpack.c.l.b16 %v7975
  %v9298 = vunpack.c.h.b16 %v7975
  %v9299 = vunpack.c.l.b16 %v7976
  %v9300 = vunpack.c.h.b16 %v7976
  %v9301 = vunpack.c.l.b16 %v7977
  %v9302 = vunpack.c.h.b16 %v7977
  %v9303 = vunpack.c.l.b16 %v7978
  %v9304 = vunpack.c.h.b16 %v7978
  %v9305 = vunpack.c.l.b16 %v7979
  %v9306 = vunpack.c.h.b16 %v7979
  %v9307 = vunpack.c.l.b16 %v7980
  %v9308 = vunpack.c.h.b16 %v7980
  %v9309 = vunpack.c.l.b16 %v7981
  %v9310 = vunpack.c.h.b16 %v7981
  %v9311 = vunpack.c.l.b16 %v7982
  %v9312 = vunpack.c.h.b16 %v7982
  %v9313 = vunpack.c.l.b16 %v7983
  %v9314 = vunpack.c.h.b16 %v7983
  %v9315 = vunpack.c.l.b16 %v7984
  %v9316 = vunpack.c.h.b16 %v7984
  %v9317 = vunpack.c.l.b16 %v7985
  %v9318 = vunpack.c.h.b16 %v7985
  %v9319 = vunpack.c.l.b16 %v7986
  %v9320 = vunpack.c.h.b16 %v7986
  %v9321 = vunpack.c.l.b16 %v7987
  %v9322 = vunpack.c.h.b16 %v7987
  %v9323 = vunpack.c.l.b16 %v7988
  %v9324 = vunpack.c.h.b16 %v7988
  %v9325 = vunpack.c.l.b16 %v7989
  %v9326 = vunpack.c.h.b16 %v7989
  %v9327 = vunpack.c.l.b16 %v7990
  %v9328 = vunpack.c.h.b16 %v7990
  %v9329 = vunpack.c.l.b16 %v7991
  %v9330 = vunpack.c.h.b16 %v7991
  %v9331 = vunpack.c.l.b16 %v7992
  %v9332 = vunpack.c.h.b16 %v7992
  %v9333 = vunpack.c.l.b16 %v7993
  %v9334 = vunpack.c.h.b16 %v7993
  %v9335 = vunpack.c.l.b16 %v7994
  %v9336 = vunpack.c.h.b16 %v7994
  %v9337 = vunpack.c.l.b16 %v7995
  %v9338 = vunpack.c.h.b16 %v7995
  %v9339 = vunpack.c.l.b16 %v7996
  %v9340 = vunpack.c.h.b16 %v7996
  %v9341 = vunpack.c.l.b16 %v7997
  %v9342 = vunpack.c.h.b16 %v7997
  %v9343 = vunpack.c.l.b16 %v7998
  %v9344 = vunpack.c.h.b16 %v7998
  %v9345 = vunpack.c.l.b16 %v7999
  %v9346 = vunpack.c.h.b16 %v7999
  %v9347 = vunpack.c.l.b16 %v8000
  %v9348 = vunpack.c.h.b16 %v8000
  %v9349 = vunpack.c.l.b16 %v8001
  %v9350 = vunpack.c.h.b16 %v8001
  %v9351 = vunpack.c.l.b16 %v8002
  %v9352 = vunpack.c.h.b16 %v8002
  %v9353 = vunpack.c.l.b16 %v8003
  %v9354 = vunpack.c.h.b16 %v8003
  %v9355 = vunpack.c.l.b16 %v8004
  %v9356 = vunpack.c.h.b16 %v8004
  %v9357 = vunpack.c.l.b16 %v8005
  %v9358 = vunpack.c.h.b16 %v8005
  %v9359 = vunpack.c.l.b16 %v8006
  %v9360 = vunpack.c.h.b16 %v8006
  %v9361 = vunpack.c.l.b16 %v8007
  %v9362 = vunpack.c.h.b16 %v8007
  %v9363 = vunpack.c.l.b16 %v8008
  %v9364 = vunpack.c.h.b16 %v8008
  %v9365 = vunpack.c.l.b16 %v8009
  %v9366 = vunpack.c.h.b16 %v8009
  %v9367 = vunpack.c.l.b16 %v8010
  %v9368 = vunpack.c.h.b16 %v8010
  %v9369 = vunpack.c.l.b16 %v8011
  %v9370 = vunpack.c.h.b16 %v8011
  %v9371 = vunpack.c.l.b16 %v8012
  %v9372 = vunpack.c.h.b16 %v8012
  %v9373 = vunpack.c.l.b16 %v8013
  %v9374 = vunpack.c.h.b16 %v8013
  %v9375 = vunpack.c.l.b16 %v8014
  %v9376 = vunpack.c.h.b16 %v8014
  %v9377 = vunpack.c.l.b16 %v8015
  %v9378 = vunpack.c.h.b16 %v8015
  %v9379 = vunpack.c.l.b16 %v8016
  %v9380 = vunpack.c.h.b16 %v8016
  %v9381 = vunpack.c.l.b16 %v8017
  %v9382 = vunpack.c.h.b16 %v8017
  %v9383 = vunpack.c.l.b16 %v8018
  %v9384 = vunpack.c.h.b16 %v8018
  %v9385 = vunpack.c.l.b16 %v8019
  %v9386 = vunpack.c.h.b16 %v8019
  %v9387 = vunpack.c.l.b16 %v8020
  %v9388 = vunpack.c.h.b16 %v8020
  %v9389 = vunpack.c.l.b16 %v8021
  %v9390 = vunpack.c.h.b16 %v8021
  %v9391 = vunpack.c.l.b16 %v8022
  %v9392 = vunpack.c.h.b16 %v8022
  %v9393 = vunpack.c.l.b16 %v8023
  %v9394 = vunpack.c.h.b16 %v8023
  %v9395 = vunpack.c.l.b16 %v8024
  %v9396 = vunpack.c.h.b16 %v8024
  %v9397 = vunpack.c.l.b16 %v8025
  %v9398 = vunpack.c.h.b16 %v8025
  %v9399 = vunpack.c.l.b16 %v8026
  %v9400 = vunpack.c.h.b16 %v8026
  %v9401 = vunpack.c.l.b16 %v8027
  %v9402 = vunpack.c.h.b16 %v8027
  %v9403 = vunpack.c.l.b16 %v8028
  %v9404 = vunpack.c.h.b16 %v8028
  %v9405 = vunpack.c.l.b16 %v8029
  %v9406 = vunpack.c.h.b16 %v8029
  %v9407 = vunpack.c.l.b16 %v8030
  %v9408 = vunpack.c.h.b16 %v8030
  %v9409 = vunpack.c.l.b16 %v8031
  %v9410 = vunpack.c.h.b16 %v8031
  %v9411 = vunpack.c.l.b16 %v8032
  %v9412 = vunpack.c.h.b16 %v8032
  %v9413 = vunpack.c.l.b16 %v8033
  %v9414 = vunpack.c.h.b16 %v8033
  %v9415 = vunpack.c.l.b16 %v8034
  %v9416 = vunpack.c.h.b16 %v8034
  %v9417 = vunpack.c.l.b16 %v8035
  %v9418 = vunpack.c.h.b16 %v8035
  %v9419 = vunpack.c.l.b16 %v8036
  %v9420 = vunpack.c.h.b16 %v8036
  %v9421 = vunpack.c.l.b16 %v8037
  %v9422 = vunpack.c.h.b16 %v8037
  %v9423 = vunpack.c.l.b16 %v8038
  %v9424 = vunpack.c.h.b16 %v8038
  %v9425 = vunpack.c.l.b16 %v8039
  %v9426 = vunpack.c.h.b16 %v8039
  %v9427 = vunpack.c.l.b16 %v8040
  %v9428 = vunpack.c.h.b16 %v8040
  %v9429 = vunpack.c.l.b16 %v8041
  %v9430 = vunpack.c.h.b16 %v8041
  %v9431 = vunpack.c.l.b16 %v8042
  %v9432 = vunpack.c.h.b16 %v8042
  %v9433 = vunpack.c.l.b16 %v8043
  %v9434 = vunpack.c.h.b16 %v8043
  %v9435 = vunpack.c.l.b16 %v8044
  %v9436 = vunpack.c.h.b16 %v8044
  %v9437 = vunpack.c.l.b16 %v8045
  %v9438 = vunpack.c.h.b16 %v8045
  %v9439 = vunpack.c.l.b16 %v8046
  %v9440 = vunpack.c.h.b16 %v8046
  %v9441 = vunpack.c.l.b16 %v8047
  %v9442 = vunpack.c.h.b16 %v8047
  %v9443 = vunpack.c.l.b16 %v8048
  %v9444 = vunpack.c.h.b16 %v8048
  %v9445 = vunpack.c.l.b16 %v8049
  %v9446 = vunpack.c.h.b16 %v8049
  %v9447 = vunpack.c.l.b16 %v8050
  %v9448 = vunpack.c.h.b16 %v8050
  %v9449 = vunpack.c.l.b16 %v8051
  %v9450 = vunpack.c.h.b16 %v8051
  %v9451 = vunpack.c.l.b16 %v8052
  %v9452 = vunpack.c.h.b16 %v8052
  %v9453 = vunpack.c.l.b16 %v8053
  %v9454 = vunpack.c.h.b16 %v8053
  %v9455 = vunpack.c.l.b16 %v8054
  %v9456 = vunpack.c.h.b16 %v8054
  %v9457 = vunpack.c.l.b16 %v8055
  %v9458 = vunpack.c.h.b16 %v8055
  %v9459 = vunpack.c.l.b16 %v8056
  %v9460 = vunpack.c.h.b16 %v8056
  %v9461 = vunpack.c.l.b16 %v8057
  %v9462 = vunpack.c.h.b16 %v8057
  %v9463 = vunpack.c.l.b16 %v8058
  %v9464 = vunpack.c.h.b16 %v8058
  %v9465 = vunpack.c.l.b16 %v8059
  %v9466 = vunpack.c.h.b16 %v8059
  %v9467 = vunpack.c.l.b16 %v8060
  %v9468 = vunpack.c.h.b16 %v8060
  %v9469 = vunpack.c.l.b16 %v8061
  %v9470 = vunpack.c.h.b16 %v8061
  %v9471 = vunpack.c.l.b16 %v8062
  %v9472 = vunpack.c.h.b16 %v8062
  %v9473 = vunpack.c.l.b16 %v8063
  %v9474 = vunpack.c.h.b16 %v8063
  %v9475 = vunpack.c.l.b16 %v8064
  %v9476 = vunpack.c.h.b16 %v8064
  %v9477 = vunpack.c.l.b16 %v8065
  %v9478 = vunpack.c.h.b16 %v8065
  %v9479 = vunpack.c.l.b16 %v8066
  %v9480 = vunpack.c.h.b16 %v8066
  %v9481 = vunpack.c.l.b16 %v8067
  %v9482 = vunpack.c.h.b16 %v8067
  %v9483 = vunpack.c.l.b16 %v8068
  %v9484 = vunpack.c.h.b16 %v8068
  %v9485 = vunpack.c.l.b16 %v8069
  %v9486 = vunpack.c.h.b16 %v8069
  %v9487 = vunpack.c.l.b16 %v8070
  %v9488 = vunpack.c.h.b16 %v8070
  %v9489 = vunpack.c.l.b16 %v8071
  %v9490 = vunpack.c.h.b16 %v8071
  %v9491 = vunpack.c.l.b16 %v8072
  %v9492 = vunpack.c.h.b16 %v8072
  %v9493 = vunpack.c.l.b16 %v8073
  %v9494 = vunpack.c.h.b16 %v8073
  %v9495 = vunpack.c.l.b16 %v8074
  %v9496 = vunpack.c.h.b16 %v8074
  %v9497 = vunpack.c.l.b16 %v8075
  %v9498 = vunpack.c.h.b16 %v8075
  %v9499 = vunpack.c.l.b16 %v8076
  %v9500 = vunpack.c.h.b16 %v8076
  %v9501 = vunpack.c.l.b16 %v8077
  %v9502 = vunpack.c.h.b16 %v8077
  %v9503 = vunpack.c.l.b16 %v8078
  %v9504 = vunpack.c.h.b16 %v8078
  %v9505 = vunpack.c.l.b16 %v8079
  %v9506 = vunpack.c.h.b16 %v8079
  %v9507 = vunpack.c.l.b16 %v8080
  %v9508 = vunpack.c.h.b16 %v8080
  %v9509 = vunpack.c.l.b16 %v8081
  %v9510 = vunpack.c.h.b16 %v8081
  %v9511 = vunpack.c.l.b16 %v8082
  %v9512 = vunpack.c.h.b16 %v8082
  %v9513 = vunpack.c.l.b16 %v8083
  %v9514 = vunpack.c.h.b16 %v8083
  %v9515 = vunpack.c.l.b16 %v8084
  %v9516 = vunpack.c.h.b16 %v8084
  %v9517 = vunpack.c.l.b16 %v8085
  %v9518 = vunpack.c.h.b16 %v8085
  %v9519 = vunpack.c.l.b16 %v8086
  %v9520 = vunpack.c.h.b16 %v8086
  %v9521 = vunpack.c.l.b16 %v8087
  %v9522 = vunpack.c.h.b16 %v8087
  %v9523 = vunpack.c.l.b16 %v8088
  %v9524 = vunpack.c.h.b16 %v8088
  %v9525 = vunpack.c.l.b16 %v8089
  %v9526 = vunpack.c.h.b16 %v8089
  %v9527 = vunpack.c.l.b16 %v8090
  %v9528 = vunpack.c.h.b16 %v8090
  %v9529 = vunpack.c.l.b16 %v8091
  %v9530 = vunpack.c.h.b16 %v8091
  %v9531 = vunpack.c.l.b16 %v8092
  %v9532 = vunpack.c.h.b16 %v8092
  %v9533 = vunpack.c.l.b16 %v8093
  %v9534 = vunpack.c.h.b16 %v8093
  %v9535 = vunpack.c.l.b16 %v8094
  %v9536 = vunpack.c.h.b16 %v8094
  %v9537 = vunpack.c.l.b16 %v8095
  %v9538 = vunpack.c.h.b16 %v8095
  %v9539 = vunpack.c.l.b16 %v8096
  %v9540 = vunpack.c.h.b16 %v8096
  %v9541 = vunpack.c.l.b16 %v8097
  %v9542 = vunpack.c.h.b16 %v8097
  %v9543 = vunpack.c.l.b16 %v8098
  %v9544 = vunpack.c.h.b16 %v8098
  %v9545 = vunpack.c.l.b16 %v8099
  %v9546 = vunpack.c.h.b16 %v8099
  %v9547 = vunpack.c.l.b16 %v8100
  %v9548 = vunpack.c.h.b16 %v8100
  %v9549 = vunpack.c.l.b16 %v8101
  %v9550 = vunpack.c.h.b16 %v8101
  %v9551 = vunpack.c.l.b16 %v8102
  %v9552 = vunpack.c.h.b16 %v8102
  %v9553 = vunpack.c.l.b16 %v8103
  %v9554 = vunpack.c.h.b16 %v8103
  %v9555 = vunpack.c.l.b16 %v8104
  %v9556 = vunpack.c.h.b16 %v8104
  %v9557 = vunpack.c.l.b16 %v8105
  %v9558 = vunpack.c.h.b16 %v8105
  %v9559 = vunpack.c.l.b16 %v8106
  %v9560 = vunpack.c.h.b16 %v8106
  %v9561 = vunpack.c.l.b16 %v8107
  %v9562 = vunpack.c.h.b16 %v8107
  %v9563 = vunpack.c.l.b16 %v8108
  %v9564 = vunpack.c.h.b16 %v8108
  %v9565 = vunpack.c.l.b16 %v8109
  %v9566 = vunpack.c.h.b16 %v8109
  %v9567 = vunpack.c.l.b16 %v8110
  %v9568 = vunpack.c.h.b16 %v8110
  %v9569 = vunpack.c.l.b16 %v8111
  %v9570 = vunpack.c.h.b16 %v8111
  %v9571 = vunpack.c.l.b16 %v8112
  %v9572 = vunpack.c.h.b16 %v8112
  %v9573 = vunpack.c.l.b16 %v8113
  %v9574 = vunpack.c.h.b16 %v8113
  %v9575 = vunpack.c.l.b16 %v8114
  %v9576 = vunpack.c.h.b16 %v8114
  %v9577 = vunpack.c.l.b16 %v8115
  %v9578 = vunpack.c.h.b16 %v8115
  %v9579 = vunpack.c.l.b16 %v8116
  %v9580 = vunpack.c.h.b16 %v8116
  %v9581 = vunpack.c.l.b16 %v8117
  %v9582 = vunpack.c.h.b16 %v8117
  %v9583 = vunpack.c.l.b16 %v8118
  %v9584 = vunpack.c.h.b16 %v8118
  %v9585 = vunpack.c.l.b16 %v8119
  %v9586 = vunpack.c.h.b16 %v8119
  %v9587 = vunpack.c.l.b16 %v8120
  %v9588 = vunpack.c.h.b16 %v8120
  %v9589 = vunpack.c.l.b16 %v8121
  %v9590 = vunpack.c.h.b16 %v8121
  %v9591 = vunpack.c.l.b16 %v8122
  %v9592 = vunpack.c.h.b16 %v8122
  %v9593 = vunpack.c.l.b16 %v8123
  %v9594 = vunpack.c.h.b16 %v8123
  %v9595 = vunpack.c.l.b16 %v8124
  %v9596 = vunpack.c.h.b16 %v8124
  %v9597 = vunpack.c.l.b16 %v8125
  %v9598 = vunpack.c.h.b16 %v8125
  %v9599 = vunpack.c.l.b16 %v8126
  %v9600 = vunpack.c.h.b16 %v8126
  %v9601 = vunpack.c.l.b16 %v8127
  %v9602 = vunpack.c.h.b16 %v8127
  %v9603 = vunpack.c.l.b16 %v8128
  %v9604 = vunpack.c.h.b16 %v8128
  %v9605 = vunpack.c.l.b16 %v8129
  %v9606 = vunpack.c.h.b16 %v8129
  %v9607 = vunpack.c.l.b16 %v8130
  %v9608 = vunpack.c.h.b16 %v8130
  %v9609 = vunpack.c.l.b16 %v8131
  %v9610 = vunpack.c.h.b16 %v8131
  %v9611 = vunpack.c.l.b16 %v8132
  %v9612 = vunpack.c.h.b16 %v8132
  %v9613 = vunpack.c.l.b16 %v8133
  %v9614 = vunpack.c.h.b16 %v8133
  %v9615 = vunpack.c.l.b16 %v8134
  %v9616 = vunpack.c.h.b16 %v8134
  %v9617 = vunpack.c.l.b16 %v8135
  %v9618 = vunpack.c.h.b16 %v8135
  %v9619 = vunpack.c.l.b16 %v8136
  %v9620 = vunpack.c.h.b16 %v8136
  %v9621 = vunpack.c.l.b16 %v8137
  %v9622 = vunpack.c.h.b16 %v8137
  %v9623 = vunpack.c.l.b16 %v8138
  %v9624 = vunpack.c.h.b16 %v8138
  %v9625 = vunpack.c.l.b16 %v8139
  %v9626 = vunpack.c.h.b16 %v8139
  %v9627 = vunpack.c.l.b16 %v8140
  %v9628 = vunpack.c.h.b16 %v8140
  %v9629 = vunpack.c.l.b16 %v8141
  %v9630 = vunpack.c.h.b16 %v8141
  %v9631 = vunpack.c.l.b16 %v8142
  %v9632 = vunpack.c.h.b16 %v8142
  %v9633 = vunpack.c.l.b16 %v8143
  %v9634 = vunpack.c.h.b16 %v8143
  %v9635 = vunpack.c.l.b16 %v8144
  %v9636 = vunpack.c.h.b16 %v8144
  %v9637 = vunpack.c.l.b16 %v8145
  %v9638 = vunpack.c.h.b16 %v8145
  %v9639 = vunpack.c.l.b16 %v8146
  %v9640 = vunpack.c.h.b16 %v8146
  %v9641 = vunpack.c.l.b16 %v8147
  %v9642 = vunpack.c.h.b16 %v8147
  %v9643 = vunpack.c.l.b16 %v8148
  %v9644 = vunpack.c.h.b16 %v8148
  %v9645 = vunpack.c.l.b16 %v8149
  %v9646 = vunpack.c.h.b16 %v8149
  %v9647 = vunpack.c.l.b16 %v8150
  %v9648 = vunpack.c.h.b16 %v8150
  %v9649 = vunpack.c.l.b16 %v8151
  %v9650 = vunpack.c.h.b16 %v8151
  %v9651 = vunpack.c.l.b16 %v8152
  %v9652 = vunpack.c.h.b16 %v8152
  %v9653 = vunpack.c.l.b16 %v8153
  %v9654 = vunpack.c.h.b16 %v8153
  %v9655 = vunpack.c.l.b16 %v8154
  %v9656 = vunpack.c.h.b16 %v8154
  %v9657 = vunpack.c.l.b16 %v8155
  %v9658 = vunpack.c.h.b16 %v8155
  %v9659 = vunpack.c.l.b16 %v8156
  %v9660 = vunpack.c.h.b16 %v8156
  %v9661 = vunpack.c.l.b16 %v8157
  %v9662 = vunpack.c.h.b16 %v8157
  %v9663 = vunpack.c.l.b16 %v8158
  %v9664 = vunpack.c.h.b16 %v8158
  %v9665 = vunpack.c.l.b16 %v8159
  %v9666 = vunpack.c.h.b16 %v8159
  %v9667 = vunpack.c.l.b16 %v8160
  %v9668 = vunpack.c.h.b16 %v8160
  %v9669 = vunpack.c.l.b16 %v8161
  %v9670 = vunpack.c.h.b16 %v8161
  %v9671 = vunpack.c.l.b16 %v8162
  %v9672 = vunpack.c.h.b16 %v8162
  %v9673 = vunpack.c.l.b16 %v8163
  %v9674 = vunpack.c.h.b16 %v8163
  %v9675 = vunpack.c.l.b16 %v8164
  %v9676 = vunpack.c.h.b16 %v8164
  %v9677 = vunpack.c.l.b16 %v8165
  %v9678 = vunpack.c.h.b16 %v8165
  %v9679 = vunpack.c.l.b16 %v8166
  %v9680 = vunpack.c.h.b16 %v8166
  %v9681 = vunpack.c.l.b16 %v8167
  %v9682 = vunpack.c.h.b16 %v8167
  %v9683 = vunpack.c.l.b16 %v8168
  %v9684 = vunpack.c.h.b16 %v8168
  %v9685 = vunpack.c.l.b16 %v8169
  %v9686 = vunpack.c.h.b16 %v8169
  %v9687 = vunpack.c.l.b16 %v8170
  %v9688 = vunpack.c.h.b16 %v8170
  %v9689 = vunpack.c.l.b16 %v8171
  %v9690 = vunpack.c.h.b16 %v8171
  %v9691 = vunpack.c.l.b16 %v8172
  %v9692 = vunpack.c.h.b16 %v8172
  %v9693 = vunpack.c.l.b16 %v8173
  %v9694 = vunpack.c.h.b16 %v8173
  %v9695 = vunpack.c.l.b16 %v8174
  %v9696 = vunpack.c.h.b16 %v8174
  %v9697 = vunpack.c.l.b16 %v8175
  %v9698 = vunpack.c.h.b16 %v8175
  %v9699 = vunpack.c.l.b16 %v8176
  %v9700 = vunpack.c.h.b16 %v8176
  %v9701 = vunpack.c.l.b16 %v8177
  %v9702 = vunpack.c.h.b16 %v8177
  %v9703 = vunpack.c.l.b16 %v8178
  %v9704 = vunpack.c.h.b16 %v8178
  %v9705 = vunpack.c.l.b16 %v8179
  %v9706 = vunpack.c.h.b16 %v8179
  %v9707 = vunpack.c.l.b16 %v8180
  %v9708 = vunpack.c.h.b16 %v8180
  %v9709 = vunpack.c.l.b16 %v8181
  %v9710 = vunpack.c.h.b16 %v8181
  %v9711 = vunpack.c.l.b16 %v8182
  %v9712 = vunpack.c.h.b16 %v8182
  %v9713 = vunpack.c.l.b16 %v8183
  %v9714 = vunpack.c.h.b16 %v8183
  %v9715 = vunpack.c.l.b16 %v8184
  %v9716 = vunpack.c.h.b16 %v8184
  %v9717 = vunpack.c.l.b16 %v8185
  %v9718 = vunpack.c.h.b16 %v8185
  %v9719 = vunpack.c.l.b16 %v8186
  %v9720 = vunpack.c.h.b16 %v8186
  %v9721 = vunpack.c.l.b16 %v8187
  %v9722 = vunpack.c.h.b16 %v8187
  %v9723 = vunpack.c.l.b16 %v8188
  %v9724 = vunpack.c.h.b16 %v8188
  %v9725 = vunpack.c.l.b16 %v8189
  %v9726 = vunpack.c.h.b16 %v8189
  %v9727 = vunpack.c.l.b16 %v8190
  %v9728 = vunpack.c.h.b16 %v8190
  %v9729 = vunpack.c.l.b16 %v8191
  %v9730 = vunpack.c.h.b16 %v8191
  %v9731 = vunpack.c.l.b16 %v8192
  %v9732 = vunpack.c.h.b16 %v8192
  %v9733 = vunpack.c.l.b16 %v8193
  %v9734 = vunpack.c.h.b16 %v8193
  %v9735 = vunpack.c.l.b16 %v8194
  %v9736 = vunpack.c.h.b16 %v8194
  %v9737 = vunpack.c.l.b16 %v8195
  %v9738 = vunpack.c.h.b16 %v8195
  %v9739 = vunpack.c.l.b16 %v8196
  %v9740 = vunpack.c.h.b16 %v8196
  %v9741 = vunpack.c.l.b16 %v8197
  %v9742 = vunpack.c.h.b16 %v8197
  %v9743 = vunpack.c.l.b16 %v8198
  %v9744 = vunpack.c.h.b16 %v8198
  %v9745 = vunpack.c.l.b16 %v8199
  %v9746 = vunpack.c.h.b16 %v8199
  %v9747 = vunpack.c.l.b16 %v8200
  %v9748 = vunpack.c.h.b16 %v8200
  %v9749 = vunpack.c.l.b16 %v8201
  %v9750 = vunpack.c.h.b16 %v8201
  %v9751 = vunpack.c.l.b16 %v8202
  %v9752 = vunpack.c.h.b16 %v8202
  %v9753 = vunpack.c.l.b16 %v8203
  %v9754 = vunpack.c.h.b16 %v8203
  %v9755 = vunpack.c.l.b16 %v8204
  %v9756 = vunpack.c.h.b16 %v8204
  %v9757 = vunpack.c.l.b16 %v8205
  %v9758 = vunpack.c.h.b16 %v8205
  %v9759 = vunpack.c.l.b16 %v8206
  %v9760 = vunpack.c.h.b16 %v8206
  %v9761 = vunpack.c.l.b16 %v8207
  %v9762 = vunpack.c.h.b16 %v8207
  %v9763 = vunpack.c.l.b16 %v8208
  %v9764 = vunpack.c.h.b16 %v8208
  %v9765 = vunpack.c.l.b16 %v8209
  %v9766 = vunpack.c.h.b16 %v8209
  %v9767 = vunpack.c.l.b16 %v8210
  %v9768 = vunpack.c.h.b16 %v8210
  %v9769 = vunpack.c.l.b16 %v8211
  %v9770 = vunpack.c.h.b16 %v8211
  %v9771 = vunpack.c.l.b16 %v8212
  %v9772 = vunpack.c.h.b16 %v8212
  %v9773 = vunpack.c.l.b16 %v8213
  %v9774 = vunpack.c.h.b16 %v8213
  %v9775 = vunpack.c.l.b16 %v8214
  %v9776 = vunpack.c.h.b16 %v8214
  %v9777 = vunpack.c.l.b16 %v8215
  %v9778 = vunpack.c.h.b16 %v8215
  %v9779 = vunpack.c.l.b16 %v8216
  %v9780 = vunpack.c.h.b16 %v8216
  %v9781 = vunpack.c.l.b16 %v8217
  %v9782 = vunpack.c.h.b16 %v8217
  %v9783 = vunpack.c.l.b16 %v8218
  %v9784 = vunpack.c.h.b16 %v8218
  %v9785 = vunpack.c.l.b16 %v8219
  %v9786 = vunpack.c.h.b16 %v8219
  %v9787 = vunpack.c.l.b16 %v8220
  %v9788 = vunpack.c.h.b16 %v8220
  %v9789 = vunpack.c.l.b16 %v8221
  %v9790 = vunpack.c.h.b16 %v8221
  %v9791 = vunpack.c.l.b16 %v8222
  %v9792 = vunpack.c.h.b16 %v8222
  %v9793 = vunpack.c.l.b16 %v8223
  %v9794 = vunpack.c.h.b16 %v8223
  %v9795 = vunpack.c.l.b16 %v8224
  %v9796 = vunpack.c.h.b16 %v8224
  %v9797 = vunpack.c.l.b16 %v8225
  %v9798 = vunpack.c.h.b16 %v8225
  %v9799 = vunpack.c.l.b16 %v8226
  %v9800 = vunpack.c.h.b16 %v8226
  %v9801 = vunpack.c.l.b16 %v8227
  %v9802 = vunpack.c.h.b16 %v8227
  %v9803 = vunpack.c.l.b16 %v8228
  %v9804 = vunpack.c.h.b16 %v8228
  %v9805 = vunpack.c.l.b16 %v8229
  %v9806 = vunpack.c.h.b16 %v8229
  %v9807 = vunpack.c.l.b16 %v8230
  %v9808 = vunpack.c.h.b16 %v8230
  %v9809 = vunpack.c.l.b16 %v8231
  %v9810 = vunpack.c.h.b16 %v8231
  %v9811 = vunpack.c.l.b16 %v8232
  %v9812 = vunpack.c.h.b16 %v8232
  %v9813 = vunpack.c.l.b16 %v8233
  %v9814 = vunpack.c.h.b16 %v8233
  %v9815 = vunpack.c.l.b16 %v8234
  %v9816 = vunpack.c.h.b16 %v8234
  %v9817 = vunpack.c.l.b16 %v8235
  %v9818 = vunpack.c.h.b16 %v8235
  %v9819 = vunpack.c.l.b16 %v8236
  %v9820 = vunpack.c.h.b16 %v8236
  %v9821 = vunpack.c.l.b16 %v8237
  %v9822 = vunpack.c.h.b16 %v8237
  %v9823 = vunpack.c.l.b16 %v8238
  %v9824 = vunpack.c.h.b16 %v8238
  %v9825 = vunpack.c.l.b16 %v8239
  %v9826 = vunpack.c.h.b16 %v8239
  %v9827 = vunpack.c.l.b16 %v8240
  %v9828 = vunpack.c.h.b16 %v8240
  %v9829 = vunpack.c.l.b16 %v8241
  %v9830 = vunpack.c.h.b16 %v8241
  %v9831 = vunpack.c.l.b16 %v8242
  %v9832 = vunpack.c.h.b16 %v8242
  %v9833 = vunpack.c.l.b16 %v8243
  %v9834 = vunpack.c.h.b16 %v8243
  %v9835 = vunpack.c.l.b16 %v8244
  %v9836 = vunpack.c.h.b16 %v8244
  %v9837 = vunpack.c.l.b16 %v8245
  %v9838 = vunpack.c.h.b16 %v8245
  %v9839 = vunpack.c.l.b16 %v8246
  %v9840 = vunpack.c.h.b16 %v8246
  %v9841 = vunpack.c.l.b16 %v8247
  %v9842 = vunpack.c.h.b16 %v8247
  %v9843 = vunpack.c.l.b16 %v8248
  %v9844 = vunpack.c.h.b16 %v8248
  %v9845 = vunpack.c.l.b16 %v8249
  %v9846 = vunpack.c.h.b16 %v8249
  %v9847 = vunpack.c.l.b16 %v8250
  %v9848 = vunpack.c.h.b16 %v8250
  %v9849 = vunpack.c.l.b16 %v8251
  %v9850 = vunpack.c.h.b16 %v8251
  %v9851 = vunpack.c.l.b16 %v8252
  %v9852 = vunpack.c.h.b16 %v8252
  %v9853 = vunpack.c.l.b16 %v8253
  %v9854 = vunpack.c.h.b16 %v8253
  %v9855 = vunpack.c.l.b16 %v8254
  %v9856 = vunpack.c.h.b16 %v8254
  %v9857 = vunpack.c.l.b16 %v8255
  %v9858 = vunpack.c.h.b16 %v8255
  %v9859 = vunpack.c.l.b16 %v8256
  %v9860 = vunpack.c.h.b16 %v8256
  %v9861 = vunpack.c.l.b16 %v8257
  %v9862 = vunpack.c.h.b16 %v8257
  %v9863 = vunpack.c.l.b16 %v8258
  %v9864 = vunpack.c.h.b16 %v8258
  %v9865 = vunpack.c.l.b16 %v8259
  %v9866 = vunpack.c.h.b16 %v8259
  %v9867 = vunpack.c.l.b16 %v8260
  %v9868 = vunpack.c.h.b16 %v8260
  %v9869 = vunpack.c.l.b16 %v8261
  %v9870 = vunpack.c.h.b16 %v8261
  %v9871 = vunpack.c.l.b16 %v8262
  %v9872 = vunpack.c.h.b16 %v8262
  %v9873 = vunpack.c.l.b16 %v8263
  %v9874 = vunpack.c.h.b16 %v8263
  %v9875 = vunpack.c.l.b16 %v8264
  %v9876 = vunpack.c.h.b16 %v8264
  %v9877 = vunpack.c.l.b16 %v8265
  %v9878 = vunpack.c.h.b16 %v8265
  %v9879 = vunpack.c.l.b16 %v8266
  %v9880 = vunpack.c.h.b16 %v8266
  %v9881 = vunpack.c.l.b16 %v8267
  %v9882 = vunpack.c.h.b16 %v8267
  %v9883 = vunpack.c.l.b16 %v8268
  %v9884 = vunpack.c.h.b16 %v8268
  %v9885 = vpack.c.b16 %v8865, %v8861
  %v9886 = vpack.c.b16 %v8866, %v8862
  %v9887 = vpack.c.b16 %v8867, %v8863
  %v9888 = vpack.c.b16 %v8868, %v8864
  %v9889 = vpack.c.b16 %v8873, %v8869
  %v9890 = vpack.c.b16 %v8874, %v8870
  %v9891 = vpack.c.b16 %v8875, %v8871
  %v9892 = vpack.c.b16 %v8876, %v8872
  %v9893 = vpack.c.b16 %v8881, %v8877
  %v9894 = vpack.c.b16 %v8882, %v8878
  %v9895 = vpack.c.b16 %v8883, %v8879
  %v9896 = vpack.c.b16 %v8884, %v8880
  %v9897 = vpack.c.b16 %v8889, %v8885
  %v9898 = vpack.c.b16 %v8890, %v8886
  %v9899 = vpack.c.b16 %v8891, %v8887
  %v9900 = vpack.c.b16 %v8892, %v8888
  %v9901 = vpack.c.b16 %v8897, %v8893
  %v9902 = vpack.c.b16 %v8898, %v8894
  %v9903 = vpack.c.b16 %v8899, %v8895
  %v9904 = vpack.c.b16 %v8900, %v8896
  %v9905 = vpack.c.b16 %v8905, %v8901
  %v9906 = vpack.c.b16 %v8906, %v8902
  %v9907 = vpack.c.b16 %v8907, %v8903
  %v9908 = vpack.c.b16 %v8908, %v8904
  %v9909 = vpack.c.b16 %v8913, %v8909
  %v9910 = vpack.c.b16 %v8914, %v8910
  %v9911 = vpack.c.b16 %v8915, %v8911
  %v9912 = vpack.c.b16 %v8916, %v8912
  %v9913 = vpack.c.b16 %v8921, %v8917
  %v9914 = vpack.c.b16 %v8922, %v8918
  %v9915 = vpack.c.b16 %v8923, %v8919
  %v9916 = vpack.c.b16 %v8924, %v8920
  %v9917 = vpack.c.b16 %v8929, %v8925
  %v9918 = vpack.c.b16 %v8930, %v8926
  %v9919 = vpack.c.b16 %v8931, %v8927
  %v9920 = vpack.c.b16 %v8932, %v8928
  %v9921 = vpack.c.b16 %v8937, %v8933
  %v9922 = vpack.c.b16 %v8938, %v8934
  %v9923 = vpack.c.b16 %v8939, %v8935
  %v9924 = vpack.c.b16 %v8940, %v8936
  %v9925 = vpack.c.b16 %v8945, %v8941
  %v9926 = vpack.c.b16 %v8946, %v8942
  %v9927 = vpack.c.b16 %v8947, %v8943
  %v9928 = vpack.c.b16 %v8948, %v8944
  %v9929 = vpack.c.b16 %v8953, %v8949
  %v9930 = vpack.c.b16 %v8954, %v8950
  %v9931 = vpack.c.b16 %v8955, %v8951
  %v9932 = vpack.c.b16 %v8956, %v8952
  %v9933 = vpack.c.b16 %v8961, %v8957
  %v9934 = vpack.c.b16 %v8962, %v8958
  %v9935 = vpack.c.b16 %v8963, %v8959
  %v9936 = vpack.c.b16 %v8964, %v8960
  %v9937 = vpack.c.b16 %v8969, %v8965
  %v9938 = vpack.c.b16 %v8970, %v8966
  %v9939 = vpack.c.b16 %v8971, %v8967
  %v9940 = vpack.c.b16 %v8972, %v8968
  %v9941 = vpack.c.b16 %v8977, %v8973
  %v9942 = vpack.c.b16 %v8978, %v8974
  %v9943 = vpack.c.b16 %v8979, %v8975
  %v9944 = vpack.c.b16 %v8980, %v8976
  %v9945 = vpack.c.b16 %v8985, %v8981
  %v9946 = vpack.c.b16 %v8986, %v8982
  %v9947 = vpack.c.b16 %v8987, %v8983
  %v9948 = vpack.c.b16 %v8988, %v8984
  %v9949 = vpack.c.b16 %v8993, %v8989
  %v9950 = vpack.c.b16 %v8994, %v8990
  %v9951 = vpack.c.b16 %v8995, %v8991
  %v9952 = vpack.c.b16 %v8996, %v8992
  %v9953 = vpack.c.b16 %v9001, %v8997
  %v9954 = vpack.c.b16 %v9002, %v8998
  %v9955 = vpack.c.b16 %v9003, %v8999
  %v9956 = vpack.c.b16 %v9004, %v9000
  %v9957 = vpack.c.b16 %v9009, %v9005
  %v9958 = vpack.c.b16 %v9010, %v9006
  %v9959 = vpack.c.b16 %v9011, %v9007
  %v9960 = vpack.c.b16 %v9012, %v9008
  %v9961 = vpack.c.b16 %v9017, %v9013
  %v9962 = vpack.c.b16 %v9018, %v9014
  %v9963 = vpack.c.b16 %v9019, %v9015
  %v9964 = vpack.c.b16 %v9020, %v9016
  %v9965 = vpack.c.b16 %v9025, %v9021
  %v9966 = vpack.c.b16 %v9026, %v9022
  %v9967 = vpack.c.b16 %v9027, %v9023
  %v9968 = vpack.c.b16 %v9028, %v9024
  %v9969 = vpack.c.b16 %v9033, %v9029
  %v9970 = vpack.c.b16 %v9034, %v9030
  %v9971 = vpack.c.b16 %v9035, %v9031
  %v9972 = vpack.c.b16 %v9036, %v9032
  %v9973 = vpack.c.b16 %v9041, %v9037
  %v9974 = vpack.c.b16 %v9042, %v9038
  %v9975 = vpack.c.b16 %v9043, %v9039
  %v9976 = vpack.c.b16 %v9044, %v9040
  %v9977 = vpack.c.b16 %v9049, %v9045
  %v9978 = vpack.c.b16 %v9050, %v9046
  %v9979 = vpack.c.b16 %v9051, %v9047
  %v9980 = vpack.c.b16 %v9052, %v9048
  %v9981 = vpack.c.b16 %v9057, %v9053
  %v9982 = vpack.c.b16 %v9058, %v9054
  %v9983 = vpack.c.b16 %v9059, %v9055
  %v9984 = vpack.c.b16 %v9060, %v9056
  %v9985 = vpack.c.b16 %v9065, %v9061
  %v9986 = vpack.c.b16 %v9066, %v9062
  %v9987 = vpack.c.b16 %v9067, %v9063
  %v9988 = vpack.c.b16 %v9068, %v9064
  %v9989 = vpack.c.b16 %v9073, %v9069
  %v9990 = vpack.c.b16 %v9074, %v9070
  %v9991 = vpack.c.b16 %v9075, %v9071
  %v9992 = vpack.c.b16 %v9076, %v9072
  %v9993 = vpack.c.b16 %v9081, %v9077
  %v9994 = vpack.c.b16 %v9082, %v9078
  %v9995 = vpack.c.b16 %v9083, %v9079
  %v9996 = vpack.c.b16 %v9084, %v9080
  %v9997 = vpack.c.b16 %v9089, %v9085
  %v9998 = vpack.c.b16 %v9090, %v9086
  %v9999 = vpack.c.b16 %v9091, %v9087
  %v10000 = vpack.c.b16 %v9092, %v9088
  %v10001 = vpack.c.b16 %v9097, %v9093
  %v10002 = vpack.c.b16 %v9098, %v9094
  %v10003 = vpack.c.b16 %v9099, %v9095
  %v10004 = vpack.c.b16 %v9100, %v9096
  %v10005 = vpack.c.b16 %v9105, %v9101
  %v10006 = vpack.c.b16 %v9106, %v9102
  %v10007 = vpack.c.b16 %v9107, %v9103
  %v10008 = vpack.c.b16 %v9108, %v9104
  %v10009 = vpack.c.b16 %v9113, %v9109
  %v10010 = vpack.c.b16 %v9114, %v9110
  %v10011 = vpack.c.b16 %v9115, %v9111
  %v10012 = vpack.c.b16 %v9116, %v9112
  %v10013 = vpack.c.b16 %v9121, %v9117
  %v10014 = vpack.c.b16 %v9122, %v9118
  %v10015 = vpack.c.b16 %v9123, %v9119
  %v10016 = vpack.c.b16 %v9124, %v9120
  %v10017 = vpack.c.b16 %v9129, %v9125
  %v10018 = vpack.c.b16 %v9130, %v9126
  %v10019 = vpack.c.b16 %v9131, %v9127
  %v10020 = vpack.c.b16 %v9132, %v9128
  %v10021 = vpack.c.b16 %v9137, %v9133
  %v10022 = vpack.c.b16 %v9138, %v9134
  %v10023 = vpack.c.b16 %v9139, %v9135
  %v10024 = vpack.c.b16 %v9140, %v9136
  %v10025 = vpack.c.b16 %v9145, %v9141
  %v10026 = vpack.c.b16 %v9146, %v9142
  %v10027 = vpack.c.b16 %v9147, %v9143
  %v10028 = vpack.c.b16 %v9148, %v9144
  %v10029 = vpack.c.b16 %v9153, %v9149
  %v10030 = vpack.c.b16 %v9154, %v9150
  %v10031 = vpack.c.b16 %v9155, %v9151
  %v10032 = vpack.c.b16 %v9156, %v9152
  %v10033 = vpack.c.b16 %v9161, %v9157
  %v10034 = vpack.c.b16 %v9162, %v9158
  %v10035 = vpack.c.b16 %v9163, %v9159
  %v10036 = vpack.c.b16 %v9164, %v9160
  %v10037 = vpack.c.b16 %v9169, %v9165
  %v10038 = vpack.c.b16 %v9170, %v9166
  %v10039 = vpack.c.b16 %v9171, %v9167
  %v10040 = vpack.c.b16 %v9172, %v9168
  %v10041 = vpack.c.b16 %v9177, %v9173
  %v10042 = vpack.c.b16 %v9178, %v9174
  %v10043 = vpack.c.b16 %v9179, %v9175
  %v10044 = vpack.c.b16 %v9180, %v9176
  %v10045 = vpack.c.b16 %v9185, %v9181
  %v10046 = vpack.c.b16 %v9186, %v9182
  %v10047 = vpack.c.b16 %v9187, %v9183
  %v10048 = vpack.c.b16 %v9188, %v9184
  %v10049 = vpack.c.b16 %v9193, %v9189
  %v10050 = vpack.c.b16 %v9194, %v9190
  %v10051 = vpack.c.b16 %v9195, %v9191
  %v10052 = vpack.c.b16 %v9196, %v9192
  %v10053 = vpack.c.b16 %v9201, %v9197
  %v10054 = vpack.c.b16 %v9202, %v9198
  %v10055 = vpack.c.b16 %v9203, %v9199
  %v10056 = vpack.c.b16 %v9204, %v9200
  %v10057 = vpack.c.b16 %v9209, %v9205
  %v10058 = vpack.c.b16 %v9210, %v9206
  %v10059 = vpack.c.b16 %v9211, %v9207
  %v10060 = vpack.c.b16 %v9212, %v9208
  %v10061 = vpack.c.b16 %v9217, %v9213
  %v10062 = vpack.c.b16 %v9218, %v9214
  %v10063 = vpack.c.b16 %v9219, %v9215
  %v10064 = vpack.c.b16 %v9220, %v9216
  %v10065 = vpack.c.b16 %v9225, %v9221
  %v10066 = vpack.c.b16 %v9226, %v9222
  %v10067 = vpack.c.b16 %v9227, %v9223
  %v10068 = vpack.c.b16 %v9228, %v9224
  %v10069 = vpack.c.b16 %v9233, %v9229
  %v10070 = vpack.c.b16 %v9234, %v9230
  %v10071 = vpack.c.b16 %v9235, %v9231
  %v10072 = vpack.c.b16 %v9236, %v9232
  %v10073 = vpack.c.b16 %v9241, %v9237
  %v10074 = vpack.c.b16 %v9242, %v9238
  %v10075 = vpack.c.b16 %v9243, %v9239
  %v10076 = vpack.c.b16 %v9244, %v9240
  %v10077 = vpack.c.b16 %v9249, %v9245
  %v10078 = vpack.c.b16 %v9250, %v9246
  %v10079 = vpack.c.b16 %v9251, %v9247
  %v10080 = vpack.c.b16 %v9252, %v9248
  %v10081 = vpack.c.b16 %v9257, %v9253
  %v10082 = vpack.c.b16 %v9258, %v9254
  %v10083 = vpack.c.b16 %v9259, %v9255
  %v10084 = vpack.c.b16 %v9260, %v9256
  %v10085 = vpack.c.b16 %v9265, %v9261
  %v10086 = vpack.c.b16 %v9266, %v9262
  %v10087 = vpack.c.b16 %v9267, %v9263
  %v10088 = vpack.c.b16 %v9268, %v9264
  %v10089 = vpack.c.b16 %v9273, %v9269
  %v10090 = vpack.c.b16 %v9274, %v9270
  %v10091 = vpack.c.b16 %v9275, %v9271
  %v10092 = vpack.c.b16 %v9276, %v9272
  %v10093 = vpack.c.b16 %v9281, %v9277
  %v10094 = vpack.c.b16 %v9282, %v9278
  %v10095 = vpack.c.b16 %v9283, %v9279
  %v10096 = vpack.c.b16 %v9284, %v9280
  %v10097 = vpack.c.b16 %v9289, %v9285
  %v10098 = vpack.c.b16 %v9290, %v9286
  %v10099 = vpack.c.b16 %v9291, %v9287
  %v10100 = vpack.c.b16 %v9292, %v9288
  %v10101 = vpack.c.b16 %v9297, %v9293
  %v10102 = vpack.c.b16 %v9298, %v9294
  %v10103 = vpack.c.b16 %v9299, %v9295
  %v10104 = vpack.c.b16 %v9300, %v9296
  %v10105 = vpack.c.b16 %v9305, %v9301
  %v10106 = vpack.c.b16 %v9306, %v9302
  %v10107 = vpack.c.b16 %v9307, %v9303
  %v10108 = vpack.c.b16 %v9308, %v9304
  %v10109 = vpack.c.b16 %v9313, %v9309
  %v10110 = vpack.c.b16 %v9314, %v9310
  %v10111 = vpack.c.b16 %v9315, %v9311
  %v10112 = vpack.c.b16 %v9316, %v9312
  %v10113 = vpack.c.b16 %v9321, %v9317
  %v10114 = vpack.c.b16 %v9322, %v9318
  %v10115 = vpack.c.b16 %v9323, %v9319
  %v10116 = vpack.c.b16 %v9324, %v9320
  %v10117 = vpack.c.b16 %v9329, %v9325
  %v10118 = vpack.c.b16 %v9330, %v9326
  %v10119 = vpack.c.b16 %v9331, %v9327
  %v10120 = vpack.c.b16 %v9332, %v9328
  %v10121 = vpack.c.b16 %v9337, %v9333
  %v10122 = vpack.c.b16 %v9338, %v9334
  %v10123 = vpack.c.b16 %v9339, %v9335
  %v10124 = vpack.c.b16 %v9340, %v9336
  %v10125 = vpack.c.b16 %v9345, %v9341
  %v10126 = vpack.c.b16 %v9346, %v9342
  %v10127 = vpack.c.b16 %v9347, %v9343
  %v10128 = vpack.c.b16 %v9348, %v9344
  %v10129 = vpack.c.b16 %v9353, %v9349
  %v10130 = vpack.c.b16 %v9354, %v9350
  %v10131 = vpack.c.b16 %v9355, %v9351
  %v10132 = vpack.c.b16 %v9356, %v9352
  %v10133 = vpack.c.b16 %v9361, %v9357
  %v10134 = vpack.c.b16 %v9362, %v9358
  %v10135 = vpack.c.b16 %v9363, %v9359
  %v10136 = vpack.c.b16 %v9364, %v9360
  %v10137 = vpack.c.b16 %v9369, %v9365
  %v10138 = vpack.c.b16 %v9370, %v9366
  %v10139 = vpack.c.b16 %v9371, %v9367
  %v10140 = vpack.c.b16 %v9372, %v9368
  %v10141 = vpack.c.b16 %v9377, %v9373
  %v10142 = vpack.c.b16 %v9378, %v9374
  %v10143 = vpack.c.b16 %v9379, %v9375
  %v10144 = vpack.c.b16 %v9380, %v9376
  %v10145 = vpack.c.b16 %v9385, %v9381
  %v10146 = vpack.c.b16 %v9386, %v9382
  %v10147 = vpack.c.b16 %v9387, %v9383
  %v10148 = vpack.c.b16 %v9388, %v9384
  %v10149 = vpack.c.b16 %v9393, %v9389
  %v10150 = vpack.c.b16 %v9394, %v9390
  %v10151 = vpack.c.b16 %v9395, %v9391
  %v10152 = vpack.c.b16 %v9396, %v9392
  %v10153 = vpack.c.b16 %v9401, %v9397
  %v10154 = vpack.c.b16 %v9402, %v9398
  %v10155 = vpack.c.b16 %v9403, %v9399
  %v10156 = vpack.c.b16 %v9404, %v9400
  %v10157 = vpack.c.b16 %v9409, %v9405
  %v10158 = vpack.c.b16 %v9410, %v9406
  %v10159 = vpack.c.b16 %v9411, %v9407
  %v10160 = vpack.c.b16 %v9412, %v9408
  %v10161 = vpack.c.b16 %v9417, %v9413
  %v10162 = vpack.c.b16 %v9418, %v9414
  %v10163 = vpack.c.b16 %v9419, %v9415
  %v10164 = vpack.c.b16 %v9420, %v9416
  %v10165 = vpack.c.b16 %v9425, %v9421
  %v10166 = vpack.c.b16 %v9426, %v9422
  %v10167 = vpack.c.b16 %v9427, %v9423
  %v10168 = vpack.c.b16 %v9428, %v9424
  %v10169 = vpack.c.b16 %v9433, %v9429
  %v10170 = vpack.c.b16 %v9434, %v9430
  %v10171 = vpack.c.b16 %v9435, %v9431
  %v10172 = vpack.c.b16 %v9436, %v9432
  %v10173 = vpack.c.b16 %v9441, %v9437
  %v10174 = vpack.c.b16 %v9442, %v9438
  %v10175 = vpack.c.b16 %v9443, %v9439
  %v10176 = vpack.c.b16 %v9444, %v9440
  %v10177 = vpack.c.b16 %v9449, %v9445
  %v10178 = vpack.c.b16 %v9450, %v9446
  %v10179 = vpack.c.b16 %v9451, %v9447
  %v10180 = vpack.c.b16 %v9452, %v9448
  %v10181 = vpack.c.b16 %v9457, %v9453
  %v10182 = vpack.c.b16 %v9458, %v9454
  %v10183 = vpack.c.b16 %v9459, %v9455
  %v10184 = vpack.c.b16 %v9460, %v9456
  %v10185 = vpack.c.b16 %v9465, %v9461
  %v10186 = vpack.c.b16 %v9466, %v9462
  %v10187 = vpack.c.b16 %v9467, %v9463
  %v10188 = vpack.c.b16 %v9468, %v9464
  %v10189 = vpack.c.b16 %v9473, %v9469
  %v10190 = vpack.c.b16 %v9474, %v9470
  %v10191 = vpack.c.b16 %v9475, %v9471
  %v10192 = vpack.c.b16 %v9476, %v9472
  %v10193 = vpack.c.b16 %v9481, %v9477
  %v10194 = vpack.c.b16 %v9482, %v9478
  %v10195 = vpack.c.b16 %v9483, %v9479
  %v10196 = vpack.c.b16 %v9484, %v9480
  %v10197 = vpack.c.b16 %v9489, %v9485
  %v10198 = vpack.c.b16 %v9490, %v9486
  %v10199 = vpack.c.b16 %v9491, %v9487
  %v10200 = vpack.c.b16 %v9492, %v9488
  %v10201 = vpack.c.b16 %v9497, %v9493
  %v10202 = vpack.c.b16 %v9498, %v9494
  %v10203 = vpack.c.b16 %v9499, %v9495
  %v10204 = vpack.c.b16 %v9500, %v9496
  %v10205 = vpack.c.b16 %v9505, %v9501
  %v10206 = vpack.c.b16 %v9506, %v9502
  %v10207 = vpack.c.b16 %v9507, %v9503
  %v10208 = vpack.c.b16 %v9508, %v9504
  %v10209 = vpack.c.b16 %v9513, %v9509
  %v10210 = vpack.c.b16 %v9514, %v9510
  %v10211 = vpack.c.b16 %v9515, %v9511
  %v10212 = vpack.c.b16 %v9516, %v9512
  %v10213 = vpack.c.b16 %v9521, %v9517
  %v10214 = vpack.c.b16 %v9522, %v9518
  %v10215 = vpack.c.b16 %v9523, %v9519
  %v10216 = vpack.c.b16 %v9524, %v9520
  %v10217 = vpack.c.b16 %v9529, %v9525
  %v10218 = vpack.c.b16 %v9530, %v9526
  %v10219 = vpack.c.b16 %v9531, %v9527
  %v10220 = vpack.c.b16 %v9532, %v9528
  %v10221 = vpack.c.b16 %v9537, %v9533
  %v10222 = vpack.c.b16 %v9538, %v9534
  %v10223 = vpack.c.b16 %v9539, %v9535
  %v10224 = vpack.c.b16 %v9540, %v9536
  %v10225 = vpack.c.b16 %v9545, %v9541
  %v10226 = vpack.c.b16 %v9546, %v9542
  %v10227 = vpack.c.b16 %v9547, %v9543
  %v10228 = vpack.c.b16 %v9548, %v9544
  %v10229 = vpack.c.b16 %v9553, %v9549
  %v10230 = vpack.c.b16 %v9554, %v9550
  %v10231 = vpack.c.b16 %v9555, %v9551
  %v10232 = vpack.c.b16 %v9556, %v9552
  %v10233 = vpack.c.b16 %v9561, %v9557
  %v10234 = vpack.c.b16 %v9562, %v9558
  %v10235 = vpack.c.b16 %v9563, %v9559
  %v10236 = vpack.c.b16 %v9564, %v9560
  %v10237 = vpack.c.b16 %v9569, %v9565
  %v10238 = vpack.c.b16 %v9570, %v9566
  %v10239 = vpack.c.b16 %v9571, %v9567
  %v10240 = vpack.c.b16 %v9572, %v9568
  %v10241 = vpack.c.b16 %v9577, %v9573
  %v10242 = vpack.c.b16 %v9578, %v9574
  %v10243 = vpack.c.b16 %v9579, %v9575
  %v10244 = vpack.c.b16 %v9580, %v9576
  %v10245 = vpack.c.b16 %v9585, %v9581
  %v10246 = vpack.c.b16 %v9586, %v9582
  %v10247 = vpack.c.b16 %v9587, %v9583
  %v10248 = vpack.c.b16 %v9588, %v9584
  %v10249 = vpack.c.b16 %v9593, %v9589
  %v10250 = vpack.c.b16 %v9594, %v9590
  %v10251 = vpack.c.b16 %v9595, %v9591
  %v10252 = vpack.c.b16 %v9596, %v9592
  %v10253 = vpack.c.b16 %v9601, %v9597
  %v10254 = vpack.c.b16 %v9602, %v9598
  %v10255 = vpack.c.b16 %v9603, %v9599
  %v10256 = vpack.c.b16 %v9604, %v9600
  %v10257 = vpack.c.b16 %v9609, %v9605
  %v10258 = vpack.c.b16 %v9610, %v9606
  %v10259 = vpack.c.b16 %v9611, %v9607
  %v10260 = vpack.c.b16 %v9612, %v9608
  %v10261 = vpack.c.b16 %v9617, %v9613
  %v10262 = vpack.c.b16 %v9618, %v9614
  %v10263 = vpack.c.b16 %v9619, %v9615
  %v10264 = vpack.c.b16 %v9620, %v9616
  %v10265 = vpack.c.b16 %v9625, %v9621
  %v10266 = vpack.c.b16 %v9626, %v9622
  %v10267 = vpack.c.b16 %v9627, %v9623
  %v10268 = vpack.c.b16 %v9628, %v9624
  %v10269 = vpack.c.b16 %v9633, %v9629
  %v10270 = vpack.c.b16 %v9634, %v9630
  %v10271 = vpack.c.b16 %v9635, %v9631
  %v10272 = vpack.c.b16 %v9636, %v9632
  %v10273 = vpack.c.b16 %v9641, %v9637
  %v10274 = vpack.c.b16 %v9642, %v9638
  %v10275 = vpack.c.b16 %v9643, %v9639
  %v10276 = vpack.c.b16 %v9644, %v9640
  %v10277 = vpack.c.b16 %v9649, %v9645
  %v10278 = vpack.c.b16 %v9650, %v9646
  %v10279 = vpack.c.b16 %v9651, %v9647
  %v10280 = vpack.c.b16 %v9652, %v9648
  %v10281 = vpack.c.b16 %v9657, %v9653
  %v10282 = vpack.c.b16 %v9658, %v9654
  %v10283 = vpack.c.b16 %v9659, %v9655
  %v10284 = vpack.c.b16 %v9660, %v9656
  %v10285 = vpack.c.b16 %v9665, %v9661
  %v10286 = vpack.c.b16 %v9666, %v9662
  %v10287 = vpack.c.b16 %v9667, %v9663
  %v10288 = vpack.c.b16 %v9668, %v9664
  %v10289 = vpack.c.b16 %v9673, %v9669
  %v10290 = vpack.c.b16 %v9674, %v9670
  %v10291 = vpack.c.b16 %v9675, %v9671
  %v10292 = vpack.c.b16 %v9676, %v9672
  %v10293 = vpack.c.b16 %v9681, %v9677
  %v10294 = vpack.c.b16 %v9682, %v9678
  %v10295 = vpack.c.b16 %v9683, %v9679
  %v10296 = vpack.c.b16 %v9684, %v9680
  %v10297 = vpack.c.b16 %v9689, %v9685
  %v10298 = vpack.c.b16 %v9690, %v9686
  %v10299 = vpack.c.b16 %v9691, %v9687
  %v10300 = vpack.c.b16 %v9692, %v9688
  %v10301 = vpack.c.b16 %v9697, %v9693
  %v10302 = vpack.c.b16 %v9698, %v9694
  %v10303 = vpack.c.b16 %v9699, %v9695
  %v10304 = vpack.c.b16 %v9700, %v9696
  %v10305 = vpack.c.b16 %v9705, %v9701
  %v10306 = vpack.c.b16 %v9706, %v9702
  %v10307 = vpack.c.b16 %v9707, %v9703
  %v10308 = vpack.c.b16 %v9708, %v9704
  %v10309 = vpack.c.b16 %v9713, %v9709
  %v10310 = vpack.c.b16 %v9714, %v9710
  %v10311 = vpack.c.b16 %v9715, %v9711
  %v10312 = vpack.c.b16 %v9716, %v9712
  %v10313 = vpack.c.b16 %v9721, %v9717
  %v10314 = vpack.c.b16 %v9722, %v9718
  %v10315 = vpack.c.b16 %v9723, %v9719
  %v10316 = vpack.c.b16 %v9724, %v9720
  %v10317 = vpack.c.b16 %v9729, %v9725
  %v10318 = vpack.c.b16 %v9730, %v9726
  %v10319 = vpack.c.b16 %v9731, %v9727
  %v10320 = vpack.c.b16 %v9732, %v9728
  %v10321 = vpack.c.b16 %v9737, %v9733
  %v10322 = vpack.c.b16 %v9738, %v9734
  %v10323 = vpack.c.b16 %v9739, %v9735
  %v10324 = vpack.c.b16 %v9740, %v9736
  %v10325 = vpack.c.b16 %v9745, %v9741
  %v10326 = vpack.c.b16 %v9746, %v9742
  %v10327 = vpack.c.b16 %v9747, %v9743
  %v10328 = vpack.c.b16 %v9748, %v9744
  %v10329 = vpack.c.b16 %v9753, %v9749
  %v10330 = vpack.c.b16 %v9754, %v9750
  %v10331 = vpack.c.b16 %v9755, %v9751
  %v10332 = vpack.c.b16 %v9756, %v9752
  %v10333 = vpack.c.b16 %v9761, %v9757
  %v10334 = vpack.c.b16 %v9762, %v9758
  %v10335 = vpack.c.b16 %v9763, %v9759
  %v10336 = vpack.c.b16 %v9764, %v9760
  %v10337 = vpack.c.b16 %v9769, %v9765
  %v10338 = vpack.c.b16 %v9770, %v9766
  %v10339 = vpack.c.b16 %v9771, %v9767
  %v10340 = vpack.c.b16 %v9772, %v9768
  %v10341 = vpack.c.b16 %v9777, %v9773
  %v10342 = vpack.c.b16 %v9778, %v9774
  %v10343 = vpack.c.b16 %v9779, %v9775
  %v10344 = vpack.c.b16 %v9780, %v9776
  %v10345 = vpack.c.b16 %v9785, %v9781
  %v10346 = vpack.c.b16 %v9786, %v9782
  %v10347 = vpack.c.b16 %v9787, %v9783
  %v10348 = vpack.c.b16 %v9788, %v9784
  %v10349 = vpack.c.b16 %v9793, %v9789
  %v10350 = vpack.c.b16 %v9794, %v9790
  %v10351 = vpack.c.b16 %v9795, %v9791
  %v10352 = vpack.c.b16 %v9796, %v9792
  %v10353 = vpack.c.b16 %v9801, %v9797
  %v10354 = vpack.c.b16 %v9802, %v9798
  %v10355 = vpack.c.b16 %v9803, %v9799
  %v10356 = vpack.c.b16 %v9804, %v9800
  %v10357 = vpack.c.b16 %v9809, %v9805
  %v10358 = vpack.c.b16 %v9810, %v9806
  %v10359 = vpack.c.b16 %v9811, %v9807
  %v10360 = vpack.c.b16 %v9812, %v9808
  %v10361 = vpack.c.b16 %v9817, %v9813
  %v10362 = vpack.c.b16 %v9818, %v9814
  %v10363 = vpack.c.b16 %v9819, %v9815
  %v10364 = vpack.c.b16 %v9820, %v9816
  %v10365 = vpack.c.b16 %v9825, %v9821
  %v10366 = vpack.c.b16 %v9826, %v9822
  %v10367 = vpack.c.b16 %v9827, %v9823
  %v10368 = vpack.c.b16 %v9828, %v9824
  %v10369 = vpack.c.b16 %v9833, %v9829
  %v10370 = vpack.c.b16 %v9834, %v9830
  %v10371 = vpack.c.b16 %v9835, %v9831
  %v10372 = vpack.c.b16 %v9836, %v9832
  %v10373 = vpack.c.b16 %v9841, %v9837
  %v10374 = vpack.c.b16 %v9842, %v9838
  %v10375 = vpack.c.b16 %v9843, %v9839
  %v10376 = vpack.c.b16 %v9844, %v9840
  %v10377 = vpack.c.b16 %v9849, %v9845
  %v10378 = vpack.c.b16 %v9850, %v9846
  %v10379 = vpack.c.b16 %v9851, %v9847
  %v10380 = vpack.c.b16 %v9852, %v9848
  %v10381 = vpack.c.b16 %v9857, %v9853
  %v10382 = vpack.c.b16 %v9858, %v9854
  %v10383 = vpack.c.b16 %v9859, %v9855
  %v10384 = vpack.c.b16 %v9860, %v9856
  %v10385 = vpack.c.b16 %v9865, %v9861
  %v10386 = vpack.c.b16 %v9866, %v9862
  %v10387 = vpack.c.b16 %v9867, %v9863
  %v10388 = vpack.c.b16 %v9868, %v9864
  %v10389 = vpack.c.b16 %v9873, %v9869
  %v10390 = vpack.c.b16 %v9874, %v9870
  %v10391 = vpack.c.b16 %v9875, %v9871
  %v10392 = vpack.c.b16 %v9876, %v9872
  %v10393 = vpack.c.b16 %v9881, %v9877
  %v10394 = vpack.c.b16 %v9882, %v9878
  %v10395 = vpack.c.b16 %v9883, %v9879
  %v10396 = vpack.c.b16 %v9884, %v9880
  %10909 = vmatprep.subr.bf16.mxu0 %v9886
  %10910 = vmatpush1.bf16.msra.mxu0 %v9885
  %10911 = vmatprep.subr.bf16.mxu0 %v9890
  %10912 = vmatpush1.bf16.msra.mxu0 %v9889
  %10913 = vmatprep.subr.bf16.mxu0 %v9894
  %10914 = vmatpush1.bf16.msra.mxu0 %v9893
  %10915 = vmatprep.subr.bf16.mxu0 %v9898
  %10916 = vmatpush1.bf16.msra.mxu0 %v9897
  %10917 = vmatprep.subr.bf16.mxu0 %v9902
  %10918 = vmatpush1.bf16.msra.mxu0 %v9901
  %10919 = vmatprep.subr.bf16.mxu0 %v9906
  %10920 = vmatpush1.bf16.msra.mxu0 %v9905
  %10921 = vmatprep.subr.bf16.mxu0 %v9910
  %10922 = vmatpush1.bf16.msra.mxu0 %v9909
  %10923 = vmatprep.subr.bf16.mxu0 %v9914
  %10924 = vmatpush1.bf16.msra.mxu0 %v9913
  %10925 = vmatprep.subr.bf16.mxu0 %v9918
  %10926 = vmatpush1.bf16.msra.mxu0 %v9917
  %10927 = vmatprep.subr.bf16.mxu0 %v9922
  %10928 = vmatpush1.bf16.msra.mxu0 %v9921
  %10929 = vmatprep.subr.bf16.mxu0 %v9926
  %10930 = vmatpush1.bf16.msra.mxu0 %v9925
  %10931 = vmatprep.subr.bf16.mxu0 %v9930
  %10932 = vmatpush1.bf16.msra.mxu0 %v9929
  %10933 = vmatprep.subr.bf16.mxu0 %v9934
  %10934 = vmatpush1.bf16.msra.mxu0 %v9933
  %10935 = vmatprep.subr.bf16.mxu0 %v9938
  %10936 = vmatpush1.bf16.msra.mxu0 %v9937
  %10937 = vmatprep.subr.bf16.mxu0 %v9942
  %10938 = vmatpush1.bf16.msra.mxu0 %v9941
  %10939 = vmatprep.subr.bf16.mxu0 %v9946
  %10940 = vmatpush1.bf16.msra.mxu0 %v9945
  %10941 = vmatprep.mubr.bf16.mxu0 %v8318
  %10942 = vmatmul.mubr.bf16.gmra.mrb[0].mxu0 %v8317
  %v10943 = vpop.f32.mrb[0].mxu0
  %v10944 = vadd.f32 0.0, %v10943
  %v10945 = vpop.f32.mrb[0].mxu0
  %v10946 = vadd.f32 0.0, %v10945
  %v10947 = vpop.f32.mrb[0].mxu0
  %v10948 = vadd.f32 0.0, %v10947
  %v10949 = vpop.f32.mrb[0].mxu0
  %v10950 = vadd.f32 0.0, %v10949
  %10951 = vdwg.mxu0
  %10952 = vmatprep.subr.bf16.mxu0 %v9950
  %10953 = vmatpush1.bf16.msra.mxu0 %v9949
  %10954 = vmatprep.subr.bf16.mxu0 %v9954
  %10955 = vmatpush1.bf16.msra.mxu0 %v9953
  %10956 = vmatprep.subr.bf16.mxu0 %v9958
  %10957 = vmatpush1.bf16.msra.mxu0 %v9957
  %10958 = vmatprep.subr.bf16.mxu0 %v9962
  %10959 = vmatpush1.bf16.msra.mxu0 %v9961
  %10960 = vmatprep.subr.bf16.mxu0 %v9966
  %10961 = vmatpush1.bf16.msra.mxu0 %v9965
  %10962 = vmatprep.subr.bf16.mxu0 %v9970
  %10963 = vmatpush1.bf16.msra.mxu0 %v9969
  %10964 = vmatprep.subr.bf16.mxu0 %v9974
  %10965 = vmatpush1.bf16.msra.mxu0 %v9973
  %10966 = vmatprep.subr.bf16.mxu0 %v9978
  %10967 = vmatpush1.bf16.msra.mxu0 %v9977
  %10968 = vmatprep.subr.bf16.mxu0 %v9982
  %10969 = vmatpush1.bf16.msra.mxu0 %v9981
  %10970 = vmatprep.subr.bf16.mxu0 %v9986
  %10971 = vmatpush1.bf16.msra.mxu0 %v9985
  %10972 = vmatprep.subr.bf16.mxu0 %v9990
  %10973 = vmatpush1.bf16.msra.mxu0 %v9989
  %10974 = vmatprep.subr.bf16.mxu0 %v9994
  %10975 = vmatpush1.bf16.msra.mxu0 %v9993
  %10976 = vmatprep.subr.bf16.mxu0 %v9998
  %10977 = vmatpush1.bf16.msra.mxu0 %v9997
  %10978 = vmatprep.subr.bf16.mxu0 %v10002
  %10979 = vmatpush1.bf16.msra.mxu0 %v10001
  %10980 = vmatprep.subr.bf16.mxu0 %v10006
  %10981 = vmatpush1.bf16.msra.mxu0 %v10005
  %10982 = vmatprep.subr.bf16.mxu0 %v10010
  %10983 = vmatpush1.bf16.msra.mxu0 %v10009
  %10984 = vmatprep.mubr.bf16.mxu0 %v8320
  %10985 = vmatmul.mubr.bf16.gmra.mrb[0].mxu0 %v8319
  %v10986 = vpop.f32.mrb[0].mxu0
  %v10987 = vadd.f32 %v10944, %v10986
  %v10988 = vpop.f32.mrb[0].mxu0
  %v10989 = vadd.f32 %v10946, %v10988
  %v10990 = vpop.f32.mrb[0].mxu0
  %v10991 = vadd.f32 %v10948, %v10990
  %v10992 = vpop.f32.mrb[0].mxu0
  %v10993 = vadd.f32 %v10950, %v10992
  %10994 = vdwg.mxu0
  %10995 = vmatprep.subr.bf16.mxu0 %v10014
  %10996 = vmatpush1.bf16.msra.mxu0 %v10013
  %10997 = vmatprep.subr.bf16.mxu0 %v10018
  %10998 = vmatpush1.bf16.msra.mxu0 %v10017
  %10999 = vmatprep.subr.bf16.mxu0 %v10022
  %11000 = vmatpush1.bf16.msra.mxu0 %v10021
  %11001 = vmatprep.subr.bf16.mxu0 %v10026
  %11002 = vmatpush1.bf16.msra.mxu0 %v10025
  %11003 = vmatprep.subr.bf16.mxu0 %v10030
  %11004 = vmatpush1.bf16.msra.mxu0 %v10029
  %11005 = vmatprep.subr.bf16.mxu0 %v10034
  %11006 = vmatpush1.bf16.msra.mxu0 %v10033
  %11007 = vmatprep.subr.bf16.mxu0 %v10038
  %11008 = vmatpush1.bf16.msra.mxu0 %v10037
  %11009 = vmatprep.subr.bf16.mxu0 %v10042
  %11010 = vmatpush1.bf16.msra.mxu0 %v10041
  %11011 = vmatprep.subr.bf16.mxu0 %v10046
  %11012 = vmatpush1.bf16.msra.mxu0 %v10045
  %11013 = vmatprep.subr.bf16.mxu0 %v10050
  %11014 = vmatpush1.bf16.msra.mxu0 %v10049
  %11015 = vmatprep.subr.bf16.mxu0 %v10054
  %11016 = vmatpush1.bf16.msra.mxu0 %v10053
  %11017 = vmatprep.subr.bf16.mxu0 %v10058
  %11018 = vmatpush1.bf16.msra.mxu0 %v10057
  %11019 = vmatprep.subr.bf16.mxu0 %v10062
  %11020 = vmatpush1.bf16.msra.mxu0 %v10061
  %11021 = vmatprep.subr.bf16.mxu0 %v10066
  %11022 = vmatpush1.bf16.msra.mxu0 %v10065
  %11023 = vmatprep.subr.bf16.mxu0 %v10070
  %11024 = vmatpush1.bf16.msra.mxu0 %v10069
  %11025 = vmatprep.subr.bf16.mxu0 %v10074
  %11026 = vmatpush1.bf16.msra.mxu0 %v10073
  %11027 = vmatprep.mubr.bf16.mxu0 %v8322
  %11028 = vmatmul.mubr.bf16.gmra.mrb[0].mxu0 %v8321
  %v11029 = vpop.f32.mrb[0].mxu0
  %v11030 = vadd.f32 %v10987, %v11029
  %v11031 = vpop.f32.mrb[0].mxu0
  %v11032 = vadd.f32 %v10989, %v11031
  %v11033 = vpop.f32.mrb[0].mxu0
  %v11034 = vadd.f32 %v10991, %v11033
  %v11035 = vpop.f32.mrb[0].mxu0
  %v11036 = vadd.f32 %v10993, %v11035
  %11037 = vdwg.mxu0
  %11038 = vmatprep.subr.bf16.mxu0 %v10078
  %11039 = vmatpush1.bf16.msra.mxu0 %v10077
  %11040 = vmatprep.subr.bf16.mxu0 %v10082
  %11041 = vmatpush1.bf16.msra.mxu0 %v10081
  %11042 = vmatprep.subr.bf16.mxu0 %v10086
  %11043 = vmatpush1.bf16.msra.mxu0 %v10085
  %11044 = vmatprep.subr.bf16.mxu0 %v10090
  %11045 = vmatpush1.bf16.msra.mxu0 %v10089
  %11046 = vmatprep.subr.bf16.mxu0 %v10094
  %11047 = vmatpush1.bf16.msra.mxu0 %v10093
  %11048 = vmatprep.subr.bf16.mxu0 %v10098
  %11049 = vmatpush1.bf16.msra.mxu0 %v10097
  %11050 = vmatprep.subr.bf16.mxu0 %v10102
  %11051 = vmatpush1.bf16.msra.mxu0 %v10101
  %11052 = vmatprep.subr.bf16.mxu0 %v10106
  %11053 = vmatpush1.bf16.msra.mxu0 %v10105
  %11054 = vmatprep.subr.bf16.mxu0 %v10110
  %11055 = vmatpush1.bf16.msra.mxu0 %v10109
  %11056 = vmatprep.subr.bf16.mxu0 %v10114
  %11057 = vmatpush1.bf16.msra.mxu0 %v10113
  %11058 = vmatprep.subr.bf16.mxu0 %v10118
  %11059 = vmatpush1.bf16.msra.mxu0 %v10117
  %11060 = vmatprep.subr.bf16.mxu0 %v10122
  %11061 = vmatpush1.bf16.msra.mxu0 %v10121
  %11062 = vmatprep.subr.bf16.mxu0 %v10126
  %11063 = vmatpush1.bf16.msra.mxu0 %v10125
  %11064 = vmatprep.subr.bf16.mxu0 %v10130
  %11065 = vmatpush1.bf16.msra.mxu0 %v10129
  %11066 = vmatprep.subr.bf16.mxu0 %v10134
  %11067 = vmatpush1.bf16.msra.mxu0 %v10133
  %11068 = vmatprep.subr.bf16.mxu0 %v10138
  %11069 = vmatpush1.bf16.msra.mxu0 %v10137
  %11070 = vmatprep.mubr.bf16.mxu0 %v8324
  %11071 = vmatmul.mubr.bf16.gmra.mrb[0].mxu0 %v8323
  %v11072 = vpop.f32.mrb[0].mxu0
  %v11073 = vadd.f32 %v11030, %v11072
  %v11074 = vpop.f32.mrb[0].mxu0
  %v11075 = vadd.f32 %v11032, %v11074
  %v11076 = vpop.f32.mrb[0].mxu0
  %v11077 = vadd.f32 %v11034, %v11076
  %v11078 = vpop.f32.mrb[0].mxu0
  %v11079 = vadd.f32 %v11036, %v11078
  %11080 = vdwg.mxu0
  %11081 = vmatprep.subr.bf16.mxu0 %v10142
  %11082 = vmatpush1.bf16.msra.mxu0 %v10141
  %11083 = vmatprep.subr.bf16.mxu0 %v10146
  %11084 = vmatpush1.bf16.msra.mxu0 %v10145
  %11085 = vmatprep.subr.bf16.mxu0 %v10150
  %11086 = vmatpush1.bf16.msra.mxu0 %v10149
  %11087 = vmatprep.subr.bf16.mxu0 %v10154
  %11088 = vmatpush1.bf16.msra.mxu0 %v10153
  %11089 = vmatprep.subr.bf16.mxu0 %v10158
  %11090 = vmatpush1.bf16.msra.mxu0 %v10157
  %11091 = vmatprep.subr.bf16.mxu0 %v10162
  %11092 = vmatpush1.bf16.msra.mxu0 %v10161
  %11093 = vmatprep.subr.bf16.mxu0 %v10166
  %11094 = vmatpush1.bf16.msra.mxu0 %v10165
  %11095 = vmatprep.subr.bf16.mxu0 %v10170
  %11096 = vmatpush1.bf16.msra.mxu0 %v10169
  %11097 = vmatprep.subr.bf16.mxu0 %v10174
  %11098 = vmatpush1.bf16.msra.mxu0 %v10173
  %11099 = vmatprep.subr.bf16.mxu0 %v10178
  %11100 = vmatpush1.bf16.msra.mxu0 %v10177
  %11101 = vmatprep.subr.bf16.mxu0 %v10182
  %11102 = vmatpush1.bf16.msra.mxu0 %v10181
  %11103 = vmatprep.subr.bf16.mxu0 %v10186
  %11104 = vmatpush1.bf16.msra.mxu0 %v10185
  %11105 = vmatprep.subr.bf16.mxu0 %v10190
  %11106 = vmatpush1.bf16.msra.mxu0 %v10189
  %11107 = vmatprep.subr.bf16.mxu0 %v10194
  %11108 = vmatpush1.bf16.msra.mxu0 %v10193
  %11109 = vmatprep.subr.bf16.mxu0 %v10198
  %11110 = vmatpush1.bf16.msra.mxu0 %v10197
  %11111 = vmatprep.subr.bf16.mxu0 %v10202
  %11112 = vmatpush1.bf16.msra.mxu0 %v10201
  %11113 = vmatprep.mubr.bf16.mxu0 %v8326
  %11114 = vmatmul.mubr.bf16.gmra.mrb[0].mxu0 %v8325
  %v11115 = vpop.f32.mrb[0].mxu0
  %v11116 = vadd.f32 %v11073, %v11115
  %v11117 = vpop.f32.mrb[0].mxu0
  %v11118 = vadd.f32 %v11075, %v11117
  %v11119 = vpop.f32.mrb[0].mxu0
  %v11120 = vadd.f32 %v11077, %v11119
  %v11121 = vpop.f32.mrb[0].mxu0
  %v11122 = vadd.f32 %v11079, %v11121
  %11123 = vdwg.mxu0
  %11124 = vmatprep.subr.bf16.mxu0 %v10206
  %11125 = vmatpush1.bf16.msra.mxu0 %v10205
  %11126 = vmatprep.subr.bf16.mxu0 %v10210
  %11127 = vmatpush1.bf16.msra.mxu0 %v10209
  %11128 = vmatprep.subr.bf16.mxu0 %v10214
  %11129 = vmatpush1.bf16.msra.mxu0 %v10213
  %11130 = vmatprep.subr.bf16.mxu0 %v10218
  %11131 = vmatpush1.bf16.msra.mxu0 %v10217
  %11132 = vmatprep.subr.bf16.mxu0 %v10222
  %11133 = vmatpush1.bf16.msra.mxu0 %v10221
  %11134 = vmatprep.subr.bf16.mxu0 %v10226
  %11135 = vmatpush1.bf16.msra.mxu0 %v10225
  %11136 = vmatprep.subr.bf16.mxu0 %v10230
  %11137 = vmatpush1.bf16.msra.mxu0 %v10229
  %11138 = vmatprep.subr.bf16.mxu0 %v10234
  %11139 = vmatpush1.bf16.msra.mxu0 %v10233
  %11140 = vmatprep.subr.bf16.mxu0 %v10238
  %11141 = vmatpush1.bf16.msra.mxu0 %v10237
  %11142 = vmatprep.subr.bf16.mxu0 %v10242
  %11143 = vmatpush1.bf16.msra.mxu0 %v10241
  %11144 = vmatprep.subr.bf16.mxu0 %v10246
  %11145 = vmatpush1.bf16.msra.mxu0 %v10245
  %11146 = vmatprep.subr.bf16.mxu0 %v10250
  %11147 = vmatpush1.bf16.msra.mxu0 %v10249
  %11148 = vmatprep.subr.bf16.mxu0 %v10254
  %11149 = vmatpush1.bf16.msra.mxu0 %v10253
  %11150 = vmatprep.subr.bf16.mxu0 %v10258
  %11151 = vmatpush1.bf16.msra.mxu0 %v10257
  %11152 = vmatprep.subr.bf16.mxu0 %v10262
  %11153 = vmatpush1.bf16.msra.mxu0 %v10261
  %11154 = vmatprep.subr.bf16.mxu0 %v10266
  %11155 = vmatpush1.bf16.msra.mxu0 %v10265
  %11156 = vmatprep.mubr.bf16.mxu0 %v8328
  %11157 = vmatmul.mubr.bf16.gmra.mrb[0].mxu0 %v8327
  %v11158 = vpop.f32.mrb[0].mxu0
  %v11159 = vadd.f32 %v11116, %v11158
  %v11160 = vpop.f32.mrb[0].mxu0
  %v11161 = vadd.f32 %v11118, %v11160
  %v11162 = vpop.f32.mrb[0].mxu0
  %v11163 = vadd.f32 %v11120, %v11162
  %v11164 = vpop.f32.mrb[0].mxu0
  %v11165 = vadd.f32 %v11122, %v11164
  %11166 = vdwg.mxu0
  %11167 = vmatprep.subr.bf16.mxu0 %v10270
  %11168 = vmatpush1.bf16.msra.mxu0 %v10269
  %11169 = vmatprep.subr.bf16.mxu0 %v10274
  %11170 = vmatpush1.bf16.msra.mxu0 %v10273
  %11171 = vmatprep.subr.bf16.mxu0 %v10278
  %11172 = vmatpush1.bf16.msra.mxu0 %v10277
  %11173 = vmatprep.subr.bf16.mxu0 %v10282
  %11174 = vmatpush1.bf16.msra.mxu0 %v10281
  %11175 = vmatprep.subr.bf16.mxu0 %v10286
  %11176 = vmatpush1.bf16.msra.mxu0 %v10285
  %11177 = vmatprep.subr.bf16.mxu0 %v10290
  %11178 = vmatpush1.bf16.msra.mxu0 %v10289
  %11179 = vmatprep.subr.bf16.mxu0 %v10294
  %11180 = vmatpush1.bf16.msra.mxu0 %v10293
  %11181 = vmatprep.subr.bf16.mxu0 %v10298
  %11182 = vmatpush1.bf16.msra.mxu0 %v10297
  %11183 = vmatprep.subr.bf16.mxu0 %v10302
  %11184 = vmatpush1.bf16.msra.mxu0 %v10301
  %11185 = vmatprep.subr.bf16.mxu0 %v10306
  %11186 = vmatpush1.bf16.msra.mxu0 %v10305
  %11187 = vmatprep.subr.bf16.mxu0 %v10310
  %11188 = vmatpush1.bf16.msra.mxu0 %v10309
  %11189 = vmatprep.subr.bf16.mxu0 %v10314
  %11190 = vmatpush1.bf16.msra.mxu0 %v10313
  %11191 = vmatprep.subr.bf16.mxu0 %v10318
  %11192 = vmatpush1.bf16.msra.mxu0 %v10317
  %11193 = vmatprep.subr.bf16.mxu0 %v10322
  %11194 = vmatpush1.bf16.msra.mxu0 %v10321
  %11195 = vmatprep.subr.bf16.mxu0 %v10326
  %11196 = vmatpush1.bf16.msra.mxu0 %v10325
  %11197 = vmatprep.subr.bf16.mxu0 %v10330
  %11198 = vmatpush1.bf16.msra.mxu0 %v10329
  %11199 = vmatprep.mubr.bf16.mxu0 %v8330
  %11200 = vmatmul.mubr.bf16.gmra.mrb[0].mxu0 %v8329
  %v11201 = vpop.f32.mrb[0].mxu0
  %v11202 = vadd.f32 %v11159, %v11201
  %v11203 = vpop.f32.mrb[0].mxu0
  %v11204 = vadd.f32 %v11161, %v11203
  %v11205 = vpop.f32.mrb[0].mxu0
  %v11206 = vadd.f32 %v11163, %v11205
  %v11207 = vpop.f32.mrb[0].mxu0
  %v11208 = vadd.f32 %v11165, %v11207
  %11209 = vdwg.mxu0
  %11210 = vmatprep.subr.bf16.mxu0 %v10334
  %11211 = vmatpush1.bf16.msra.mxu0 %v10333
  %11212 = vmatprep.subr.bf16.mxu0 %v10338
  %11213 = vmatpush1.bf16.msra.mxu0 %v10337
  %11214 = vmatprep.subr.bf16.mxu0 %v10342
  %11215 = vmatpush1.bf16.msra.mxu0 %v10341
  %11216 = vmatprep.subr.bf16.mxu0 %v10346
  %11217 = vmatpush1.bf16.msra.mxu0 %v10345
  %11218 = vmatprep.subr.bf16.mxu0 %v10350
  %11219 = vmatpush1.bf16.msra.mxu0 %v10349
  %11220 = vmatprep.subr.bf16.mxu0 %v10354
  %11221 = vmatpush1.bf16.msra.mxu0 %v10353
  %11222 = vmatprep.subr.bf16.mxu0 %v10358
  %11223 = vmatpush1.bf16.msra.mxu0 %v10357
  %11224 = vmatprep.subr.bf16.mxu0 %v10362
  %11225 = vmatpush1.bf16.msra.mxu0 %v10361
  %11226 = vmatprep.subr.bf16.mxu0 %v10366
  %11227 = vmatpush1.bf16.msra.mxu0 %v10365
  %11228 = vmatprep.subr.bf16.mxu0 %v10370
  %11229 = vmatpush1.bf16.msra.mxu0 %v10369
  %11230 = vmatprep.subr.bf16.mxu0 %v10374
  %11231 = vmatpush1.bf16.msra.mxu0 %v10373
  %11232 = vmatprep.subr.bf16.mxu0 %v10378
  %11233 = vmatpush1.bf16.msra.mxu0 %v10377
  %11234 = vmatprep.subr.bf16.mxu0 %v10382
  %11235 = vmatpush1.bf16.msra.mxu0 %v10381
  %11236 = vmatprep.subr.bf16.mxu0 %v10386
  %11237 = vmatpush1.bf16.msra.mxu0 %v10385
  %11238 = vmatprep.subr.bf16.mxu0 %v10390
  %11239 = vmatpush1.bf16.msra.mxu0 %v10389
  %11240 = vmatprep.subr.bf16.mxu0 %v10394
  %11241 = vmatpush1.bf16.msra.mxu0 %v10393
  %11242 = vmatprep.mubr.bf16.mxu0 %v8332
  %11243 = vmatmul.mubr.bf16.gmra.mrb[0].mxu0 %v8331
  %v11244 = vpop.f32.mrb[0].mxu0
  %v11245 = vadd.f32 %v11202, %v11244
  %v11246 = vpop.f32.mrb[0].mxu0
  %v11247 = vadd.f32 %v11204, %v11246
  %v11248 = vpop.f32.mrb[0].mxu0
  %v11249 = vadd.f32 %v11206, %v11248
  %v11250 = vpop.f32.mrb[0].mxu0
  %v11251 = vadd.f32 %v11208, %v11250
  %11252 = vdwg.mxu0
  %11253 = vmatprep.subr.bf16.mxu0 %v9888
  %11254 = vmatpush1.bf16.msra.mxu0 %v9887
  %11255 = vmatprep.subr.bf16.mxu0 %v9892
  %11256 = vmatpush1.bf16.msra.mxu0 %v9891
  %11257 = vmatprep.subr.bf16.mxu0 %v9896
  %11258 = vmatpush1.bf16.msra.mxu0 %v9895
  %11259 = vmatprep.subr.bf16.mxu0 %v9900
  %11260 = vmatpush1.bf16.msra.mxu0 %v9899
  %11261 = vmatprep.subr.bf16.mxu0 %v9904
  %11262 = vmatpush1.bf16.msra.mxu0 %v9903
  %11263 = vmatprep.subr.bf16.mxu0 %v9908
  %11264 = vmatpush1.bf16.msra.mxu0 %v9907
  %11265 = vmatprep.subr.bf16.mxu0 %v9912
  %11266 = vmatpush1.bf16.msra.mxu0 %v9911
  %11267 = vmatprep.subr.bf16.mxu0 %v9916
  %11268 = vmatpush1.bf16.msra.mxu0 %v9915
  %11269 = vmatprep.subr.bf16.mxu0 %v9920
  %11270 = vmatpush1.bf16.msra.mxu0 %v9919
  %11271 = vmatprep.subr.bf16.mxu0 %v9924
  %11272 = vmatpush1.bf16.msra.mxu0 %v9923
  %11273 = vmatprep.subr.bf16.mxu0 %v9928
  %11274 = vmatpush1.bf16.msra.mxu0 %v9927
  %11275 = vmatprep.subr.bf16.mxu0 %v9932
  %11276 = vmatpush1.bf16.msra.mxu0 %v9931
  %11277 = vmatprep.subr.bf16.mxu0 %v9936
  %11278 = vmatpush1.bf16.msra.mxu0 %v9935
  %11279 = vmatprep.subr.bf16.mxu0 %v9940
  %11280 = vmatpush1.bf16.msra.mxu0 %v9939
  %11281 = vmatprep.subr.bf16.mxu0 %v9944
  %11282 = vmatpush1.bf16.msra.mxu0 %v9943
  %11283 = vmatprep.subr.bf16.mxu0 %v9948
  %11284 = vmatpush1.bf16.msra.mxu0 %v9947
  %11285 = vmatprep.mubr.bf16.mxu0 %v8318
  %11286 = vmatmul.mubr.bf16.gmra.mrb[0].mxu0 %v8317
  %v11287 = vpop.f32.mrb[0].mxu0
  %v11288 = vadd.f32 0.0, %v11287
  %v11289 = vpop.f32.mrb[0].mxu0
  %v11290 = vadd.f32 0.0, %v11289
  %v11291 = vpop.f32.mrb[0].mxu0
  %v11292 = vadd.f32 0.0, %v11291
  %v11293 = vpop.f32.mrb[0].mxu0
  %v11294 = vadd.f32 0.0, %v11293
  %11295 = vdwg.mxu0
  %11296 = vmatprep.subr.bf16.mxu0 %v9952
  %11297 = vmatpush1.bf16.msra.mxu0 %v9951
  %11298 = vmatprep.subr.bf16.mxu0 %v9956
  %11299 = vmatpush1.bf16.msra.mxu0 %v9955
  %11300 = vmatprep.subr.bf16.mxu0 %v9960
  %11301 = vmatpush1.bf16.msra.mxu0 %v9959
  %11302 = vmatprep.subr.bf16.mxu0 %v9964
  %11303 = vmatpush1.bf16.msra.mxu0 %v9963
  %11304 = vmatprep.subr.bf16.mxu0 %v9968
  %11305 = vmatpush1.bf16.msra.mxu0 %v9967
  %11306 = vmatprep.subr.bf16.mxu0 %v9972
  %11307 = vmatpush1.bf16.msra.mxu0 %v9971
  %11308 = vmatprep.subr.bf16.mxu0 %v9976
  %11309 = vmatpush1.bf16.msra.mxu0 %v9975
  %11310 = vmatprep.subr.bf16.mxu0 %v9980
  %11311 = vmatpush1.bf16.msra.mxu0 %v9979
  %11312 = vmatprep.subr.bf16.mxu0 %v9984
  %11313 = vmatpush1.bf16.msra.mxu0 %v9983
  %11314 = vmatprep.subr.bf16.mxu0 %v9988
  %11315 = vmatpush1.bf16.msra.mxu0 %v9987
  %11316 = vmatprep.subr.bf16.mxu0 %v9992
  %11317 = vmatpush1.bf16.msra.mxu0 %v9991
  %11318 = vmatprep.subr.bf16.mxu0 %v9996
  %11319 = vmatpush1.bf16.msra.mxu0 %v9995
  %11320 = vmatprep.subr.bf16.mxu0 %v10000
  %11321 = vmatpush1.bf16.msra.mxu0 %v9999
  %11322 = vmatprep.subr.bf16.mxu0 %v10004
  %11323 = vmatpush1.bf16.msra.mxu0 %v10003
  %11324 = vmatprep.subr.bf16.mxu0 %v10008
  %11325 = vmatpush1.bf16.msra.mxu0 %v10007
  %11326 = vmatprep.subr.bf16.mxu0 %v10012
  %11327 = vmatpush1.bf16.msra.mxu0 %v10011
  %11328 = vmatprep.mubr.bf16.mxu0 %v8320
  %11329 = vmatmul.mubr.bf16.gmra.mrb[0].mxu0 %v8319
  %v11330 = vpop.f32.mrb[0].mxu0
  %v11331 = vadd.f32 %v11288, %v11330
  %v11332 = vpop.f32.mrb[0].mxu0
  %v11333 = vadd.f32 %v11290, %v11332
  %v11334 = vpop.f32.mrb[0].mxu0
  %v11335 = vadd.f32 %v11292, %v11334
  %v11336 = vpop.f32.mrb[0].mxu0
  %v11337 = vadd.f32 %v11294, %v11336
  %11338 = vdwg.mxu0
  %11339 = vmatprep.subr.bf16.mxu0 %v10016
  %11340 = vmatpush1.bf16.msra.mxu0 %v10015
  %11341 = vmatprep.subr.bf16.mxu0 %v10020
  %11342 = vmatpush1.bf16.msra.mxu0 %v10019
  %11343 = vmatprep.subr.bf16.mxu0 %v10024
  %11344 = vmatpush1.bf16.msra.mxu0 %v10023
  %11345 = vmatprep.subr.bf16.mxu0 %v10028
  %11346 = vmatpush1.bf16.msra.mxu0 %v10027
  %11347 = vmatprep.subr.bf16.mxu0 %v10032
  %11348 = vmatpush1.bf16.msra.mxu0 %v10031
  %11349 = vmatprep.subr.bf16.mxu0 %v10036
  %11350 = vmatpush1.bf16.msra.mxu0 %v10035
  %11351 = vmatprep.subr.bf16.mxu0 %v10040
  %11352 = vmatpush1.bf16.msra.mxu0 %v10039
  %11353 = vmatprep.subr.bf16.mxu0 %v10044
  %11354 = vmatpush1.bf16.msra.mxu0 %v10043
  %11355 = vmatprep.subr.bf16.mxu0 %v10048
  %11356 = vmatpush1.bf16.msra.mxu0 %v10047
  %11357 = vmatprep.subr.bf16.mxu0 %v10052
  %11358 = vmatpush1.bf16.msra.mxu0 %v10051
  %11359 = vmatprep.subr.bf16.mxu0 %v10056
  %11360 = vmatpush1.bf16.msra.mxu0 %v10055
  %11361 = vmatprep.subr.bf16.mxu0 %v10060
  %11362 = vmatpush1.bf16.msra.mxu0 %v10059
  %11363 = vmatprep.subr.bf16.mxu0 %v10064
  %11364 = vmatpush1.bf16.msra.mxu0 %v10063
  %11365 = vmatprep.subr.bf16.mxu0 %v10068
  %11366 = vmatpush1.bf16.msra.mxu0 %v10067
  %11367 = vmatprep.subr.bf16.mxu0 %v10072
  %11368 = vmatpush1.bf16.msra.mxu0 %v10071
  %11369 = vmatprep.subr.bf16.mxu0 %v10076
  %11370 = vmatpush1.bf16.msra.mxu0 %v10075
  %11371 = vmatprep.mubr.bf16.mxu0 %v8322
  %11372 = vmatmul.mubr.bf16.gmra.mrb[0].mxu0 %v8321
  %v11373 = vpop.f32.mrb[0].mxu0
  %v11374 = vadd.f32 %v11331, %v11373
  %v11375 = vpop.f32.mrb[0].mxu0
  %v11376 = vadd.f32 %v11333, %v11375
  %v11377 = vpop.f32.mrb[0].mxu0
  %v11378 = vadd.f32 %v11335, %v11377
  %v11379 = vpop.f32.mrb[0].mxu0
  %v11380 = vadd.f32 %v11337, %v11379
  %11381 = vdwg.mxu0
  %11382 = vmatprep.subr.bf16.mxu0 %v10080
  %11383 = vmatpush1.bf16.msra.mxu0 %v10079
  %11384 = vmatprep.subr.bf16.mxu0 %v10084
  %11385 = vmatpush1.bf16.msra.mxu0 %v10083
  %11386 = vmatprep.subr.bf16.mxu0 %v10088
  %11387 = vmatpush1.bf16.msra.mxu0 %v10087
  %11388 = vmatprep.subr.bf16.mxu0 %v10092
  %11389 = vmatpush1.bf16.msra.mxu0 %v10091
  %11390 = vmatprep.subr.bf16.mxu0 %v10096
  %11391 = vmatpush1.bf16.msra.mxu0 %v10095
  %11392 = vmatprep.subr.bf16.mxu0 %v10100
  %11393 = vmatpush1.bf16.msra.mxu0 %v10099
  %11394 = vmatprep.subr.bf16.mxu0 %v10104
  %11395 = vmatpush1.bf16.msra.mxu0 %v10103
  %11396 = vmatprep.subr.bf16.mxu0 %v10108
  %11397 = vmatpush1.bf16.msra.mxu0 %v10107
  %11398 = vmatprep.subr.bf16.mxu0 %v10112
  %11399 = vmatpush1.bf16.msra.mxu0 %v10111
  %11400 = vmatprep.subr.bf16.mxu0 %v10116
  %11401 = vmatpush1.bf16.msra.mxu0 %v10115
  %11402 = vmatprep.subr.bf16.mxu0 %v10120
  %11403 = vmatpush1.bf16.msra.mxu0 %v10119
  %11404 = vmatprep.subr.bf16.mxu0 %v10124
  %11405 = vmatpush1.bf16.msra.mxu0 %v10123
  %11406 = vmatprep.subr.bf16.mxu0 %v10128
  %11407 = vmatpush1.bf16.msra.mxu0 %v10127
  %11408 = vmatprep.subr.bf16.mxu0 %v10132
  %11409 = vmatpush1.bf16.msra.mxu0 %v10131
  %11410 = vmatprep.subr.bf16.mxu0 %v10136
  %11411 = vmatpush1.bf16.msra.mxu0 %v10135
  %11412 = vmatprep.subr.bf16.mxu0 %v10140
  %11413 = vmatpush1.bf16.msra.mxu0 %v10139
  %11414 = vmatprep.mubr.bf16.mxu0 %v8324
  %11415 = vmatmul.mubr.bf16.gmra.mrb[0].mxu0 %v8323
  %v11416 = vpop.f32.mrb[0].mxu0
  %v11417 = vadd.f32 %v11374, %v11416
  %v11418 = vpop.f32.mrb[0].mxu0
  %v11419 = vadd.f32 %v11376, %v11418
  %v11420 = vpop.f32.mrb[0].mxu0
  %v11421 = vadd.f32 %v11378, %v11420
  %v11422 = vpop.f32.mrb[0].mxu0
  %v11423 = vadd.f32 %v11380, %v11422
  %11424 = vdwg.mxu0
  %11425 = vmatprep.subr.bf16.mxu0 %v10144
  %11426 = vmatpush1.bf16.msra.mxu0 %v10143
  %11427 = vmatprep.subr.bf16.mxu0 %v10148
  %11428 = vmatpush1.bf16.msra.mxu0 %v10147
  %11429 = vmatprep.subr.bf16.mxu0 %v10152
  %11430 = vmatpush1.bf16.msra.mxu0 %v10151
  %11431 = vmatprep.subr.bf16.mxu0 %v10156
  %11432 = vmatpush1.bf16.msra.mxu0 %v10155
  %11433 = vmatprep.subr.bf16.mxu0 %v10160
  %11434 = vmatpush1.bf16.msra.mxu0 %v10159
  %11435 = vmatprep.subr.bf16.mxu0 %v10164
  %11436 = vmatpush1.bf16.msra.mxu0 %v10163
  %11437 = vmatprep.subr.bf16.mxu0 %v10168
  %11438 = vmatpush1.bf16.msra.mxu0 %v10167
  %11439 = vmatprep.subr.bf16.mxu0 %v10172
  %11440 = vmatpush1.bf16.msra.mxu0 %v10171
  %11441 = vmatprep.subr.bf16.mxu0 %v10176
  %11442 = vmatpush1.bf16.msra.mxu0 %v10175
  %11443 = vmatprep.subr.bf16.mxu0 %v10180
  %11444 = vmatpush1.bf16.msra.mxu0 %v10179
  %11445 = vmatprep.subr.bf16.mxu0 %v10184
  %11446 = vmatpush1.bf16.msra.mxu0 %v10183
  %11447 = vmatprep.subr.bf16.mxu0 %v10188
  %11448 = vmatpush1.bf16.msra.mxu0 %v10187
  %11449 = vmatprep.subr.bf16.mxu0 %v10192
  %11450 = vmatpush1.bf16.msra.mxu0 %v10191
  %11451 = vmatprep.subr.bf16.mxu0 %v10196
  %11452 = vmatpush1.bf16.msra.mxu0 %v10195
  %11453 = vmatprep.subr.bf16.mxu0 %v10200
  %11454 = vmatpush1.bf16.msra.mxu0 %v10199
  %11455 = vmatprep.subr.bf16.mxu0 %v10204
  %11456 = vmatpush1.bf16.msra.mxu0 %v10203
  %11457 = vmatprep.mubr.bf16.mxu0 %v8326
  %11458 = vmatmul.mubr.bf16.gmra.mrb[0].mxu0 %v8325
  %v11459 = vpop.f32.mrb[0].mxu0
  %v11460 = vadd.f32 %v11417, %v11459
  %v11461 = vpop.f32.mrb[0].mxu0
  %v11462 = vadd.f32 %v11419, %v11461
  %v11463 = vpop.f32.mrb[0].mxu0
  %v11464 = vadd.f32 %v11421, %v11463
  %v11465 = vpop.f32.mrb[0].mxu0
  %v11466 = vadd.f32 %v11423, %v11465
  %11467 = vdwg.mxu0
  %11468 = vmatprep.subr.bf16.mxu0 %v10208
  %11469 = vmatpush1.bf16.msra.mxu0 %v10207
  %11470 = vmatprep.subr.bf16.mxu0 %v10212
  %11471 = vmatpush1.bf16.msra.mxu0 %v10211
  %11472 = vmatprep.subr.bf16.mxu0 %v10216
  %11473 = vmatpush1.bf16.msra.mxu0 %v10215
  %11474 = vmatprep.subr.bf16.mxu0 %v10220
  %11475 = vmatpush1.bf16.msra.mxu0 %v10219
  %11476 = vmatprep.subr.bf16.mxu0 %v10224
  %11477 = vmatpush1.bf16.msra.mxu0 %v10223
  %11478 = vmatprep.subr.bf16.mxu0 %v10228
  %11479 = vmatpush1.bf16.msra.mxu0 %v10227
  %11480 = vmatprep.subr.bf16.mxu0 %v10232
  %11481 = vmatpush1.bf16.msra.mxu0 %v10231
  %11482 = vmatprep.subr.bf16.mxu0 %v10236
  %11483 = vmatpush1.bf16.msra.mxu0 %v10235
  %11484 = vmatprep.subr.bf16.mxu0 %v10240
  %11485 = vmatpush1.bf16.msra.mxu0 %v10239
  %11486 = vmatprep.subr.bf16.mxu0 %v10244
  %11487 = vmatpush1.bf16.msra.mxu0 %v10243
  %11488 = vmatprep.subr.bf16.mxu0 %v10248
  %11489 = vmatpush1.bf16.msra.mxu0 %v10247
  %11490 = vmatprep.subr.bf16.mxu0 %v10252
  %11491 = vmatpush1.bf16.msra.mxu0 %v10251
  %11492 = vmatprep.subr.bf16.mxu0 %v10256
  %11493 = vmatpush1.bf16.msra.mxu0 %v10255
  %11494 = vmatprep.subr.bf16.mxu0 %v10260
  %11495 = vmatpush1.bf16.msra.mxu0 %v10259
  %11496 = vmatprep.subr.bf16.mxu0 %v10264
  %11497 = vmatpush1.bf16.msra.mxu0 %v10263
  %11498 = vmatprep.subr.bf16.mxu0 %v10268
  %11499 = vmatpush1.bf16.msra.mxu0 %v10267
  %11500 = vmatprep.mubr.bf16.mxu0 %v8328
  %11501 = vmatmul.mubr.bf16.gmra.mrb[0].mxu0 %v8327
  %v11502 = vpop.f32.mrb[0].mxu0
  %v11503 = vadd.f32 %v11460, %v11502
  %v11504 = vpop.f32.mrb[0].mxu0
  %v11505 = vadd.f32 %v11462, %v11504
  %v11506 = vpop.f32.mrb[0].mxu0
  %v11507 = vadd.f32 %v11464, %v11506
  %v11508 = vpop.f32.mrb[0].mxu0
  %v11509 = vadd.f32 %v11466, %v11508
  %11510 = vdwg.mxu0
  %11511 = vmatprep.subr.bf16.mxu0 %v10272
  %11512 = vmatpush1.bf16.msra.mxu0 %v10271
  %11513 = vmatprep.subr.bf16.mxu0 %v10276
  %11514 = vmatpush1.bf16.msra.mxu0 %v10275
  %11515 = vmatprep.subr.bf16.mxu0 %v10280
  %11516 = vmatpush1.bf16.msra.mxu0 %v10279
  %11517 = vmatprep.subr.bf16.mxu0 %v10284
  %11518 = vmatpush1.bf16.msra.mxu0 %v10283
  %11519 = vmatprep.subr.bf16.mxu0 %v10288
  %11520 = vmatpush1.bf16.msra.mxu0 %v10287
  %11521 = vmatprep.subr.bf16.mxu0 %v10292
  %11522 = vmatpush1.bf16.msra.mxu0 %v10291
  %11523 = vmatprep.subr.bf16.mxu0 %v10296
  %11524 = vmatpush1.bf16.msra.mxu0 %v10295
  %11525 = vmatprep.subr.bf16.mxu0 %v10300
  %11526 = vmatpush1.bf16.msra.mxu0 %v10299
  %11527 = vmatprep.subr.bf16.mxu0 %v10304
  %11528 = vmatpush1.bf16.msra.mxu0 %v10303
  %11529 = vmatprep.subr.bf16.mxu0 %v10308
  %11530 = vmatpush1.bf16.msra.mxu0 %v10307
  %11531 = vmatprep.subr.bf16.mxu0 %v10312
  %11532 = vmatpush1.bf16.msra.mxu0 %v10311
  %11533 = vmatprep.subr.bf16.mxu0 %v10316
  %11534 = vmatpush1.bf16.msra.mxu0 %v10315
  %11535 = vmatprep.subr.bf16.mxu0 %v10320
  %11536 = vmatpush1.bf16.msra.mxu0 %v10319
  %11537 = vmatprep.subr.bf16.mxu0 %v10324
  %11538 = vmatpush1.bf16.msra.mxu0 %v10323
  %11539 = vmatprep.subr.bf16.mxu0 %v10328
  %11540 = vmatpush1.bf16.msra.mxu0 %v10327
  %11541 = vmatprep.subr.bf16.mxu0 %v10332
  %11542 = vmatpush1.bf16.msra.mxu0 %v10331
  %11543 = vmatprep.mubr.bf16.mxu0 %v8330
  %11544 = vmatmul.mubr.bf16.gmra.mrb[0].mxu0 %v8329
  %v11545 = vpop.f32.mrb[0].mxu0
  %v11546 = vadd.f32 %v11503, %v11545
  %v11547 = vpop.f32.mrb[0].mxu0
  %v11548 = vadd.f32 %v11505, %v11547
  %v11549 = vpop.f32.mrb[0].mxu0
  %v11550 = vadd.f32 %v11507, %v11549
  %v11551 = vpop.f32.mrb[0].mxu0
  %v11552 = vadd.f32 %v11509, %v11551
  %11553 = vdwg.mxu0
  %11554 = vmatprep.subr.bf16.mxu0 %v10336
  %11555 = vmatpush1.bf16.msra.mxu0 %v10335
  %11556 = vmatprep.subr.bf16.mxu0 %v10340
  %11557 = vmatpush1.bf16.msra.mxu0 %v10339
  %11558 = vmatprep.subr.bf16.mxu0 %v10344
  %11559 = vmatpush1.bf16.msra.mxu0 %v10343
  %11560 = vmatprep.subr.bf16.mxu0 %v10348
  %11561 = vmatpush1.bf16.msra.mxu0 %v10347
  %11562 = vmatprep.subr.bf16.mxu0 %v10352
  %11563 = vmatpush1.bf16.msra.mxu0 %v10351
  %11564 = vmatprep.subr.bf16.mxu0 %v10356
  %11565 = vmatpush1.bf16.msra.mxu0 %v10355
  %11566 = vmatprep.subr.bf16.mxu0 %v10360
  %11567 = vmatpush1.bf16.msra.mxu0 %v10359
  %11568 = vmatprep.subr.bf16.mxu0 %v10364
  %11569 = vmatpush1.bf16.msra.mxu0 %v10363
  %11570 = vmatprep.subr.bf16.mxu0 %v10368
  %11571 = vmatpush1.bf16.msra.mxu0 %v10367
  %11572 = vmatprep.subr.bf16.mxu0 %v10372
  %11573 = vmatpush1.bf16.msra.mxu0 %v10371
  %11574 = vmatprep.subr.bf16.mxu0 %v10376
  %11575 = vmatpush1.bf16.msra.mxu0 %v10375
  %11576 = vmatprep.subr.bf16.mxu0 %v10380
  %11577 = vmatpush1.bf16.msra.mxu0 %v10379
  %11578 = vmatprep.subr.bf16.mxu0 %v10384
  %11579 = vmatpush1.bf16.msra.mxu0 %v10383
  %11580 = vmatprep.subr.bf16.mxu0 %v10388
  %11581 = vmatpush1.bf16.msra.mxu0 %v10387
  %11582 = vmatprep.subr.bf16.mxu0 %v10392
  %11583 = vmatpush1.bf16.msra.mxu0 %v10391
  %11584 = vmatprep.subr.bf16.mxu0 %v10396
  %11585 = vmatpush1.bf16.msra.mxu0 %v10395
  %11586 = vmatprep.mubr.bf16.mxu0 %v8332
  %11587 = vmatmul.mubr.bf16.gmra.mrb[0].mxu0 %v8331
  %v11588 = vpop.f32.mrb[0].mxu0
  %v11589 = vadd.f32 %v11546, %v11588
  %v11590 = vpop.f32.mrb[0].mxu0
  %v11591 = vadd.f32 %v11548, %v11590
  %v11592 = vpop.f32.mrb[0].mxu0
  %v11593 = vadd.f32 %v11550, %v11592
  %v11594 = vpop.f32.mrb[0].mxu0
  %v11595 = vadd.f32 %v11552, %v11594
  %11596 = vdwg.mxu0
  %v11597 = vadd.f32 %v7389, %v11245
  %v11598 = vadd.f32 %v7391, %v11247
  %v11599 = vadd.f32 %v7733, %v11589
  %v11600 = vadd.f32 %v7735, %v11591
  %v11601 = vadd.f32 %v7393, %v11249
  %v11602 = vadd.f32 %v7395, %v11251
  %v11603 = vadd.f32 %v7737, %v11593
  %v11604 = vadd.f32 %v7739, %v11595
  %v11605 = vld [vmem:[%s5] sm:$0xf]
  %v11607 = vlaneseq
  %v11608 = vshrl.u32 %v11607, 7
  %v11609 = vsub.s32 0, %v11608
  %v11610 = vrot.slane %v11605, %v11609
  %v11611 = vlaneseq
  %v11612 = vshrl.u32 %v11611, 7
  %v11613 = vsub.s32 1, %v11612
  %v11614 = vrot.slane %v11605, %v11613
  %v11615 = vlaneseq
  %v11616 = vshrl.u32 %v11615, 7
  %v11617 = vsub.s32 2, %v11616
  %v11618 = vrot.slane %v11605, %v11617
  %v11619 = vlaneseq
  %v11620 = vshrl.u32 %v11619, 7
  %v11621 = vsub.s32 3, %v11620
  %v11622 = vrot.slane %v11605, %v11621
  %v11627 = vadd.f32 %v11597, %v11610
  %v11628 = vadd.f32 %v11598, %v11614
  %v11629 = vadd.f32 %v11599, %v11618
  %v11630 = vadd.f32 %v11600, %v11622
  %v11631 = vadd.f32 %v11601, %v11610
  %v11632 = vadd.f32 %v11602, %v11614
  %v11633 = vadd.f32 %v11603, %v11618
  %v11634 = vadd.f32 %v11604, %v11622
  %v11635 = vld [vmem:[%s3] sm:$0xff]
  %v11636 = vld [vmem:[%s3 + $0x8] sm:$0xff]
  %v11637 = vld [vmem:[%s3 + $0x10] sm:$0xff]
  %v11638 = vld [vmem:[%s3 + $0x18] sm:$0xff]
  %v11639 = vld [vmem:[%s3 + $0x20] sm:$0xff]
  %v11640 = vld [vmem:[%s3 + $0x28] sm:$0xff]
  %v11641 = vld [vmem:[%s6] sm:$0xff]
  %v11642 = vld [vmem:[%s6 + $0x8] sm:$0xff]
  %v11643 = vld [vmem:[%s6 + $0x10] sm:$0xff]
  %v11644 = vld [vmem:[%s6 + $0x18] sm:$0xff]
  %v11645 = vld [vmem:[%s6 + $0x20] sm:$0xff]
  %v11646 = vld [vmem:[%s6 + $0x28] sm:$0xff]
  %v11647 = vld [vmem:[%s6 + $0x30] sm:$0xff]
  %v11648 = vld [vmem:[%s6 + $0x38] sm:$0xff]
  %v11649 = vld [vmem:[%s6 + $0x40] sm:$0xff]
  %v11650 = vld [vmem:[%s6 + $0x48] sm:$0xff]
  %v11651 = vld [vmem:[%s6 + $0x50] sm:$0xff]
  %v11652 = vld [vmem:[%s6 + $0x58] sm:$0xff]
  %v11653 = vld [vmem:[%s6 + $0x60] sm:$0xff]
  %v11654 = vld [vmem:[%s6 + $0x68] sm:$0xff]
  %v11655 = vld [vmem:[%s6 + $0x70] sm:$0xff]
  %v11656 = vld [vmem:[%s6 + $0x78] sm:$0xff]
  %v11657 = vld [vmem:[%s6 + $0x80] sm:$0xff]
  %v11658 = vld [vmem:[%s6 + $0x88] sm:$0xff]
  %v11659 = vld [vmem:[%s6 + $0x90] sm:$0xff]
  %v11660 = vld [vmem:[%s6 + $0x98] sm:$0xff]
  %v11661 = vld [vmem:[%s6 + $0xa0] sm:$0xff]
  %v11662 = vld [vmem:[%s6 + $0xa8] sm:$0xff]
  %v11663 = vld [vmem:[%s6 + $0xb0] sm:$0xff]
  %v11664 = vld [vmem:[%s6 + $0xb8] sm:$0xff]
  %v11665 = vld [vmem:[%s6 + $0xc0] sm:$0xff]
  %v11666 = vld [vmem:[%s6 + $0xc8] sm:$0xff]
  %v11667 = vld [vmem:[%s6 + $0xd0] sm:$0xff]
  %v11668 = vld [vmem:[%s6 + $0xd8] sm:$0xff]
  %v11669 = vld [vmem:[%s6 + $0xe0] sm:$0xff]
  %v11670 = vld [vmem:[%s6 + $0xe8] sm:$0xff]
  %v11671 = vld [vmem:[%s6 + $0xf0] sm:$0xff]
  %v11672 = vld [vmem:[%s6 + $0xf8] sm:$0xff]
  %v11673 = vld [vmem:[%s6 + $0x100] sm:$0xff]
  %v11674 = vld [vmem:[%s6 + $0x108] sm:$0xff]
  %v11675 = vld [vmem:[%s6 + $0x110] sm:$0xff]
  %v11676 = vld [vmem:[%s6 + $0x118] sm:$0xff]
  %v11677 = vld [vmem:[%s6 + $0x120] sm:$0xff]
  %v11678 = vld [vmem:[%s6 + $0x128] sm:$0xff]
  %v11679 = vld [vmem:[%s6 + $0x130] sm:$0xff]
  %v11680 = vld [vmem:[%s6 + $0x138] sm:$0xff]
  %v11681 = vld [vmem:[%s6 + $0x140] sm:$0xff]
  %v11682 = vld [vmem:[%s6 + $0x148] sm:$0xff]
  %v11683 = vld [vmem:[%s6 + $0x150] sm:$0xff]
  %v11684 = vld [vmem:[%s6 + $0x158] sm:$0xff]
  %v11685 = vld [vmem:[%s6 + $0x160] sm:$0xff]
  %v11686 = vld [vmem:[%s6 + $0x168] sm:$0xff]
  %v11687 = vld [vmem:[%s6 + $0x170] sm:$0xff]
  %v11688 = vld [vmem:[%s6 + $0x178] sm:$0xff]
  %v11689 = vld [vmem:[%s6 + $0x180] sm:$0xff]
  %v11690 = vld [vmem:[%s6 + $0x188] sm:$0xff]
  %v11691 = vld [vmem:[%s6 + $0x190] sm:$0xff]
  %v11692 = vld [vmem:[%s6 + $0x198] sm:$0xff]
  %v11693 = vld [vmem:[%s6 + $0x1a0] sm:$0xff]
  %v11694 = vld [vmem:[%s6 + $0x1a8] sm:$0xff]
  %v11695 = vld [vmem:[%s6 + $0x1b0] sm:$0xff]
  %v11696 = vld [vmem:[%s6 + $0x1b8] sm:$0xff]
  %v11697 = vld [vmem:[%s6 + $0x1c0] sm:$0xff]
  %v11698 = vld [vmem:[%s6 + $0x1c8] sm:$0xff]
  %v11699 = vld [vmem:[%s6 + $0x1d0] sm:$0xff]
  %v11700 = vld [vmem:[%s6 + $0x1d8] sm:$0xff]
  %v11701 = vld [vmem:[%s6 + $0x1e0] sm:$0xff]
  %v11702 = vld [vmem:[%s6 + $0x1e8] sm:$0xff]
  %v11703 = vld [vmem:[%s6 + $0x1f0] sm:$0xff]
  %v11704 = vld [vmem:[%s6 + $0x1f8] sm:$0xff]
  %v11705 = vld [vmem:[%s6 + $0x200] sm:$0xff]
  %v11706 = vld [vmem:[%s6 + $0x208] sm:$0xff]
  %v11707 = vld [vmem:[%s6 + $0x210] sm:$0xff]
  %v11708 = vld [vmem:[%s6 + $0x218] sm:$0xff]
  %v11709 = vld [vmem:[%s6 + $0x220] sm:$0xff]
  %v11710 = vld [vmem:[%s6 + $0x228] sm:$0xff]
  %v11711 = vld [vmem:[%s6 + $0x230] sm:$0xff]
  %v11712 = vld [vmem:[%s6 + $0x238] sm:$0xff]
  %v11713 = vld [vmem:[%s6 + $0x240] sm:$0xff]
  %v11714 = vld [vmem:[%s6 + $0x248] sm:$0xff]
  %v11715 = vld [vmem:[%s6 + $0x250] sm:$0xff]
  %v11716 = vld [vmem:[%s6 + $0x258] sm:$0xff]
  %v11717 = vld [vmem:[%s6 + $0x260] sm:$0xff]
  %v11718 = vld [vmem:[%s6 + $0x268] sm:$0xff]
  %v11719 = vld [vmem:[%s6 + $0x270] sm:$0xff]
  %v11720 = vld [vmem:[%s6 + $0x278] sm:$0xff]
  %v11721 = vld [vmem:[%s6 + $0x280] sm:$0xff]
  %v11722 = vld [vmem:[%s6 + $0x288] sm:$0xff]
  %v11723 = vld [vmem:[%s6 + $0x290] sm:$0xff]
  %v11724 = vld [vmem:[%s6 + $0x298] sm:$0xff]
  %v11725 = vld [vmem:[%s6 + $0x2a0] sm:$0xff]
  %v11726 = vld [vmem:[%s6 + $0x2a8] sm:$0xff]
  %v11727 = vld [vmem:[%s6 + $0x2b0] sm:$0xff]
  %v11728 = vld [vmem:[%s6 + $0x2b8] sm:$0xff]
  %v11729 = vld [vmem:[%s6 + $0x2c0] sm:$0xff]
  %v11730 = vld [vmem:[%s6 + $0x2c8] sm:$0xff]
  %v11731 = vld [vmem:[%s6 + $0x2d0] sm:$0xff]
  %v11732 = vld [vmem:[%s6 + $0x2d8] sm:$0xff]
  %v11733 = vld [vmem:[%s6 + $0x2e0] sm:$0xff]
  %v11734 = vld [vmem:[%s6 + $0x2e8] sm:$0xff]
  %v11735 = vld [vmem:[%s6 + $0x2f0] sm:$0xff]
  %v11736 = vld [vmem:[%s6 + $0x2f8] sm:$0xff]
  %v11737 = vld [vmem:[%s6 + $0x300] sm:$0xff]
  %v11738 = vld [vmem:[%s6 + $0x308] sm:$0xff]
  %v11739 = vld [vmem:[%s6 + $0x310] sm:$0xff]
  %v11740 = vld [vmem:[%s6 + $0x318] sm:$0xff]
  %v11741 = vld [vmem:[%s6 + $0x320] sm:$0xff]
  %v11742 = vld [vmem:[%s6 + $0x328] sm:$0xff]
  %v11743 = vld [vmem:[%s6 + $0x330] sm:$0xff]
  %v11744 = vld [vmem:[%s6 + $0x338] sm:$0xff]
  %v11745 = vld [vmem:[%s6 + $0x340] sm:$0xff]
  %v11746 = vld [vmem:[%s6 + $0x348] sm:$0xff]
  %v11747 = vld [vmem:[%s6 + $0x350] sm:$0xff]
  %v11748 = vld [vmem:[%s6 + $0x358] sm:$0xff]
  %v11749 = vld [vmem:[%s6 + $0x360] sm:$0xff]
  %v11750 = vld [vmem:[%s6 + $0x368] sm:$0xff]
  %v11751 = vld [vmem:[%s6 + $0x370] sm:$0xff]
  %v11752 = vld [vmem:[%s6 + $0x378] sm:$0xff]
  %v11753 = vld [vmem:[%s6 + $0x380] sm:$0xff]
  %v11754 = vld [vmem:[%s6 + $0x388] sm:$0xff]
  %v11755 = vld [vmem:[%s6 + $0x390] sm:$0xff]
  %v11756 = vld [vmem:[%s6 + $0x398] sm:$0xff]
  %v11757 = vld [vmem:[%s6 + $0x3a0] sm:$0xff]
  %v11758 = vld [vmem:[%s6 + $0x3a8] sm:$0xff]
  %v11759 = vld [vmem:[%s6 + $0x3b0] sm:$0xff]
  %v11760 = vld [vmem:[%s6 + $0x3b8] sm:$0xff]
  %v11761 = vld [vmem:[%s6 + $0x3c0] sm:$0xff]
  %v11762 = vld [vmem:[%s6 + $0x3c8] sm:$0xff]
  %v11763 = vld [vmem:[%s6 + $0x3d0] sm:$0xff]
  %v11764 = vld [vmem:[%s6 + $0x3d8] sm:$0xff]
  %v11765 = vld [vmem:[%s6 + $0x3e0] sm:$0xff]
  %v11766 = vld [vmem:[%s6 + $0x3e8] sm:$0xff]
  %v11767 = vld [vmem:[%s6 + $0x3f0] sm:$0xff]
  %v11768 = vld [vmem:[%s6 + $0x3f8] sm:$0xff]
  %v11769 = vld [vmem:[%s6 + $0x400] sm:$0xff]
  %v11770 = vld [vmem:[%s6 + $0x408] sm:$0xff]
  %v11771 = vld [vmem:[%s6 + $0x410] sm:$0xff]
  %v11772 = vld [vmem:[%s6 + $0x418] sm:$0xff]
  %v11773 = vld [vmem:[%s6 + $0x420] sm:$0xff]
  %v11774 = vld [vmem:[%s6 + $0x428] sm:$0xff]
  %v11775 = vld [vmem:[%s6 + $0x430] sm:$0xff]
  %v11776 = vld [vmem:[%s6 + $0x438] sm:$0xff]
  %v11777 = vld [vmem:[%s6 + $0x440] sm:$0xff]
  %v11778 = vld [vmem:[%s6 + $0x448] sm:$0xff]
  %v11779 = vld [vmem:[%s6 + $0x450] sm:$0xff]
  %v11780 = vld [vmem:[%s6 + $0x458] sm:$0xff]
  %v11781 = vld [vmem:[%s6 + $0x460] sm:$0xff]
  %v11782 = vld [vmem:[%s6 + $0x468] sm:$0xff]
  %v11783 = vld [vmem:[%s6 + $0x470] sm:$0xff]
  %v11784 = vld [vmem:[%s6 + $0x478] sm:$0xff]
  %v11785 = vld [vmem:[%s6 + $0x480] sm:$0xff]
  %v11786 = vld [vmem:[%s6 + $0x488] sm:$0xff]
  %v11787 = vld [vmem:[%s6 + $0x490] sm:$0xff]
  %v11788 = vld [vmem:[%s6 + $0x498] sm:$0xff]
  %v11789 = vld [vmem:[%s6 + $0x4a0] sm:$0xff]
  %v11790 = vld [vmem:[%s6 + $0x4a8] sm:$0xff]
  %v11791 = vld [vmem:[%s6 + $0x4b0] sm:$0xff]
  %v11792 = vld [vmem:[%s6 + $0x4b8] sm:$0xff]
  %v11793 = vld [vmem:[%s6 + $0x4c0] sm:$0xff]
  %v11794 = vld [vmem:[%s6 + $0x4c8] sm:$0xff]
  %v11795 = vld [vmem:[%s6 + $0x4d0] sm:$0xff]
  %v11796 = vld [vmem:[%s6 + $0x4d8] sm:$0xff]
  %v11797 = vld [vmem:[%s6 + $0x4e0] sm:$0xff]
  %v11798 = vld [vmem:[%s6 + $0x4e8] sm:$0xff]
  %v11799 = vld [vmem:[%s6 + $0x4f0] sm:$0xff]
  %v11800 = vld [vmem:[%s6 + $0x4f8] sm:$0xff]
  %v11801 = vld [vmem:[%s6 + $0x500] sm:$0xff]
  %v11802 = vld [vmem:[%s6 + $0x508] sm:$0xff]
  %v11803 = vld [vmem:[%s6 + $0x510] sm:$0xff]
  %v11804 = vld [vmem:[%s6 + $0x518] sm:$0xff]
  %v11805 = vld [vmem:[%s6 + $0x520] sm:$0xff]
  %v11806 = vld [vmem:[%s6 + $0x528] sm:$0xff]
  %v11807 = vld [vmem:[%s6 + $0x530] sm:$0xff]
  %v11808 = vld [vmem:[%s6 + $0x538] sm:$0xff]
  %v11809 = vld [vmem:[%s6 + $0x540] sm:$0xff]
  %v11810 = vld [vmem:[%s6 + $0x548] sm:$0xff]
  %v11811 = vld [vmem:[%s6 + $0x550] sm:$0xff]
  %v11812 = vld [vmem:[%s6 + $0x558] sm:$0xff]
  %v11813 = vld [vmem:[%s6 + $0x560] sm:$0xff]
  %v11814 = vld [vmem:[%s6 + $0x568] sm:$0xff]
  %v11815 = vld [vmem:[%s6 + $0x570] sm:$0xff]
  %v11816 = vld [vmem:[%s6 + $0x578] sm:$0xff]
  %v11817 = vld [vmem:[%s6 + $0x580] sm:$0xff]
  %v11818 = vld [vmem:[%s6 + $0x588] sm:$0xff]
  %v11819 = vld [vmem:[%s6 + $0x590] sm:$0xff]
  %v11820 = vld [vmem:[%s6 + $0x598] sm:$0xff]
  %v11821 = vld [vmem:[%s6 + $0x5a0] sm:$0xff]
  %v11822 = vld [vmem:[%s6 + $0x5a8] sm:$0xff]
  %v11823 = vld [vmem:[%s6 + $0x5b0] sm:$0xff]
  %v11824 = vld [vmem:[%s6 + $0x5b8] sm:$0xff]
  %v11825 = vld [vmem:[%s6 + $0x5c0] sm:$0xff]
  %v11826 = vld [vmem:[%s6 + $0x5c8] sm:$0xff]
  %v11827 = vld [vmem:[%s6 + $0x5d0] sm:$0xff]
  %v11828 = vld [vmem:[%s6 + $0x5d8] sm:$0xff]
  %v11829 = vld [vmem:[%s6 + $0x5e0] sm:$0xff]
  %v11830 = vld [vmem:[%s6 + $0x5e8] sm:$0xff]
  %v11831 = vld [vmem:[%s6 + $0x5f0] sm:$0xff]
  %v11832 = vld [vmem:[%s6 + $0x5f8] sm:$0xff]
  %v11833 = vld [vmem:[%s7] sm:$0xf]
  %v11835 = vlaneseq
  %v11836 = vshrl.u32 %v11835, 7
  %v11837 = vsub.s32 0, %v11836
  %v11838 = vrot.slane %v11833, %v11837
  %v11839 = vlaneseq
  %v11840 = vshrl.u32 %v11839, 7
  %v11841 = vsub.s32 1, %v11840
  %v11842 = vrot.slane %v11833, %v11841
  %v11843 = vlaneseq
  %v11844 = vshrl.u32 %v11843, 7
  %v11845 = vsub.s32 2, %v11844
  %v11846 = vrot.slane %v11833, %v11845
  %v11847 = vlaneseq
  %v11848 = vshrl.u32 %v11847, 7
  %v11849 = vsub.s32 3, %v11848
  %v11850 = vrot.slane %v11833, %v11849
  %v11861 = vunpack.c.l.b16 %v11635
  %v11862 = vunpack.c.h.b16 %v11635
  %v11863 = vunpack.c.l.b16 %v11636
  %v11864 = vunpack.c.h.b16 %v11636
  %v11865 = vunpack.c.l.b16 %v11637
  %v11866 = vunpack.c.h.b16 %v11637
  %v11867 = vunpack.c.l.b16 %v11638
  %v11868 = vunpack.c.h.b16 %v11638
  %v11869 = vunpack.c.l.b16 %v11639
  %v11870 = vunpack.c.h.b16 %v11639
  %v11871 = vunpack.c.l.b16 %v11640
  %v11872 = vunpack.c.h.b16 %v11640
  %v11873 = vpack.c.b16 %v11867, %v11861
  %v11874 = vpack.c.b16 %v11868, %v11862
  %v11875 = vpack.c.b16 %v11869, %v11863
  %v11876 = vpack.c.b16 %v11870, %v11864
  %v11877 = vpack.c.b16 %v11871, %v11865
  %v11878 = vpack.c.b16 %v11872, %v11866
  %v12077 = vunpack.c.l.b16 %v11641
  %v12078 = vunpack.c.h.b16 %v11641
  %v12079 = vunpack.c.l.b16 %v11642
  %v12080 = vunpack.c.h.b16 %v11642
  %v12081 = vunpack.c.l.b16 %v11643
  %v12082 = vunpack.c.h.b16 %v11643
  %v12083 = vunpack.c.l.b16 %v11644
  %v12084 = vunpack.c.h.b16 %v11644
  %v12085 = vunpack.c.l.b16 %v11645
  %v12086 = vunpack.c.h.b16 %v11645
  %v12087 = vunpack.c.l.b16 %v11646
  %v12088 = vunpack.c.h.b16 %v11646
  %v12089 = vunpack.c.l.b16 %v11647
  %v12090 = vunpack.c.h.b16 %v11647
  %v12091 = vunpack.c.l.b16 %v11648
  %v12092 = vunpack.c.h.b16 %v11648
  %v12093 = vunpack.c.l.b16 %v11649
  %v12094 = vunpack.c.h.b16 %v11649
  %v12095 = vunpack.c.l.b16 %v11650
  %v12096 = vunpack.c.h.b16 %v11650
  %v12097 = vunpack.c.l.b16 %v11651
  %v12098 = vunpack.c.h.b16 %v11651
  %v12099 = vunpack.c.l.b16 %v11652
  %v12100 = vunpack.c.h.b16 %v11652
  %v12101 = vunpack.c.l.b16 %v11653
  %v12102 = vunpack.c.h.b16 %v11653
  %v12103 = vunpack.c.l.b16 %v11654
  %v12104 = vunpack.c.h.b16 %v11654
  %v12105 = vunpack.c.l.b16 %v11655
  %v12106 = vunpack.c.h.b16 %v11655
  %v12107 = vunpack.c.l.b16 %v11656
  %v12108 = vunpack.c.h.b16 %v11656
  %v12109 = vunpack.c.l.b16 %v11657
  %v12110 = vunpack.c.h.b16 %v11657
  %v12111 = vunpack.c.l.b16 %v11658
  %v12112 = vunpack.c.h.b16 %v11658
  %v12113 = vunpack.c.l.b16 %v11659
  %v12114 = vunpack.c.h.b16 %v11659
  %v12115 = vunpack.c.l.b16 %v11660
  %v12116 = vunpack.c.h.b16 %v11660
  %v12117 = vunpack.c.l.b16 %v11661
  %v12118 = vunpack.c.h.b16 %v11661
  %v12119 = vunpack.c.l.b16 %v11662
  %v12120 = vunpack.c.h.b16 %v11662
  %v12121 = vunpack.c.l.b16 %v11663
  %v12122 = vunpack.c.h.b16 %v11663
  %v12123 = vunpack.c.l.b16 %v11664
  %v12124 = vunpack.c.h.b16 %v11664
  %v12125 = vunpack.c.l.b16 %v11665
  %v12126 = vunpack.c.h.b16 %v11665
  %v12127 = vunpack.c.l.b16 %v11666
  %v12128 = vunpack.c.h.b16 %v11666
  %v12129 = vunpack.c.l.b16 %v11667
  %v12130 = vunpack.c.h.b16 %v11667
  %v12131 = vunpack.c.l.b16 %v11668
  %v12132 = vunpack.c.h.b16 %v11668
  %v12133 = vunpack.c.l.b16 %v11669
  %v12134 = vunpack.c.h.b16 %v11669
  %v12135 = vunpack.c.l.b16 %v11670
  %v12136 = vunpack.c.h.b16 %v11670
  %v12137 = vunpack.c.l.b16 %v11671
  %v12138 = vunpack.c.h.b16 %v11671
  %v12139 = vunpack.c.l.b16 %v11672
  %v12140 = vunpack.c.h.b16 %v11672
  %v12141 = vunpack.c.l.b16 %v11673
  %v12142 = vunpack.c.h.b16 %v11673
  %v12143 = vunpack.c.l.b16 %v11674
  %v12144 = vunpack.c.h.b16 %v11674
  %v12145 = vunpack.c.l.b16 %v11675
  %v12146 = vunpack.c.h.b16 %v11675
  %v12147 = vunpack.c.l.b16 %v11676
  %v12148 = vunpack.c.h.b16 %v11676
  %v12149 = vunpack.c.l.b16 %v11677
  %v12150 = vunpack.c.h.b16 %v11677
  %v12151 = vunpack.c.l.b16 %v11678
  %v12152 = vunpack.c.h.b16 %v11678
  %v12153 = vunpack.c.l.b16 %v11679
  %v12154 = vunpack.c.h.b16 %v11679
  %v12155 = vunpack.c.l.b16 %v11680
  %v12156 = vunpack.c.h.b16 %v11680
  %v12157 = vunpack.c.l.b16 %v11681
  %v12158 = vunpack.c.h.b16 %v11681
  %v12159 = vunpack.c.l.b16 %v11682
  %v12160 = vunpack.c.h.b16 %v11682
  %v12161 = vunpack.c.l.b16 %v11683
  %v12162 = vunpack.c.h.b16 %v11683
  %v12163 = vunpack.c.l.b16 %v11684
  %v12164 = vunpack.c.h.b16 %v11684
  %v12165 = vunpack.c.l.b16 %v11685
  %v12166 = vunpack.c.h.b16 %v11685
  %v12167 = vunpack.c.l.b16 %v11686
  %v12168 = vunpack.c.h.b16 %v11686
  %v12169 = vunpack.c.l.b16 %v11687
  %v12170 = vunpack.c.h.b16 %v11687
  %v12171 = vunpack.c.l.b16 %v11688
  %v12172 = vunpack.c.h.b16 %v11688
  %v12173 = vunpack.c.l.b16 %v11689
  %v12174 = vunpack.c.h.b16 %v11689
  %v12175 = vunpack.c.l.b16 %v11690
  %v12176 = vunpack.c.h.b16 %v11690
  %v12177 = vunpack.c.l.b16 %v11691
  %v12178 = vunpack.c.h.b16 %v11691
  %v12179 = vunpack.c.l.b16 %v11692
  %v12180 = vunpack.c.h.b16 %v11692
  %v12181 = vunpack.c.l.b16 %v11693
  %v12182 = vunpack.c.h.b16 %v11693
  %v12183 = vunpack.c.l.b16 %v11694
  %v12184 = vunpack.c.h.b16 %v11694
  %v12185 = vunpack.c.l.b16 %v11695
  %v12186 = vunpack.c.h.b16 %v11695
  %v12187 = vunpack.c.l.b16 %v11696
  %v12188 = vunpack.c.h.b16 %v11696
  %v12189 = vunpack.c.l.b16 %v11697
  %v12190 = vunpack.c.h.b16 %v11697
  %v12191 = vunpack.c.l.b16 %v11698
  %v12192 = vunpack.c.h.b16 %v11698
  %v12193 = vunpack.c.l.b16 %v11699
  %v12194 = vunpack.c.h.b16 %v11699
  %v12195 = vunpack.c.l.b16 %v11700
  %v12196 = vunpack.c.h.b16 %v11700
  %v12197 = vunpack.c.l.b16 %v11701
  %v12198 = vunpack.c.h.b16 %v11701
  %v12199 = vunpack.c.l.b16 %v11702
  %v12200 = vunpack.c.h.b16 %v11702
  %v12201 = vunpack.c.l.b16 %v11703
  %v12202 = vunpack.c.h.b16 %v11703
  %v12203 = vunpack.c.l.b16 %v11704
  %v12204 = vunpack.c.h.b16 %v11704
  %v12205 = vunpack.c.l.b16 %v11705
  %v12206 = vunpack.c.h.b16 %v11705
  %v12207 = vunpack.c.l.b16 %v11706
  %v12208 = vunpack.c.h.b16 %v11706
  %v12209 = vunpack.c.l.b16 %v11707
  %v12210 = vunpack.c.h.b16 %v11707
  %v12211 = vunpack.c.l.b16 %v11708
  %v12212 = vunpack.c.h.b16 %v11708
  %v12213 = vunpack.c.l.b16 %v11709
  %v12214 = vunpack.c.h.b16 %v11709
  %v12215 = vunpack.c.l.b16 %v11710
  %v12216 = vunpack.c.h.b16 %v11710
  %v12217 = vunpack.c.l.b16 %v11711
  %v12218 = vunpack.c.h.b16 %v11711
  %v12219 = vunpack.c.l.b16 %v11712
  %v12220 = vunpack.c.h.b16 %v11712
  %v12221 = vunpack.c.l.b16 %v11713
  %v12222 = vunpack.c.h.b16 %v11713
  %v12223 = vunpack.c.l.b16 %v11714
  %v12224 = vunpack.c.h.b16 %v11714
  %v12225 = vunpack.c.l.b16 %v11715
  %v12226 = vunpack.c.h.b16 %v11715
  %v12227 = vunpack.c.l.b16 %v11716
  %v12228 = vunpack.c.h.b16 %v11716
  %v12229 = vunpack.c.l.b16 %v11717
  %v12230 = vunpack.c.h.b16 %v11717
  %v12231 = vunpack.c.l.b16 %v11718
  %v12232 = vunpack.c.h.b16 %v11718
  %v12233 = vunpack.c.l.b16 %v11719
  %v12234 = vunpack.c.h.b16 %v11719
  %v12235 = vunpack.c.l.b16 %v11720
  %v12236 = vunpack.c.h.b16 %v11720
  %v12237 = vunpack.c.l.b16 %v11721
  %v12238 = vunpack.c.h.b16 %v11721
  %v12239 = vunpack.c.l.b16 %v11722
  %v12240 = vunpack.c.h.b16 %v11722
  %v12241 = vunpack.c.l.b16 %v11723
  %v12242 = vunpack.c.h.b16 %v11723
  %v12243 = vunpack.c.l.b16 %v11724
  %v12244 = vunpack.c.h.b16 %v11724
  %v12245 = vunpack.c.l.b16 %v11725
  %v12246 = vunpack.c.h.b16 %v11725
  %v12247 = vunpack.c.l.b16 %v11726
  %v12248 = vunpack.c.h.b16 %v11726
  %v12249 = vunpack.c.l.b16 %v11727
  %v12250 = vunpack.c.h.b16 %v11727
  %v12251 = vunpack.c.l.b16 %v11728
  %v12252 = vunpack.c.h.b16 %v11728
  %v12253 = vunpack.c.l.b16 %v11729
  %v12254 = vunpack.c.h.b16 %v11729
  %v12255 = vunpack.c.l.b16 %v11730
  %v12256 = vunpack.c.h.b16 %v11730
  %v12257 = vunpack.c.l.b16 %v11731
  %v12258 = vunpack.c.h.b16 %v11731
  %v12259 = vunpack.c.l.b16 %v11732
  %v12260 = vunpack.c.h.b16 %v11732
  %v12261 = vunpack.c.l.b16 %v11733
  %v12262 = vunpack.c.h.b16 %v11733
  %v12263 = vunpack.c.l.b16 %v11734
  %v12264 = vunpack.c.h.b16 %v11734
  %v12265 = vunpack.c.l.b16 %v11735
  %v12266 = vunpack.c.h.b16 %v11735
  %v12267 = vunpack.c.l.b16 %v11736
  %v12268 = vunpack.c.h.b16 %v11736
  %v12269 = vunpack.c.l.b16 %v11737
  %v12270 = vunpack.c.h.b16 %v11737
  %v12271 = vunpack.c.l.b16 %v11738
  %v12272 = vunpack.c.h.b16 %v11738
  %v12273 = vunpack.c.l.b16 %v11739
  %v12274 = vunpack.c.h.b16 %v11739
  %v12275 = vunpack.c.l.b16 %v11740
  %v12276 = vunpack.c.h.b16 %v11740
  %v12277 = vunpack.c.l.b16 %v11741
  %v12278 = vunpack.c.h.b16 %v11741
  %v12279 = vunpack.c.l.b16 %v11742
  %v12280 = vunpack.c.h.b16 %v11742
  %v12281 = vunpack.c.l.b16 %v11743
  %v12282 = vunpack.c.h.b16 %v11743
  %v12283 = vunpack.c.l.b16 %v11744
  %v12284 = vunpack.c.h.b16 %v11744
  %v12285 = vunpack.c.l.b16 %v11745
  %v12286 = vunpack.c.h.b16 %v11745
  %v12287 = vunpack.c.l.b16 %v11746
  %v12288 = vunpack.c.h.b16 %v11746
  %v12289 = vunpack.c.l.b16 %v11747
  %v12290 = vunpack.c.h.b16 %v11747
  %v12291 = vunpack.c.l.b16 %v11748
  %v12292 = vunpack.c.h.b16 %v11748
  %v12293 = vunpack.c.l.b16 %v11749
  %v12294 = vunpack.c.h.b16 %v11749
  %v12295 = vunpack.c.l.b16 %v11750
  %v12296 = vunpack.c.h.b16 %v11750
  %v12297 = vunpack.c.l.b16 %v11751
  %v12298 = vunpack.c.h.b16 %v11751
  %v12299 = vunpack.c.l.b16 %v11752
  %v12300 = vunpack.c.h.b16 %v11752
  %v12301 = vunpack.c.l.b16 %v11753
  %v12302 = vunpack.c.h.b16 %v11753
  %v12303 = vunpack.c.l.b16 %v11754
  %v12304 = vunpack.c.h.b16 %v11754
  %v12305 = vunpack.c.l.b16 %v11755
  %v12306 = vunpack.c.h.b16 %v11755
  %v12307 = vunpack.c.l.b16 %v11756
  %v12308 = vunpack.c.h.b16 %v11756
  %v12309 = vunpack.c.l.b16 %v11757
  %v12310 = vunpack.c.h.b16 %v11757
  %v12311 = vunpack.c.l.b16 %v11758
  %v12312 = vunpack.c.h.b16 %v11758
  %v12313 = vunpack.c.l.b16 %v11759
  %v12314 = vunpack.c.h.b16 %v11759
  %v12315 = vunpack.c.l.b16 %v11760
  %v12316 = vunpack.c.h.b16 %v11760
  %v12317 = vunpack.c.l.b16 %v11761
  %v12318 = vunpack.c.h.b16 %v11761
  %v12319 = vunpack.c.l.b16 %v11762
  %v12320 = vunpack.c.h.b16 %v11762
  %v12321 = vunpack.c.l.b16 %v11763
  %v12322 = vunpack.c.h.b16 %v11763
  %v12323 = vunpack.c.l.b16 %v11764
  %v12324 = vunpack.c.h.b16 %v11764
  %v12325 = vunpack.c.l.b16 %v11765
  %v12326 = vunpack.c.h.b16 %v11765
  %v12327 = vunpack.c.l.b16 %v11766
  %v12328 = vunpack.c.h.b16 %v11766
  %v12329 = vunpack.c.l.b16 %v11767
  %v12330 = vunpack.c.h.b16 %v11767
  %v12331 = vunpack.c.l.b16 %v11768
  %v12332 = vunpack.c.h.b16 %v11768
  %v12333 = vunpack.c.l.b16 %v11769
  %v12334 = vunpack.c.h.b16 %v11769
  %v12335 = vunpack.c.l.b16 %v11770
  %v12336 = vunpack.c.h.b16 %v11770
  %v12337 = vunpack.c.l.b16 %v11771
  %v12338 = vunpack.c.h.b16 %v11771
  %v12339 = vunpack.c.l.b16 %v11772
  %v12340 = vunpack.c.h.b16 %v11772
  %v12341 = vunpack.c.l.b16 %v11773
  %v12342 = vunpack.c.h.b16 %v11773
  %v12343 = vunpack.c.l.b16 %v11774
  %v12344 = vunpack.c.h.b16 %v11774
  %v12345 = vunpack.c.l.b16 %v11775
  %v12346 = vunpack.c.h.b16 %v11775
  %v12347 = vunpack.c.l.b16 %v11776
  %v12348 = vunpack.c.h.b16 %v11776
  %v12349 = vunpack.c.l.b16 %v11777
  %v12350 = vunpack.c.h.b16 %v11777
  %v12351 = vunpack.c.l.b16 %v11778
  %v12352 = vunpack.c.h.b16 %v11778
  %v12353 = vunpack.c.l.b16 %v11779
  %v12354 = vunpack.c.h.b16 %v11779
  %v12355 = vunpack.c.l.b16 %v11780
  %v12356 = vunpack.c.h.b16 %v11780
  %v12357 = vunpack.c.l.b16 %v11781
  %v12358 = vunpack.c.h.b16 %v11781
  %v12359 = vunpack.c.l.b16 %v11782
  %v12360 = vunpack.c.h.b16 %v11782
  %v12361 = vunpack.c.l.b16 %v11783
  %v12362 = vunpack.c.h.b16 %v11783
  %v12363 = vunpack.c.l.b16 %v11784
  %v12364 = vunpack.c.h.b16 %v11784
  %v12365 = vunpack.c.l.b16 %v11785
  %v12366 = vunpack.c.h.b16 %v11785
  %v12367 = vunpack.c.l.b16 %v11786
  %v12368 = vunpack.c.h.b16 %v11786
  %v12369 = vunpack.c.l.b16 %v11787
  %v12370 = vunpack.c.h.b16 %v11787
  %v12371 = vunpack.c.l.b16 %v11788
  %v12372 = vunpack.c.h.b16 %v11788
  %v12373 = vunpack.c.l.b16 %v11789
  %v12374 = vunpack.c.h.b16 %v11789
  %v12375 = vunpack.c.l.b16 %v11790
  %v12376 = vunpack.c.h.b16 %v11790
  %v12377 = vunpack.c.l.b16 %v11791
  %v12378 = vunpack.c.h.b16 %v11791
  %v12379 = vunpack.c.l.b16 %v11792
  %v12380 = vunpack.c.h.b16 %v11792
  %v12381 = vunpack.c.l.b16 %v11793
  %v12382 = vunpack.c.h.b16 %v11793
  %v12383 = vunpack.c.l.b16 %v11794
  %v12384 = vunpack.c.h.b16 %v11794
  %v12385 = vunpack.c.l.b16 %v11795
  %v12386 = vunpack.c.h.b16 %v11795
  %v12387 = vunpack.c.l.b16 %v11796
  %v12388 = vunpack.c.h.b16 %v11796
  %v12389 = vunpack.c.l.b16 %v11797
  %v12390 = vunpack.c.h.b16 %v11797
  %v12391 = vunpack.c.l.b16 %v11798
  %v12392 = vunpack.c.h.b16 %v11798
  %v12393 = vunpack.c.l.b16 %v11799
  %v12394 = vunpack.c.h.b16 %v11799
  %v12395 = vunpack.c.l.b16 %v11800
  %v12396 = vunpack.c.h.b16 %v11800
  %v12397 = vunpack.c.l.b16 %v11801
  %v12398 = vunpack.c.h.b16 %v11801
  %v12399 = vunpack.c.l.b16 %v11802
  %v12400 = vunpack.c.h.b16 %v11802
  %v12401 = vunpack.c.l.b16 %v11803
  %v12402 = vunpack.c.h.b16 %v11803
  %v12403 = vunpack.c.l.b16 %v11804
  %v12404 = vunpack.c.h.b16 %v11804
  %v12405 = vunpack.c.l.b16 %v11805
  %v12406 = vunpack.c.h.b16 %v11805
  %v12407 = vunpack.c.l.b16 %v11806
  %v12408 = vunpack.c.h.b16 %v11806
  %v12409 = vunpack.c.l.b16 %v11807
  %v12410 = vunpack.c.h.b16 %v11807
  %v12411 = vunpack.c.l.b16 %v11808
  %v12412 = vunpack.c.h.b16 %v11808
  %v12413 = vunpack.c.l.b16 %v11809
  %v12414 = vunpack.c.h.b16 %v11809
  %v12415 = vunpack.c.l.b16 %v11810
  %v12416 = vunpack.c.h.b16 %v11810
  %v12417 = vunpack.c.l.b16 %v11811
  %v12418 = vunpack.c.h.b16 %v11811
  %v12419 = vunpack.c.l.b16 %v11812
  %v12420 = vunpack.c.h.b16 %v11812
  %v12421 = vunpack.c.l.b16 %v11813
  %v12422 = vunpack.c.h.b16 %v11813
  %v12423 = vunpack.c.l.b16 %v11814
  %v12424 = vunpack.c.h.b16 %v11814
  %v12425 = vunpack.c.l.b16 %v11815
  %v12426 = vunpack.c.h.b16 %v11815
  %v12427 = vunpack.c.l.b16 %v11816
  %v12428 = vunpack.c.h.b16 %v11816
  %v12429 = vunpack.c.l.b16 %v11817
  %v12430 = vunpack.c.h.b16 %v11817
  %v12431 = vunpack.c.l.b16 %v11818
  %v12432 = vunpack.c.h.b16 %v11818
  %v12433 = vunpack.c.l.b16 %v11819
  %v12434 = vunpack.c.h.b16 %v11819
  %v12435 = vunpack.c.l.b16 %v11820
  %v12436 = vunpack.c.h.b16 %v11820
  %v12437 = vunpack.c.l.b16 %v11821
  %v12438 = vunpack.c.h.b16 %v11821
  %v12439 = vunpack.c.l.b16 %v11822
  %v12440 = vunpack.c.h.b16 %v11822
  %v12441 = vunpack.c.l.b16 %v11823
  %v12442 = vunpack.c.h.b16 %v11823
  %v12443 = vunpack.c.l.b16 %v11824
  %v12444 = vunpack.c.h.b16 %v11824
  %v12445 = vunpack.c.l.b16 %v11825
  %v12446 = vunpack.c.h.b16 %v11825
  %v12447 = vunpack.c.l.b16 %v11826
  %v12448 = vunpack.c.h.b16 %v11826
  %v12449 = vunpack.c.l.b16 %v11827
  %v12450 = vunpack.c.h.b16 %v11827
  %v12451 = vunpack.c.l.b16 %v11828
  %v12452 = vunpack.c.h.b16 %v11828
  %v12453 = vunpack.c.l.b16 %v11829
  %v12454 = vunpack.c.h.b16 %v11829
  %v12455 = vunpack.c.l.b16 %v11830
  %v12456 = vunpack.c.h.b16 %v11830
  %v12457 = vunpack.c.l.b16 %v11831
  %v12458 = vunpack.c.h.b16 %v11831
  %v12459 = vunpack.c.l.b16 %v11832
  %v12460 = vunpack.c.h.b16 %v11832
  %v12461 = vpack.c.b16 %v12081, %v12077
  %v12462 = vpack.c.b16 %v12082, %v12078
  %v12463 = vpack.c.b16 %v12083, %v12079
  %v12464 = vpack.c.b16 %v12084, %v12080
  %v12465 = vpack.c.b16 %v12089, %v12085
  %v12466 = vpack.c.b16 %v12090, %v12086
  %v12467 = vpack.c.b16 %v12091, %v12087
  %v12468 = vpack.c.b16 %v12092, %v12088
  %v12469 = vpack.c.b16 %v12097, %v12093
  %v12470 = vpack.c.b16 %v12098, %v12094
  %v12471 = vpack.c.b16 %v12099, %v12095
  %v12472 = vpack.c.b16 %v12100, %v12096
  %v12473 = vpack.c.b16 %v12105, %v12101
  %v12474 = vpack.c.b16 %v12106, %v12102
  %v12475 = vpack.c.b16 %v12107, %v12103
  %v12476 = vpack.c.b16 %v12108, %v12104
  %v12477 = vpack.c.b16 %v12113, %v12109
  %v12478 = vpack.c.b16 %v12114, %v12110
  %v12479 = vpack.c.b16 %v12115, %v12111
  %v12480 = vpack.c.b16 %v12116, %v12112
  %v12481 = vpack.c.b16 %v12121, %v12117
  %v12482 = vpack.c.b16 %v12122, %v12118
  %v12483 = vpack.c.b16 %v12123, %v12119
  %v12484 = vpack.c.b16 %v12124, %v12120
  %v12485 = vpack.c.b16 %v12129, %v12125
  %v12486 = vpack.c.b16 %v12130, %v12126
  %v12487 = vpack.c.b16 %v12131, %v12127
  %v12488 = vpack.c.b16 %v12132, %v12128
  %v12489 = vpack.c.b16 %v12137, %v12133
  %v12490 = vpack.c.b16 %v12138, %v12134
  %v12491 = vpack.c.b16 %v12139, %v12135
  %v12492 = vpack.c.b16 %v12140, %v12136
  %v12493 = vpack.c.b16 %v12145, %v12141
  %v12494 = vpack.c.b16 %v12146, %v12142
  %v12495 = vpack.c.b16 %v12147, %v12143
  %v12496 = vpack.c.b16 %v12148, %v12144
  %v12497 = vpack.c.b16 %v12153, %v12149
  %v12498 = vpack.c.b16 %v12154, %v12150
  %v12499 = vpack.c.b16 %v12155, %v12151
  %v12500 = vpack.c.b16 %v12156, %v12152
  %v12501 = vpack.c.b16 %v12161, %v12157
  %v12502 = vpack.c.b16 %v12162, %v12158
  %v12503 = vpack.c.b16 %v12163, %v12159
  %v12504 = vpack.c.b16 %v12164, %v12160
  %v12505 = vpack.c.b16 %v12169, %v12165
  %v12506 = vpack.c.b16 %v12170, %v12166
  %v12507 = vpack.c.b16 %v12171, %v12167
  %v12508 = vpack.c.b16 %v12172, %v12168
  %v12509 = vpack.c.b16 %v12177, %v12173
  %v12510 = vpack.c.b16 %v12178, %v12174
  %v12511 = vpack.c.b16 %v12179, %v12175
  %v12512 = vpack.c.b16 %v12180, %v12176
  %v12513 = vpack.c.b16 %v12185, %v12181
  %v12514 = vpack.c.b16 %v12186, %v12182
  %v12515 = vpack.c.b16 %v12187, %v12183
  %v12516 = vpack.c.b16 %v12188, %v12184
  %v12517 = vpack.c.b16 %v12193, %v12189
  %v12518 = vpack.c.b16 %v12194, %v12190
  %v12519 = vpack.c.b16 %v12195, %v12191
  %v12520 = vpack.c.b16 %v12196, %v12192
  %v12521 = vpack.c.b16 %v12201, %v12197
  %v12522 = vpack.c.b16 %v12202, %v12198
  %v12523 = vpack.c.b16 %v12203, %v12199
  %v12524 = vpack.c.b16 %v12204, %v12200
  %v12525 = vpack.c.b16 %v12209, %v12205
  %v12526 = vpack.c.b16 %v12210, %v12206
  %v12527 = vpack.c.b16 %v12211, %v12207
  %v12528 = vpack.c.b16 %v12212, %v12208
  %v12529 = vpack.c.b16 %v12217, %v12213
  %v12530 = vpack.c.b16 %v12218, %v12214
  %v12531 = vpack.c.b16 %v12219, %v12215
  %v12532 = vpack.c.b16 %v12220, %v12216
  %v12533 = vpack.c.b16 %v12225, %v12221
  %v12534 = vpack.c.b16 %v12226, %v12222
  %v12535 = vpack.c.b16 %v12227, %v12223
  %v12536 = vpack.c.b16 %v12228, %v12224
  %v12537 = vpack.c.b16 %v12233, %v12229
  %v12538 = vpack.c.b16 %v12234, %v12230
  %v12539 = vpack.c.b16 %v12235, %v12231
  %v12540 = vpack.c.b16 %v12236, %v12232
  %v12541 = vpack.c.b16 %v12241, %v12237
  %v12542 = vpack.c.b16 %v12242, %v12238
  %v12543 = vpack.c.b16 %v12243, %v12239
  %v12544 = vpack.c.b16 %v12244, %v12240
  %v12545 = vpack.c.b16 %v12249, %v12245
  %v12546 = vpack.c.b16 %v12250, %v12246
  %v12547 = vpack.c.b16 %v12251, %v12247
  %v12548 = vpack.c.b16 %v12252, %v12248
  %v12549 = vpack.c.b16 %v12257, %v12253
  %v12550 = vpack.c.b16 %v12258, %v12254
  %v12551 = vpack.c.b16 %v12259, %v12255
  %v12552 = vpack.c.b16 %v12260, %v12256
  %v12553 = vpack.c.b16 %v12265, %v12261
  %v12554 = vpack.c.b16 %v12266, %v12262
  %v12555 = vpack.c.b16 %v12267, %v12263
  %v12556 = vpack.c.b16 %v12268, %v12264
  %v12557 = vpack.c.b16 %v12273, %v12269
  %v12558 = vpack.c.b16 %v12274, %v12270
  %v12559 = vpack.c.b16 %v12275, %v12271
  %v12560 = vpack.c.b16 %v12276, %v12272
  %v12561 = vpack.c.b16 %v12281, %v12277
  %v12562 = vpack.c.b16 %v12282, %v12278
  %v12563 = vpack.c.b16 %v12283, %v12279
  %v12564 = vpack.c.b16 %v12284, %v12280
  %v12565 = vpack.c.b16 %v12289, %v12285
  %v12566 = vpack.c.b16 %v12290, %v12286
  %v12567 = vpack.c.b16 %v12291, %v12287
  %v12568 = vpack.c.b16 %v12292, %v12288
  %v12569 = vpack.c.b16 %v12297, %v12293
  %v12570 = vpack.c.b16 %v12298, %v12294
  %v12571 = vpack.c.b16 %v12299, %v12295
  %v12572 = vpack.c.b16 %v12300, %v12296
  %v12573 = vpack.c.b16 %v12305, %v12301
  %v12574 = vpack.c.b16 %v12306, %v12302
  %v12575 = vpack.c.b16 %v12307, %v12303
  %v12576 = vpack.c.b16 %v12308, %v12304
  %v12577 = vpack.c.b16 %v12313, %v12309
  %v12578 = vpack.c.b16 %v12314, %v12310
  %v12579 = vpack.c.b16 %v12315, %v12311
  %v12580 = vpack.c.b16 %v12316, %v12312
  %v12581 = vpack.c.b16 %v12321, %v12317
  %v12582 = vpack.c.b16 %v12322, %v12318
  %v12583 = vpack.c.b16 %v12323, %v12319
  %v12584 = vpack.c.b16 %v12324, %v12320
  %v12585 = vpack.c.b16 %v12329, %v12325
  %v12586 = vpack.c.b16 %v12330, %v12326
  %v12587 = vpack.c.b16 %v12331, %v12327
  %v12588 = vpack.c.b16 %v12332, %v12328
  %v12589 = vpack.c.b16 %v12337, %v12333
  %v12590 = vpack.c.b16 %v12338, %v12334
  %v12591 = vpack.c.b16 %v12339, %v12335
  %v12592 = vpack.c.b16 %v12340, %v12336
  %v12593 = vpack.c.b16 %v12345, %v12341
  %v12594 = vpack.c.b16 %v12346, %v12342
  %v12595 = vpack.c.b16 %v12347, %v12343
  %v12596 = vpack.c.b16 %v12348, %v12344
  %v12597 = vpack.c.b16 %v12353, %v12349
  %v12598 = vpack.c.b16 %v12354, %v12350
  %v12599 = vpack.c.b16 %v12355, %v12351
  %v12600 = vpack.c.b16 %v12356, %v12352
  %v12601 = vpack.c.b16 %v12361, %v12357
  %v12602 = vpack.c.b16 %v12362, %v12358
  %v12603 = vpack.c.b16 %v12363, %v12359
  %v12604 = vpack.c.b16 %v12364, %v12360
  %v12605 = vpack.c.b16 %v12369, %v12365
  %v12606 = vpack.c.b16 %v12370, %v12366
  %v12607 = vpack.c.b16 %v12371, %v12367
  %v12608 = vpack.c.b16 %v12372, %v12368
  %v12609 = vpack.c.b16 %v12377, %v12373
  %v12610 = vpack.c.b16 %v12378, %v12374
  %v12611 = vpack.c.b16 %v12379, %v12375
  %v12612 = vpack.c.b16 %v12380, %v12376
  %v12613 = vpack.c.b16 %v12385, %v12381
  %v12614 = vpack.c.b16 %v12386, %v12382
  %v12615 = vpack.c.b16 %v12387, %v12383
  %v12616 = vpack.c.b16 %v12388, %v12384
  %v12617 = vpack.c.b16 %v12393, %v12389
  %v12618 = vpack.c.b16 %v12394, %v12390
  %v12619 = vpack.c.b16 %v12395, %v12391
  %v12620 = vpack.c.b16 %v12396, %v12392
  %v12621 = vpack.c.b16 %v12401, %v12397
  %v12622 = vpack.c.b16 %v12402, %v12398
  %v12623 = vpack.c.b16 %v12403, %v12399
  %v12624 = vpack.c.b16 %v12404, %v12400
  %v12625 = vpack.c.b16 %v12409, %v12405
  %v12626 = vpack.c.b16 %v12410, %v12406
  %v12627 = vpack.c.b16 %v12411, %v12407
  %v12628 = vpack.c.b16 %v12412, %v12408
  %v12629 = vpack.c.b16 %v12417, %v12413
  %v12630 = vpack.c.b16 %v12418, %v12414
  %v12631 = vpack.c.b16 %v12419, %v12415
  %v12632 = vpack.c.b16 %v12420, %v12416
  %v12633 = vpack.c.b16 %v12425, %v12421
  %v12634 = vpack.c.b16 %v12426, %v12422
  %v12635 = vpack.c.b16 %v12427, %v12423
  %v12636 = vpack.c.b16 %v12428, %v12424
  %v12637 = vpack.c.b16 %v12433, %v12429
  %v12638 = vpack.c.b16 %v12434, %v12430
  %v12639 = vpack.c.b16 %v12435, %v12431
  %v12640 = vpack.c.b16 %v12436, %v12432
  %v12641 = vpack.c.b16 %v12441, %v12437
  %v12642 = vpack.c.b16 %v12442, %v12438
  %v12643 = vpack.c.b16 %v12443, %v12439
  %v12644 = vpack.c.b16 %v12444, %v12440
  %v12645 = vpack.c.b16 %v12449, %v12445
  %v12646 = vpack.c.b16 %v12450, %v12446
  %v12647 = vpack.c.b16 %v12451, %v12447
  %v12648 = vpack.c.b16 %v12452, %v12448
  %v12649 = vpack.c.b16 %v12457, %v12453
  %v12650 = vpack.c.b16 %v12458, %v12454
  %v12651 = vpack.c.b16 %v12459, %v12455
  %v12652 = vpack.c.b16 %v12460, %v12456
  %12845 = vmatprep.subr.bf16.mxu0 %v12462
  %12846 = vmatpush1.bf16.msra.mxu0 %v12461
  %12847 = vmatprep.subr.bf16.mxu0 %v12466
  %12848 = vmatpush1.bf16.msra.mxu0 %v12465
  %12849 = vmatprep.subr.bf16.mxu0 %v12470
  %12850 = vmatpush1.bf16.msra.mxu0 %v12469
  %12851 = vmatprep.subr.bf16.mxu0 %v12474
  %12852 = vmatpush1.bf16.msra.mxu0 %v12473
  %12853 = vmatprep.subr.bf16.mxu0 %v12478
  %12854 = vmatpush1.bf16.msra.mxu0 %v12477
  %12855 = vmatprep.subr.bf16.mxu0 %v12482
  %12856 = vmatpush1.bf16.msra.mxu0 %v12481
  %12857 = vmatprep.subr.bf16.mxu0 %v12486
  %12858 = vmatpush1.bf16.msra.mxu0 %v12485
  %12859 = vmatprep.subr.bf16.mxu0 %v12490
  %12860 = vmatpush1.bf16.msra.mxu0 %v12489
  %12861 = vmatprep.subr.bf16.mxu0 %v12494
  %12862 = vmatpush1.bf16.msra.mxu0 %v12493
  %12863 = vmatprep.subr.bf16.mxu0 %v12498
  %12864 = vmatpush1.bf16.msra.mxu0 %v12497
  %12865 = vmatprep.subr.bf16.mxu0 %v12502
  %12866 = vmatpush1.bf16.msra.mxu0 %v12501
  %12867 = vmatprep.subr.bf16.mxu0 %v12506
  %12868 = vmatpush1.bf16.msra.mxu0 %v12505
  %12869 = vmatprep.subr.bf16.mxu0 %v12510
  %12870 = vmatpush1.bf16.msra.mxu0 %v12509
  %12871 = vmatprep.subr.bf16.mxu0 %v12514
  %12872 = vmatpush1.bf16.msra.mxu0 %v12513
  %12873 = vmatprep.subr.bf16.mxu0 %v12518
  %12874 = vmatpush1.bf16.msra.mxu0 %v12517
  %12875 = vmatprep.subr.bf16.mxu0 %v12522
  %12876 = vmatpush1.bf16.msra.mxu0 %v12521
  %12877 = vmatprep.mubr.bf16.mxu0 %v11874
  %12878 = vmatmul.mubr.bf16.gmra.mrb[0].mxu0 %v11873
  %v12879 = vpop.f32.mrb[0].mxu0
  %v12880 = vadd.f32 %v11838, %v12879
  %v12881 = vpop.f32.mrb[0].mxu0
  %v12882 = vadd.f32 %v11842, %v12881
  %v12883 = vpop.f32.mrb[0].mxu0
  %v12884 = vadd.f32 %v11838, %v12883
  %v12885 = vpop.f32.mrb[0].mxu0
  %v12886 = vadd.f32 %v11842, %v12885
  %12887 = vdwg.mxu0
  %12888 = vmatprep.subr.bf16.mxu0 %v12526
  %12889 = vmatpush1.bf16.msra.mxu0 %v12525
  %12890 = vmatprep.subr.bf16.mxu0 %v12530
  %12891 = vmatpush1.bf16.msra.mxu0 %v12529
  %12892 = vmatprep.subr.bf16.mxu0 %v12534
  %12893 = vmatpush1.bf16.msra.mxu0 %v12533
  %12894 = vmatprep.subr.bf16.mxu0 %v12538
  %12895 = vmatpush1.bf16.msra.mxu0 %v12537
  %12896 = vmatprep.subr.bf16.mxu0 %v12542
  %12897 = vmatpush1.bf16.msra.mxu0 %v12541
  %12898 = vmatprep.subr.bf16.mxu0 %v12546
  %12899 = vmatpush1.bf16.msra.mxu0 %v12545
  %12900 = vmatprep.subr.bf16.mxu0 %v12550
  %12901 = vmatpush1.bf16.msra.mxu0 %v12549
  %12902 = vmatprep.subr.bf16.mxu0 %v12554
  %12903 = vmatpush1.bf16.msra.mxu0 %v12553
  %12904 = vmatprep.subr.bf16.mxu0 %v12558
  %12905 = vmatpush1.bf16.msra.mxu0 %v12557
  %12906 = vmatprep.subr.bf16.mxu0 %v12562
  %12907 = vmatpush1.bf16.msra.mxu0 %v12561
  %12908 = vmatprep.subr.bf16.mxu0 %v12566
  %12909 = vmatpush1.bf16.msra.mxu0 %v12565
  %12910 = vmatprep.subr.bf16.mxu0 %v12570
  %12911 = vmatpush1.bf16.msra.mxu0 %v12569
  %12912 = vmatprep.subr.bf16.mxu0 %v12574
  %12913 = vmatpush1.bf16.msra.mxu0 %v12573
  %12914 = vmatprep.subr.bf16.mxu0 %v12578
  %12915 = vmatpush1.bf16.msra.mxu0 %v12577
  %12916 = vmatprep.subr.bf16.mxu0 %v12582
  %12917 = vmatpush1.bf16.msra.mxu0 %v12581
  %12918 = vmatprep.subr.bf16.mxu0 %v12586
  %12919 = vmatpush1.bf16.msra.mxu0 %v12585
  %12920 = vmatprep.mubr.bf16.mxu0 %v11876
  %12921 = vmatmul.mubr.bf16.gmra.mrb[0].mxu0 %v11875
  %v12922 = vpop.f32.mrb[0].mxu0
  %v12923 = vadd.f32 %v12880, %v12922
  %v12924 = vpop.f32.mrb[0].mxu0
  %v12925 = vadd.f32 %v12882, %v12924
  %v12926 = vpop.f32.mrb[0].mxu0
  %v12927 = vadd.f32 %v12884, %v12926
  %v12928 = vpop.f32.mrb[0].mxu0
  %v12929 = vadd.f32 %v12886, %v12928
  %12930 = vdwg.mxu0
  %12931 = vmatprep.subr.bf16.mxu0 %v12590
  %12932 = vmatpush1.bf16.msra.mxu0 %v12589
  %12933 = vmatprep.subr.bf16.mxu0 %v12594
  %12934 = vmatpush1.bf16.msra.mxu0 %v12593
  %12935 = vmatprep.subr.bf16.mxu0 %v12598
  %12936 = vmatpush1.bf16.msra.mxu0 %v12597
  %12937 = vmatprep.subr.bf16.mxu0 %v12602
  %12938 = vmatpush1.bf16.msra.mxu0 %v12601
  %12939 = vmatprep.subr.bf16.mxu0 %v12606
  %12940 = vmatpush1.bf16.msra.mxu0 %v12605
  %12941 = vmatprep.subr.bf16.mxu0 %v12610
  %12942 = vmatpush1.bf16.msra.mxu0 %v12609
  %12943 = vmatprep.subr.bf16.mxu0 %v12614
  %12944 = vmatpush1.bf16.msra.mxu0 %v12613
  %12945 = vmatprep.subr.bf16.mxu0 %v12618
  %12946 = vmatpush1.bf16.msra.mxu0 %v12617
  %12947 = vmatprep.subr.bf16.mxu0 %v12622
  %12948 = vmatpush1.bf16.msra.mxu0 %v12621
  %12949 = vmatprep.subr.bf16.mxu0 %v12626
  %12950 = vmatpush1.bf16.msra.mxu0 %v12625
  %12951 = vmatprep.subr.bf16.mxu0 %v12630
  %12952 = vmatpush1.bf16.msra.mxu0 %v12629
  %12953 = vmatprep.subr.bf16.mxu0 %v12634
  %12954 = vmatpush1.bf16.msra.mxu0 %v12633
  %12955 = vmatprep.subr.bf16.mxu0 %v12638
  %12956 = vmatpush1.bf16.msra.mxu0 %v12637
  %12957 = vmatprep.subr.bf16.mxu0 %v12642
  %12958 = vmatpush1.bf16.msra.mxu0 %v12641
  %12959 = vmatprep.subr.bf16.mxu0 %v12646
  %12960 = vmatpush1.bf16.msra.mxu0 %v12645
  %12961 = vmatprep.subr.bf16.mxu0 %v12650
  %12962 = vmatpush1.bf16.msra.mxu0 %v12649
  %12963 = vmatprep.mubr.bf16.mxu0 %v11878
  %12964 = vmatmul.mubr.bf16.gmra.mrb[0].mxu0 %v11877
  %v12965 = vpop.f32.mrb[0].mxu0
  %v12966 = vadd.f32 %v12923, %v12965
  %v12967 = vpop.f32.mrb[0].mxu0
  %v12968 = vadd.f32 %v12925, %v12967
  %v12969 = vpop.f32.mrb[0].mxu0
  %v12970 = vadd.f32 %v12927, %v12969
  %v12971 = vpop.f32.mrb[0].mxu0
  %v12972 = vadd.f32 %v12929, %v12971
  %12973 = vdwg.mxu0
  %12974 = vmatprep.subr.bf16.mxu0 %v12464
  %12975 = vmatpush1.bf16.msra.mxu0 %v12463
  %12976 = vmatprep.subr.bf16.mxu0 %v12468
  %12977 = vmatpush1.bf16.msra.mxu0 %v12467
  %12978 = vmatprep.subr.bf16.mxu0 %v12472
  %12979 = vmatpush1.bf16.msra.mxu0 %v12471
  %12980 = vmatprep.subr.bf16.mxu0 %v12476
  %12981 = vmatpush1.bf16.msra.mxu0 %v12475
  %12982 = vmatprep.subr.bf16.mxu0 %v12480
  %12983 = vmatpush1.bf16.msra.mxu0 %v12479
  %12984 = vmatprep.subr.bf16.mxu0 %v12484
  %12985 = vmatpush1.bf16.msra.mxu0 %v12483
  %12986 = vmatprep.subr.bf16.mxu0 %v12488
  %12987 = vmatpush1.bf16.msra.mxu0 %v12487
  %12988 = vmatprep.subr.bf16.mxu0 %v12492
  %12989 = vmatpush1.bf16.msra.mxu0 %v12491
  %12990 = vmatprep.subr.bf16.mxu0 %v12496
  %12991 = vmatpush1.bf16.msra.mxu0 %v12495
  %12992 = vmatprep.subr.bf16.mxu0 %v12500
  %12993 = vmatpush1.bf16.msra.mxu0 %v12499
  %12994 = vmatprep.subr.bf16.mxu0 %v12504
  %12995 = vmatpush1.bf16.msra.mxu0 %v12503
  %12996 = vmatprep.subr.bf16.mxu0 %v12508
  %12997 = vmatpush1.bf16.msra.mxu0 %v12507
  %12998 = vmatprep.subr.bf16.mxu0 %v12512
  %12999 = vmatpush1.bf16.msra.mxu0 %v12511
  %13000 = vmatprep.subr.bf16.mxu0 %v12516
  %13001 = vmatpush1.bf16.msra.mxu0 %v12515
  %13002 = vmatprep.subr.bf16.mxu0 %v12520
  %13003 = vmatpush1.bf16.msra.mxu0 %v12519
  %13004 = vmatprep.subr.bf16.mxu0 %v12524
  %13005 = vmatpush1.bf16.msra.mxu0 %v12523
  %13006 = vmatprep.mubr.bf16.mxu0 %v11874
  %13007 = vmatmul.mubr.bf16.gmra.mrb[0].mxu0 %v11873
  %v13008 = vpop.f32.mrb[0].mxu0
  %v13009 = vadd.f32 %v11846, %v13008
  %v13010 = vpop.f32.mrb[0].mxu0
  %v13011 = vadd.f32 %v11850, %v13010
  %v13012 = vpop.f32.mrb[0].mxu0
  %v13013 = vadd.f32 %v11846, %v13012
  %v13014 = vpop.f32.mrb[0].mxu0
  %v13015 = vadd.f32 %v11850, %v13014
  %13016 = vdwg.mxu0
  %13017 = vmatprep.subr.bf16.mxu0 %v12528
  %13018 = vmatpush1.bf16.msra.mxu0 %v12527
  %13019 = vmatprep.subr.bf16.mxu0 %v12532
  %13020 = vmatpush1.bf16.msra.mxu0 %v12531
  %13021 = vmatprep.subr.bf16.mxu0 %v12536
  %13022 = vmatpush1.bf16.msra.mxu0 %v12535
  %13023 = vmatprep.subr.bf16.mxu0 %v12540
  %13024 = vmatpush1.bf16.msra.mxu0 %v12539
  %13025 = vmatprep.subr.bf16.mxu0 %v12544
  %13026 = vmatpush1.bf16.msra.mxu0 %v12543
  %13027 = vmatprep.subr.bf16.mxu0 %v12548
  %13028 = vmatpush1.bf16.msra.mxu0 %v12547
  %13029 = vmatprep.subr.bf16.mxu0 %v12552
  %13030 = vmatpush1.bf16.msra.mxu0 %v12551
  %13031 = vmatprep.subr.bf16.mxu0 %v12556
  %13032 = vmatpush1.bf16.msra.mxu0 %v12555
  %13033 = vmatprep.subr.bf16.mxu0 %v12560
  %13034 = vmatpush1.bf16.msra.mxu0 %v12559
  %13035 = vmatprep.subr.bf16.mxu0 %v12564
  %13036 = vmatpush1.bf16.msra.mxu0 %v12563
  %13037 = vmatprep.subr.bf16.mxu0 %v12568
  %13038 = vmatpush1.bf16.msra.mxu0 %v12567
  %13039 = vmatprep.subr.bf16.mxu0 %v12572
  %13040 = vmatpush1.bf16.msra.mxu0 %v12571
  %13041 = vmatprep.subr.bf16.mxu0 %v12576
  %13042 = vmatpush1.bf16.msra.mxu0 %v12575
  %13043 = vmatprep.subr.bf16.mxu0 %v12580
  %13044 = vmatpush1.bf16.msra.mxu0 %v12579
  %13045 = vmatprep.subr.bf16.mxu0 %v12584
  %13046 = vmatpush1.bf16.msra.mxu0 %v12583
  %13047 = vmatprep.subr.bf16.mxu0 %v12588
  %13048 = vmatpush1.bf16.msra.mxu0 %v12587
  %13049 = vmatprep.mubr.bf16.mxu0 %v11876
  %13050 = vmatmul.mubr.bf16.gmra.mrb[0].mxu0 %v11875
  %v13051 = vpop.f32.mrb[0].mxu0
  %v13052 = vadd.f32 %v13009, %v13051
  %v13053 = vpop.f32.mrb[0].mxu0
  %v13054 = vadd.f32 %v13011, %v13053
  %v13055 = vpop.f32.mrb[0].mxu0
  %v13056 = vadd.f32 %v13013, %v13055
  %v13057 = vpop.f32.mrb[0].mxu0
  %v13058 = vadd.f32 %v13015, %v13057
  %13059 = vdwg.mxu0
  %13060 = vmatprep.subr.bf16.mxu0 %v12592
  %13061 = vmatpush1.bf16.msra.mxu0 %v12591
  %13062 = vmatprep.subr.bf16.mxu0 %v12596
  %13063 = vmatpush1.bf16.msra.mxu0 %v12595
  %13064 = vmatprep.subr.bf16.mxu0 %v12600
  %13065 = vmatpush1.bf16.msra.mxu0 %v12599
  %13066 = vmatprep.subr.bf16.mxu0 %v12604
  %13067 = vmatpush1.bf16.msra.mxu0 %v12603
  %13068 = vmatprep.subr.bf16.mxu0 %v12608
  %13069 = vmatpush1.bf16.msra.mxu0 %v12607
  %13070 = vmatprep.subr.bf16.mxu0 %v12612
  %13071 = vmatpush1.bf16.msra.mxu0 %v12611
  %13072 = vmatprep.subr.bf16.mxu0 %v12616
  %13073 = vmatpush1.bf16.msra.mxu0 %v12615
  %13074 = vmatprep.subr.bf16.mxu0 %v12620
  %13075 = vmatpush1.bf16.msra.mxu0 %v12619
  %13076 = vmatprep.subr.bf16.mxu0 %v12624
  %13077 = vmatpush1.bf16.msra.mxu0 %v12623
  %13078 = vmatprep.subr.bf16.mxu0 %v12628
  %13079 = vmatpush1.bf16.msra.mxu0 %v12627
  %13080 = vmatprep.subr.bf16.mxu0 %v12632
  %13081 = vmatpush1.bf16.msra.mxu0 %v12631
  %13082 = vmatprep.subr.bf16.mxu0 %v12636
  %13083 = vmatpush1.bf16.msra.mxu0 %v12635
  %13084 = vmatprep.subr.bf16.mxu0 %v12640
  %13085 = vmatpush1.bf16.msra.mxu0 %v12639
  %13086 = vmatprep.subr.bf16.mxu0 %v12644
  %13087 = vmatpush1.bf16.msra.mxu0 %v12643
  %13088 = vmatprep.subr.bf16.mxu0 %v12648
  %13089 = vmatpush1.bf16.msra.mxu0 %v12647
  %13090 = vmatprep.subr.bf16.mxu0 %v12652
  %13091 = vmatpush1.bf16.msra.mxu0 %v12651
  %13092 = vmatprep.mubr.bf16.mxu0 %v11878
  %13093 = vmatmul.mubr.bf16.gmra.mrb[0].mxu0 %v11877
  %v13094 = vpop.f32.mrb[0].mxu0
  %v13095 = vadd.f32 %v13052, %v13094
  %v13096 = vpop.f32.mrb[0].mxu0
  %v13097 = vadd.f32 %v13054, %v13096
  %v13098 = vpop.f32.mrb[0].mxu0
  %v13099 = vadd.f32 %v13056, %v13098
  %v13100 = vpop.f32.mrb[0].mxu0
  %v13101 = vadd.f32 %v13058, %v13100
  %13102 = vdwg.mxu0
  %v13103 = vmul.f32 %v11627, %v11627
  %v13104 = vmul.f32 %v11628, %v11628
  %v13105 = vmul.f32 %v11629, %v11629
  %v13106 = vmul.f32 %v11630, %v11630
  %v13107 = vmul.f32 %v11631, %v11631
  %v13108 = vmul.f32 %v11632, %v11632
  %v13109 = vmul.f32 %v11633, %v11633
  %v13110 = vmul.f32 %v11634, %v11634
  %v13111 = vadd.f32 %v13103, %v13104
  %v13112 = vadd.f32 %v13111, %v13105
  %v13113 = vadd.f32 %v13112, %v13106
  %13114 = vadd.xlane.f32.xlu0 %v13113
  %v13115 = vpop.xlane.xlu0 %13114
  %v13116 = vadd.f32 %v13107, %v13108
  %v13117 = vadd.f32 %v13116, %v13109
  %v13118 = vadd.f32 %v13117, %v13110
  %13119 = vadd.xlane.f32.xlu0 %v13118
  %v13120 = vpop.xlane.xlu0 %13119
  %v13121 = vrsqrt.pop %v13115
  %v13122 = vrsqrt.pop %v13120
  %v13123 = vmul.f32 %v11627, %v13121
  %v13124 = vmul.f32 %v11628, %v13121
  %v13125 = vmul.f32 %v11629, %v13121
  %v13126 = vmul.f32 %v11630, %v13121
  %v13127 = vmul.f32 %v11631, %v13122
  %v13128 = vmul.f32 %v11632, %v13122
  %v13129 = vmul.f32 %v11633, %v13122
  %v13130 = vmul.f32 %v11634, %v13122
  %v13131 = vmul.f32 %v12966, %v12966
  %v13132 = vmul.f32 %v12968, %v12968
  %v13133 = vmul.f32 %v13095, %v13095
  %v13134 = vmul.f32 %v13097, %v13097
  %v13135 = vmul.f32 %v12970, %v12970
  %v13136 = vmul.f32 %v12972, %v12972
  %v13137 = vmul.f32 %v13099, %v13099
  %v13138 = vmul.f32 %v13101, %v13101
  %v13139 = vadd.f32 %v13131, %v13132
  %v13140 = vadd.f32 %v13139, %v13133
  %v13141 = vadd.f32 %v13140, %v13134
  %13142 = vadd.xlane.f32.xlu0 %v13141
  %v13143 = vpop.xlane.xlu0 %13142
  %v13144 = vadd.f32 %v13135, %v13136
  %v13145 = vadd.f32 %v13144, %v13137
  %v13146 = vadd.f32 %v13145, %v13138
  %13147 = vadd.xlane.f32.xlu0 %v13146
  %v13148 = vpop.xlane.xlu0 %13147
  %v13149 = vrsqrt.pop %v13143
  %v13150 = vrsqrt.pop %v13148
  %v13151 = vmul.f32 %v12966, %v13149
  %v13152 = vmul.f32 %v12968, %v13149
  %v13153 = vmul.f32 %v13095, %v13149
  %v13154 = vmul.f32 %v13097, %v13149
  %v13155 = vmul.f32 %v12970, %v13150
  %v13156 = vmul.f32 %v12972, %v13150
  %v13157 = vmul.f32 %v13099, %v13150
  %v13158 = vmul.f32 %v13101, %v13150
  %v13159 = vmul.f32 %v13123, %v13151
  %v13160 = vmul.f32 %v13124, %v13152
  %v13161 = vmul.f32 %v13125, %v13153
  %v13162 = vmul.f32 %v13126, %v13154
  %v13163 = vadd.f32 %v13159, %v13160
  %v13164 = vadd.f32 %v13163, %v13161
  %v13165 = vadd.f32 %v13164, %v13162
  %13166 = vadd.xlane.f32.xlu0 %v13165
  %v13167 = vpop.xlane.xlu0 %13166
  %v13168 = vmul.f32 %v13123, %v13155
  %v13169 = vmul.f32 %v13124, %v13156
  %v13170 = vmul.f32 %v13125, %v13157
  %v13171 = vmul.f32 %v13126, %v13158
  %v13172 = vadd.f32 %v13168, %v13169
  %v13173 = vadd.f32 %v13172, %v13170
  %v13174 = vadd.f32 %v13173, %v13171
  %13175 = vadd.xlane.f32.xlu0 %v13174
  %v13176 = vpop.xlane.xlu0 %13175
  %v13177 = vmul.f32 %v13155, %v13127
  %v13178 = vmul.f32 %v13156, %v13128
  %v13179 = vmul.f32 %v13157, %v13129
  %v13180 = vmul.f32 %v13158, %v13130
  %v13181 = vadd.f32 %v13177, %v13178
  %v13182 = vadd.f32 %v13181, %v13179
  %v13183 = vadd.f32 %v13182, %v13180
  %13184 = vadd.xlane.f32.xlu0 %v13183
  %v13185 = vpop.xlane.xlu0 %13184
  %v13186 = vsub.f32 0.2, %v13167
  %v13187 = vadd.f32 %v13186, %v13176
  %v13188 = vmax.f32 %v13187, 0.0
  %v13189 = vsub.f32 0.2, %v13185
  %v13190 = vadd.f32 %v13189, %v13176
  %v13191 = vmax.f32 %v13190, 0.0
  %s13192 = smul.u32 0, 8
  %v13193 = vlaneseq
  %v13194 = vshrl.u32 %v13193, 7
  %v13195 = vstv %s13192
  %v13196 = vadd.s32 %v13195, %v13194
  %vm13197 = vcmp.lt.s32.totalorder %v13196, 2
  %v13198 = vadd.f32 %v13188, %v13191
  %v13199 = vsel %vm13197, %v13198, 0.0
  %vm13200 = vcmask 7168
  %v13201 = vsel %vm13200, %v13199, 0.0
  %13202 = vadd.xlane.f32.xlu0 %v13201
  %v13203 = vpop.xlane.xlu0 %13202
  %v13204 = vrot.slane %v13203, 4
  %v13205 = vadd.f32 %v13203, %v13204
  %v13206 = vrot.slane %v13205, 2
  %v13207 = vadd.f32 %v13205, %v13206
  %v13208 = vrot.slane %v13207, 1
  %v13209 = vadd.f32 %v13207, %v13208
  %s13210 = vtos %v13209
  %v13211 = vstv %s13210
  %13212 = vst [vmem:[%s8] sm:$0xff] %v13211
  // Predicated region
  $region34: #{poem_image_embed_forward.1} parent=0 // pred_check
    _
  $region35: #{poem_image_embed_forward.1} parent=0 // pred_check_branch
    %13214 = sbr.rel (0) target = $region37
  $region36: #{poem_image_embed_forward.1} parent=0 // pred_region
    _
  $region37: #{poem_image_embed_forward.1} parent=0 // pred_fallthru
    _
  // Predicated region
  $region38: #{poem_image_embed_forward.1} parent=0 // pred_check
    _
  $region39: #{poem_image_embed_forward.1} parent=0 // pred_check_branch
    %13216 = sbr.rel (0) target = $region41
  $region40: #{poem_image_embed_forward.1} parent=0 // pred_region
    _
  $region41: #{poem_image_embed_forward.1} parent=0 // pred_fallthru
    _

</llo_original>
